<compile_context>
chip_gen: v7x
topology: tpu7x:2x2x1
jax: 0.10.0
libtpu: 0.0.40
codegen_flags: <defaults>
</compile_context>

<pallas_src>
import functools
from typing import NamedTuple, Optional

import numpy as np
import jax
import jax.numpy as jnp
from jax import lax
from jax.experimental import pallas as pl
from jax.experimental.pallas import tpu as pltpu

LN_EPS = 1e-6  # matches pypots (nn.LayerNorm(d_model, eps=1e-6))


class SAITSConfig(NamedTuple):
    n_layers: int
    n_steps: int
    n_features: int
    d_model: int
    d_ffn: int
    n_heads: int
    d_k: int
    d_v: int


# Parameter keys that feed the MXU (cast to the matmul dtype, e.g. bf16, to halve weight DMA/VMEM).
_MM_KEYS = {"emb1_wx", "emb1_wm", "emb2_wx", "emb2_wm", "rz_w", "rb_w", "rg_w",
            "wc_wm", "wc_wa", "wq", "wk", "wv", "wfc", "ffn_w1", "ffn_w2"}


def _cast_matmul_weights(params, mm_dtype):
    def go(d):
        out = {}
        for k, v in d.items():
            if isinstance(v, dict):
                out[k] = go(v)
            elif k in _MM_KEYS:
                out[k] = jnp.asarray(v).astype(mm_dtype)
            else:
                out[k] = jnp.asarray(v).astype(jnp.float32)
        return out
    return go(params)


def _layer_norm(x, gamma, beta):
    mu = jnp.mean(x, axis=-1, keepdims=True)
    var = jnp.mean((x - mu) ** 2, axis=-1, keepdims=True)
    return (x - mu) * lax.rsqrt(var + LN_EPS) * gamma + beta


# ---------------------------------------------------------------------------
# The single fused kernel: one grid step == one batch tile of TB samples
# ---------------------------------------------------------------------------
def _saits_kernel(*refs, treedef, n_params, cfg, tb, has_mask, mm_dtype):
    n_fixed = 3 if has_mask else 2
    x_ref, m_ref = refs[0], refs[1]
    add_mask = refs[2][...] if has_mask else None          # (S, S) additive mask (0 / -1e9)
    param_refs = refs[n_fixed:n_fixed + n_params]
    xpack_ref, attn1_ref, attn2_ref = refs[n_fixed + n_params:]
    p = jax.tree_util.tree_unflatten(treedef, list(param_refs))

    S, F, D = cfg.n_steps, cfg.n_features, cfg.d_model
    H, dk, dv = cfg.n_heads, cfg.d_k, cfg.d_v
    M = tb * S                                              # flattened rows per grid step

    def mm(a, w):
        # MXU matmul: bf16 (or f32) operands, f32 accumulation.
        return jnp.dot(a.astype(mm_dtype), w.astype(mm_dtype),
                       preferred_element_type=jnp.float32)

    x = x_ref[...].reshape(M, F)                            # (TB*S, F)
    msk = m_ref[...].reshape(M, F)

    pos = p["pos_table"][...]                               # (S, D)
    if tb > 1:
        pos = jnp.broadcast_to(pos, (tb, S, D)).reshape(M, D)

    def encoder_layer(h, lp, l, attn_ref, store_attn, want_mean):
        """One Transformer encoder layer on the flattened (TB*S, D) activation."""
        lnp = lp["lnp"][l]                                  # (5, D): [ln1_g, ln1_b, ln2_g, ln2_b, ffn_b2]
        attn_out = jnp.zeros((M, D), jnp.float32)
        attn_sum = jnp.zeros((tb, S, S), jnp.float32) if want_mean else None

        for hh in range(H):
            # Per-head projections straight from the flat activation (no wide-proj lane slicing).
            q = mm(h, lp["wq"][l, hh]).reshape(tb, S, dk)   # 1/sqrt(d_k) folded into wq
            k = mm(h, lp["wk"][l, hh]).reshape(tb, S, dk)
            v = mm(h, lp["wv"][l, hh]).reshape(tb, S, dv)

            s = jnp.einsum("bqd,bkd->bqk", q.astype(mm_dtype), k.astype(mm_dtype),
                           preferred_element_type=jnp.float32)          # (TB, S, S)
            if has_mask:
                s = s + add_mask
            s = s - jnp.max(s, axis=-1, keepdims=True)
            e = jnp.exp(s)
            # exact reciprocal on the layer whose attention weights are returned / reused
            attn = e * pl.reciprocal(jnp.sum(e, axis=-1, keepdims=True),
                                     approx=not store_attn)
            if store_attn:
                attn_ref[:, hh:hh + 1, :, :] = attn[:, None, :, :]
            if want_mean:
                attn_sum = attn_sum + attn

            ctx = jnp.einsum("bqk,bkd->bqd", attn.astype(mm_dtype), v.astype(mm_dtype),
                             preferred_element_type=jnp.float32)        # (TB, S, dv)
            # accumulate fc projection per head (replaces lane concatenate of contexts)
            attn_out = attn_out + mm(ctx.reshape(M, dv), lp["wfc"][l, hh])

        h = _layer_norm(attn_out + h, lnp[0:1, :], lnp[1:2, :])
        f1 = jnp.maximum(mm(h, lp["ffn_w1"][l]) + lp["ffn_b1"][l], 0.0)
        y = mm(f1, lp["ffn_w2"][l]) + lnp[4:5, :] + h
        h = _layer_norm(y, lnp[2:3, :], lnp[3:4, :])
        return h, attn_sum

    # ---- first DMSA block ----
    # concat([X, mask]) @ W_emb1 + b  ==  X @ W_x + mask @ W_m + b   (avoids lane concat)
    h = (mm(x, p["emb1_wx"][...]) + mm(msk, p["emb1_wm"][...])
         + p["emb1_b"][...] + pos)
    for l in range(cfg.n_layers):
        h, _ = encoder_layer(h, p["block1"], l, attn1_ref,
                             store_attn=(l == cfg.n_layers - 1), want_mean=False)
    xt1 = mm(h, p["rz_w"][...]) + p["rz_b"][...]            # (TB*S, F)

    # ---- second DMSA block ----
    x_prime = msk * x + (1.0 - msk) * xt1
    h = (mm(x_prime, p["emb2_wx"][...]) + mm(msk, p["emb2_wm"][...])
         + p["emb2_b"][...] + pos)
    attn_sum = None
    for l in range(cfg.n_layers):
        last = (l == cfg.n_layers - 1)
        h, s_ = encoder_layer(h, p["block2"], l, attn2_ref,
                              store_attn=last, want_mean=last)
        if last:
            attn_sum = s_

    f = jnp.maximum(mm(h, p["rb_w"][...]) + p["rb_b"][...], 0.0)
    xt2 = mm(f, p["rg_w"][...]) + p["rg_b"][...]            # (TB*S, F)

    # ---- weighted combination ----
    attn_mean = (attn_sum * (1.0 / H)).reshape(M, S)        # head-mean of last-layer block-2 attention
    z = (mm(msk, p["wc_wm"][...]) + mm(attn_mean, p["wc_wa"][...]) + p["wc_b"][...])
    cw = jax.nn.sigmoid(z)
    xt3 = (1.0 - cw) * xt2 + cw * xt1

    # single lane-dense store of [X_tilde_1 | X_tilde_2 | X_tilde_3 | combining_weights]
    xpack_ref[...] = jnp.concatenate([xt1, xt2, xt3, cw], axis=-1).reshape(tb, S, 4 * F)


# ---------------------------------------------------------------------------
# Wrapper: one pallas_call for the whole forward
# ---------------------------------------------------------------------------
def _choose_block_batch(B, S):
    """Largest divisor of B with TB*S <= ~256 rows, keeping >= 2 grid steps (v7x: 2 TensorCores)."""
    target_rows = 256
    divs = [d for d in range(1, B + 1) if B % d == 0]
    tb = max([d for d in divs if d * S <= max(target_rows, S)] or [1])
    if B >= 2 and B // tb < 2:
        smaller = [d for d in divs if B // d >= 2]
        if smaller:
            tb = max(smaller)
    return tb


def _rough_vmem_bytes(cfg, tb, flat):
    S, F = cfg.n_steps, cfg.n_features
    H = cfg.n_heads
    m = tb * S
    weight_bytes = 2 * sum(int(np.prod(a.shape)) * a.dtype.itemsize for a in flat)
    io_bytes = 2 * (2 * tb * S * F * 4 + tb * S * 4 * F * 4 + 2 * tb * H * S * S * 4)
    act_bytes = 4 * m * (8 * cfg.d_model + cfg.d_ffn + 4 * S + 3 * max(cfg.d_k, cfg.d_v))
    return weight_bytes + io_bytes + act_bytes


def _backbone_saits_forward(params, X, missing_mask, attn_mask: Optional[jnp.ndarray] = None, *,
                            config: SAITSConfig, block_batch=None, matmul_dtype=jnp.bfloat16):
    B, S, F = X.shape
    H = config.n_heads
    has_mask = attn_mask is not None

    tb = block_batch if block_batch is not None else _choose_block_batch(B, S)
    if B % tb != 0:
        tb = 1
    nb = B // tb

    casted = _cast_matmul_weights(params, matmul_dtype)
    flat, treedef = jax.tree_util.tree_flatten(casted)
    n_params = len(flat)

    def weight_spec(a):
        nd = a.ndim
        return pl.BlockSpec(a.shape, lambda b, _nd=nd: (0,) * _nd)   # constant index_map -> DMA'd once

    in_specs = [pl.BlockSpec((tb, S, F), lambda b: (b, 0, 0)),        # X
                pl.BlockSpec((tb, S, F), lambda b: (b, 0, 0))]        # missing_mask
    mask_args = ()
    if has_mask:
        add_mask = jnp.where(attn_mask.reshape(S, S) == 0, -1e9, 0.0).astype(jnp.float32)
        in_specs.append(pl.BlockSpec((S, S), lambda b: (0, 0)))
        mask_args = (add_mask,)
    in_specs += [weight_spec(a) for a in flat]                        # all weights, VMEM-resident

    out_shape = (
        jax.ShapeDtypeStruct((B, S, 4 * F), jnp.float32),             # packed [xt1|xt2|xt3|cw]
        jax.ShapeDtypeStruct((B, H, S, S), jnp.float32),              # first_DMSA_attn_weights
        jax.ShapeDtypeStruct((B, H, S, S), jnp.float32),              # second_DMSA_attn_weights
    )
    out_specs = (
        pl.BlockSpec((tb, S, 4 * F), lambda b: (b, 0, 0)),
        pl.BlockSpec((tb, H, S, S), lambda b: (b, 0, 0, 0)),
        pl.BlockSpec((tb, H, S, S), lambda b: (b, 0, 0, 0)),
    )

    kernel = functools.partial(_saits_kernel, treedef=treedef, n_params=n_params,
                               cfg=config, tb=tb, has_mask=has_mask, mm_dtype=matmul_dtype)

    vmem_limit = int(min(48 << 20, max(32 << 20, 2 * _rough_vmem_bytes(config, tb, flat))))

    xpack, attn1, attn2 = pl.pallas_call(
        kernel,
        out_shape=out_shape,
        grid=(nb,),
        in_specs=in_specs,
        out_specs=out_specs,
        compiler_params=pltpu.CompilerParams(
            dimension_semantics=("parallel",),                        # batch tiles shard across TCs
            vmem_limit_bytes=vmem_limit),
    )(X.astype(jnp.float32), missing_mask.astype(jnp.float32), *mask_args, *flat)

    X_tilde_1 = xpack[..., 0 * F:1 * F]
    X_tilde_2 = xpack[..., 1 * F:2 * F]
    X_tilde_3 = xpack[..., 2 * F:3 * F]
    combining_weights = xpack[..., 3 * F:4 * F]
    return X_tilde_1, X_tilde_2, X_tilde_3, attn1, attn2, combining_weights


backbone_saits_forward = jax.jit(
    _backbone_saits_forward, static_argnames=("config", "block_batch", "matmul_dtype"))


# ---------------------------------------------------------------------------
# Deterministic parameter initialization (synthetic weights, torch-Linear-style uniform)
# Weights stored (in_dim, out_dim) = torch.nn.Linear.weight.T; q/k/v/fc stored per head.
# ---------------------------------------------------------------------------
def init_params(key, cfg: SAITSConfig):
    L, S, F = cfg.n_layers, cfg.n_steps, cfg.n_features
    D, d_ffn, H, dk, dv = cfg.d_model, cfg.d_ffn, cfg.n_heads, cfg.d_k, cfg.d_v
    keys = iter(jax.random.split(key, 64))

    def uni(shape, fan_in):
        bound = 1.0 / float(np.sqrt(fan_in))
        return jax.random.uniform(next(keys), shape, jnp.float32, -bound, bound)

    def block():
        # LayerNorm / ffn-bias vectors packed along one sublane axis:
        #   rows = [ln1_gamma, ln1_beta, ln2_gamma, ln2_beta, ffn_bias2]
        lnp = jnp.concatenate([
            jnp.ones((L, 1, D), jnp.float32),
            jnp.zeros((L, 1, D), jnp.float32),
            jnp.ones((L, 1, D), jnp.float32),
            jnp.zeros((L, 1, D), jnp.float32),
            uni((L, 1, D), d_ffn),
        ], axis=1)
        return dict(
            # NOTE: 1/temperature (= 1/sqrt(d_k)) is folded into wq here; when porting torch
            # weights, reshape w_qs.weight.T to (H, D, d_k) and divide by sqrt(d_k) the same way.
            wq=uni((L, H, D, dk), D) / float(np.sqrt(dk)),
            wk=uni((L, H, D, dk), D),
            wv=uni((L, H, D, dv), D),
            wfc=uni((L, H, dv, D), H * dv),               # fc has bias=False (pypots default)
            lnp=lnp,
            ffn_w1=uni((L, D, d_ffn), D),
            ffn_b1=uni((L, 1, d_ffn), D),
            ffn_w2=uni((L, d_ffn, D), d_ffn),
        )

    actual_in = 2 * F
    emb1 = uni((actual_in, D), actual_in)
    emb2 = uni((actual_in, D), actual_in)
    wc = uni((F + S, F), F + S)

    # sinusoidal positional encoding table (same as pypots PositionalEncoding)
    pos = np.arange(S)[:, None].astype(np.float64)
    j = np.arange(D)[None, :]
    angle = pos / np.power(10000.0, 2.0 * (j // 2) / D)
    table = np.zeros((S, D), dtype=np.float32)
    table[:, 0::2] = np.sin(angle[:, 0::2])
    table[:, 1::2] = np.cos(angle[:, 1::2])

    return dict(
        pos_table=jnp.asarray(table),
        emb1_wx=emb1[:F], emb1_wm=emb1[F:], emb1_b=uni((1, D), actual_in),
        emb2_wx=emb2[:F], emb2_wm=emb2[F:], emb2_b=uni((1, D), actual_in),
        rz_w=uni((D, F), D), rz_b=uni((1, F), D),
        rb_w=uni((D, F), D), rb_b=uni((1, F), D),
        rg_w=uni((F, F), F), rg_b=uni((1, F), F),
        wc_wm=wc[:F], wc_wa=wc[F:], wc_b=uni((1, F), F + S),
        block1=block(),
        block2=block(),
    )


# ---------------------------------------------------------------------------
if __name__ == "__main__":
    cfg = SAITSConfig(n_layers=2, n_steps=8, n_features=5,
                      d_model=32, d_ffn=64, n_heads=2, d_k=16, d_v=16)
    B = 4  # -> block_batch = 2 (two samples per grid step, 2 grid steps)

    root = jax.random.PRNGKey(0)
    k_params, k_x, k_m = jax.random.split(root, 3)
    params = init_params(k_params, cfg)

    X = jax.random.normal(k_x, (B, cfg.n_steps, cfg.n_features), jnp.float32)
    missing_mask = (jax.random.uniform(k_m, (B, cfg.n_steps, cfg.n_features)) > 0.3
                    ).astype(jnp.float32)

    # no attention mask (attn_mask=None specialised path)
    outs = backbone_saits_forward(params, X, missing_mask, config=cfg)
    outs = jax.block_until_ready(outs)

    X_tilde_1, X_tilde_2, X_tilde_3, attn1, attn2, cw = outs
    assert X_tilde_1.shape == (B, cfg.n_steps, cfg.n_features)
    assert X_tilde_2.shape == (B, cfg.n_steps, cfg.n_features)
    assert X_tilde_3.shape == (B, cfg.n_steps, cfg.n_features)
    assert attn1.shape == (B, cfg.n_heads, cfg.n_steps, cfg.n_steps)
    assert attn2.shape == (B, cfg.n_heads, cfg.n_steps, cfg.n_steps)
    assert cw.shape == (B, cfg.n_steps, cfg.n_features)
    assert all(bool(jnp.all(jnp.isfinite(o))) for o in outs)

    # SAITS-style diagonal attention mask (masked where mask == 0) exercises the masked path
    diag_mask = 1.0 - jnp.eye(cfg.n_steps, dtype=jnp.float32)
    outs_m = backbone_saits_forward(params, X, missing_mask, diag_mask, config=cfg)
    outs_m = jax.block_until_ready(outs_m)
    assert all(bool(jnp.all(jnp.isfinite(o))) for o in outs_m)

    print("KERNEL_OK")
</pallas_src>

<mosaic_0001>
module attributes {stable_mosaic.version = 11 : i64} {
  func.func @_saits_kernel(%arg0: i32, %arg1: memref<2x8x5xf32, #tpu.memory_space<vmem>>, %arg2: memref<2x8x5xf32, #tpu.memory_space<vmem>>, %arg3: memref<2x1x64xf32, #tpu.memory_space<vmem>>, %arg4: memref<2x32x64xbf16, #tpu.memory_space<vmem>>, %arg5: memref<2x64x32xbf16, #tpu.memory_space<vmem>>, %arg6: memref<2x5x32xf32, #tpu.memory_space<vmem>>, %arg7: memref<2x2x16x32xbf16, #tpu.memory_space<vmem>>, %arg8: memref<2x2x32x16xbf16, #tpu.memory_space<vmem>>, %arg9: memref<2x2x32x16xbf16, #tpu.memory_space<vmem>>, %arg10: memref<2x2x32x16xbf16, #tpu.memory_space<vmem>>, %arg11: memref<2x1x64xf32, #tpu.memory_space<vmem>>, %arg12: memref<2x32x64xbf16, #tpu.memory_space<vmem>>, %arg13: memref<2x64x32xbf16, #tpu.memory_space<vmem>>, %arg14: memref<2x5x32xf32, #tpu.memory_space<vmem>>, %arg15: memref<2x2x16x32xbf16, #tpu.memory_space<vmem>>, %arg16: memref<2x2x32x16xbf16, #tpu.memory_space<vmem>>, %arg17: memref<2x2x32x16xbf16, #tpu.memory_space<vmem>>, %arg18: memref<2x2x32x16xbf16, #tpu.memory_space<vmem>>, %arg19: memref<1x32xf32, #tpu.memory_space<vmem>>, %arg20: memref<5x32xbf16, #tpu.memory_space<vmem>>, %arg21: memref<5x32xbf16, #tpu.memory_space<vmem>>, %arg22: memref<1x32xf32, #tpu.memory_space<vmem>>, %arg23: memref<5x32xbf16, #tpu.memory_space<vmem>>, %arg24: memref<5x32xbf16, #tpu.memory_space<vmem>>, %arg25: memref<8x32xf32, #tpu.memory_space<vmem>>, %arg26: memref<1x5xf32, #tpu.memory_space<vmem>>, %arg27: memref<32x5xbf16, #tpu.memory_space<vmem>>, %arg28: memref<1x5xf32, #tpu.memory_space<vmem>>, %arg29: memref<5x5xbf16, #tpu.memory_space<vmem>>, %arg30: memref<1x5xf32, #tpu.memory_space<vmem>>, %arg31: memref<32x5xbf16, #tpu.memory_space<vmem>>, %arg32: memref<1x5xf32, #tpu.memory_space<vmem>>, %arg33: memref<8x5xbf16, #tpu.memory_space<vmem>>, %arg34: memref<5x5xbf16, #tpu.memory_space<vmem>>, %arg35: memref<2x8x20xf32, #tpu.memory_space<vmem>>, %arg36: memref<2x2x8x8xf32, #tpu.memory_space<vmem>>, %arg37: memref<2x2x8x8xf32, #tpu.memory_space<vmem>>) attributes {dimension_semantics = [#tpu.dimension_semantics<parallel>], iteration_bounds = array<i64: 2>, scalar_prefetch = 0 : i64, scratch_operands = 0 : i64, tpu.core_type = #tpu.core_type<tc>, window_params = [{transform_indices = @transform_0, window_bounds = array<i64: 2, 8, 5>}, {transform_indices = @transform_1, window_bounds = array<i64: 2, 8, 5>}, {pipeline_mode = #tpu.pipeline_mode<synchronous>, transform_indices = @transform_2, window_bounds = array<i64: 2, 1, 64>}, {pipeline_mode = #tpu.pipeline_mode<synchronous>, transform_indices = @transform_3, window_bounds = array<i64: 2, 32, 64>}, {pipeline_mode = #tpu.pipeline_mode<synchronous>, transform_indices = @transform_4, window_bounds = array<i64: 2, 64, 32>}, {pipeline_mode = #tpu.pipeline_mode<synchronous>, transform_indices = @transform_5, window_bounds = array<i64: 2, 5, 32>}, {pipeline_mode = #tpu.pipeline_mode<synchronous>, transform_indices = @transform_6, window_bounds = array<i64: 2, 2, 16, 32>}, {pipeline_mode = #tpu.pipeline_mode<synchronous>, transform_indices = @transform_7, window_bounds = array<i64: 2, 2, 32, 16>}, {pipeline_mode = #tpu.pipeline_mode<synchronous>, transform_indices = @transform_8, window_bounds = array<i64: 2, 2, 32, 16>}, {pipeline_mode = #tpu.pipeline_mode<synchronous>, transform_indices = @transform_9, window_bounds = array<i64: 2, 2, 32, 16>}, {pipeline_mode = #tpu.pipeline_mode<synchronous>, transform_indices = @transform_10, window_bounds = array<i64: 2, 1, 64>}, {pipeline_mode = #tpu.pipeline_mode<synchronous>, transform_indices = @transform_11, window_bounds = array<i64: 2, 32, 64>}, {pipeline_mode = #tpu.pipeline_mode<synchronous>, transform_indices = @transform_12, window_bounds = array<i64: 2, 64, 32>}, {pipeline_mode = #tpu.pipeline_mode<synchronous>, transform_indices = @transform_13, window_bounds = array<i64: 2, 5, 32>}, {pipeline_mode = #tpu.pipeline_mode<synchronous>, transform_indices = @transform_14, window_bounds = array<i64: 2, 2, 16, 32>}, {pipeline_mode = #tpu.pipeline_mode<synchronous>, transform_indices = @transform_15, window_bounds = array<i64: 2, 2, 32, 16>}, {pipeline_mode = #tpu.pipeline_mode<synchronous>, transform_indices = @transform_16, window_bounds = array<i64: 2, 2, 32, 16>}, {pipeline_mode = #tpu.pipeline_mode<synchronous>, transform_indices = @transform_17, window_bounds = array<i64: 2, 2, 32, 16>}, {pipeline_mode = #tpu.pipeline_mode<synchronous>, transform_indices = @transform_18, window_bounds = array<i64: 1, 32>}, {pipeline_mode = #tpu.pipeline_mode<synchronous>, transform_indices = @transform_19, window_bounds = array<i64: 5, 32>}, {pipeline_mode = #tpu.pipeline_mode<synchronous>, transform_indices = @transform_20, window_bounds = array<i64: 5, 32>}, {pipeline_mode = #tpu.pipeline_mode<synchronous>, transform_indices = @transform_21, window_bounds = array<i64: 1, 32>}, {pipeline_mode = #tpu.pipeline_mode<synchronous>, transform_indices = @transform_22, window_bounds = array<i64: 5, 32>}, {pipeline_mode = #tpu.pipeline_mode<synchronous>, transform_indices = @transform_23, window_bounds = array<i64: 5, 32>}, {pipeline_mode = #tpu.pipeline_mode<synchronous>, transform_indices = @transform_24, window_bounds = array<i64: 8, 32>}, {pipeline_mode = #tpu.pipeline_mode<synchronous>, transform_indices = @transform_25, window_bounds = array<i64: 1, 5>}, {pipeline_mode = #tpu.pipeline_mode<synchronous>, transform_indices = @transform_26, window_bounds = array<i64: 32, 5>}, {pipeline_mode = #tpu.pipeline_mode<synchronous>, transform_indices = @transform_27, window_bounds = array<i64: 1, 5>}, {pipeline_mode = #tpu.pipeline_mode<synchronous>, transform_indices = @transform_28, window_bounds = array<i64: 5, 5>}, {pipeline_mode = #tpu.pipeline_mode<synchronous>, transform_indices = @transform_29, window_bounds = array<i64: 1, 5>}, {pipeline_mode = #tpu.pipeline_mode<synchronous>, transform_indices = @transform_30, window_bounds = array<i64: 32, 5>}, {pipeline_mode = #tpu.pipeline_mode<synchronous>, transform_indices = @transform_31, window_bounds = array<i64: 1, 5>}, {pipeline_mode = #tpu.pipeline_mode<synchronous>, transform_indices = @transform_32, window_bounds = array<i64: 8, 5>}, {pipeline_mode = #tpu.pipeline_mode<synchronous>, transform_indices = @transform_33, window_bounds = array<i64: 5, 5>}, {transform_indices = @transform_34, window_bounds = array<i64: 2, 8, 20>}, {transform_indices = @transform_35, window_bounds = array<i64: 2, 2, 8, 8>}, {transform_indices = @transform_36, window_bounds = array<i64: 2, 2, 8, 8>}]} {
    %c0 = arith.constant 0 : index
    %c0_0 = arith.constant 0 : index
    %c0_1 = arith.constant 0 : index
    %0 = vector.load %arg1[%c0, %c0_0, %c0_1] : memref<2x8x5xf32, #tpu.memory_space<vmem>>, vector<2x8x5xf32>
    %1 = vector.shape_cast %0 : vector<2x8x5xf32> to vector<16x5xf32>
    %c0_2 = arith.constant 0 : index
    %c0_3 = arith.constant 0 : index
    %c0_4 = arith.constant 0 : index
    %2 = vector.load %arg2[%c0_2, %c0_3, %c0_4] : memref<2x8x5xf32, #tpu.memory_space<vmem>>, vector<2x8x5xf32>
    %3 = vector.shape_cast %2 : vector<2x8x5xf32> to vector<16x5xf32>
    %c0_5 = arith.constant 0 : index
    %c0_6 = arith.constant 0 : index
    %4 = vector.load %arg25[%c0_5, %c0_6] : memref<8x32xf32, #tpu.memory_space<vmem>>, vector<8x32xf32>
    %5 = vector.shape_cast %4 : vector<8x32xf32> to vector<1x8x32xf32>
    %6 = vector.broadcast %5 : vector<1x8x32xf32> to vector<2x8x32xf32>
    %7 = vector.shape_cast %6 : vector<2x8x32xf32> to vector<16x32xf32>
    %c0_7 = arith.constant 0 : index
    %c0_8 = arith.constant 0 : index
    %8 = vector.load %arg21[%c0_7, %c0_8] : memref<5x32xbf16, #tpu.memory_space<vmem>>, vector<5x32xbf16>
    %9 = arith.truncf %1 : vector<16x5xf32> to vector<16x5xbf16>
    %cst = arith.constant dense<0.000000e+00> : vector<16x32xf32>
    %10 = tpu.matmul %9, %8, %cst {dimension_numbers = #tpu.dot_dimension_numbers<[1], [0], [0], [1], [0, 0, 1, 1], [], []>} : vector<16x5xbf16>, vector<5x32xbf16>, vector<16x32xf32> -> vector<16x32xf32>
    %c0_9 = arith.constant 0 : index
    %c0_10 = arith.constant 0 : index
    %11 = vector.load %arg20[%c0_9, %c0_10] : memref<5x32xbf16, #tpu.memory_space<vmem>>, vector<5x32xbf16>
    %12 = arith.truncf %3 : vector<16x5xf32> to vector<16x5xbf16>
    %cst_11 = arith.constant dense<0.000000e+00> : vector<16x32xf32>
    %13 = tpu.matmul %12, %11, %cst_11 {dimension_numbers = #tpu.dot_dimension_numbers<[1], [0], [0], [1], [0, 0, 1, 1], [], []>} : vector<16x5xbf16>, vector<5x32xbf16>, vector<16x32xf32> -> vector<16x32xf32>
    %14 = arith.addf %10, %13 : vector<16x32xf32>
    %c0_12 = arith.constant 0 : index
    %c0_13 = arith.constant 0 : index
    %15 = vector.load %arg19[%c0_12, %c0_13] : memref<1x32xf32, #tpu.memory_space<vmem>>, vector<1x32xf32>
    %16 = vector.broadcast %15 : vector<1x32xf32> to vector<16x32xf32>
    %17 = arith.addf %14, %16 : vector<16x32xf32>
    %18 = arith.addf %17, %7 : vector<16x32xf32>
    %c0_14 = arith.constant 0 : index
    %c0_15 = arith.constant 0 : index
    %c0_16 = arith.constant 0 : index
    %19 = vector.load %arg6[%c0_14, %c0_15, %c0_16] : memref<2x5x32xf32, #tpu.memory_space<vmem>>, vector<1x5x32xf32>
    %20 = vector.shape_cast %19 : vector<1x5x32xf32> to vector<5x32xf32>
    %cst_17 = arith.constant 0.000000e+00 : f32
    %21 = vector.broadcast %cst_17 : f32 to vector<16x32xf32>
    %c0_18 = arith.constant 0 : index
    %c0_19 = arith.constant 0 : index
    %c0_20 = arith.constant 0 : index
    %c0_21 = arith.constant 0 : index
    %22 = vector.load %arg9[%c0_18, %c0_19, %c0_20, %c0_21] : memref<2x2x32x16xbf16, #tpu.memory_space<vmem>>, vector<1x1x32x16xbf16>
    %23 = vector.shape_cast %22 : vector<1x1x32x16xbf16> to vector<32x16xbf16>
    %24 = arith.truncf %18 : vector<16x32xf32> to vector<16x32xbf16>
    %cst_22 = arith.constant dense<0.000000e+00> : vector<16x16xf32>
    %25 = tpu.matmul %24, %23, %cst_22 {dimension_numbers = #tpu.dot_dimension_numbers<[1], [0], [0], [1], [0, 0, 1, 1], [], []>} : vector<16x32xbf16>, vector<32x16xbf16>, vector<16x16xf32> -> vector<16x16xf32>
    %26 = vector.shape_cast %25 : vector<16x16xf32> to vector<2x8x16xf32>
    %c0_23 = arith.constant 0 : index
    %c0_24 = arith.constant 0 : index
    %c0_25 = arith.constant 0 : index
    %c0_26 = arith.constant 0 : index
    %27 = vector.load %arg8[%c0_23, %c0_24, %c0_25, %c0_26] : memref<2x2x32x16xbf16, #tpu.memory_space<vmem>>, vector<1x1x32x16xbf16>
    %28 = vector.shape_cast %27 : vector<1x1x32x16xbf16> to vector<32x16xbf16>
    %29 = arith.truncf %18 : vector<16x32xf32> to vector<16x32xbf16>
    %cst_27 = arith.constant dense<0.000000e+00> : vector<16x16xf32>
    %30 = tpu.matmul %29, %28, %cst_27 {dimension_numbers = #tpu.dot_dimension_numbers<[1], [0], [0], [1], [0, 0, 1, 1], [], []>} : vector<16x32xbf16>, vector<32x16xbf16>, vector<16x16xf32> -> vector<16x16xf32>
    %31 = vector.shape_cast %30 : vector<16x16xf32> to vector<2x8x16xf32>
    %c0_28 = arith.constant 0 : index
    %c0_29 = arith.constant 0 : index
    %c0_30 = arith.constant 0 : index
    %c0_31 = arith.constant 0 : index
    %32 = vector.load %arg10[%c0_28, %c0_29, %c0_30, %c0_31] : memref<2x2x32x16xbf16, #tpu.memory_space<vmem>>, vector<1x1x32x16xbf16>
    %33 = vector.shape_cast %32 : vector<1x1x32x16xbf16> to vector<32x16xbf16>
    %34 = arith.truncf %18 : vector<16x32xf32> to vector<16x32xbf16>
    %cst_32 = arith.constant dense<0.000000e+00> : vector<16x16xf32>
    %35 = tpu.matmul %34, %33, %cst_32 {dimension_numbers = #tpu.dot_dimension_numbers<[1], [0], [0], [1], [0, 0, 1, 1], [], []>} : vector<16x32xbf16>, vector<32x16xbf16>, vector<16x16xf32> -> vector<16x16xf32>
    %36 = vector.shape_cast %35 : vector<16x16xf32> to vector<2x8x16xf32>
    %37 = arith.truncf %26 : vector<2x8x16xf32> to vector<2x8x16xbf16>
    %38 = arith.truncf %31 : vector<2x8x16xf32> to vector<2x8x16xbf16>
    "tpu.trace_start"() <{level = 10 : i32, message = "bqd,bkd->bqk"}> : () -> ()
    %cst_33 = arith.constant dense<0.000000e+00> : vector<2x8x8xf32>
    %39 = tpu.matmul %37, %38, %cst_33 {dimension_numbers = #tpu.dot_dimension_numbers<[2], [2], [1], [1], [0, 0, 0, 1, 1, 1], [0], [0]>} : vector<2x8x16xbf16>, vector<2x8x16xbf16>, vector<2x8x8xf32> -> vector<2x8x8xf32>
    "tpu.trace_stop"() : () -> ()
    %cst_34 = arith.constant dense<0xFF800000> : vector<2x8xf32>
    %40 = vector.multi_reduction <maximumf>, %39, %cst_34 [2] : vector<2x8x8xf32> to vector<2x8xf32>
    %41 = vector.shape_cast %40 : vector<2x8xf32> to vector<2x8x1xf32>
    %42 = vector.broadcast %41 : vector<2x8x1xf32> to vector<2x8x8xf32>
    %43 = arith.subf %39, %42 : vector<2x8x8xf32>
    %44 = math.exp %43 : vector<2x8x8xf32>
    %cst_35 = arith.constant dense<0.000000e+00> : vector<2x8xf32>
    %45 = vector.multi_reduction <add>, %44, %cst_35 [2] : vector<2x8x8xf32> to vector<2x8xf32>
    %46 = vector.shape_cast %45 : vector<2x8xf32> to vector<2x8x1xf32>
    %47 = tpu.reciprocal %46 {approx = true} : vector<2x8x1xf32> -> vector<2x8x1xf32>
    %48 = vector.broadcast %47 : vector<2x8x1xf32> to vector<2x8x8xf32>
    %49 = arith.mulf %44, %48 : vector<2x8x8xf32>
    %50 = arith.truncf %49 : vector<2x8x8xf32> to vector<2x8x8xbf16>
    %51 = arith.truncf %36 : vector<2x8x16xf32> to vector<2x8x16xbf16>
    "tpu.trace_start"() <{level = 10 : i32, message = "bqk,bkd->bqd"}> : () -> ()
    %cst_36 = arith.constant dense<0.000000e+00> : vector<2x8x16xf32>
    %52 = tpu.matmul %50, %51, %cst_36 {dimension_numbers = #tpu.dot_dimension_numbers<[2], [1], [1], [2], [0, 0, 0, 1, 1, 2], [0], [0]>} : vector<2x8x8xbf16>, vector<2x8x16xbf16>, vector<2x8x16xf32> -> vector<2x8x16xf32>
    "tpu.trace_stop"() : () -> ()
    %53 = vector.shape_cast %52 : vector<2x8x16xf32> to vector<16x16xf32>
    %c0_37 = arith.constant 0 : index
    %c0_38 = arith.constant 0 : index
    %c0_39 = arith.constant 0 : index
    %c0_40 = arith.constant 0 : index
    %54 = vector.load %arg7[%c0_37, %c0_38, %c0_39, %c0_40] : memref<2x2x16x32xbf16, #tpu.memory_space<vmem>>, vector<1x1x16x32xbf16>
    %55 = vector.shape_cast %54 : vector<1x1x16x32xbf16> to vector<16x32xbf16>
    %56 = arith.truncf %53 : vector<16x16xf32> to vector<16x16xbf16>
    %cst_41 = arith.constant dense<0.000000e+00> : vector<16x32xf32>
    %57 = tpu.matmul %56, %55, %cst_41 {dimension_numbers = #tpu.dot_dimension_numbers<[1], [0], [0], [1], [0, 0, 1, 1], [], []>} : vector<16x16xbf16>, vector<16x32xbf16>, vector<16x32xf32> -> vector<16x32xf32>
    %58 = arith.addf %21, %57 : vector<16x32xf32>
    %c0_42 = arith.constant 0 : index
    %c1 = arith.constant 1 : index
    %c0_43 = arith.constant 0 : index
    %c0_44 = arith.constant 0 : index
    %59 = vector.load %arg9[%c0_42, %c1, %c0_43, %c0_44] : memref<2x2x32x16xbf16, #tpu.memory_space<vmem>>, vector<1x1x32x16xbf16>
    %60 = vector.shape_cast %59 : vector<1x1x32x16xbf16> to vector<32x16xbf16>
    %61 = arith.truncf %18 : vector<16x32xf32> to vector<16x32xbf16>
    %cst_45 = arith.constant dense<0.000000e+00> : vector<16x16xf32>
    %62 = tpu.matmul %61, %60, %cst_45 {dimension_numbers = #tpu.dot_dimension_numbers<[1], [0], [0], [1], [0, 0, 1, 1], [], []>} : vector<16x32xbf16>, vector<32x16xbf16>, vector<16x16xf32> -> vector<16x16xf32>
    %63 = vector.shape_cast %62 : vector<16x16xf32> to vector<2x8x16xf32>
    %c0_46 = arith.constant 0 : index
    %c1_47 = arith.constant 1 : index
    %c0_48 = arith.constant 0 : index
    %c0_49 = arith.constant 0 : index
    %64 = vector.load %arg8[%c0_46, %c1_47, %c0_48, %c0_49] : memref<2x2x32x16xbf16, #tpu.memory_space<vmem>>, vector<1x1x32x16xbf16>
    %65 = vector.shape_cast %64 : vector<1x1x32x16xbf16> to vector<32x16xbf16>
    %66 = arith.truncf %18 : vector<16x32xf32> to vector<16x32xbf16>
    %cst_50 = arith.constant dense<0.000000e+00> : vector<16x16xf32>
    %67 = tpu.matmul %66, %65, %cst_50 {dimension_numbers = #tpu.dot_dimension_numbers<[1], [0], [0], [1], [0, 0, 1, 1], [], []>} : vector<16x32xbf16>, vector<32x16xbf16>, vector<16x16xf32> -> vector<16x16xf32>
    %68 = vector.shape_cast %67 : vector<16x16xf32> to vector<2x8x16xf32>
    %c0_51 = arith.constant 0 : index
    %c1_52 = arith.constant 1 : index
    %c0_53 = arith.constant 0 : index
    %c0_54 = arith.constant 0 : index
    %69 = vector.load %arg10[%c0_51, %c1_52, %c0_53, %c0_54] : memref<2x2x32x16xbf16, #tpu.memory_space<vmem>>, vector<1x1x32x16xbf16>
    %70 = vector.shape_cast %69 : vector<1x1x32x16xbf16> to vector<32x16xbf16>
    %71 = arith.truncf %18 : vector<16x32xf32> to vector<16x32xbf16>
    %cst_55 = arith.constant dense<0.000000e+00> : vector<16x16xf32>
    %72 = tpu.matmul %71, %70, %cst_55 {dimension_numbers = #tpu.dot_dimension_numbers<[1], [0], [0], [1], [0, 0, 1, 1], [], []>} : vector<16x32xbf16>, vector<32x16xbf16>, vector<16x16xf32> -> vector<16x16xf32>
    %73 = vector.shape_cast %72 : vector<16x16xf32> to vector<2x8x16xf32>
    %74 = arith.truncf %63 : vector<2x8x16xf32> to vector<2x8x16xbf16>
    %75 = arith.truncf %68 : vector<2x8x16xf32> to vector<2x8x16xbf16>
    "tpu.trace_start"() <{level = 10 : i32, message = "bqd,bkd->bqk"}> : () -> ()
    %cst_56 = arith.constant dense<0.000000e+00> : vector<2x8x8xf32>
    %76 = tpu.matmul %74, %75, %cst_56 {dimension_numbers = #tpu.dot_dimension_numbers<[2], [2], [1], [1], [0, 0, 0, 1, 1, 1], [0], [0]>} : vector<2x8x16xbf16>, vector<2x8x16xbf16>, vector<2x8x8xf32> -> vector<2x8x8xf32>
    "tpu.trace_stop"() : () -> ()
    %cst_57 = arith.constant dense<0xFF800000> : vector<2x8xf32>
    %77 = vector.multi_reduction <maximumf>, %76, %cst_57 [2] : vector<2x8x8xf32> to vector<2x8xf32>
    %78 = vector.shape_cast %77 : vector<2x8xf32> to vector<2x8x1xf32>
    %79 = vector.broadcast %78 : vector<2x8x1xf32> to vector<2x8x8xf32>
    %80 = arith.subf %76, %79 : vector<2x8x8xf32>
    %81 = math.exp %80 : vector<2x8x8xf32>
    %cst_58 = arith.constant dense<0.000000e+00> : vector<2x8xf32>
    %82 = vector.multi_reduction <add>, %81, %cst_58 [2] : vector<2x8x8xf32> to vector<2x8xf32>
    %83 = vector.shape_cast %82 : vector<2x8xf32> to vector<2x8x1xf32>
    %84 = tpu.reciprocal %83 {approx = true} : vector<2x8x1xf32> -> vector<2x8x1xf32>
    %85 = vector.broadcast %84 : vector<2x8x1xf32> to vector<2x8x8xf32>
    %86 = arith.mulf %81, %85 : vector<2x8x8xf32>
    %87 = arith.truncf %86 : vector<2x8x8xf32> to vector<2x8x8xbf16>
    %88 = arith.truncf %73 : vector<2x8x16xf32> to vector<2x8x16xbf16>
    "tpu.trace_start"() <{level = 10 : i32, message = "bqk,bkd->bqd"}> : () -> ()
    %cst_59 = arith.constant dense<0.000000e+00> : vector<2x8x16xf32>
    %89 = tpu.matmul %87, %88, %cst_59 {dimension_numbers = #tpu.dot_dimension_numbers<[2], [1], [1], [2], [0, 0, 0, 1, 1, 2], [0], [0]>} : vector<2x8x8xbf16>, vector<2x8x16xbf16>, vector<2x8x16xf32> -> vector<2x8x16xf32>
    "tpu.trace_stop"() : () -> ()
    %90 = vector.shape_cast %89 : vector<2x8x16xf32> to vector<16x16xf32>
    %c0_60 = arith.constant 0 : index
    %c1_61 = arith.constant 1 : index
    %c0_62 = arith.constant 0 : index
    %c0_63 = arith.constant 0 : index
    %91 = vector.load %arg7[%c0_60, %c1_61, %c0_62, %c0_63] : memref<2x2x16x32xbf16, #tpu.memory_space<vmem>>, vector<1x1x16x32xbf16>
    %92 = vector.shape_cast %91 : vector<1x1x16x32xbf16> to vector<16x32xbf16>
    %93 = arith.truncf %90 : vector<16x16xf32> to vector<16x16xbf16>
    %cst_64 = arith.constant dense<0.000000e+00> : vector<16x32xf32>
    %94 = tpu.matmul %93, %92, %cst_64 {dimension_numbers = #tpu.dot_dimension_numbers<[1], [0], [0], [1], [0, 0, 1, 1], [], []>} : vector<16x16xbf16>, vector<16x32xbf16>, vector<16x32xf32> -> vector<16x32xf32>
    %95 = arith.addf %58, %94 : vector<16x32xf32>
    %96 = arith.addf %95, %18 : vector<16x32xf32>
    %97 = vector.extract_strided_slice %20 {offsets = [0, 0], sizes = [1, 32], strides = [1, 1]} : vector<5x32xf32> to vector<1x32xf32>
    %98 = vector.extract_strided_slice %20 {offsets = [1, 0], sizes = [1, 32], strides = [1, 1]} : vector<5x32xf32> to vector<1x32xf32>
    %cst_65 = arith.constant dense<0.000000e+00> : vector<16xf32>
    %99 = vector.multi_reduction <add>, %96, %cst_65 [1] : vector<16x32xf32> to vector<16xf32>
    %100 = vector.shape_cast %99 : vector<16xf32> to vector<16x1xf32>
    %cst_66 = arith.constant 3.200000e+01 : f32
    %101 = vector.broadcast %cst_66 : f32 to vector<16x1xf32>
    %102 = arith.divf %100, %101 : vector<16x1xf32>
    %103 = vector.broadcast %102 : vector<16x1xf32> to vector<16x32xf32>
    %104 = arith.subf %96, %103 : vector<16x32xf32>
    %105 = arith.mulf %104, %104 : vector<16x32xf32>
    %cst_67 = arith.constant dense<0.000000e+00> : vector<16xf32>
    %106 = vector.multi_reduction <add>, %105, %cst_67 [1] : vector<16x32xf32> to vector<16xf32>
    %107 = vector.shape_cast %106 : vector<16xf32> to vector<16x1xf32>
    %cst_68 = arith.constant 3.200000e+01 : f32
    %108 = vector.broadcast %cst_68 : f32 to vector<16x1xf32>
    %109 = arith.divf %107, %108 : vector<16x1xf32>
    %110 = vector.broadcast %102 : vector<16x1xf32> to vector<16x32xf32>
    %111 = arith.subf %96, %110 : vector<16x32xf32>
    %cst_69 = arith.constant 9.99999997E-7 : f32
    %112 = vector.broadcast %cst_69 : f32 to vector<16x1xf32>
    %113 = arith.addf %109, %112 : vector<16x1xf32>
    %114 = math.rsqrt %113 : vector<16x1xf32>
    %115 = vector.broadcast %114 : vector<16x1xf32> to vector<16x32xf32>
    %116 = arith.mulf %111, %115 : vector<16x32xf32>
    %117 = vector.broadcast %97 : vector<1x32xf32> to vector<16x32xf32>
    %118 = arith.mulf %116, %117 : vector<16x32xf32>
    %119 = vector.broadcast %98 : vector<1x32xf32> to vector<16x32xf32>
    %120 = arith.addf %118, %119 : vector<16x32xf32>
    %c0_70 = arith.constant 0 : index
    %c0_71 = arith.constant 0 : index
    %c0_72 = arith.constant 0 : index
    %121 = vector.load %arg4[%c0_70, %c0_71, %c0_72] : memref<2x32x64xbf16, #tpu.memory_space<vmem>>, vector<1x32x64xbf16>
    %122 = vector.shape_cast %121 : vector<1x32x64xbf16> to vector<32x64xbf16>
    %123 = arith.truncf %120 : vector<16x32xf32> to vector<16x32xbf16>
    %cst_73 = arith.constant dense<0.000000e+00> : vector<16x64xf32>
    %124 = tpu.matmul %123, %122, %cst_73 {dimension_numbers = #tpu.dot_dimension_numbers<[1], [0], [0], [1], [0, 0, 1, 1], [], []>} : vector<16x32xbf16>, vector<32x64xbf16>, vector<16x64xf32> -> vector<16x64xf32>
    %c0_74 = arith.constant 0 : index
    %c0_75 = arith.constant 0 : index
    %c0_76 = arith.constant 0 : index
    %125 = vector.load %arg3[%c0_74, %c0_75, %c0_76] : memref<2x1x64xf32, #tpu.memory_space<vmem>>, vector<1x1x64xf32>
    %126 = vector.shape_cast %125 : vector<1x1x64xf32> to vector<1x64xf32>
    %127 = vector.broadcast %126 : vector<1x64xf32> to vector<16x64xf32>
    %128 = arith.addf %124, %127 : vector<16x64xf32>
    %cst_77 = arith.constant 0.000000e+00 : f32
    %129 = vector.broadcast %cst_77 : f32 to vector<16x64xf32>
    %130 = arith.maximumf %128, %129 : vector<16x64xf32>
    %c0_78 = arith.constant 0 : index
    %c0_79 = arith.constant 0 : index
    %c0_80 = arith.constant 0 : index
    %131 = vector.load %arg5[%c0_78, %c0_79, %c0_80] : memref<2x64x32xbf16, #tpu.memory_space<vmem>>, vector<1x64x32xbf16>
    %132 = vector.shape_cast %131 : vector<1x64x32xbf16> to vector<64x32xbf16>
    %133 = arith.truncf %130 : vector<16x64xf32> to vector<16x64xbf16>
    %cst_81 = arith.constant dense<0.000000e+00> : vector<16x32xf32>
    %134 = tpu.matmul %133, %132, %cst_81 {dimension_numbers = #tpu.dot_dimension_numbers<[1], [0], [0], [1], [0, 0, 1, 1], [], []>} : vector<16x64xbf16>, vector<64x32xbf16>, vector<16x32xf32> -> vector<16x32xf32>
    %135 = vector.extract_strided_slice %20 {offsets = [4, 0], sizes = [1, 32], strides = [1, 1]} : vector<5x32xf32> to vector<1x32xf32>
    %136 = vector.broadcast %135 : vector<1x32xf32> to vector<16x32xf32>
    %137 = arith.addf %134, %136 : vector<16x32xf32>
    %138 = arith.addf %137, %120 : vector<16x32xf32>
    %139 = vector.extract_strided_slice %20 {offsets = [2, 0], sizes = [1, 32], strides = [1, 1]} : vector<5x32xf32> to vector<1x32xf32>
    %140 = vector.extract_strided_slice %20 {offsets = [3, 0], sizes = [1, 32], strides = [1, 1]} : vector<5x32xf32> to vector<1x32xf32>
    %cst_82 = arith.constant dense<0.000000e+00> : vector<16xf32>
    %141 = vector.multi_reduction <add>, %138, %cst_82 [1] : vector<16x32xf32> to vector<16xf32>
    %142 = vector.shape_cast %141 : vector<16xf32> to vector<16x1xf32>
    %cst_83 = arith.constant 3.200000e+01 : f32
    %143 = vector.broadcast %cst_83 : f32 to vector<16x1xf32>
    %144 = arith.divf %142, %143 : vector<16x1xf32>
    %145 = vector.broadcast %144 : vector<16x1xf32> to vector<16x32xf32>
    %146 = arith.subf %138, %145 : vector<16x32xf32>
    %147 = arith.mulf %146, %146 : vector<16x32xf32>
    %cst_84 = arith.constant dense<0.000000e+00> : vector<16xf32>
    %148 = vector.multi_reduction <add>, %147, %cst_84 [1] : vector<16x32xf32> to vector<16xf32>
    %149 = vector.shape_cast %148 : vector<16xf32> to vector<16x1xf32>
    %cst_85 = arith.constant 3.200000e+01 : f32
    %150 = vector.broadcast %cst_85 : f32 to vector<16x1xf32>
    %151 = arith.divf %149, %150 : vector<16x1xf32>
    %152 = vector.broadcast %144 : vector<16x1xf32> to vector<16x32xf32>
    %153 = arith.subf %138, %152 : vector<16x32xf32>
    %cst_86 = arith.constant 9.99999997E-7 : f32
    %154 = vector.broadcast %cst_86 : f32 to vector<16x1xf32>
    %155 = arith.addf %151, %154 : vector<16x1xf32>
    %156 = math.rsqrt %155 : vector<16x1xf32>
    %157 = vector.broadcast %156 : vector<16x1xf32> to vector<16x32xf32>
    %158 = arith.mulf %153, %157 : vector<16x32xf32>
    %159 = vector.broadcast %139 : vector<1x32xf32> to vector<16x32xf32>
    %160 = arith.mulf %158, %159 : vector<16x32xf32>
    %161 = vector.broadcast %140 : vector<1x32xf32> to vector<16x32xf32>
    %162 = arith.addf %160, %161 : vector<16x32xf32>
    %c1_87 = arith.constant 1 : index
    %c0_88 = arith.constant 0 : index
    %c0_89 = arith.constant 0 : index
    %163 = vector.load %arg6[%c1_87, %c0_88, %c0_89] : memref<2x5x32xf32, #tpu.memory_space<vmem>>, vector<1x5x32xf32>
    %164 = vector.shape_cast %163 : vector<1x5x32xf32> to vector<5x32xf32>
    %cst_90 = arith.constant 0.000000e+00 : f32
    %165 = vector.broadcast %cst_90 : f32 to vector<16x32xf32>
    %c1_91 = arith.constant 1 : index
    %c0_92 = arith.constant 0 : index
    %c0_93 = arith.constant 0 : index
    %c0_94 = arith.constant 0 : index
    %166 = vector.load %arg9[%c1_91, %c0_92, %c0_93, %c0_94] : memref<2x2x32x16xbf16, #tpu.memory_space<vmem>>, vector<1x1x32x16xbf16>
    %167 = vector.shape_cast %166 : vector<1x1x32x16xbf16> to vector<32x16xbf16>
    %168 = arith.truncf %162 : vector<16x32xf32> to vector<16x32xbf16>
    %cst_95 = arith.constant dense<0.000000e+00> : vector<16x16xf32>
    %169 = tpu.matmul %168, %167, %cst_95 {dimension_numbers = #tpu.dot_dimension_numbers<[1], [0], [0], [1], [0, 0, 1, 1], [], []>} : vector<16x32xbf16>, vector<32x16xbf16>, vector<16x16xf32> -> vector<16x16xf32>
    %170 = vector.shape_cast %169 : vector<16x16xf32> to vector<2x8x16xf32>
    %c1_96 = arith.constant 1 : index
    %c0_97 = arith.constant 0 : index
    %c0_98 = arith.constant 0 : index
    %c0_99 = arith.constant 0 : index
    %171 = vector.load %arg8[%c1_96, %c0_97, %c0_98, %c0_99] : memref<2x2x32x16xbf16, #tpu.memory_space<vmem>>, vector<1x1x32x16xbf16>
    %172 = vector.shape_cast %171 : vector<1x1x32x16xbf16> to vector<32x16xbf16>
    %173 = arith.truncf %162 : vector<16x32xf32> to vector<16x32xbf16>
    %cst_100 = arith.constant dense<0.000000e+00> : vector<16x16xf32>
    %174 = tpu.matmul %173, %172, %cst_100 {dimension_numbers = #tpu.dot_dimension_numbers<[1], [0], [0], [1], [0, 0, 1, 1], [], []>} : vector<16x32xbf16>, vector<32x16xbf16>, vector<16x16xf32> -> vector<16x16xf32>
    %175 = vector.shape_cast %174 : vector<16x16xf32> to vector<2x8x16xf32>
    %c1_101 = arith.constant 1 : index
    %c0_102 = arith.constant 0 : index
    %c0_103 = arith.constant 0 : index
    %c0_104 = arith.constant 0 : index
    %176 = vector.load %arg10[%c1_101, %c0_102, %c0_103, %c0_104] : memref<2x2x32x16xbf16, #tpu.memory_space<vmem>>, vector<1x1x32x16xbf16>
    %177 = vector.shape_cast %176 : vector<1x1x32x16xbf16> to vector<32x16xbf16>
    %178 = arith.truncf %162 : vector<16x32xf32> to vector<16x32xbf16>
    %cst_105 = arith.constant dense<0.000000e+00> : vector<16x16xf32>
    %179 = tpu.matmul %178, %177, %cst_105 {dimension_numbers = #tpu.dot_dimension_numbers<[1], [0], [0], [1], [0, 0, 1, 1], [], []>} : vector<16x32xbf16>, vector<32x16xbf16>, vector<16x16xf32> -> vector<16x16xf32>
    %180 = vector.shape_cast %179 : vector<16x16xf32> to vector<2x8x16xf32>
    %181 = arith.truncf %170 : vector<2x8x16xf32> to vector<2x8x16xbf16>
    %182 = arith.truncf %175 : vector<2x8x16xf32> to vector<2x8x16xbf16>
    "tpu.trace_start"() <{level = 10 : i32, message = "bqd,bkd->bqk"}> : () -> ()
    %cst_106 = arith.constant dense<0.000000e+00> : vector<2x8x8xf32>
    %183 = tpu.matmul %181, %182, %cst_106 {dimension_numbers = #tpu.dot_dimension_numbers<[2], [2], [1], [1], [0, 0, 0, 1, 1, 1], [0], [0]>} : vector<2x8x16xbf16>, vector<2x8x16xbf16>, vector<2x8x8xf32> -> vector<2x8x8xf32>
    "tpu.trace_stop"() : () -> ()
    %cst_107 = arith.constant dense<0xFF800000> : vector<2x8xf32>
    %184 = vector.multi_reduction <maximumf>, %183, %cst_107 [2] : vector<2x8x8xf32> to vector<2x8xf32>
    %185 = vector.shape_cast %184 : vector<2x8xf32> to vector<2x8x1xf32>
    %186 = vector.broadcast %185 : vector<2x8x1xf32> to vector<2x8x8xf32>
    %187 = arith.subf %183, %186 : vector<2x8x8xf32>
    %188 = math.exp %187 : vector<2x8x8xf32>
    %cst_108 = arith.constant dense<0.000000e+00> : vector<2x8xf32>
    %189 = vector.multi_reduction <add>, %188, %cst_108 [2] : vector<2x8x8xf32> to vector<2x8xf32>
    %190 = vector.shape_cast %189 : vector<2x8xf32> to vector<2x8x1xf32>
    %191 = tpu.reciprocal %190 : vector<2x8x1xf32> -> vector<2x8x1xf32>
    %192 = vector.broadcast %191 : vector<2x8x1xf32> to vector<2x8x8xf32>
    %193 = arith.mulf %188, %192 : vector<2x8x8xf32>
    %194 = vector.shape_cast %193 : vector<2x8x8xf32> to vector<2x1x8x8xf32>
    %c0_109 = arith.constant 0 : index
    %c0_110 = arith.constant 0 : index
    %c0_111 = arith.constant 0 : index
    %c0_112 = arith.constant 0 : index
    %195 = vector.load %arg36[%c0_109, %c0_110, %c0_111, %c0_112] : memref<2x2x8x8xf32, #tpu.memory_space<vmem>>, vector<2x1x8x8xf32>
    tpu.vector_store %arg36[%c0_109, %c0_110, %c0_111, %c0_112], %194 {strides = array<i32>} : memref<2x2x8x8xf32, #tpu.memory_space<vmem>>, vector<2x1x8x8xf32>,
    %196 = arith.truncf %193 : vector<2x8x8xf32> to vector<2x8x8xbf16>
    %197 = arith.truncf %180 : vector<2x8x16xf32> to vector<2x8x16xbf16>
    "tpu.trace_start"() <{level = 10 : i32, message = "bqk,bkd->bqd"}> : () -> ()
    %cst_113 = arith.constant dense<0.000000e+00> : vector<2x8x16xf32>
    %198 = tpu.matmul %196, %197, %cst_113 {dimension_numbers = #tpu.dot_dimension_numbers<[2], [1], [1], [2], [0, 0, 0, 1, 1, 2], [0], [0]>} : vector<2x8x8xbf16>, vector<2x8x16xbf16>, vector<2x8x16xf32> -> vector<2x8x16xf32>
    "tpu.trace_stop"() : () -> ()
    %199 = vector.shape_cast %198 : vector<2x8x16xf32> to vector<16x16xf32>
    %c1_114 = arith.constant 1 : index
    %c0_115 = arith.constant 0 : index
    %c0_116 = arith.constant 0 : index
    %c0_117 = arith.constant 0 : index
    %200 = vector.load %arg7[%c1_114, %c0_115, %c0_116, %c0_117] : memref<2x2x16x32xbf16, #tpu.memory_space<vmem>>, vector<1x1x16x32xbf16>
    %201 = vector.shape_cast %200 : vector<1x1x16x32xbf16> to vector<16x32xbf16>
    %202 = arith.truncf %199 : vector<16x16xf32> to vector<16x16xbf16>
    %cst_118 = arith.constant dense<0.000000e+00> : vector<16x32xf32>
    %203 = tpu.matmul %202, %201, %cst_118 {dimension_numbers = #tpu.dot_dimension_numbers<[1], [0], [0], [1], [0, 0, 1, 1], [], []>} : vector<16x16xbf16>, vector<16x32xbf16>, vector<16x32xf32> -> vector<16x32xf32>
    %204 = arith.addf %165, %203 : vector<16x32xf32>
    %c1_119 = arith.constant 1 : index
    %c1_120 = arith.constant 1 : index
    %c0_121 = arith.constant 0 : index
    %c0_122 = arith.constant 0 : index
    %205 = vector.load %arg9[%c1_119, %c1_120, %c0_121, %c0_122] : memref<2x2x32x16xbf16, #tpu.memory_space<vmem>>, vector<1x1x32x16xbf16>
    %206 = vector.shape_cast %205 : vector<1x1x32x16xbf16> to vector<32x16xbf16>
    %207 = arith.truncf %162 : vector<16x32xf32> to vector<16x32xbf16>
    %cst_123 = arith.constant dense<0.000000e+00> : vector<16x16xf32>
    %208 = tpu.matmul %207, %206, %cst_123 {dimension_numbers = #tpu.dot_dimension_numbers<[1], [0], [0], [1], [0, 0, 1, 1], [], []>} : vector<16x32xbf16>, vector<32x16xbf16>, vector<16x16xf32> -> vector<16x16xf32>
    %209 = vector.shape_cast %208 : vector<16x16xf32> to vector<2x8x16xf32>
    %c1_124 = arith.constant 1 : index
    %c1_125 = arith.constant 1 : index
    %c0_126 = arith.constant 0 : index
    %c0_127 = arith.constant 0 : index
    %210 = vector.load %arg8[%c1_124, %c1_125, %c0_126, %c0_127] : memref<2x2x32x16xbf16, #tpu.memory_space<vmem>>, vector<1x1x32x16xbf16>
    %211 = vector.shape_cast %210 : vector<1x1x32x16xbf16> to vector<32x16xbf16>
    %212 = arith.truncf %162 : vector<16x32xf32> to vector<16x32xbf16>
    %cst_128 = arith.constant dense<0.000000e+00> : vector<16x16xf32>
    %213 = tpu.matmul %212, %211, %cst_128 {dimension_numbers = #tpu.dot_dimension_numbers<[1], [0], [0], [1], [0, 0, 1, 1], [], []>} : vector<16x32xbf16>, vector<32x16xbf16>, vector<16x16xf32> -> vector<16x16xf32>
    %214 = vector.shape_cast %213 : vector<16x16xf32> to vector<2x8x16xf32>
    %c1_129 = arith.constant 1 : index
    %c1_130 = arith.constant 1 : index
    %c0_131 = arith.constant 0 : index
    %c0_132 = arith.constant 0 : index
    %215 = vector.load %arg10[%c1_129, %c1_130, %c0_131, %c0_132] : memref<2x2x32x16xbf16, #tpu.memory_space<vmem>>, vector<1x1x32x16xbf16>
    %216 = vector.shape_cast %215 : vector<1x1x32x16xbf16> to vector<32x16xbf16>
    %217 = arith.truncf %162 : vector<16x32xf32> to vector<16x32xbf16>
    %cst_133 = arith.constant dense<0.000000e+00> : vector<16x16xf32>
    %218 = tpu.matmul %217, %216, %cst_133 {dimension_numbers = #tpu.dot_dimension_numbers<[1], [0], [0], [1], [0, 0, 1, 1], [], []>} : vector<16x32xbf16>, vector<32x16xbf16>, vector<16x16xf32> -> vector<16x16xf32>
    %219 = vector.shape_cast %218 : vector<16x16xf32> to vector<2x8x16xf32>
    %220 = arith.truncf %209 : vector<2x8x16xf32> to vector<2x8x16xbf16>
    %221 = arith.truncf %214 : vector<2x8x16xf32> to vector<2x8x16xbf16>
    "tpu.trace_start"() <{level = 10 : i32, message = "bqd,bkd->bqk"}> : () -> ()
    %cst_134 = arith.constant dense<0.000000e+00> : vector<2x8x8xf32>
    %222 = tpu.matmul %220, %221, %cst_134 {dimension_numbers = #tpu.dot_dimension_numbers<[2], [2], [1], [1], [0, 0, 0, 1, 1, 1], [0], [0]>} : vector<2x8x16xbf16>, vector<2x8x16xbf16>, vector<2x8x8xf32> -> vector<2x8x8xf32>
    "tpu.trace_stop"() : () -> ()
    %cst_135 = arith.constant dense<0xFF800000> : vector<2x8xf32>
    %223 = vector.multi_reduction <maximumf>, %222, %cst_135 [2] : vector<2x8x8xf32> to vector<2x8xf32>
    %224 = vector.shape_cast %223 : vector<2x8xf32> to vector<2x8x1xf32>
    %225 = vector.broadcast %224 : vector<2x8x1xf32> to vector<2x8x8xf32>
    %226 = arith.subf %222, %225 : vector<2x8x8xf32>
    %227 = math.exp %226 : vector<2x8x8xf32>
    %cst_136 = arith.constant dense<0.000000e+00> : vector<2x8xf32>
    %228 = vector.multi_reduction <add>, %227, %cst_136 [2] : vector<2x8x8xf32> to vector<2x8xf32>
    %229 = vector.shape_cast %228 : vector<2x8xf32> to vector<2x8x1xf32>
    %230 = tpu.reciprocal %229 : vector<2x8x1xf32> -> vector<2x8x1xf32>
    %231 = vector.broadcast %230 : vector<2x8x1xf32> to vector<2x8x8xf32>
    %232 = arith.mulf %227, %231 : vector<2x8x8xf32>
    %233 = vector.shape_cast %232 : vector<2x8x8xf32> to vector<2x1x8x8xf32>
    %c0_137 = arith.constant 0 : index
    %c1_138 = arith.constant 1 : index
    %c0_139 = arith.constant 0 : index
    %c0_140 = arith.constant 0 : index
    %234 = vector.load %arg36[%c0_137, %c1_138, %c0_139, %c0_140] : memref<2x2x8x8xf32, #tpu.memory_space<vmem>>, vector<2x1x8x8xf32>
    tpu.vector_store %arg36[%c0_137, %c1_138, %c0_139, %c0_140], %233 {strides = array<i32>} : memref<2x2x8x8xf32, #tpu.memory_space<vmem>>, vector<2x1x8x8xf32>,
    %235 = arith.truncf %232 : vector<2x8x8xf32> to vector<2x8x8xbf16>
    %236 = arith.truncf %219 : vector<2x8x16xf32> to vector<2x8x16xbf16>
    "tpu.trace_start"() <{level = 10 : i32, message = "bqk,bkd->bqd"}> : () -> ()
    %cst_141 = arith.constant dense<0.000000e+00> : vector<2x8x16xf32>
    %237 = tpu.matmul %235, %236, %cst_141 {dimension_numbers = #tpu.dot_dimension_numbers<[2], [1], [1], [2], [0, 0, 0, 1, 1, 2], [0], [0]>} : vector<2x8x8xbf16>, vector<2x8x16xbf16>, vector<2x8x16xf32> -> vector<2x8x16xf32>
    "tpu.trace_stop"() : () -> ()
    %238 = vector.shape_cast %237 : vector<2x8x16xf32> to vector<16x16xf32>
    %c1_142 = arith.constant 1 : index
    %c1_143 = arith.constant 1 : index
    %c0_144 = arith.constant 0 : index
    %c0_145 = arith.constant 0 : index
    %239 = vector.load %arg7[%c1_142, %c1_143, %c0_144, %c0_145] : memref<2x2x16x32xbf16, #tpu.memory_space<vmem>>, vector<1x1x16x32xbf16>
    %240 = vector.shape_cast %239 : vector<1x1x16x32xbf16> to vector<16x32xbf16>
    %241 = arith.truncf %238 : vector<16x16xf32> to vector<16x16xbf16>
    %cst_146 = arith.constant dense<0.000000e+00> : vector<16x32xf32>
    %242 = tpu.matmul %241, %240, %cst_146 {dimension_numbers = #tpu.dot_dimension_numbers<[1], [0], [0], [1], [0, 0, 1, 1], [], []>} : vector<16x16xbf16>, vector<16x32xbf16>, vector<16x32xf32> -> vector<16x32xf32>
    %243 = arith.addf %204, %242 : vector<16x32xf32>
    %244 = arith.addf %243, %162 : vector<16x32xf32>
    %245 = vector.extract_strided_slice %164 {offsets = [0, 0], sizes = [1, 32], strides = [1, 1]} : vector<5x32xf32> to vector<1x32xf32>
    %246 = vector.extract_strided_slice %164 {offsets = [1, 0], sizes = [1, 32], strides = [1, 1]} : vector<5x32xf32> to vector<1x32xf32>
    %cst_147 = arith.constant dense<0.000000e+00> : vector<16xf32>
    %247 = vector.multi_reduction <add>, %244, %cst_147 [1] : vector<16x32xf32> to vector<16xf32>
    %248 = vector.shape_cast %247 : vector<16xf32> to vector<16x1xf32>
    %cst_148 = arith.constant 3.200000e+01 : f32
    %249 = vector.broadcast %cst_148 : f32 to vector<16x1xf32>
    %250 = arith.divf %248, %249 : vector<16x1xf32>
    %251 = vector.broadcast %250 : vector<16x1xf32> to vector<16x32xf32>
    %252 = arith.subf %244, %251 : vector<16x32xf32>
    %253 = arith.mulf %252, %252 : vector<16x32xf32>
    %cst_149 = arith.constant dense<0.000000e+00> : vector<16xf32>
    %254 = vector.multi_reduction <add>, %253, %cst_149 [1] : vector<16x32xf32> to vector<16xf32>
    %255 = vector.shape_cast %254 : vector<16xf32> to vector<16x1xf32>
    %cst_150 = arith.constant 3.200000e+01 : f32
    %256 = vector.broadcast %cst_150 : f32 to vector<16x1xf32>
    %257 = arith.divf %255, %256 : vector<16x1xf32>
    %258 = vector.broadcast %250 : vector<16x1xf32> to vector<16x32xf32>
    %259 = arith.subf %244, %258 : vector<16x32xf32>
    %cst_151 = arith.constant 9.99999997E-7 : f32
    %260 = vector.broadcast %cst_151 : f32 to vector<16x1xf32>
    %261 = arith.addf %257, %260 : vector<16x1xf32>
    %262 = math.rsqrt %261 : vector<16x1xf32>
    %263 = vector.broadcast %262 : vector<16x1xf32> to vector<16x32xf32>
    %264 = arith.mulf %259, %263 : vector<16x32xf32>
    %265 = vector.broadcast %245 : vector<1x32xf32> to vector<16x32xf32>
    %266 = arith.mulf %264, %265 : vector<16x32xf32>
    %267 = vector.broadcast %246 : vector<1x32xf32> to vector<16x32xf32>
    %268 = arith.addf %266, %267 : vector<16x32xf32>
    %c1_152 = arith.constant 1 : index
    %c0_153 = arith.constant 0 : index
    %c0_154 = arith.constant 0 : index
    %269 = vector.load %arg4[%c1_152, %c0_153, %c0_154] : memref<2x32x64xbf16, #tpu.memory_space<vmem>>, vector<1x32x64xbf16>
    %270 = vector.shape_cast %269 : vector<1x32x64xbf16> to vector<32x64xbf16>
    %271 = arith.truncf %268 : vector<16x32xf32> to vector<16x32xbf16>
    %cst_155 = arith.constant dense<0.000000e+00> : vector<16x64xf32>
    %272 = tpu.matmul %271, %270, %cst_155 {dimension_numbers = #tpu.dot_dimension_numbers<[1], [0], [0], [1], [0, 0, 1, 1], [], []>} : vector<16x32xbf16>, vector<32x64xbf16>, vector<16x64xf32> -> vector<16x64xf32>
    %c1_156 = arith.constant 1 : index
    %c0_157 = arith.constant 0 : index
    %c0_158 = arith.constant 0 : index
    %273 = vector.load %arg3[%c1_156, %c0_157, %c0_158] : memref<2x1x64xf32, #tpu.memory_space<vmem>>, vector<1x1x64xf32>
    %274 = vector.shape_cast %273 : vector<1x1x64xf32> to vector<1x64xf32>
    %275 = vector.broadcast %274 : vector<1x64xf32> to vector<16x64xf32>
    %276 = arith.addf %272, %275 : vector<16x64xf32>
    %cst_159 = arith.constant 0.000000e+00 : f32
    %277 = vector.broadcast %cst_159 : f32 to vector<16x64xf32>
    %278 = arith.maximumf %276, %277 : vector<16x64xf32>
    %c1_160 = arith.constant 1 : index
    %c0_161 = arith.constant 0 : index
    %c0_162 = arith.constant 0 : index
    %279 = vector.load %arg5[%c1_160, %c0_161, %c0_162] : memref<2x64x32xbf16, #tpu.memory_space<vmem>>, vector<1x64x32xbf16>
    %280 = vector.shape_cast %279 : vector<1x64x32xbf16> to vector<64x32xbf16>
    %281 = arith.truncf %278 : vector<16x64xf32> to vector<16x64xbf16>
    %cst_163 = arith.constant dense<0.000000e+00> : vector<16x32xf32>
    %282 = tpu.matmul %281, %280, %cst_163 {dimension_numbers = #tpu.dot_dimension_numbers<[1], [0], [0], [1], [0, 0, 1, 1], [], []>} : vector<16x64xbf16>, vector<64x32xbf16>, vector<16x32xf32> -> vector<16x32xf32>
    %283 = vector.extract_strided_slice %164 {offsets = [4, 0], sizes = [1, 32], strides = [1, 1]} : vector<5x32xf32> to vector<1x32xf32>
    %284 = vector.broadcast %283 : vector<1x32xf32> to vector<16x32xf32>
    %285 = arith.addf %282, %284 : vector<16x32xf32>
    %286 = arith.addf %285, %268 : vector<16x32xf32>
    %287 = vector.extract_strided_slice %164 {offsets = [2, 0], sizes = [1, 32], strides = [1, 1]} : vector<5x32xf32> to vector<1x32xf32>
    %288 = vector.extract_strided_slice %164 {offsets = [3, 0], sizes = [1, 32], strides = [1, 1]} : vector<5x32xf32> to vector<1x32xf32>
    %cst_164 = arith.constant dense<0.000000e+00> : vector<16xf32>
    %289 = vector.multi_reduction <add>, %286, %cst_164 [1] : vector<16x32xf32> to vector<16xf32>
    %290 = vector.shape_cast %289 : vector<16xf32> to vector<16x1xf32>
    %cst_165 = arith.constant 3.200000e+01 : f32
    %291 = vector.broadcast %cst_165 : f32 to vector<16x1xf32>
    %292 = arith.divf %290, %291 : vector<16x1xf32>
    %293 = vector.broadcast %292 : vector<16x1xf32> to vector<16x32xf32>
    %294 = arith.subf %286, %293 : vector<16x32xf32>
    %295 = arith.mulf %294, %294 : vector<16x32xf32>
    %cst_166 = arith.constant dense<0.000000e+00> : vector<16xf32>
    %296 = vector.multi_reduction <add>, %295, %cst_166 [1] : vector<16x32xf32> to vector<16xf32>
    %297 = vector.shape_cast %296 : vector<16xf32> to vector<16x1xf32>
    %cst_167 = arith.constant 3.200000e+01 : f32
    %298 = vector.broadcast %cst_167 : f32 to vector<16x1xf32>
    %299 = arith.divf %297, %298 : vector<16x1xf32>
    %300 = vector.broadcast %292 : vector<16x1xf32> to vector<16x32xf32>
    %301 = arith.subf %286, %300 : vector<16x32xf32>
    %cst_168 = arith.constant 9.99999997E-7 : f32
    %302 = vector.broadcast %cst_168 : f32 to vector<16x1xf32>
    %303 = arith.addf %299, %302 : vector<16x1xf32>
    %304 = math.rsqrt %303 : vector<16x1xf32>
    %305 = vector.broadcast %304 : vector<16x1xf32> to vector<16x32xf32>
    %306 = arith.mulf %301, %305 : vector<16x32xf32>
    %307 = vector.broadcast %287 : vector<1x32xf32> to vector<16x32xf32>
    %308 = arith.mulf %306, %307 : vector<16x32xf32>
    %309 = vector.broadcast %288 : vector<1x32xf32> to vector<16x32xf32>
    %310 = arith.addf %308, %309 : vector<16x32xf32>
    %c0_169 = arith.constant 0 : index
    %c0_170 = arith.constant 0 : index
    %311 = vector.load %arg31[%c0_169, %c0_170] : memref<32x5xbf16, #tpu.memory_space<vmem>>, vector<32x5xbf16>
    %312 = arith.truncf %310 : vector<16x32xf32> to vector<16x32xbf16>
    %cst_171 = arith.constant dense<0.000000e+00> : vector<16x5xf32>
    %313 = tpu.matmul %312, %311, %cst_171 {dimension_numbers = #tpu.dot_dimension_numbers<[1], [0], [0], [1], [0, 0, 1, 1], [], []>} : vector<16x32xbf16>, vector<32x5xbf16>, vector<16x5xf32> -> vector<16x5xf32>
    %c0_172 = arith.constant 0 : index
    %c0_173 = arith.constant 0 : index
    %314 = vector.load %arg30[%c0_172, %c0_173] : memref<1x5xf32, #tpu.memory_space<vmem>>, vector<1x5xf32>
    %315 = vector.broadcast %314 : vector<1x5xf32> to vector<16x5xf32>
    %316 = arith.addf %313, %315 : vector<16x5xf32>
    %317 = arith.mulf %3, %1 : vector<16x5xf32>
    %cst_174 = arith.constant 1.000000e+00 : f32
    %318 = vector.broadcast %cst_174 : f32 to vector<16x5xf32>
    %319 = arith.subf %318, %3 : vector<16x5xf32>
    %320 = arith.mulf %319, %316 : vector<16x5xf32>
    %321 = arith.addf %317, %320 : vector<16x5xf32>
    %c0_175 = arith.constant 0 : index
    %c0_176 = arith.constant 0 : index
    %322 = vector.load %arg24[%c0_175, %c0_176] : memref<5x32xbf16, #tpu.memory_space<vmem>>, vector<5x32xbf16>
    %323 = arith.truncf %321 : vector<16x5xf32> to vector<16x5xbf16>
    %cst_177 = arith.constant dense<0.000000e+00> : vector<16x32xf32>
    %324 = tpu.matmul %323, %322, %cst_177 {dimension_numbers = #tpu.dot_dimension_numbers<[1], [0], [0], [1], [0, 0, 1, 1], [], []>} : vector<16x5xbf16>, vector<5x32xbf16>, vector<16x32xf32> -> vector<16x32xf32>
    %c0_178 = arith.constant 0 : index
    %c0_179 = arith.constant 0 : index
    %325 = vector.load %arg23[%c0_178, %c0_179] : memref<5x32xbf16, #tpu.memory_space<vmem>>, vector<5x32xbf16>
    %326 = arith.truncf %3 : vector<16x5xf32> to vector<16x5xbf16>
    %cst_180 = arith.constant dense<0.000000e+00> : vector<16x32xf32>
    %327 = tpu.matmul %326, %325, %cst_180 {dimension_numbers = #tpu.dot_dimension_numbers<[1], [0], [0], [1], [0, 0, 1, 1], [], []>} : vector<16x5xbf16>, vector<5x32xbf16>, vector<16x32xf32> -> vector<16x32xf32>
    %328 = arith.addf %324, %327 : vector<16x32xf32>
    %c0_181 = arith.constant 0 : index
    %c0_182 = arith.constant 0 : index
    %329 = vector.load %arg22[%c0_181, %c0_182] : memref<1x32xf32, #tpu.memory_space<vmem>>, vector<1x32xf32>
    %330 = vector.broadcast %329 : vector<1x32xf32> to vector<16x32xf32>
    %331 = arith.addf %328, %330 : vector<16x32xf32>
    %332 = arith.addf %331, %7 : vector<16x32xf32>
    %c0_183 = arith.constant 0 : index
    %c0_184 = arith.constant 0 : index
    %c0_185 = arith.constant 0 : index
    %333 = vector.load %arg14[%c0_183, %c0_184, %c0_185] : memref<2x5x32xf32, #tpu.memory_space<vmem>>, vector<1x5x32xf32>
    %334 = vector.shape_cast %333 : vector<1x5x32xf32> to vector<5x32xf32>
    %cst_186 = arith.constant 0.000000e+00 : f32
    %335 = vector.broadcast %cst_186 : f32 to vector<16x32xf32>
    %c0_187 = arith.constant 0 : index
    %c0_188 = arith.constant 0 : index
    %c0_189 = arith.constant 0 : index
    %c0_190 = arith.constant 0 : index
    %336 = vector.load %arg17[%c0_187, %c0_188, %c0_189, %c0_190] : memref<2x2x32x16xbf16, #tpu.memory_space<vmem>>, vector<1x1x32x16xbf16>
    %337 = vector.shape_cast %336 : vector<1x1x32x16xbf16> to vector<32x16xbf16>
    %338 = arith.truncf %332 : vector<16x32xf32> to vector<16x32xbf16>
    %cst_191 = arith.constant dense<0.000000e+00> : vector<16x16xf32>
    %339 = tpu.matmul %338, %337, %cst_191 {dimension_numbers = #tpu.dot_dimension_numbers<[1], [0], [0], [1], [0, 0, 1, 1], [], []>} : vector<16x32xbf16>, vector<32x16xbf16>, vector<16x16xf32> -> vector<16x16xf32>
    %340 = vector.shape_cast %339 : vector<16x16xf32> to vector<2x8x16xf32>
    %c0_192 = arith.constant 0 : index
    %c0_193 = arith.constant 0 : index
    %c0_194 = arith.constant 0 : index
    %c0_195 = arith.constant 0 : index
    %341 = vector.load %arg16[%c0_192, %c0_193, %c0_194, %c0_195] : memref<2x2x32x16xbf16, #tpu.memory_space<vmem>>, vector<1x1x32x16xbf16>
    %342 = vector.shape_cast %341 : vector<1x1x32x16xbf16> to vector<32x16xbf16>
    %343 = arith.truncf %332 : vector<16x32xf32> to vector<16x32xbf16>
    %cst_196 = arith.constant dense<0.000000e+00> : vector<16x16xf32>
    %344 = tpu.matmul %343, %342, %cst_196 {dimension_numbers = #tpu.dot_dimension_numbers<[1], [0], [0], [1], [0, 0, 1, 1], [], []>} : vector<16x32xbf16>, vector<32x16xbf16>, vector<16x16xf32> -> vector<16x16xf32>
    %345 = vector.shape_cast %344 : vector<16x16xf32> to vector<2x8x16xf32>
    %c0_197 = arith.constant 0 : index
    %c0_198 = arith.constant 0 : index
    %c0_199 = arith.constant 0 : index
    %c0_200 = arith.constant 0 : index
    %346 = vector.load %arg18[%c0_197, %c0_198, %c0_199, %c0_200] : memref<2x2x32x16xbf16, #tpu.memory_space<vmem>>, vector<1x1x32x16xbf16>
    %347 = vector.shape_cast %346 : vector<1x1x32x16xbf16> to vector<32x16xbf16>
    %348 = arith.truncf %332 : vector<16x32xf32> to vector<16x32xbf16>
    %cst_201 = arith.constant dense<0.000000e+00> : vector<16x16xf32>
    %349 = tpu.matmul %348, %347, %cst_201 {dimension_numbers = #tpu.dot_dimension_numbers<[1], [0], [0], [1], [0, 0, 1, 1], [], []>} : vector<16x32xbf16>, vector<32x16xbf16>, vector<16x16xf32> -> vector<16x16xf32>
    %350 = vector.shape_cast %349 : vector<16x16xf32> to vector<2x8x16xf32>
    %351 = arith.truncf %340 : vector<2x8x16xf32> to vector<2x8x16xbf16>
    %352 = arith.truncf %345 : vector<2x8x16xf32> to vector<2x8x16xbf16>
    "tpu.trace_start"() <{level = 10 : i32, message = "bqd,bkd->bqk"}> : () -> ()
    %cst_202 = arith.constant dense<0.000000e+00> : vector<2x8x8xf32>
    %353 = tpu.matmul %351, %352, %cst_202 {dimension_numbers = #tpu.dot_dimension_numbers<[2], [2], [1], [1], [0, 0, 0, 1, 1, 1], [0], [0]>} : vector<2x8x16xbf16>, vector<2x8x16xbf16>, vector<2x8x8xf32> -> vector<2x8x8xf32>
    "tpu.trace_stop"() : () -> ()
    %cst_203 = arith.constant dense<0xFF800000> : vector<2x8xf32>
    %354 = vector.multi_reduction <maximumf>, %353, %cst_203 [2] : vector<2x8x8xf32> to vector<2x8xf32>
    %355 = vector.shape_cast %354 : vector<2x8xf32> to vector<2x8x1xf32>
    %356 = vector.broadcast %355 : vector<2x8x1xf32> to vector<2x8x8xf32>
    %357 = arith.subf %353, %356 : vector<2x8x8xf32>
    %358 = math.exp %357 : vector<2x8x8xf32>
    %cst_204 = arith.constant dense<0.000000e+00> : vector<2x8xf32>
    %359 = vector.multi_reduction <add>, %358, %cst_204 [2] : vector<2x8x8xf32> to vector<2x8xf32>
    %360 = vector.shape_cast %359 : vector<2x8xf32> to vector<2x8x1xf32>
    %361 = tpu.reciprocal %360 {approx = true} : vector<2x8x1xf32> -> vector<2x8x1xf32>
    %362 = vector.broadcast %361 : vector<2x8x1xf32> to vector<2x8x8xf32>
    %363 = arith.mulf %358, %362 : vector<2x8x8xf32>
    %364 = arith.truncf %363 : vector<2x8x8xf32> to vector<2x8x8xbf16>
    %365 = arith.truncf %350 : vector<2x8x16xf32> to vector<2x8x16xbf16>
    "tpu.trace_start"() <{level = 10 : i32, message = "bqk,bkd->bqd"}> : () -> ()
    %cst_205 = arith.constant dense<0.000000e+00> : vector<2x8x16xf32>
    %366 = tpu.matmul %364, %365, %cst_205 {dimension_numbers = #tpu.dot_dimension_numbers<[2], [1], [1], [2], [0, 0, 0, 1, 1, 2], [0], [0]>} : vector<2x8x8xbf16>, vector<2x8x16xbf16>, vector<2x8x16xf32> -> vector<2x8x16xf32>
    "tpu.trace_stop"() : () -> ()
    %367 = vector.shape_cast %366 : vector<2x8x16xf32> to vector<16x16xf32>
    %c0_206 = arith.constant 0 : index
    %c0_207 = arith.constant 0 : index
    %c0_208 = arith.constant 0 : index
    %c0_209 = arith.constant 0 : index
    %368 = vector.load %arg15[%c0_206, %c0_207, %c0_208, %c0_209] : memref<2x2x16x32xbf16, #tpu.memory_space<vmem>>, vector<1x1x16x32xbf16>
    %369 = vector.shape_cast %368 : vector<1x1x16x32xbf16> to vector<16x32xbf16>
    %370 = arith.truncf %367 : vector<16x16xf32> to vector<16x16xbf16>
    %cst_210 = arith.constant dense<0.000000e+00> : vector<16x32xf32>
    %371 = tpu.matmul %370, %369, %cst_210 {dimension_numbers = #tpu.dot_dimension_numbers<[1], [0], [0], [1], [0, 0, 1, 1], [], []>} : vector<16x16xbf16>, vector<16x32xbf16>, vector<16x32xf32> -> vector<16x32xf32>
    %372 = arith.addf %335, %371 : vector<16x32xf32>
    %c0_211 = arith.constant 0 : index
    %c1_212 = arith.constant 1 : index
    %c0_213 = arith.constant 0 : index
    %c0_214 = arith.constant 0 : index
    %373 = vector.load %arg17[%c0_211, %c1_212, %c0_213, %c0_214] : memref<2x2x32x16xbf16, #tpu.memory_space<vmem>>, vector<1x1x32x16xbf16>
    %374 = vector.shape_cast %373 : vector<1x1x32x16xbf16> to vector<32x16xbf16>
    %375 = arith.truncf %332 : vector<16x32xf32> to vector<16x32xbf16>
    %cst_215 = arith.constant dense<0.000000e+00> : vector<16x16xf32>
    %376 = tpu.matmul %375, %374, %cst_215 {dimension_numbers = #tpu.dot_dimension_numbers<[1], [0], [0], [1], [0, 0, 1, 1], [], []>} : vector<16x32xbf16>, vector<32x16xbf16>, vector<16x16xf32> -> vector<16x16xf32>
    %377 = vector.shape_cast %376 : vector<16x16xf32> to vector<2x8x16xf32>
    %c0_216 = arith.constant 0 : index
    %c1_217 = arith.constant 1 : index
    %c0_218 = arith.constant 0 : index
    %c0_219 = arith.constant 0 : index
    %378 = vector.load %arg16[%c0_216, %c1_217, %c0_218, %c0_219] : memref<2x2x32x16xbf16, #tpu.memory_space<vmem>>, vector<1x1x32x16xbf16>
    %379 = vector.shape_cast %378 : vector<1x1x32x16xbf16> to vector<32x16xbf16>
    %380 = arith.truncf %332 : vector<16x32xf32> to vector<16x32xbf16>
    %cst_220 = arith.constant dense<0.000000e+00> : vector<16x16xf32>
    %381 = tpu.matmul %380, %379, %cst_220 {dimension_numbers = #tpu.dot_dimension_numbers<[1], [0], [0], [1], [0, 0, 1, 1], [], []>} : vector<16x32xbf16>, vector<32x16xbf16>, vector<16x16xf32> -> vector<16x16xf32>
    %382 = vector.shape_cast %381 : vector<16x16xf32> to vector<2x8x16xf32>
    %c0_221 = arith.constant 0 : index
    %c1_222 = arith.constant 1 : index
    %c0_223 = arith.constant 0 : index
    %c0_224 = arith.constant 0 : index
    %383 = vector.load %arg18[%c0_221, %c1_222, %c0_223, %c0_224] : memref<2x2x32x16xbf16, #tpu.memory_space<vmem>>, vector<1x1x32x16xbf16>
    %384 = vector.shape_cast %383 : vector<1x1x32x16xbf16> to vector<32x16xbf16>
    %385 = arith.truncf %332 : vector<16x32xf32> to vector<16x32xbf16>
    %cst_225 = arith.constant dense<0.000000e+00> : vector<16x16xf32>
    %386 = tpu.matmul %385, %384, %cst_225 {dimension_numbers = #tpu.dot_dimension_numbers<[1], [0], [0], [1], [0, 0, 1, 1], [], []>} : vector<16x32xbf16>, vector<32x16xbf16>, vector<16x16xf32> -> vector<16x16xf32>
    %387 = vector.shape_cast %386 : vector<16x16xf32> to vector<2x8x16xf32>
    %388 = arith.truncf %377 : vector<2x8x16xf32> to vector<2x8x16xbf16>
    %389 = arith.truncf %382 : vector<2x8x16xf32> to vector<2x8x16xbf16>
    "tpu.trace_start"() <{level = 10 : i32, message = "bqd,bkd->bqk"}> : () -> ()
    %cst_226 = arith.constant dense<0.000000e+00> : vector<2x8x8xf32>
    %390 = tpu.matmul %388, %389, %cst_226 {dimension_numbers = #tpu.dot_dimension_numbers<[2], [2], [1], [1], [0, 0, 0, 1, 1, 1], [0], [0]>} : vector<2x8x16xbf16>, vector<2x8x16xbf16>, vector<2x8x8xf32> -> vector<2x8x8xf32>
    "tpu.trace_stop"() : () -> ()
    %cst_227 = arith.constant dense<0xFF800000> : vector<2x8xf32>
    %391 = vector.multi_reduction <maximumf>, %390, %cst_227 [2] : vector<2x8x8xf32> to vector<2x8xf32>
    %392 = vector.shape_cast %391 : vector<2x8xf32> to vector<2x8x1xf32>
    %393 = vector.broadcast %392 : vector<2x8x1xf32> to vector<2x8x8xf32>
    %394 = arith.subf %390, %393 : vector<2x8x8xf32>
    %395 = math.exp %394 : vector<2x8x8xf32>
    %cst_228 = arith.constant dense<0.000000e+00> : vector<2x8xf32>
    %396 = vector.multi_reduction <add>, %395, %cst_228 [2] : vector<2x8x8xf32> to vector<2x8xf32>
    %397 = vector.shape_cast %396 : vector<2x8xf32> to vector<2x8x1xf32>
    %398 = tpu.reciprocal %397 {approx = true} : vector<2x8x1xf32> -> vector<2x8x1xf32>
    %399 = vector.broadcast %398 : vector<2x8x1xf32> to vector<2x8x8xf32>
    %400 = arith.mulf %395, %399 : vector<2x8x8xf32>
    %401 = arith.truncf %400 : vector<2x8x8xf32> to vector<2x8x8xbf16>
    %402 = arith.truncf %387 : vector<2x8x16xf32> to vector<2x8x16xbf16>
    "tpu.trace_start"() <{level = 10 : i32, message = "bqk,bkd->bqd"}> : () -> ()
    %cst_229 = arith.constant dense<0.000000e+00> : vector<2x8x16xf32>
    %403 = tpu.matmul %401, %402, %cst_229 {dimension_numbers = #tpu.dot_dimension_numbers<[2], [1], [1], [2], [0, 0, 0, 1, 1, 2], [0], [0]>} : vector<2x8x8xbf16>, vector<2x8x16xbf16>, vector<2x8x16xf32> -> vector<2x8x16xf32>
    "tpu.trace_stop"() : () -> ()
    %404 = vector.shape_cast %403 : vector<2x8x16xf32> to vector<16x16xf32>
    %c0_230 = arith.constant 0 : index
    %c1_231 = arith.constant 1 : index
    %c0_232 = arith.constant 0 : index
    %c0_233 = arith.constant 0 : index
    %405 = vector.load %arg15[%c0_230, %c1_231, %c0_232, %c0_233] : memref<2x2x16x32xbf16, #tpu.memory_space<vmem>>, vector<1x1x16x32xbf16>
    %406 = vector.shape_cast %405 : vector<1x1x16x32xbf16> to vector<16x32xbf16>
    %407 = arith.truncf %404 : vector<16x16xf32> to vector<16x16xbf16>
    %cst_234 = arith.constant dense<0.000000e+00> : vector<16x32xf32>
    %408 = tpu.matmul %407, %406, %cst_234 {dimension_numbers = #tpu.dot_dimension_numbers<[1], [0], [0], [1], [0, 0, 1, 1], [], []>} : vector<16x16xbf16>, vector<16x32xbf16>, vector<16x32xf32> -> vector<16x32xf32>
    %409 = arith.addf %372, %408 : vector<16x32xf32>
    %410 = arith.addf %409, %332 : vector<16x32xf32>
    %411 = vector.extract_strided_slice %334 {offsets = [0, 0], sizes = [1, 32], strides = [1, 1]} : vector<5x32xf32> to vector<1x32xf32>
    %412 = vector.extract_strided_slice %334 {offsets = [1, 0], sizes = [1, 32], strides = [1, 1]} : vector<5x32xf32> to vector<1x32xf32>
    %cst_235 = arith.constant dense<0.000000e+00> : vector<16xf32>
    %413 = vector.multi_reduction <add>, %410, %cst_235 [1] : vector<16x32xf32> to vector<16xf32>
    %414 = vector.shape_cast %413 : vector<16xf32> to vector<16x1xf32>
    %cst_236 = arith.constant 3.200000e+01 : f32
    %415 = vector.broadcast %cst_236 : f32 to vector<16x1xf32>
    %416 = arith.divf %414, %415 : vector<16x1xf32>
    %417 = vector.broadcast %416 : vector<16x1xf32> to vector<16x32xf32>
    %418 = arith.subf %410, %417 : vector<16x32xf32>
    %419 = arith.mulf %418, %418 : vector<16x32xf32>
    %cst_237 = arith.constant dense<0.000000e+00> : vector<16xf32>
    %420 = vector.multi_reduction <add>, %419, %cst_237 [1] : vector<16x32xf32> to vector<16xf32>
    %421 = vector.shape_cast %420 : vector<16xf32> to vector<16x1xf32>
    %cst_238 = arith.constant 3.200000e+01 : f32
    %422 = vector.broadcast %cst_238 : f32 to vector<16x1xf32>
    %423 = arith.divf %421, %422 : vector<16x1xf32>
    %424 = vector.broadcast %416 : vector<16x1xf32> to vector<16x32xf32>
    %425 = arith.subf %410, %424 : vector<16x32xf32>
    %cst_239 = arith.constant 9.99999997E-7 : f32
    %426 = vector.broadcast %cst_239 : f32 to vector<16x1xf32>
    %427 = arith.addf %423, %426 : vector<16x1xf32>
    %428 = math.rsqrt %427 : vector<16x1xf32>
    %429 = vector.broadcast %428 : vector<16x1xf32> to vector<16x32xf32>
    %430 = arith.mulf %425, %429 : vector<16x32xf32>
    %431 = vector.broadcast %411 : vector<1x32xf32> to vector<16x32xf32>
    %432 = arith.mulf %430, %431 : vector<16x32xf32>
    %433 = vector.broadcast %412 : vector<1x32xf32> to vector<16x32xf32>
    %434 = arith.addf %432, %433 : vector<16x32xf32>
    %c0_240 = arith.constant 0 : index
    %c0_241 = arith.constant 0 : index
    %c0_242 = arith.constant 0 : index
    %435 = vector.load %arg12[%c0_240, %c0_241, %c0_242] : memref<2x32x64xbf16, #tpu.memory_space<vmem>>, vector<1x32x64xbf16>
    %436 = vector.shape_cast %435 : vector<1x32x64xbf16> to vector<32x64xbf16>
    %437 = arith.truncf %434 : vector<16x32xf32> to vector<16x32xbf16>
    %cst_243 = arith.constant dense<0.000000e+00> : vector<16x64xf32>
    %438 = tpu.matmul %437, %436, %cst_243 {dimension_numbers = #tpu.dot_dimension_numbers<[1], [0], [0], [1], [0, 0, 1, 1], [], []>} : vector<16x32xbf16>, vector<32x64xbf16>, vector<16x64xf32> -> vector<16x64xf32>
    %c0_244 = arith.constant 0 : index
    %c0_245 = arith.constant 0 : index
    %c0_246 = arith.constant 0 : index
    %439 = vector.load %arg11[%c0_244, %c0_245, %c0_246] : memref<2x1x64xf32, #tpu.memory_space<vmem>>, vector<1x1x64xf32>
    %440 = vector.shape_cast %439 : vector<1x1x64xf32> to vector<1x64xf32>
    %441 = vector.broadcast %440 : vector<1x64xf32> to vector<16x64xf32>
    %442 = arith.addf %438, %441 : vector<16x64xf32>
    %cst_247 = arith.constant 0.000000e+00 : f32
    %443 = vector.broadcast %cst_247 : f32 to vector<16x64xf32>
    %444 = arith.maximumf %442, %443 : vector<16x64xf32>
    %c0_248 = arith.constant 0 : index
    %c0_249 = arith.constant 0 : index
    %c0_250 = arith.constant 0 : index
    %445 = vector.load %arg13[%c0_248, %c0_249, %c0_250] : memref<2x64x32xbf16, #tpu.memory_space<vmem>>, vector<1x64x32xbf16>
    %446 = vector.shape_cast %445 : vector<1x64x32xbf16> to vector<64x32xbf16>
    %447 = arith.truncf %444 : vector<16x64xf32> to vector<16x64xbf16>
    %cst_251 = arith.constant dense<0.000000e+00> : vector<16x32xf32>
    %448 = tpu.matmul %447, %446, %cst_251 {dimension_numbers = #tpu.dot_dimension_numbers<[1], [0], [0], [1], [0, 0, 1, 1], [], []>} : vector<16x64xbf16>, vector<64x32xbf16>, vector<16x32xf32> -> vector<16x32xf32>
    %449 = vector.extract_strided_slice %334 {offsets = [4, 0], sizes = [1, 32], strides = [1, 1]} : vector<5x32xf32> to vector<1x32xf32>
    %450 = vector.broadcast %449 : vector<1x32xf32> to vector<16x32xf32>
    %451 = arith.addf %448, %450 : vector<16x32xf32>
    %452 = arith.addf %451, %434 : vector<16x32xf32>
    %453 = vector.extract_strided_slice %334 {offsets = [2, 0], sizes = [1, 32], strides = [1, 1]} : vector<5x32xf32> to vector<1x32xf32>
    %454 = vector.extract_strided_slice %334 {offsets = [3, 0], sizes = [1, 32], strides = [1, 1]} : vector<5x32xf32> to vector<1x32xf32>
    %cst_252 = arith.constant dense<0.000000e+00> : vector<16xf32>
    %455 = vector.multi_reduction <add>, %452, %cst_252 [1] : vector<16x32xf32> to vector<16xf32>
    %456 = vector.shape_cast %455 : vector<16xf32> to vector<16x1xf32>
    %cst_253 = arith.constant 3.200000e+01 : f32
    %457 = vector.broadcast %cst_253 : f32 to vector<16x1xf32>
    %458 = arith.divf %456, %457 : vector<16x1xf32>
    %459 = vector.broadcast %458 : vector<16x1xf32> to vector<16x32xf32>
    %460 = arith.subf %452, %459 : vector<16x32xf32>
    %461 = arith.mulf %460, %460 : vector<16x32xf32>
    %cst_254 = arith.constant dense<0.000000e+00> : vector<16xf32>
    %462 = vector.multi_reduction <add>, %461, %cst_254 [1] : vector<16x32xf32> to vector<16xf32>
    %463 = vector.shape_cast %462 : vector<16xf32> to vector<16x1xf32>
    %cst_255 = arith.constant 3.200000e+01 : f32
    %464 = vector.broadcast %cst_255 : f32 to vector<16x1xf32>
    %465 = arith.divf %463, %464 : vector<16x1xf32>
    %466 = vector.broadcast %458 : vector<16x1xf32> to vector<16x32xf32>
    %467 = arith.subf %452, %466 : vector<16x32xf32>
    %cst_256 = arith.constant 9.99999997E-7 : f32
    %468 = vector.broadcast %cst_256 : f32 to vector<16x1xf32>
    %469 = arith.addf %465, %468 : vector<16x1xf32>
    %470 = math.rsqrt %469 : vector<16x1xf32>
    %471 = vector.broadcast %470 : vector<16x1xf32> to vector<16x32xf32>
    %472 = arith.mulf %467, %471 : vector<16x32xf32>
    %473 = vector.broadcast %453 : vector<1x32xf32> to vector<16x32xf32>
    %474 = arith.mulf %472, %473 : vector<16x32xf32>
    %475 = vector.broadcast %454 : vector<1x32xf32> to vector<16x32xf32>
    %476 = arith.addf %474, %475 : vector<16x32xf32>
    %c1_257 = arith.constant 1 : index
    %c0_258 = arith.constant 0 : index
    %c0_259 = arith.constant 0 : index
    %477 = vector.load %arg14[%c1_257, %c0_258, %c0_259] : memref<2x5x32xf32, #tpu.memory_space<vmem>>, vector<1x5x32xf32>
    %478 = vector.shape_cast %477 : vector<1x5x32xf32> to vector<5x32xf32>
    %cst_260 = arith.constant 0.000000e+00 : f32
    %479 = vector.broadcast %cst_260 : f32 to vector<16x32xf32>
    %cst_261 = arith.constant 0.000000e+00 : f32
    %480 = vector.broadcast %cst_261 : f32 to vector<2x8x8xf32>
    %c1_262 = arith.constant 1 : index
    %c0_263 = arith.constant 0 : index
    %c0_264 = arith.constant 0 : index
    %c0_265 = arith.constant 0 : index
    %481 = vector.load %arg17[%c1_262, %c0_263, %c0_264, %c0_265] : memref<2x2x32x16xbf16, #tpu.memory_space<vmem>>, vector<1x1x32x16xbf16>
    %482 = vector.shape_cast %481 : vector<1x1x32x16xbf16> to vector<32x16xbf16>
    %483 = arith.truncf %476 : vector<16x32xf32> to vector<16x32xbf16>
    %cst_266 = arith.constant dense<0.000000e+00> : vector<16x16xf32>
    %484 = tpu.matmul %483, %482, %cst_266 {dimension_numbers = #tpu.dot_dimension_numbers<[1], [0], [0], [1], [0, 0, 1, 1], [], []>} : vector<16x32xbf16>, vector<32x16xbf16>, vector<16x16xf32> -> vector<16x16xf32>
    %485 = vector.shape_cast %484 : vector<16x16xf32> to vector<2x8x16xf32>
    %c1_267 = arith.constant 1 : index
    %c0_268 = arith.constant 0 : index
    %c0_269 = arith.constant 0 : index
    %c0_270 = arith.constant 0 : index
    %486 = vector.load %arg16[%c1_267, %c0_268, %c0_269, %c0_270] : memref<2x2x32x16xbf16, #tpu.memory_space<vmem>>, vector<1x1x32x16xbf16>
    %487 = vector.shape_cast %486 : vector<1x1x32x16xbf16> to vector<32x16xbf16>
    %488 = arith.truncf %476 : vector<16x32xf32> to vector<16x32xbf16>
    %cst_271 = arith.constant dense<0.000000e+00> : vector<16x16xf32>
    %489 = tpu.matmul %488, %487, %cst_271 {dimension_numbers = #tpu.dot_dimension_numbers<[1], [0], [0], [1], [0, 0, 1, 1], [], []>} : vector<16x32xbf16>, vector<32x16xbf16>, vector<16x16xf32> -> vector<16x16xf32>
    %490 = vector.shape_cast %489 : vector<16x16xf32> to vector<2x8x16xf32>
    %c1_272 = arith.constant 1 : index
    %c0_273 = arith.constant 0 : index
    %c0_274 = arith.constant 0 : index
    %c0_275 = arith.constant 0 : index
    %491 = vector.load %arg18[%c1_272, %c0_273, %c0_274, %c0_275] : memref<2x2x32x16xbf16, #tpu.memory_space<vmem>>, vector<1x1x32x16xbf16>
    %492 = vector.shape_cast %491 : vector<1x1x32x16xbf16> to vector<32x16xbf16>
    %493 = arith.truncf %476 : vector<16x32xf32> to vector<16x32xbf16>
    %cst_276 = arith.constant dense<0.000000e+00> : vector<16x16xf32>
    %494 = tpu.matmul %493, %492, %cst_276 {dimension_numbers = #tpu.dot_dimension_numbers<[1], [0], [0], [1], [0, 0, 1, 1], [], []>} : vector<16x32xbf16>, vector<32x16xbf16>, vector<16x16xf32> -> vector<16x16xf32>
    %495 = vector.shape_cast %494 : vector<16x16xf32> to vector<2x8x16xf32>
    %496 = arith.truncf %485 : vector<2x8x16xf32> to vector<2x8x16xbf16>
    %497 = arith.truncf %490 : vector<2x8x16xf32> to vector<2x8x16xbf16>
    "tpu.trace_start"() <{level = 10 : i32, message = "bqd,bkd->bqk"}> : () -> ()
    %cst_277 = arith.constant dense<0.000000e+00> : vector<2x8x8xf32>
    %498 = tpu.matmul %496, %497, %cst_277 {dimension_numbers = #tpu.dot_dimension_numbers<[2], [2], [1], [1], [0, 0, 0, 1, 1, 1], [0], [0]>} : vector<2x8x16xbf16>, vector<2x8x16xbf16>, vector<2x8x8xf32> -> vector<2x8x8xf32>
    "tpu.trace_stop"() : () -> ()
    %cst_278 = arith.constant dense<0xFF800000> : vector<2x8xf32>
    %499 = vector.multi_reduction <maximumf>, %498, %cst_278 [2] : vector<2x8x8xf32> to vector<2x8xf32>
    %500 = vector.shape_cast %499 : vector<2x8xf32> to vector<2x8x1xf32>
    %501 = vector.broadcast %500 : vector<2x8x1xf32> to vector<2x8x8xf32>
    %502 = arith.subf %498, %501 : vector<2x8x8xf32>
    %503 = math.exp %502 : vector<2x8x8xf32>
    %cst_279 = arith.constant dense<0.000000e+00> : vector<2x8xf32>
    %504 = vector.multi_reduction <add>, %503, %cst_279 [2] : vector<2x8x8xf32> to vector<2x8xf32>
    %505 = vector.shape_cast %504 : vector<2x8xf32> to vector<2x8x1xf32>
    %506 = tpu.reciprocal %505 : vector<2x8x1xf32> -> vector<2x8x1xf32>
    %507 = vector.broadcast %506 : vector<2x8x1xf32> to vector<2x8x8xf32>
    %508 = arith.mulf %503, %507 : vector<2x8x8xf32>
    %509 = vector.shape_cast %508 : vector<2x8x8xf32> to vector<2x1x8x8xf32>
    %c0_280 = arith.constant 0 : index
    %c0_281 = arith.constant 0 : index
    %c0_282 = arith.constant 0 : index
    %c0_283 = arith.constant 0 : index
    %510 = vector.load %arg37[%c0_280, %c0_281, %c0_282, %c0_283] : memref<2x2x8x8xf32, #tpu.memory_space<vmem>>, vector<2x1x8x8xf32>
    tpu.vector_store %arg37[%c0_280, %c0_281, %c0_282, %c0_283], %509 {strides = array<i32>} : memref<2x2x8x8xf32, #tpu.memory_space<vmem>>, vector<2x1x8x8xf32>,
    %511 = arith.addf %480, %508 : vector<2x8x8xf32>
    %512 = arith.truncf %508 : vector<2x8x8xf32> to vector<2x8x8xbf16>
    %513 = arith.truncf %495 : vector<2x8x16xf32> to vector<2x8x16xbf16>
    "tpu.trace_start"() <{level = 10 : i32, message = "bqk,bkd->bqd"}> : () -> ()
    %cst_284 = arith.constant dense<0.000000e+00> : vector<2x8x16xf32>
    %514 = tpu.matmul %512, %513, %cst_284 {dimension_numbers = #tpu.dot_dimension_numbers<[2], [1], [1], [2], [0, 0, 0, 1, 1, 2], [0], [0]>} : vector<2x8x8xbf16>, vector<2x8x16xbf16>, vector<2x8x16xf32> -> vector<2x8x16xf32>
    "tpu.trace_stop"() : () -> ()
    %515 = vector.shape_cast %514 : vector<2x8x16xf32> to vector<16x16xf32>
    %c1_285 = arith.constant 1 : index
    %c0_286 = arith.constant 0 : index
    %c0_287 = arith.constant 0 : index
    %c0_288 = arith.constant 0 : index
    %516 = vector.load %arg15[%c1_285, %c0_286, %c0_287, %c0_288] : memref<2x2x16x32xbf16, #tpu.memory_space<vmem>>, vector<1x1x16x32xbf16>
    %517 = vector.shape_cast %516 : vector<1x1x16x32xbf16> to vector<16x32xbf16>
    %518 = arith.truncf %515 : vector<16x16xf32> to vector<16x16xbf16>
    %cst_289 = arith.constant dense<0.000000e+00> : vector<16x32xf32>
    %519 = tpu.matmul %518, %517, %cst_289 {dimension_numbers = #tpu.dot_dimension_numbers<[1], [0], [0], [1], [0, 0, 1, 1], [], []>} : vector<16x16xbf16>, vector<16x32xbf16>, vector<16x32xf32> -> vector<16x32xf32>
    %520 = arith.addf %479, %519 : vector<16x32xf32>
    %c1_290 = arith.constant 1 : index
    %c1_291 = arith.constant 1 : index
    %c0_292 = arith.constant 0 : index
    %c0_293 = arith.constant 0 : index
    %521 = vector.load %arg17[%c1_290, %c1_291, %c0_292, %c0_293] : memref<2x2x32x16xbf16, #tpu.memory_space<vmem>>, vector<1x1x32x16xbf16>
    %522 = vector.shape_cast %521 : vector<1x1x32x16xbf16> to vector<32x16xbf16>
    %523 = arith.truncf %476 : vector<16x32xf32> to vector<16x32xbf16>
    %cst_294 = arith.constant dense<0.000000e+00> : vector<16x16xf32>
    %524 = tpu.matmul %523, %522, %cst_294 {dimension_numbers = #tpu.dot_dimension_numbers<[1], [0], [0], [1], [0, 0, 1, 1], [], []>} : vector<16x32xbf16>, vector<32x16xbf16>, vector<16x16xf32> -> vector<16x16xf32>
    %525 = vector.shape_cast %524 : vector<16x16xf32> to vector<2x8x16xf32>
    %c1_295 = arith.constant 1 : index
    %c1_296 = arith.constant 1 : index
    %c0_297 = arith.constant 0 : index
    %c0_298 = arith.constant 0 : index
    %526 = vector.load %arg16[%c1_295, %c1_296, %c0_297, %c0_298] : memref<2x2x32x16xbf16, #tpu.memory_space<vmem>>, vector<1x1x32x16xbf16>
    %527 = vector.shape_cast %526 : vector<1x1x32x16xbf16> to vector<32x16xbf16>
    %528 = arith.truncf %476 : vector<16x32xf32> to vector<16x32xbf16>
    %cst_299 = arith.constant dense<0.000000e+00> : vector<16x16xf32>
    %529 = tpu.matmul %528, %527, %cst_299 {dimension_numbers = #tpu.dot_dimension_numbers<[1], [0], [0], [1], [0, 0, 1, 1], [], []>} : vector<16x32xbf16>, vector<32x16xbf16>, vector<16x16xf32> -> vector<16x16xf32>
    %530 = vector.shape_cast %529 : vector<16x16xf32> to vector<2x8x16xf32>
    %c1_300 = arith.constant 1 : index
    %c1_301 = arith.constant 1 : index
    %c0_302 = arith.constant 0 : index
    %c0_303 = arith.constant 0 : index
    %531 = vector.load %arg18[%c1_300, %c1_301, %c0_302, %c0_303] : memref<2x2x32x16xbf16, #tpu.memory_space<vmem>>, vector<1x1x32x16xbf16>
    %532 = vector.shape_cast %531 : vector<1x1x32x16xbf16> to vector<32x16xbf16>
    %533 = arith.truncf %476 : vector<16x32xf32> to vector<16x32xbf16>
    %cst_304 = arith.constant dense<0.000000e+00> : vector<16x16xf32>
    %534 = tpu.matmul %533, %532, %cst_304 {dimension_numbers = #tpu.dot_dimension_numbers<[1], [0], [0], [1], [0, 0, 1, 1], [], []>} : vector<16x32xbf16>, vector<32x16xbf16>, vector<16x16xf32> -> vector<16x16xf32>
    %535 = vector.shape_cast %534 : vector<16x16xf32> to vector<2x8x16xf32>
    %536 = arith.truncf %525 : vector<2x8x16xf32> to vector<2x8x16xbf16>
    %537 = arith.truncf %530 : vector<2x8x16xf32> to vector<2x8x16xbf16>
    "tpu.trace_start"() <{level = 10 : i32, message = "bqd,bkd->bqk"}> : () -> ()
    %cst_305 = arith.constant dense<0.000000e+00> : vector<2x8x8xf32>
    %538 = tpu.matmul %536, %537, %cst_305 {dimension_numbers = #tpu.dot_dimension_numbers<[2], [2], [1], [1], [0, 0, 0, 1, 1, 1], [0], [0]>} : vector<2x8x16xbf16>, vector<2x8x16xbf16>, vector<2x8x8xf32> -> vector<2x8x8xf32>
    "tpu.trace_stop"() : () -> ()
    %cst_306 = arith.constant dense<0xFF800000> : vector<2x8xf32>
    %539 = vector.multi_reduction <maximumf>, %538, %cst_306 [2] : vector<2x8x8xf32> to vector<2x8xf32>
    %540 = vector.shape_cast %539 : vector<2x8xf32> to vector<2x8x1xf32>
    %541 = vector.broadcast %540 : vector<2x8x1xf32> to vector<2x8x8xf32>
    %542 = arith.subf %538, %541 : vector<2x8x8xf32>
    %543 = math.exp %542 : vector<2x8x8xf32>
    %cst_307 = arith.constant dense<0.000000e+00> : vector<2x8xf32>
    %544 = vector.multi_reduction <add>, %543, %cst_307 [2] : vector<2x8x8xf32> to vector<2x8xf32>
    %545 = vector.shape_cast %544 : vector<2x8xf32> to vector<2x8x1xf32>
    %546 = tpu.reciprocal %545 : vector<2x8x1xf32> -> vector<2x8x1xf32>
    %547 = vector.broadcast %546 : vector<2x8x1xf32> to vector<2x8x8xf32>
    %548 = arith.mulf %543, %547 : vector<2x8x8xf32>
    %549 = vector.shape_cast %548 : vector<2x8x8xf32> to vector<2x1x8x8xf32>
    %c0_308 = arith.constant 0 : index
    %c1_309 = arith.constant 1 : index
    %c0_310 = arith.constant 0 : index
    %c0_311 = arith.constant 0 : index
    %550 = vector.load %arg37[%c0_308, %c1_309, %c0_310, %c0_311] : memref<2x2x8x8xf32, #tpu.memory_space<vmem>>, vector<2x1x8x8xf32>
    tpu.vector_store %arg37[%c0_308, %c1_309, %c0_310, %c0_311], %549 {strides = array<i32>} : memref<2x2x8x8xf32, #tpu.memory_space<vmem>>, vector<2x1x8x8xf32>,
    %551 = arith.addf %511, %548 : vector<2x8x8xf32>
    %552 = arith.truncf %548 : vector<2x8x8xf32> to vector<2x8x8xbf16>
    %553 = arith.truncf %535 : vector<2x8x16xf32> to vector<2x8x16xbf16>
    "tpu.trace_start"() <{level = 10 : i32, message = "bqk,bkd->bqd"}> : () -> ()
    %cst_312 = arith.constant dense<0.000000e+00> : vector<2x8x16xf32>
    %554 = tpu.matmul %552, %553, %cst_312 {dimension_numbers = #tpu.dot_dimension_numbers<[2], [1], [1], [2], [0, 0, 0, 1, 1, 2], [0], [0]>} : vector<2x8x8xbf16>, vector<2x8x16xbf16>, vector<2x8x16xf32> -> vector<2x8x16xf32>
    "tpu.trace_stop"() : () -> ()
    %555 = vector.shape_cast %554 : vector<2x8x16xf32> to vector<16x16xf32>
    %c1_313 = arith.constant 1 : index
    %c1_314 = arith.constant 1 : index
    %c0_315 = arith.constant 0 : index
    %c0_316 = arith.constant 0 : index
    %556 = vector.load %arg15[%c1_313, %c1_314, %c0_315, %c0_316] : memref<2x2x16x32xbf16, #tpu.memory_space<vmem>>, vector<1x1x16x32xbf16>
    %557 = vector.shape_cast %556 : vector<1x1x16x32xbf16> to vector<16x32xbf16>
    %558 = arith.truncf %555 : vector<16x16xf32> to vector<16x16xbf16>
    %cst_317 = arith.constant dense<0.000000e+00> : vector<16x32xf32>
    %559 = tpu.matmul %558, %557, %cst_317 {dimension_numbers = #tpu.dot_dimension_numbers<[1], [0], [0], [1], [0, 0, 1, 1], [], []>} : vector<16x16xbf16>, vector<16x32xbf16>, vector<16x32xf32> -> vector<16x32xf32>
    %560 = arith.addf %520, %559 : vector<16x32xf32>
    %561 = arith.addf %560, %476 : vector<16x32xf32>
    %562 = vector.extract_strided_slice %478 {offsets = [0, 0], sizes = [1, 32], strides = [1, 1]} : vector<5x32xf32> to vector<1x32xf32>
    %563 = vector.extract_strided_slice %478 {offsets = [1, 0], sizes = [1, 32], strides = [1, 1]} : vector<5x32xf32> to vector<1x32xf32>
    %cst_318 = arith.constant dense<0.000000e+00> : vector<16xf32>
    %564 = vector.multi_reduction <add>, %561, %cst_318 [1] : vector<16x32xf32> to vector<16xf32>
    %565 = vector.shape_cast %564 : vector<16xf32> to vector<16x1xf32>
    %cst_319 = arith.constant 3.200000e+01 : f32
    %566 = vector.broadcast %cst_319 : f32 to vector<16x1xf32>
    %567 = arith.divf %565, %566 : vector<16x1xf32>
    %568 = vector.broadcast %567 : vector<16x1xf32> to vector<16x32xf32>
    %569 = arith.subf %561, %568 : vector<16x32xf32>
    %570 = arith.mulf %569, %569 : vector<16x32xf32>
    %cst_320 = arith.constant dense<0.000000e+00> : vector<16xf32>
    %571 = vector.multi_reduction <add>, %570, %cst_320 [1] : vector<16x32xf32> to vector<16xf32>
    %572 = vector.shape_cast %571 : vector<16xf32> to vector<16x1xf32>
    %cst_321 = arith.constant 3.200000e+01 : f32
    %573 = vector.broadcast %cst_321 : f32 to vector<16x1xf32>
    %574 = arith.divf %572, %573 : vector<16x1xf32>
    %575 = vector.broadcast %567 : vector<16x1xf32> to vector<16x32xf32>
    %576 = arith.subf %561, %575 : vector<16x32xf32>
    %cst_322 = arith.constant 9.99999997E-7 : f32
    %577 = vector.broadcast %cst_322 : f32 to vector<16x1xf32>
    %578 = arith.addf %574, %577 : vector<16x1xf32>
    %579 = math.rsqrt %578 : vector<16x1xf32>
    %580 = vector.broadcast %579 : vector<16x1xf32> to vector<16x32xf32>
    %581 = arith.mulf %576, %580 : vector<16x32xf32>
    %582 = vector.broadcast %562 : vector<1x32xf32> to vector<16x32xf32>
    %583 = arith.mulf %581, %582 : vector<16x32xf32>
    %584 = vector.broadcast %563 : vector<1x32xf32> to vector<16x32xf32>
    %585 = arith.addf %583, %584 : vector<16x32xf32>
    %c1_323 = arith.constant 1 : index
    %c0_324 = arith.constant 0 : index
    %c0_325 = arith.constant 0 : index
    %586 = vector.load %arg12[%c1_323, %c0_324, %c0_325] : memref<2x32x64xbf16, #tpu.memory_space<vmem>>, vector<1x32x64xbf16>
    %587 = vector.shape_cast %586 : vector<1x32x64xbf16> to vector<32x64xbf16>
    %588 = arith.truncf %585 : vector<16x32xf32> to vector<16x32xbf16>
    %cst_326 = arith.constant dense<0.000000e+00> : vector<16x64xf32>
    %589 = tpu.matmul %588, %587, %cst_326 {dimension_numbers = #tpu.dot_dimension_numbers<[1], [0], [0], [1], [0, 0, 1, 1], [], []>} : vector<16x32xbf16>, vector<32x64xbf16>, vector<16x64xf32> -> vector<16x64xf32>
    %c1_327 = arith.constant 1 : index
    %c0_328 = arith.constant 0 : index
    %c0_329 = arith.constant 0 : index
    %590 = vector.load %arg11[%c1_327, %c0_328, %c0_329] : memref<2x1x64xf32, #tpu.memory_space<vmem>>, vector<1x1x64xf32>
    %591 = vector.shape_cast %590 : vector<1x1x64xf32> to vector<1x64xf32>
    %592 = vector.broadcast %591 : vector<1x64xf32> to vector<16x64xf32>
    %593 = arith.addf %589, %592 : vector<16x64xf32>
    %cst_330 = arith.constant 0.000000e+00 : f32
    %594 = vector.broadcast %cst_330 : f32 to vector<16x64xf32>
    %595 = arith.maximumf %593, %594 : vector<16x64xf32>
    %c1_331 = arith.constant 1 : index
    %c0_332 = arith.constant 0 : index
    %c0_333 = arith.constant 0 : index
    %596 = vector.load %arg13[%c1_331, %c0_332, %c0_333] : memref<2x64x32xbf16, #tpu.memory_space<vmem>>, vector<1x64x32xbf16>
    %597 = vector.shape_cast %596 : vector<1x64x32xbf16> to vector<64x32xbf16>
    %598 = arith.truncf %595 : vector<16x64xf32> to vector<16x64xbf16>
    %cst_334 = arith.constant dense<0.000000e+00> : vector<16x32xf32>
    %599 = tpu.matmul %598, %597, %cst_334 {dimension_numbers = #tpu.dot_dimension_numbers<[1], [0], [0], [1], [0, 0, 1, 1], [], []>} : vector<16x64xbf16>, vector<64x32xbf16>, vector<16x32xf32> -> vector<16x32xf32>
    %600 = vector.extract_strided_slice %478 {offsets = [4, 0], sizes = [1, 32], strides = [1, 1]} : vector<5x32xf32> to vector<1x32xf32>
    %601 = vector.broadcast %600 : vector<1x32xf32> to vector<16x32xf32>
    %602 = arith.addf %599, %601 : vector<16x32xf32>
    %603 = arith.addf %602, %585 : vector<16x32xf32>
    %604 = vector.extract_strided_slice %478 {offsets = [2, 0], sizes = [1, 32], strides = [1, 1]} : vector<5x32xf32> to vector<1x32xf32>
    %605 = vector.extract_strided_slice %478 {offsets = [3, 0], sizes = [1, 32], strides = [1, 1]} : vector<5x32xf32> to vector<1x32xf32>
    %cst_335 = arith.constant dense<0.000000e+00> : vector<16xf32>
    %606 = vector.multi_reduction <add>, %603, %cst_335 [1] : vector<16x32xf32> to vector<16xf32>
    %607 = vector.shape_cast %606 : vector<16xf32> to vector<16x1xf32>
    %cst_336 = arith.constant 3.200000e+01 : f32
    %608 = vector.broadcast %cst_336 : f32 to vector<16x1xf32>
    %609 = arith.divf %607, %608 : vector<16x1xf32>
    %610 = vector.broadcast %609 : vector<16x1xf32> to vector<16x32xf32>
    %611 = arith.subf %603, %610 : vector<16x32xf32>
    %612 = arith.mulf %611, %611 : vector<16x32xf32>
    %cst_337 = arith.constant dense<0.000000e+00> : vector<16xf32>
    %613 = vector.multi_reduction <add>, %612, %cst_337 [1] : vector<16x32xf32> to vector<16xf32>
    %614 = vector.shape_cast %613 : vector<16xf32> to vector<16x1xf32>
    %cst_338 = arith.constant 3.200000e+01 : f32
    %615 = vector.broadcast %cst_338 : f32 to vector<16x1xf32>
    %616 = arith.divf %614, %615 : vector<16x1xf32>
    %617 = vector.broadcast %609 : vector<16x1xf32> to vector<16x32xf32>
    %618 = arith.subf %603, %617 : vector<16x32xf32>
    %cst_339 = arith.constant 9.99999997E-7 : f32
    %619 = vector.broadcast %cst_339 : f32 to vector<16x1xf32>
    %620 = arith.addf %616, %619 : vector<16x1xf32>
    %621 = math.rsqrt %620 : vector<16x1xf32>
    %622 = vector.broadcast %621 : vector<16x1xf32> to vector<16x32xf32>
    %623 = arith.mulf %618, %622 : vector<16x32xf32>
    %624 = vector.broadcast %604 : vector<1x32xf32> to vector<16x32xf32>
    %625 = arith.mulf %623, %624 : vector<16x32xf32>
    %626 = vector.broadcast %605 : vector<1x32xf32> to vector<16x32xf32>
    %627 = arith.addf %625, %626 : vector<16x32xf32>
    %c0_340 = arith.constant 0 : index
    %c0_341 = arith.constant 0 : index
    %628 = vector.load %arg27[%c0_340, %c0_341] : memref<32x5xbf16, #tpu.memory_space<vmem>>, vector<32x5xbf16>
    %629 = arith.truncf %627 : vector<16x32xf32> to vector<16x32xbf16>
    %cst_342 = arith.constant dense<0.000000e+00> : vector<16x5xf32>
    %630 = tpu.matmul %629, %628, %cst_342 {dimension_numbers = #tpu.dot_dimension_numbers<[1], [0], [0], [1], [0, 0, 1, 1], [], []>} : vector<16x32xbf16>, vector<32x5xbf16>, vector<16x5xf32> -> vector<16x5xf32>
    %c0_343 = arith.constant 0 : index
    %c0_344 = arith.constant 0 : index
    %631 = vector.load %arg26[%c0_343, %c0_344] : memref<1x5xf32, #tpu.memory_space<vmem>>, vector<1x5xf32>
    %632 = vector.broadcast %631 : vector<1x5xf32> to vector<16x5xf32>
    %633 = arith.addf %630, %632 : vector<16x5xf32>
    %cst_345 = arith.constant 0.000000e+00 : f32
    %634 = vector.broadcast %cst_345 : f32 to vector<16x5xf32>
    %635 = arith.maximumf %633, %634 : vector<16x5xf32>
    %c0_346 = arith.constant 0 : index
    %c0_347 = arith.constant 0 : index
    %636 = vector.load %arg29[%c0_346, %c0_347] : memref<5x5xbf16, #tpu.memory_space<vmem>>, vector<5x5xbf16>
    %637 = arith.truncf %635 : vector<16x5xf32> to vector<16x5xbf16>
    %cst_348 = arith.constant dense<0.000000e+00> : vector<16x5xf32>
    %638 = tpu.matmul %637, %636, %cst_348 {dimension_numbers = #tpu.dot_dimension_numbers<[1], [0], [0], [1], [0, 0, 1, 1], [], []>} : vector<16x5xbf16>, vector<5x5xbf16>, vector<16x5xf32> -> vector<16x5xf32>
    %c0_349 = arith.constant 0 : index
    %c0_350 = arith.constant 0 : index
    %639 = vector.load %arg28[%c0_349, %c0_350] : memref<1x5xf32, #tpu.memory_space<vmem>>, vector<1x5xf32>
    %640 = vector.broadcast %639 : vector<1x5xf32> to vector<16x5xf32>
    %641 = arith.addf %638, %640 : vector<16x5xf32>
    %cst_351 = arith.constant 5.000000e-01 : f32
    %642 = vector.broadcast %cst_351 : f32 to vector<2x8x8xf32>
    %643 = arith.mulf %551, %642 : vector<2x8x8xf32>
    %644 = vector.shape_cast %643 : vector<2x8x8xf32> to vector<16x8xf32>
    %c0_352 = arith.constant 0 : index
    %c0_353 = arith.constant 0 : index
    %645 = vector.load %arg34[%c0_352, %c0_353] : memref<5x5xbf16, #tpu.memory_space<vmem>>, vector<5x5xbf16>
    %646 = arith.truncf %3 : vector<16x5xf32> to vector<16x5xbf16>
    %cst_354 = arith.constant dense<0.000000e+00> : vector<16x5xf32>
    %647 = tpu.matmul %646, %645, %cst_354 {dimension_numbers = #tpu.dot_dimension_numbers<[1], [0], [0], [1], [0, 0, 1, 1], [], []>} : vector<16x5xbf16>, vector<5x5xbf16>, vector<16x5xf32> -> vector<16x5xf32>
    %c0_355 = arith.constant 0 : index
    %c0_356 = arith.constant 0 : index
    %648 = vector.load %arg33[%c0_355, %c0_356] : memref<8x5xbf16, #tpu.memory_space<vmem>>, vector<8x5xbf16>
    %649 = arith.truncf %644 : vector<16x8xf32> to vector<16x8xbf16>
    %cst_357 = arith.constant dense<0.000000e+00> : vector<16x5xf32>
    %650 = tpu.matmul %649, %648, %cst_357 {dimension_numbers = #tpu.dot_dimension_numbers<[1], [0], [0], [1], [0, 0, 1, 1], [], []>} : vector<16x8xbf16>, vector<8x5xbf16>, vector<16x5xf32> -> vector<16x5xf32>
    %651 = arith.addf %647, %650 : vector<16x5xf32>
    %c0_358 = arith.constant 0 : index
    %c0_359 = arith.constant 0 : index
    %652 = vector.load %arg32[%c0_358, %c0_359] : memref<1x5xf32, #tpu.memory_space<vmem>>, vector<1x5xf32>
    %653 = vector.broadcast %652 : vector<1x5xf32> to vector<16x5xf32>
    %654 = arith.addf %651, %653 : vector<16x5xf32>
    %655 = arith.negf %654 : vector<16x5xf32>
    %656 = math.exp %655 : vector<16x5xf32>
    %cst_360 = arith.constant 1.000000e+00 : f32
    %657 = vector.broadcast %cst_360 : f32 to vector<16x5xf32>
    %658 = arith.addf %657, %656 : vector<16x5xf32>
    %659 = arith.divf %657, %658 : vector<16x5xf32>
    %cst_361 = arith.constant 1.000000e+00 : f32
    %660 = vector.broadcast %cst_361 : f32 to vector<16x5xf32>
    %661 = arith.subf %660, %659 : vector<16x5xf32>
    %662 = arith.mulf %661, %641 : vector<16x5xf32>
    %663 = arith.mulf %659, %316 : vector<16x5xf32>
    %664 = arith.addf %662, %663 : vector<16x5xf32>
    %665 = tpu.concatenate %316, %641, %664, %659 in 1 : vector<16x5xf32>, vector<16x5xf32>, vector<16x5xf32>, vector<16x5xf32> -> vector<16x20xf32>
    %666 = vector.shape_cast %665 : vector<16x20xf32> to vector<2x8x20xf32>
    %c0_362 = arith.constant 0 : index
    %c0_363 = arith.constant 0 : index
    %c0_364 = arith.constant 0 : index
    %667 = vector.load %arg35[%c0_362, %c0_363, %c0_364] : memref<2x8x20xf32, #tpu.memory_space<vmem>>, vector<2x8x20xf32>
    tpu.vector_store %arg35[%c0_362, %c0_363, %c0_364], %666 {strides = array<i32>} : memref<2x8x20xf32, #tpu.memory_space<vmem>>, vector<2x8x20xf32>,
    return
  }
  func.func @transform_0(%arg0: i32) -> (i32, i32, i32) {
    %c0_i32 = arith.constant 0 : i32
    %c0_i32_0 = arith.constant 0 : i32
    %c0_i32_1 = arith.constant 0 : i32
    return %arg0, %c0_i32, %c0_i32_0 : i32, i32, i32
  }
  func.func @transform_1(%arg0: i32) -> (i32, i32, i32) {
    %c0_i32 = arith.constant 0 : i32
    %c0_i32_0 = arith.constant 0 : i32
    %c0_i32_1 = arith.constant 0 : i32
    return %arg0, %c0_i32, %c0_i32_0 : i32, i32, i32
  }
  func.func @transform_2(%arg0: i32) -> (i32, i32, i32) {
    %c0_i32 = arith.constant 0 : i32
    %c0_i32_0 = arith.constant 0 : i32
    %c0_i32_1 = arith.constant 0 : i32
    %c0_i32_2 = arith.constant 0 : i32
    return %c0_i32, %c0_i32_0, %c0_i32_1 : i32, i32, i32
  }
  func.func @transform_3(%arg0: i32) -> (i32, i32, i32) {
    %c0_i32 = arith.constant 0 : i32
    %c0_i32_0 = arith.constant 0 : i32
    %c0_i32_1 = arith.constant 0 : i32
    %c0_i32_2 = arith.constant 0 : i32
    return %c0_i32, %c0_i32_0, %c0_i32_1 : i32, i32, i32
  }
  func.func @transform_4(%arg0: i32) -> (i32, i32, i32) {
    %c0_i32 = arith.constant 0 : i32
    %c0_i32_0 = arith.constant 0 : i32
    %c0_i32_1 = arith.constant 0 : i32
    %c0_i32_2 = arith.constant 0 : i32
    return %c0_i32, %c0_i32_0, %c0_i32_1 : i32, i32, i32
  }
  func.func @transform_5(%arg0: i32) -> (i32, i32, i32) {
    %c0_i32 = arith.constant 0 : i32
    %c0_i32_0 = arith.constant 0 : i32
    %c0_i32_1 = arith.constant 0 : i32
    %c0_i32_2 = arith.constant 0 : i32
    return %c0_i32, %c0_i32_0, %c0_i32_1 : i32, i32, i32
  }
  func.func @transform_6(%arg0: i32) -> (i32, i32, i32, i32) {
    %c0_i32 = arith.constant 0 : i32
    %c0_i32_0 = arith.constant 0 : i32
    %c0_i32_1 = arith.constant 0 : i32
    %c0_i32_2 = arith.constant 0 : i32
    %c0_i32_3 = arith.constant 0 : i32
    return %c0_i32, %c0_i32_0, %c0_i32_1, %c0_i32_2 : i32, i32, i32, i32
  }
  func.func @transform_7(%arg0: i32) -> (i32, i32, i32, i32) {
    %c0_i32 = arith.constant 0 : i32
    %c0_i32_0 = arith.constant 0 : i32
    %c0_i32_1 = arith.constant 0 : i32
    %c0_i32_2 = arith.constant 0 : i32
    %c0_i32_3 = arith.constant 0 : i32
    return %c0_i32, %c0_i32_0, %c0_i32_1, %c0_i32_2 : i32, i32, i32, i32
  }
  func.func @transform_8(%arg0: i32) -> (i32, i32, i32, i32) {
    %c0_i32 = arith.constant 0 : i32
    %c0_i32_0 = arith.constant 0 : i32
    %c0_i32_1 = arith.constant 0 : i32
    %c0_i32_2 = arith.constant 0 : i32
    %c0_i32_3 = arith.constant 0 : i32
    return %c0_i32, %c0_i32_0, %c0_i32_1, %c0_i32_2 : i32, i32, i32, i32
  }
  func.func @transform_9(%arg0: i32) -> (i32, i32, i32, i32) {
    %c0_i32 = arith.constant 0 : i32
    %c0_i32_0 = arith.constant 0 : i32
    %c0_i32_1 = arith.constant 0 : i32
    %c0_i32_2 = arith.constant 0 : i32
    %c0_i32_3 = arith.constant 0 : i32
    return %c0_i32, %c0_i32_0, %c0_i32_1, %c0_i32_2 : i32, i32, i32, i32
  }
  func.func @transform_10(%arg0: i32) -> (i32, i32, i32) {
    %c0_i32 = arith.constant 0 : i32
    %c0_i32_0 = arith.constant 0 : i32
    %c0_i32_1 = arith.constant 0 : i32
    %c0_i32_2 = arith.constant 0 : i32
    return %c0_i32, %c0_i32_0, %c0_i32_1 : i32, i32, i32
  }
  func.func @transform_11(%arg0: i32) -> (i32, i32, i32) {
    %c0_i32 = arith.constant 0 : i32
    %c0_i32_0 = arith.constant 0 : i32
    %c0_i32_1 = arith.constant 0 : i32
    %c0_i32_2 = arith.constant 0 : i32
    return %c0_i32, %c0_i32_0, %c0_i32_1 : i32, i32, i32
  }
  func.func @transform_12(%arg0: i32) -> (i32, i32, i32) {
    %c0_i32 = arith.constant 0 : i32
    %c0_i32_0 = arith.constant 0 : i32
    %c0_i32_1 = arith.constant 0 : i32
    %c0_i32_2 = arith.constant 0 : i32
    return %c0_i32, %c0_i32_0, %c0_i32_1 : i32, i32, i32
  }
  func.func @transform_13(%arg0: i32) -> (i32, i32, i32) {
    %c0_i32 = arith.constant 0 : i32
    %c0_i32_0 = arith.constant 0 : i32
    %c0_i32_1 = arith.constant 0 : i32
    %c0_i32_2 = arith.constant 0 : i32
    return %c0_i32, %c0_i32_0, %c0_i32_1 : i32, i32, i32
  }
  func.func @transform_14(%arg0: i32) -> (i32, i32, i32, i32) {
    %c0_i32 = arith.constant 0 : i32
    %c0_i32_0 = arith.constant 0 : i32
    %c0_i32_1 = arith.constant 0 : i32
    %c0_i32_2 = arith.constant 0 : i32
    %c0_i32_3 = arith.constant 0 : i32
    return %c0_i32, %c0_i32_0, %c0_i32_1, %c0_i32_2 : i32, i32, i32, i32
  }
  func.func @transform_15(%arg0: i32) -> (i32, i32, i32, i32) {
    %c0_i32 = arith.constant 0 : i32
    %c0_i32_0 = arith.constant 0 : i32
    %c0_i32_1 = arith.constant 0 : i32
    %c0_i32_2 = arith.constant 0 : i32
    %c0_i32_3 = arith.constant 0 : i32
    return %c0_i32, %c0_i32_0, %c0_i32_1, %c0_i32_2 : i32, i32, i32, i32
  }
  func.func @transform_16(%arg0: i32) -> (i32, i32, i32, i32) {
    %c0_i32 = arith.constant 0 : i32
    %c0_i32_0 = arith.constant 0 : i32
    %c0_i32_1 = arith.constant 0 : i32
    %c0_i32_2 = arith.constant 0 : i32
    %c0_i32_3 = arith.constant 0 : i32
    return %c0_i32, %c0_i32_0, %c0_i32_1, %c0_i32_2 : i32, i32, i32, i32
  }
  func.func @transform_17(%arg0: i32) -> (i32, i32, i32, i32) {
    %c0_i32 = arith.constant 0 : i32
    %c0_i32_0 = arith.constant 0 : i32
    %c0_i32_1 = arith.constant 0 : i32
    %c0_i32_2 = arith.constant 0 : i32
    %c0_i32_3 = arith.constant 0 : i32
    return %c0_i32, %c0_i32_0, %c0_i32_1, %c0_i32_2 : i32, i32, i32, i32
  }
  func.func @transform_18(%arg0: i32) -> (i32, i32) {
    %c0_i32 = arith.constant 0 : i32
    %c0_i32_0 = arith.constant 0 : i32
    %c0_i32_1 = arith.constant 0 : i32
    return %c0_i32, %c0_i32_0 : i32, i32
  }
  func.func @transform_19(%arg0: i32) -> (i32, i32) {
    %c0_i32 = arith.constant 0 : i32
    %c0_i32_0 = arith.constant 0 : i32
    %c0_i32_1 = arith.constant 0 : i32
    return %c0_i32, %c0_i32_0 : i32, i32
  }
  func.func @transform_20(%arg0: i32) -> (i32, i32) {
    %c0_i32 = arith.constant 0 : i32
    %c0_i32_0 = arith.constant 0 : i32
    %c0_i32_1 = arith.constant 0 : i32
    return %c0_i32, %c0_i32_0 : i32, i32
  }
  func.func @transform_21(%arg0: i32) -> (i32, i32) {
    %c0_i32 = arith.constant 0 : i32
    %c0_i32_0 = arith.constant 0 : i32
    %c0_i32_1 = arith.constant 0 : i32
    return %c0_i32, %c0_i32_0 : i32, i32
  }
  func.func @transform_22(%arg0: i32) -> (i32, i32) {
    %c0_i32 = arith.constant 0 : i32
    %c0_i32_0 = arith.constant 0 : i32
    %c0_i32_1 = arith.constant 0 : i32
    return %c0_i32, %c0_i32_0 : i32, i32
  }
  func.func @transform_23(%arg0: i32) -> (i32, i32) {
    %c0_i32 = arith.constant 0 : i32
    %c0_i32_0 = arith.constant 0 : i32
    %c0_i32_1 = arith.constant 0 : i32
    return %c0_i32, %c0_i32_0 : i32, i32
  }
  func.func @transform_24(%arg0: i32) -> (i32, i32) {
    %c0_i32 = arith.constant 0 : i32
    %c0_i32_0 = arith.constant 0 : i32
    %c0_i32_1 = arith.constant 0 : i32
    return %c0_i32, %c0_i32_0 : i32, i32
  }
  func.func @transform_25(%arg0: i32) -> (i32, i32) {
    %c0_i32 = arith.constant 0 : i32
    %c0_i32_0 = arith.constant 0 : i32
    %c0_i32_1 = arith.constant 0 : i32
    return %c0_i32, %c0_i32_0 : i32, i32
  }
  func.func @transform_26(%arg0: i32) -> (i32, i32) {
    %c0_i32 = arith.constant 0 : i32
    %c0_i32_0 = arith.constant 0 : i32
    %c0_i32_1 = arith.constant 0 : i32
    return %c0_i32, %c0_i32_0 : i32, i32
  }
  func.func @transform_27(%arg0: i32) -> (i32, i32) {
    %c0_i32 = arith.constant 0 : i32
    %c0_i32_0 = arith.constant 0 : i32
    %c0_i32_1 = arith.constant 0 : i32
    return %c0_i32, %c0_i32_0 : i32, i32
  }
  func.func @transform_28(%arg0: i32) -> (i32, i32) {
    %c0_i32 = arith.constant 0 : i32
    %c0_i32_0 = arith.constant 0 : i32
    %c0_i32_1 = arith.constant 0 : i32
    return %c0_i32, %c0_i32_0 : i32, i32
  }
  func.func @transform_29(%arg0: i32) -> (i32, i32) {
    %c0_i32 = arith.constant 0 : i32
    %c0_i32_0 = arith.constant 0 : i32
    %c0_i32_1 = arith.constant 0 : i32
    return %c0_i32, %c0_i32_0 : i32, i32
  }
  func.func @transform_30(%arg0: i32) -> (i32, i32) {
    %c0_i32 = arith.constant 0 : i32
    %c0_i32_0 = arith.constant 0 : i32
    %c0_i32_1 = arith.constant 0 : i32
    return %c0_i32, %c0_i32_0 : i32, i32
  }
  func.func @transform_31(%arg0: i32) -> (i32, i32) {
    %c0_i32 = arith.constant 0 : i32
    %c0_i32_0 = arith.constant 0 : i32
    %c0_i32_1 = arith.constant 0 : i32
    return %c0_i32, %c0_i32_0 : i32, i32
  }
  func.func @transform_32(%arg0: i32) -> (i32, i32) {
    %c0_i32 = arith.constant 0 : i32
    %c0_i32_0 = arith.constant 0 : i32
    %c0_i32_1 = arith.constant 0 : i32
    return %c0_i32, %c0_i32_0 : i32, i32
  }
  func.func @transform_33(%arg0: i32) -> (i32, i32) {
    %c0_i32 = arith.constant 0 : i32
    %c0_i32_0 = arith.constant 0 : i32
    %c0_i32_1 = arith.constant 0 : i32
    return %c0_i32, %c0_i32_0 : i32, i32
  }
  func.func @transform_34(%arg0: i32) -> (i32, i32, i32) {
    %c0_i32 = arith.constant 0 : i32
    %c0_i32_0 = arith.constant 0 : i32
    %c0_i32_1 = arith.constant 0 : i32
    return %arg0, %c0_i32, %c0_i32_0 : i32, i32, i32
  }
  func.func @transform_35(%arg0: i32) -> (i32, i32, i32, i32) {
    %c0_i32 = arith.constant 0 : i32
    %c0_i32_0 = arith.constant 0 : i32
    %c0_i32_1 = arith.constant 0 : i32
    %c0_i32_2 = arith.constant 0 : i32
    return %arg0, %c0_i32, %c0_i32_0, %c0_i32_1 : i32, i32, i32, i32
  }
  func.func @transform_36(%arg0: i32) -> (i32, i32, i32, i32) {
    %c0_i32 = arith.constant 0 : i32
    %c0_i32_0 = arith.constant 0 : i32
    %c0_i32_1 = arith.constant 0 : i32
    %c0_i32_2 = arith.constant 0 : i32
    return %arg0, %c0_i32, %c0_i32_0, %c0_i32_1 : i32, i32, i32, i32
  }
}

</mosaic_0001>

<llo_original>
// kernel: _backbone_saits_forward.1
$region0: #{_backbone_saits_forward.1}
  #allocation0 [shape = 'u32[]', space=smem, size = 0x4, offset = 0x4, fixed_abs, tag = 'smem constant byte address 0x4 - core index']
  #allocation1 [shape = 'u32[144,128]{1,0:T(1,128)}', space=vmem, size = 0x12000, scoped, tag = 'internal scratch']
  %s0 = inlined_call_operand.smem [shape: u32[37], index: -1, kind: input, shape index: {}]
  %s1 = sld [smem:[%s0]]
  %s2 = scalar_lea.smem %s0, 1
  %s3 = sld [smem:[%s2]]
  %s4 = scalar_lea.smem %s0, 2
  %s5 = sld [smem:[%s4]]
  %s6 = scalar_lea.smem %s0, 3
  %s7 = sld [smem:[%s6]]
  %s8 = scalar_lea.smem %s0, 4
  %s9 = sld [smem:[%s8]]
  %s10 = scalar_lea.smem %s0, 5
  %s11 = sld [smem:[%s10]]
  %s12 = scalar_lea.smem %s0, 6
  %s13 = sld [smem:[%s12]]
  %s14 = scalar_lea.smem %s0, 7
  %s15 = sld [smem:[%s14]]
  %s16 = scalar_lea.smem %s0, 8
  %s17 = sld [smem:[%s16]]
  %s18 = scalar_lea.smem %s0, 9
  %s19 = sld [smem:[%s18]]
  %s20 = scalar_lea.smem %s0, 10
  %s21 = sld [smem:[%s20]]
  %s22 = scalar_lea.smem %s0, 11
  %s23 = sld [smem:[%s22]]
  %s24 = scalar_lea.smem %s0, 12
  %s25 = sld [smem:[%s24]]
  %s26 = scalar_lea.smem %s0, 13
  %s27 = sld [smem:[%s26]]
  %s28 = scalar_lea.smem %s0, 14
  %s29 = sld [smem:[%s28]]
  %s30 = scalar_lea.smem %s0, 15
  %s31 = sld [smem:[%s30]]
  %s32 = scalar_lea.smem %s0, 16
  %s33 = sld [smem:[%s32]]
  %s34 = scalar_lea.smem %s0, 17
  %s35 = sld [smem:[%s34]]
  %s36 = scalar_lea.smem %s0, 18
  %s37 = sld [smem:[%s36]]
  %s38 = scalar_lea.smem %s0, 19
  %s39 = sld [smem:[%s38]]
  %s40 = scalar_lea.smem %s0, 20
  %s41 = sld [smem:[%s40]]
  %s42 = scalar_lea.smem %s0, 21
  %s43 = sld [smem:[%s42]]
  %s44 = scalar_lea.smem %s0, 22
  %s45 = sld [smem:[%s44]]
  %s46 = scalar_lea.smem %s0, 23
  %s47 = sld [smem:[%s46]]
  %s48 = scalar_lea.smem %s0, 24
  %s49 = sld [smem:[%s48]]
  %s50 = scalar_lea.smem %s0, 25
  %s51 = sld [smem:[%s50]]
  %s52 = scalar_lea.smem %s0, 26
  %s53 = sld [smem:[%s52]]
  %s54 = scalar_lea.smem %s0, 27
  %s55 = sld [smem:[%s54]]
  %s56 = scalar_lea.smem %s0, 28
  %s57 = sld [smem:[%s56]]
  %s58 = scalar_lea.smem %s0, 29
  %s59 = sld [smem:[%s58]]
  %s60 = scalar_lea.smem %s0, 30
  %s61 = sld [smem:[%s60]]
  %s62 = scalar_lea.smem %s0, 31
  %s63 = sld [smem:[%s62]]
  %s64 = scalar_lea.smem %s0, 32
  %s65 = sld [smem:[%s64]]
  %s66 = scalar_lea.smem %s0, 33
  %s67 = sld [smem:[%s66]]
  %s68 = scalar_lea.smem %s0, 34
  %s69 = sld [smem:[%s68]]
  %s70 = scalar_lea.smem %s0, 35
  %s71 = sld [smem:[%s70]]
  %s72 = scalar_lea.smem %s0, 36
  %s73 = sld [smem:[%s72]]
  %74 = xla_tuple %s69, %s71, %s73
  %s75 = sld [smem:[#allocation0]]
  $region185: #{_backbone_saits_forward.1} parent=0
    _
  %s77 = ssub.s32 1, %s75
  %s78 = scalar_select 0, %s77, %s75
  $region1: #{_backbone_saits_forward.1} parent=0
    #allocation2 [shape = 'u8[32768]{0}', space=vmem, size = 0x8000, scoped, tag = 'output window, operand 1']
    #allocation3 [shape = 's32[2]{0}', space=sflag, size = 0x8, scoped, tag = 'scoped memory for _backbone_saits_forward.1']
    #allocation4 [shape = 'u8[32768]{0}', space=vmem, size = 0x8000, scoped, tag = 'output window, operand 2']
    #allocation5 [shape = 's32[2]{0}', space=sflag, size = 0x8, scoped, tag = 'scoped memory for _backbone_saits_forward.1']
    %79 = vsyncpa [#allocation3], 0
    %s80 = scalar_lea.sflag [#allocation3], 1
    %81 = vsyncpa %s80, 0
    %82 = vsyncpa [#allocation5], 0
    %s83 = scalar_lea.sflag [#allocation5], 1
    %84 = vsyncpa %s83, 0
    loop: start=0, step=1, limit=4
    $region2: #{_backbone_saits_forward.1} parent=1 // loop_pre_header
      _
    $region3: #{_backbone_saits_forward.1} parent=1 // loop_header
      %s86 = sphi 0, %s90
      %p87 = scmp.ge.s32.totalorder %s86, 4
      %s96 = sphi 0, %s98
      %s99 = sphi 0, %s96
      %s100 = sphi 0, %s99
      %s116 = sphi 0, %s100
      %s122 = sphi 0, %s124
      %s125 = sphi 0, %s122
      %s126 = sphi 0, %s125
      %s142 = sphi 0, %s126
      %s146 = sphi 0, %s146
      %s148 = sphi 0, %s146
      %s149 = sphi 0, %s148
      %s163 = sphi 0, %s149
      %s167 = sphi 0, %s167
      %s169 = sphi 0, %s167
      %s170 = sphi 0, %s169
      %s184 = sphi 0, %s170
      %s188 = sphi 0, %s188
      %s190 = sphi 0, %s188
      %s191 = sphi 0, %s190
      %s205 = sphi 0, %s191
      %s209 = sphi 0, %s209
      %s211 = sphi 0, %s209
      %s212 = sphi 0, %s211
      %s226 = sphi 0, %s212
      %s230 = sphi 0, %s230
      %s232 = sphi 0, %s230
      %s233 = sphi 0, %s232
      %s247 = sphi 0, %s233
      %s251 = sphi 0, %s251
      %s253 = sphi 0, %s251
      %s254 = sphi 0, %s253
      %s268 = sphi 0, %s254
      %s272 = sphi 0, %s272
      %s274 = sphi 0, %s272
      %s275 = sphi 0, %s274
      %s289 = sphi 0, %s275
      %s293 = sphi 0, %s293
      %s295 = sphi 0, %s293
      %s296 = sphi 0, %s295
      %s310 = sphi 0, %s296
      %s314 = sphi 0, %s314
      %s316 = sphi 0, %s314
      %s317 = sphi 0, %s316
      %s331 = sphi 0, %s317
      %s335 = sphi 0, %s335
      %s337 = sphi 0, %s335
      %s338 = sphi 0, %s337
      %s352 = sphi 0, %s338
      %s356 = sphi 0, %s356
      %s358 = sphi 0, %s356
      %s359 = sphi 0, %s358
      %s373 = sphi 0, %s359
      %s377 = sphi 0, %s377
      %s379 = sphi 0, %s377
      %s380 = sphi 0, %s379
      %s394 = sphi 0, %s380
      %s398 = sphi 0, %s398
      %s400 = sphi 0, %s398
      %s401 = sphi 0, %s400
      %s415 = sphi 0, %s401
      %s419 = sphi 0, %s419
      %s421 = sphi 0, %s419
      %s422 = sphi 0, %s421
      %s436 = sphi 0, %s422
      %s440 = sphi 0, %s440
      %s442 = sphi 0, %s440
      %s443 = sphi 0, %s442
      %s457 = sphi 0, %s443
      %s461 = sphi 0, %s461
      %s463 = sphi 0, %s461
      %s464 = sphi 0, %s463
      %s478 = sphi 0, %s464
      %s482 = sphi 0, %s482
      %s484 = sphi 0, %s482
      %s485 = sphi 0, %s484
      %s499 = sphi 0, %s485
      %s503 = sphi 0, %s503
      %s505 = sphi 0, %s503
      %s506 = sphi 0, %s505
      %s520 = sphi 0, %s506
      %s524 = sphi 0, %s524
      %s526 = sphi 0, %s524
      %s527 = sphi 0, %s526
      %s541 = sphi 0, %s527
      %s545 = sphi 0, %s545
      %s547 = sphi 0, %s545
      %s548 = sphi 0, %s547
      %s562 = sphi 0, %s548
      %s566 = sphi 0, %s566
      %s568 = sphi 0, %s566
      %s569 = sphi 0, %s568
      %s583 = sphi 0, %s569
      %s587 = sphi 0, %s587
      %s589 = sphi 0, %s587
      %s590 = sphi 0, %s589
      %s604 = sphi 0, %s590
      %s608 = sphi 0, %s608
      %s610 = sphi 0, %s608
      %s611 = sphi 0, %s610
      %s625 = sphi 0, %s611
      %s629 = sphi 0, %s629
      %s631 = sphi 0, %s629
      %s632 = sphi 0, %s631
      %s646 = sphi 0, %s632
      %s650 = sphi 0, %s650
      %s652 = sphi 0, %s650
      %s653 = sphi 0, %s652
      %s667 = sphi 0, %s653
      %s671 = sphi 0, %s671
      %s673 = sphi 0, %s671
      %s674 = sphi 0, %s673
      %s688 = sphi 0, %s674
      %s692 = sphi 0, %s692
      %s694 = sphi 0, %s692
      %s695 = sphi 0, %s694
      %s709 = sphi 0, %s695
      %s713 = sphi 0, %s713
      %s715 = sphi 0, %s713
      %s716 = sphi 0, %s715
      %s730 = sphi 0, %s716
      %s734 = sphi 0, %s734
      %s736 = sphi 0, %s734
      %s737 = sphi 0, %s736
      %s751 = sphi 0, %s737
      %s755 = sphi 0, %s755
      %s757 = sphi 0, %s755
      %s758 = sphi 0, %s757
      %s772 = sphi 0, %s758
      %s776 = sphi 0, %s776
      %s778 = sphi 0, %s776
      %s779 = sphi 0, %s778
      %s793 = sphi 0, %s779
      %s797 = sphi 0, %s797
      %s799 = sphi 0, %s797
      %s800 = sphi 0, %s799
      %s814 = sphi 0, %s800
      %s820 = sphi 0, %s822
      %s823 = sphi 0, %s820
      %s824 = sphi 0, %s823
      %s840 = sphi 0, %s824
      %s846 = sphi 0, %s848
      %s849 = sphi 0, %s846
      %s850 = sphi 0, %s849
      %s866 = sphi 0, %s850
      %s872 = sphi 0, %s874
      %s875 = sphi 0, %s872
      %s876 = sphi 0, %s875
      %s892 = sphi 0, %s876
    $region4: #{_backbone_saits_forward.1} parent=1 // loop_header_branch
      %89 = sbr.rel (%p87) target = $region8
    $region5: #{_backbone_saits_forward.1} parent=1 // loop_body
      %s91 = ssub.s32 %s86, 1
      %s92 = ssub.s32 %s86, 2
      %s93 = sadd.s32 %s86, 1
      %s94 = ssub.s32 %s86, %s93
      %p95 = scmp.eq.s32.totalorder %s94, 0
      %s97 = sadd.s32 %s96, 1
      %s98 = scalar_select %p95, %s96, %s97
      %p101 = pneg %p95
      %p102 = scmp.eq.s32.totalorder %s86, 1
      %p103 = por %p101, %p102
      %p104 = scmp.ne.s32.totalorder %s96, %s99
      %p105 = scmp.eq.s32.totalorder %s86, 0
      %p106 = por %p104, %p105
      %p107 = scmp.ne.s32.totalorder %s96, %s99
      %p108 = scmp.eq.s32.totalorder %s91, 1
      %p109 = por %p107, %p108
      %p110 = scmp.ne.s32.totalorder %s99, %s100
      %p111 = scmp.eq.s32.totalorder %s91, 0
      %p112 = por %p110, %p111
      %p113 = scmp.ne.s32.totalorder %s99, %s100
      %p114 = scmp.eq.s32.totalorder %s92, 1
      %p115 = por %p113, %p114
      %p117 = scmp.ne.s32.totalorder %s100, %s116
      %p118 = scmp.eq.s32.totalorder %s92, 0
      %p119 = por %p117, %p118
      %s120 = ssub.s32 %s86, %s93
      %p121 = scmp.eq.s32.totalorder %s120, 0
      %s123 = sadd.s32 %s122, 1
      %s124 = scalar_select %p121, %s122, %s123
      %p127 = pneg %p121
      %p128 = scmp.eq.s32.totalorder %s86, 1
      %p129 = por %p127, %p128
      %p130 = scmp.ne.s32.totalorder %s122, %s125
      %p131 = scmp.eq.s32.totalorder %s86, 0
      %p132 = por %p130, %p131
      %p133 = scmp.ne.s32.totalorder %s122, %s125
      %p134 = scmp.eq.s32.totalorder %s91, 1
      %p135 = por %p133, %p134
      %p136 = scmp.ne.s32.totalorder %s125, %s126
      %p137 = scmp.eq.s32.totalorder %s91, 0
      %p138 = por %p136, %p137
      %p139 = scmp.ne.s32.totalorder %s125, %s126
      %p140 = scmp.eq.s32.totalorder %s92, 1
      %p141 = por %p139, %p140
      %p143 = scmp.ne.s32.totalorder %s126, %s142
      %p144 = scmp.eq.s32.totalorder %s92, 0
      %p145 = por %p143, %p144
      %s147 = sadd.s32 %s146, 1
      %p150 = scmp.eq.s32.totalorder %s86, 1
      %p151 = scmp.ne.s32.totalorder %s146, %s148
      %p152 = scmp.eq.s32.totalorder %s86, 0
      %p153 = por %p151, %p152
      %p154 = scmp.ne.s32.totalorder %s146, %s148
      %p155 = scmp.eq.s32.totalorder %s91, 1
      %p156 = por %p154, %p155
      %p157 = scmp.ne.s32.totalorder %s148, %s149
      %p158 = scmp.eq.s32.totalorder %s91, 0
      %p159 = por %p157, %p158
      %p160 = scmp.ne.s32.totalorder %s148, %s149
      %p161 = scmp.eq.s32.totalorder %s92, 1
      %p162 = por %p160, %p161
      %p164 = scmp.ne.s32.totalorder %s149, %s163
      %p165 = scmp.eq.s32.totalorder %s92, 0
      %p166 = por %p164, %p165
      %s168 = sadd.s32 %s167, 1
      %p171 = scmp.eq.s32.totalorder %s86, 1
      %p172 = scmp.ne.s32.totalorder %s167, %s169
      %p173 = scmp.eq.s32.totalorder %s86, 0
      %p174 = por %p172, %p173
      %p175 = scmp.ne.s32.totalorder %s167, %s169
      %p176 = scmp.eq.s32.totalorder %s91, 1
      %p177 = por %p175, %p176
      %p178 = scmp.ne.s32.totalorder %s169, %s170
      %p179 = scmp.eq.s32.totalorder %s91, 0
      %p180 = por %p178, %p179
      %p181 = scmp.ne.s32.totalorder %s169, %s170
      %p182 = scmp.eq.s32.totalorder %s92, 1
      %p183 = por %p181, %p182
      %p185 = scmp.ne.s32.totalorder %s170, %s184
      %p186 = scmp.eq.s32.totalorder %s92, 0
      %p187 = por %p185, %p186
      %s189 = sadd.s32 %s188, 1
      %p192 = scmp.eq.s32.totalorder %s86, 1
      %p193 = scmp.ne.s32.totalorder %s188, %s190
      %p194 = scmp.eq.s32.totalorder %s86, 0
      %p195 = por %p193, %p194
      %p196 = scmp.ne.s32.totalorder %s188, %s190
      %p197 = scmp.eq.s32.totalorder %s91, 1
      %p198 = por %p196, %p197
      %p199 = scmp.ne.s32.totalorder %s190, %s191
      %p200 = scmp.eq.s32.totalorder %s91, 0
      %p201 = por %p199, %p200
      %p202 = scmp.ne.s32.totalorder %s190, %s191
      %p203 = scmp.eq.s32.totalorder %s92, 1
      %p204 = por %p202, %p203
      %p206 = scmp.ne.s32.totalorder %s191, %s205
      %p207 = scmp.eq.s32.totalorder %s92, 0
      %p208 = por %p206, %p207
      %s210 = sadd.s32 %s209, 1
      %p213 = scmp.eq.s32.totalorder %s86, 1
      %p214 = scmp.ne.s32.totalorder %s209, %s211
      %p215 = scmp.eq.s32.totalorder %s86, 0
      %p216 = por %p214, %p215
      %p217 = scmp.ne.s32.totalorder %s209, %s211
      %p218 = scmp.eq.s32.totalorder %s91, 1
      %p219 = por %p217, %p218
      %p220 = scmp.ne.s32.totalorder %s211, %s212
      %p221 = scmp.eq.s32.totalorder %s91, 0
      %p222 = por %p220, %p221
      %p223 = scmp.ne.s32.totalorder %s211, %s212
      %p224 = scmp.eq.s32.totalorder %s92, 1
      %p225 = por %p223, %p224
      %p227 = scmp.ne.s32.totalorder %s212, %s226
      %p228 = scmp.eq.s32.totalorder %s92, 0
      %p229 = por %p227, %p228
      %s231 = sadd.s32 %s230, 1
      %p234 = scmp.eq.s32.totalorder %s86, 1
      %p235 = scmp.ne.s32.totalorder %s230, %s232
      %p236 = scmp.eq.s32.totalorder %s86, 0
      %p237 = por %p235, %p236
      %p238 = scmp.ne.s32.totalorder %s230, %s232
      %p239 = scmp.eq.s32.totalorder %s91, 1
      %p240 = por %p238, %p239
      %p241 = scmp.ne.s32.totalorder %s232, %s233
      %p242 = scmp.eq.s32.totalorder %s91, 0
      %p243 = por %p241, %p242
      %p244 = scmp.ne.s32.totalorder %s232, %s233
      %p245 = scmp.eq.s32.totalorder %s92, 1
      %p246 = por %p244, %p245
      %p248 = scmp.ne.s32.totalorder %s233, %s247
      %p249 = scmp.eq.s32.totalorder %s92, 0
      %p250 = por %p248, %p249
      %s252 = sadd.s32 %s251, 1
      %p255 = scmp.eq.s32.totalorder %s86, 1
      %p256 = scmp.ne.s32.totalorder %s251, %s253
      %p257 = scmp.eq.s32.totalorder %s86, 0
      %p258 = por %p256, %p257
      %p259 = scmp.ne.s32.totalorder %s251, %s253
      %p260 = scmp.eq.s32.totalorder %s91, 1
      %p261 = por %p259, %p260
      %p262 = scmp.ne.s32.totalorder %s253, %s254
      %p263 = scmp.eq.s32.totalorder %s91, 0
      %p264 = por %p262, %p263
      %p265 = scmp.ne.s32.totalorder %s253, %s254
      %p266 = scmp.eq.s32.totalorder %s92, 1
      %p267 = por %p265, %p266
      %p269 = scmp.ne.s32.totalorder %s254, %s268
      %p270 = scmp.eq.s32.totalorder %s92, 0
      %p271 = por %p269, %p270
      %s273 = sadd.s32 %s272, 1
      %p276 = scmp.eq.s32.totalorder %s86, 1
      %p277 = scmp.ne.s32.totalorder %s272, %s274
      %p278 = scmp.eq.s32.totalorder %s86, 0
      %p279 = por %p277, %p278
      %p280 = scmp.ne.s32.totalorder %s272, %s274
      %p281 = scmp.eq.s32.totalorder %s91, 1
      %p282 = por %p280, %p281
      %p283 = scmp.ne.s32.totalorder %s274, %s275
      %p284 = scmp.eq.s32.totalorder %s91, 0
      %p285 = por %p283, %p284
      %p286 = scmp.ne.s32.totalorder %s274, %s275
      %p287 = scmp.eq.s32.totalorder %s92, 1
      %p288 = por %p286, %p287
      %p290 = scmp.ne.s32.totalorder %s275, %s289
      %p291 = scmp.eq.s32.totalorder %s92, 0
      %p292 = por %p290, %p291
      %s294 = sadd.s32 %s293, 1
      %p297 = scmp.eq.s32.totalorder %s86, 1
      %p298 = scmp.ne.s32.totalorder %s293, %s295
      %p299 = scmp.eq.s32.totalorder %s86, 0
      %p300 = por %p298, %p299
      %p301 = scmp.ne.s32.totalorder %s293, %s295
      %p302 = scmp.eq.s32.totalorder %s91, 1
      %p303 = por %p301, %p302
      %p304 = scmp.ne.s32.totalorder %s295, %s296
      %p305 = scmp.eq.s32.totalorder %s91, 0
      %p306 = por %p304, %p305
      %p307 = scmp.ne.s32.totalorder %s295, %s296
      %p308 = scmp.eq.s32.totalorder %s92, 1
      %p309 = por %p307, %p308
      %p311 = scmp.ne.s32.totalorder %s296, %s310
      %p312 = scmp.eq.s32.totalorder %s92, 0
      %p313 = por %p311, %p312
      %s315 = sadd.s32 %s314, 1
      %p318 = scmp.eq.s32.totalorder %s86, 1
      %p319 = scmp.ne.s32.totalorder %s314, %s316
      %p320 = scmp.eq.s32.totalorder %s86, 0
      %p321 = por %p319, %p320
      %p322 = scmp.ne.s32.totalorder %s314, %s316
      %p323 = scmp.eq.s32.totalorder %s91, 1
      %p324 = por %p322, %p323
      %p325 = scmp.ne.s32.totalorder %s316, %s317
      %p326 = scmp.eq.s32.totalorder %s91, 0
      %p327 = por %p325, %p326
      %p328 = scmp.ne.s32.totalorder %s316, %s317
      %p329 = scmp.eq.s32.totalorder %s92, 1
      %p330 = por %p328, %p329
      %p332 = scmp.ne.s32.totalorder %s317, %s331
      %p333 = scmp.eq.s32.totalorder %s92, 0
      %p334 = por %p332, %p333
      %s336 = sadd.s32 %s335, 1
      %p339 = scmp.eq.s32.totalorder %s86, 1
      %p340 = scmp.ne.s32.totalorder %s335, %s337
      %p341 = scmp.eq.s32.totalorder %s86, 0
      %p342 = por %p340, %p341
      %p343 = scmp.ne.s32.totalorder %s335, %s337
      %p344 = scmp.eq.s32.totalorder %s91, 1
      %p345 = por %p343, %p344
      %p346 = scmp.ne.s32.totalorder %s337, %s338
      %p347 = scmp.eq.s32.totalorder %s91, 0
      %p348 = por %p346, %p347
      %p349 = scmp.ne.s32.totalorder %s337, %s338
      %p350 = scmp.eq.s32.totalorder %s92, 1
      %p351 = por %p349, %p350
      %p353 = scmp.ne.s32.totalorder %s338, %s352
      %p354 = scmp.eq.s32.totalorder %s92, 0
      %p355 = por %p353, %p354
      %s357 = sadd.s32 %s356, 1
      %p360 = scmp.eq.s32.totalorder %s86, 1
      %p361 = scmp.ne.s32.totalorder %s356, %s358
      %p362 = scmp.eq.s32.totalorder %s86, 0
      %p363 = por %p361, %p362
      %p364 = scmp.ne.s32.totalorder %s356, %s358
      %p365 = scmp.eq.s32.totalorder %s91, 1
      %p366 = por %p364, %p365
      %p367 = scmp.ne.s32.totalorder %s358, %s359
      %p368 = scmp.eq.s32.totalorder %s91, 0
      %p369 = por %p367, %p368
      %p370 = scmp.ne.s32.totalorder %s358, %s359
      %p371 = scmp.eq.s32.totalorder %s92, 1
      %p372 = por %p370, %p371
      %p374 = scmp.ne.s32.totalorder %s359, %s373
      %p375 = scmp.eq.s32.totalorder %s92, 0
      %p376 = por %p374, %p375
      %s378 = sadd.s32 %s377, 1
      %p381 = scmp.eq.s32.totalorder %s86, 1
      %p382 = scmp.ne.s32.totalorder %s377, %s379
      %p383 = scmp.eq.s32.totalorder %s86, 0
      %p384 = por %p382, %p383
      %p385 = scmp.ne.s32.totalorder %s377, %s379
      %p386 = scmp.eq.s32.totalorder %s91, 1
      %p387 = por %p385, %p386
      %p388 = scmp.ne.s32.totalorder %s379, %s380
      %p389 = scmp.eq.s32.totalorder %s91, 0
      %p390 = por %p388, %p389
      %p391 = scmp.ne.s32.totalorder %s379, %s380
      %p392 = scmp.eq.s32.totalorder %s92, 1
      %p393 = por %p391, %p392
      %p395 = scmp.ne.s32.totalorder %s380, %s394
      %p396 = scmp.eq.s32.totalorder %s92, 0
      %p397 = por %p395, %p396
      %s399 = sadd.s32 %s398, 1
      %p402 = scmp.eq.s32.totalorder %s86, 1
      %p403 = scmp.ne.s32.totalorder %s398, %s400
      %p404 = scmp.eq.s32.totalorder %s86, 0
      %p405 = por %p403, %p404
      %p406 = scmp.ne.s32.totalorder %s398, %s400
      %p407 = scmp.eq.s32.totalorder %s91, 1
      %p408 = por %p406, %p407
      %p409 = scmp.ne.s32.totalorder %s400, %s401
      %p410 = scmp.eq.s32.totalorder %s91, 0
      %p411 = por %p409, %p410
      %p412 = scmp.ne.s32.totalorder %s400, %s401
      %p413 = scmp.eq.s32.totalorder %s92, 1
      %p414 = por %p412, %p413
      %p416 = scmp.ne.s32.totalorder %s401, %s415
      %p417 = scmp.eq.s32.totalorder %s92, 0
      %p418 = por %p416, %p417
      %s420 = sadd.s32 %s419, 1
      %p423 = scmp.eq.s32.totalorder %s86, 1
      %p424 = scmp.ne.s32.totalorder %s419, %s421
      %p425 = scmp.eq.s32.totalorder %s86, 0
      %p426 = por %p424, %p425
      %p427 = scmp.ne.s32.totalorder %s419, %s421
      %p428 = scmp.eq.s32.totalorder %s91, 1
      %p429 = por %p427, %p428
      %p430 = scmp.ne.s32.totalorder %s421, %s422
      %p431 = scmp.eq.s32.totalorder %s91, 0
      %p432 = por %p430, %p431
      %p433 = scmp.ne.s32.totalorder %s421, %s422
      %p434 = scmp.eq.s32.totalorder %s92, 1
      %p435 = por %p433, %p434
      %p437 = scmp.ne.s32.totalorder %s422, %s436
      %p438 = scmp.eq.s32.totalorder %s92, 0
      %p439 = por %p437, %p438
      %s441 = sadd.s32 %s440, 1
      %p444 = scmp.eq.s32.totalorder %s86, 1
      %p445 = scmp.ne.s32.totalorder %s440, %s442
      %p446 = scmp.eq.s32.totalorder %s86, 0
      %p447 = por %p445, %p446
      %p448 = scmp.ne.s32.totalorder %s440, %s442
      %p449 = scmp.eq.s32.totalorder %s91, 1
      %p450 = por %p448, %p449
      %p451 = scmp.ne.s32.totalorder %s442, %s443
      %p452 = scmp.eq.s32.totalorder %s91, 0
      %p453 = por %p451, %p452
      %p454 = scmp.ne.s32.totalorder %s442, %s443
      %p455 = scmp.eq.s32.totalorder %s92, 1
      %p456 = por %p454, %p455
      %p458 = scmp.ne.s32.totalorder %s443, %s457
      %p459 = scmp.eq.s32.totalorder %s92, 0
      %p460 = por %p458, %p459
      %s462 = sadd.s32 %s461, 1
      %p465 = scmp.eq.s32.totalorder %s86, 1
      %p466 = scmp.ne.s32.totalorder %s461, %s463
      %p467 = scmp.eq.s32.totalorder %s86, 0
      %p468 = por %p466, %p467
      %p469 = scmp.ne.s32.totalorder %s461, %s463
      %p470 = scmp.eq.s32.totalorder %s91, 1
      %p471 = por %p469, %p470
      %p472 = scmp.ne.s32.totalorder %s463, %s464
      %p473 = scmp.eq.s32.totalorder %s91, 0
      %p474 = por %p472, %p473
      %p475 = scmp.ne.s32.totalorder %s463, %s464
      %p476 = scmp.eq.s32.totalorder %s92, 1
      %p477 = por %p475, %p476
      %p479 = scmp.ne.s32.totalorder %s464, %s478
      %p480 = scmp.eq.s32.totalorder %s92, 0
      %p481 = por %p479, %p480
      %s483 = sadd.s32 %s482, 1
      %p486 = scmp.eq.s32.totalorder %s86, 1
      %p487 = scmp.ne.s32.totalorder %s482, %s484
      %p488 = scmp.eq.s32.totalorder %s86, 0
      %p489 = por %p487, %p488
      %p490 = scmp.ne.s32.totalorder %s482, %s484
      %p491 = scmp.eq.s32.totalorder %s91, 1
      %p492 = por %p490, %p491
      %p493 = scmp.ne.s32.totalorder %s484, %s485
      %p494 = scmp.eq.s32.totalorder %s91, 0
      %p495 = por %p493, %p494
      %p496 = scmp.ne.s32.totalorder %s484, %s485
      %p497 = scmp.eq.s32.totalorder %s92, 1
      %p498 = por %p496, %p497
      %p500 = scmp.ne.s32.totalorder %s485, %s499
      %p501 = scmp.eq.s32.totalorder %s92, 0
      %p502 = por %p500, %p501
      %s504 = sadd.s32 %s503, 1
      %p507 = scmp.eq.s32.totalorder %s86, 1
      %p508 = scmp.ne.s32.totalorder %s503, %s505
      %p509 = scmp.eq.s32.totalorder %s86, 0
      %p510 = por %p508, %p509
      %p511 = scmp.ne.s32.totalorder %s503, %s505
      %p512 = scmp.eq.s32.totalorder %s91, 1
      %p513 = por %p511, %p512
      %p514 = scmp.ne.s32.totalorder %s505, %s506
      %p515 = scmp.eq.s32.totalorder %s91, 0
      %p516 = por %p514, %p515
      %p517 = scmp.ne.s32.totalorder %s505, %s506
      %p518 = scmp.eq.s32.totalorder %s92, 1
      %p519 = por %p517, %p518
      %p521 = scmp.ne.s32.totalorder %s506, %s520
      %p522 = scmp.eq.s32.totalorder %s92, 0
      %p523 = por %p521, %p522
      %s525 = sadd.s32 %s524, 1
      %p528 = scmp.eq.s32.totalorder %s86, 1
      %p529 = scmp.ne.s32.totalorder %s524, %s526
      %p530 = scmp.eq.s32.totalorder %s86, 0
      %p531 = por %p529, %p530
      %p532 = scmp.ne.s32.totalorder %s524, %s526
      %p533 = scmp.eq.s32.totalorder %s91, 1
      %p534 = por %p532, %p533
      %p535 = scmp.ne.s32.totalorder %s526, %s527
      %p536 = scmp.eq.s32.totalorder %s91, 0
      %p537 = por %p535, %p536
      %p538 = scmp.ne.s32.totalorder %s526, %s527
      %p539 = scmp.eq.s32.totalorder %s92, 1
      %p540 = por %p538, %p539
      %p542 = scmp.ne.s32.totalorder %s527, %s541
      %p543 = scmp.eq.s32.totalorder %s92, 0
      %p544 = por %p542, %p543
      %s546 = sadd.s32 %s545, 1
      %p549 = scmp.eq.s32.totalorder %s86, 1
      %p550 = scmp.ne.s32.totalorder %s545, %s547
      %p551 = scmp.eq.s32.totalorder %s86, 0
      %p552 = por %p550, %p551
      %p553 = scmp.ne.s32.totalorder %s545, %s547
      %p554 = scmp.eq.s32.totalorder %s91, 1
      %p555 = por %p553, %p554
      %p556 = scmp.ne.s32.totalorder %s547, %s548
      %p557 = scmp.eq.s32.totalorder %s91, 0
      %p558 = por %p556, %p557
      %p559 = scmp.ne.s32.totalorder %s547, %s548
      %p560 = scmp.eq.s32.totalorder %s92, 1
      %p561 = por %p559, %p560
      %p563 = scmp.ne.s32.totalorder %s548, %s562
      %p564 = scmp.eq.s32.totalorder %s92, 0
      %p565 = por %p563, %p564
      %s567 = sadd.s32 %s566, 1
      %p570 = scmp.eq.s32.totalorder %s86, 1
      %p571 = scmp.ne.s32.totalorder %s566, %s568
      %p572 = scmp.eq.s32.totalorder %s86, 0
      %p573 = por %p571, %p572
      %p574 = scmp.ne.s32.totalorder %s566, %s568
      %p575 = scmp.eq.s32.totalorder %s91, 1
      %p576 = por %p574, %p575
      %p577 = scmp.ne.s32.totalorder %s568, %s569
      %p578 = scmp.eq.s32.totalorder %s91, 0
      %p579 = por %p577, %p578
      %p580 = scmp.ne.s32.totalorder %s568, %s569
      %p581 = scmp.eq.s32.totalorder %s92, 1
      %p582 = por %p580, %p581
      %p584 = scmp.ne.s32.totalorder %s569, %s583
      %p585 = scmp.eq.s32.totalorder %s92, 0
      %p586 = por %p584, %p585
      %s588 = sadd.s32 %s587, 1
      %p591 = scmp.eq.s32.totalorder %s86, 1
      %p592 = scmp.ne.s32.totalorder %s587, %s589
      %p593 = scmp.eq.s32.totalorder %s86, 0
      %p594 = por %p592, %p593
      %p595 = scmp.ne.s32.totalorder %s587, %s589
      %p596 = scmp.eq.s32.totalorder %s91, 1
      %p597 = por %p595, %p596
      %p598 = scmp.ne.s32.totalorder %s589, %s590
      %p599 = scmp.eq.s32.totalorder %s91, 0
      %p600 = por %p598, %p599
      %p601 = scmp.ne.s32.totalorder %s589, %s590
      %p602 = scmp.eq.s32.totalorder %s92, 1
      %p603 = por %p601, %p602
      %p605 = scmp.ne.s32.totalorder %s590, %s604
      %p606 = scmp.eq.s32.totalorder %s92, 0
      %p607 = por %p605, %p606
      %s609 = sadd.s32 %s608, 1
      %p612 = scmp.eq.s32.totalorder %s86, 1
      %p613 = scmp.ne.s32.totalorder %s608, %s610
      %p614 = scmp.eq.s32.totalorder %s86, 0
      %p615 = por %p613, %p614
      %p616 = scmp.ne.s32.totalorder %s608, %s610
      %p617 = scmp.eq.s32.totalorder %s91, 1
      %p618 = por %p616, %p617
      %p619 = scmp.ne.s32.totalorder %s610, %s611
      %p620 = scmp.eq.s32.totalorder %s91, 0
      %p621 = por %p619, %p620
      %p622 = scmp.ne.s32.totalorder %s610, %s611
      %p623 = scmp.eq.s32.totalorder %s92, 1
      %p624 = por %p622, %p623
      %p626 = scmp.ne.s32.totalorder %s611, %s625
      %p627 = scmp.eq.s32.totalorder %s92, 0
      %p628 = por %p626, %p627
      %s630 = sadd.s32 %s629, 1
      %p633 = scmp.eq.s32.totalorder %s86, 1
      %p634 = scmp.ne.s32.totalorder %s629, %s631
      %p635 = scmp.eq.s32.totalorder %s86, 0
      %p636 = por %p634, %p635
      %p637 = scmp.ne.s32.totalorder %s629, %s631
      %p638 = scmp.eq.s32.totalorder %s91, 1
      %p639 = por %p637, %p638
      %p640 = scmp.ne.s32.totalorder %s631, %s632
      %p641 = scmp.eq.s32.totalorder %s91, 0
      %p642 = por %p640, %p641
      %p643 = scmp.ne.s32.totalorder %s631, %s632
      %p644 = scmp.eq.s32.totalorder %s92, 1
      %p645 = por %p643, %p644
      %p647 = scmp.ne.s32.totalorder %s632, %s646
      %p648 = scmp.eq.s32.totalorder %s92, 0
      %p649 = por %p647, %p648
      %s651 = sadd.s32 %s650, 1
      %p654 = scmp.eq.s32.totalorder %s86, 1
      %p655 = scmp.ne.s32.totalorder %s650, %s652
      %p656 = scmp.eq.s32.totalorder %s86, 0
      %p657 = por %p655, %p656
      %p658 = scmp.ne.s32.totalorder %s650, %s652
      %p659 = scmp.eq.s32.totalorder %s91, 1
      %p660 = por %p658, %p659
      %p661 = scmp.ne.s32.totalorder %s652, %s653
      %p662 = scmp.eq.s32.totalorder %s91, 0
      %p663 = por %p661, %p662
      %p664 = scmp.ne.s32.totalorder %s652, %s653
      %p665 = scmp.eq.s32.totalorder %s92, 1
      %p666 = por %p664, %p665
      %p668 = scmp.ne.s32.totalorder %s653, %s667
      %p669 = scmp.eq.s32.totalorder %s92, 0
      %p670 = por %p668, %p669
      %s672 = sadd.s32 %s671, 1
      %p675 = scmp.eq.s32.totalorder %s86, 1
      %p676 = scmp.ne.s32.totalorder %s671, %s673
      %p677 = scmp.eq.s32.totalorder %s86, 0
      %p678 = por %p676, %p677
      %p679 = scmp.ne.s32.totalorder %s671, %s673
      %p680 = scmp.eq.s32.totalorder %s91, 1
      %p681 = por %p679, %p680
      %p682 = scmp.ne.s32.totalorder %s673, %s674
      %p683 = scmp.eq.s32.totalorder %s91, 0
      %p684 = por %p682, %p683
      %p685 = scmp.ne.s32.totalorder %s673, %s674
      %p686 = scmp.eq.s32.totalorder %s92, 1
      %p687 = por %p685, %p686
      %p689 = scmp.ne.s32.totalorder %s674, %s688
      %p690 = scmp.eq.s32.totalorder %s92, 0
      %p691 = por %p689, %p690
      %s693 = sadd.s32 %s692, 1
      %p696 = scmp.eq.s32.totalorder %s86, 1
      %p697 = scmp.ne.s32.totalorder %s692, %s694
      %p698 = scmp.eq.s32.totalorder %s86, 0
      %p699 = por %p697, %p698
      %p700 = scmp.ne.s32.totalorder %s692, %s694
      %p701 = scmp.eq.s32.totalorder %s91, 1
      %p702 = por %p700, %p701
      %p703 = scmp.ne.s32.totalorder %s694, %s695
      %p704 = scmp.eq.s32.totalorder %s91, 0
      %p705 = por %p703, %p704
      %p706 = scmp.ne.s32.totalorder %s694, %s695
      %p707 = scmp.eq.s32.totalorder %s92, 1
      %p708 = por %p706, %p707
      %p710 = scmp.ne.s32.totalorder %s695, %s709
      %p711 = scmp.eq.s32.totalorder %s92, 0
      %p712 = por %p710, %p711
      %s714 = sadd.s32 %s713, 1
      %p717 = scmp.eq.s32.totalorder %s86, 1
      %p718 = scmp.ne.s32.totalorder %s713, %s715
      %p719 = scmp.eq.s32.totalorder %s86, 0
      %p720 = por %p718, %p719
      %p721 = scmp.ne.s32.totalorder %s713, %s715
      %p722 = scmp.eq.s32.totalorder %s91, 1
      %p723 = por %p721, %p722
      %p724 = scmp.ne.s32.totalorder %s715, %s716
      %p725 = scmp.eq.s32.totalorder %s91, 0
      %p726 = por %p724, %p725
      %p727 = scmp.ne.s32.totalorder %s715, %s716
      %p728 = scmp.eq.s32.totalorder %s92, 1
      %p729 = por %p727, %p728
      %p731 = scmp.ne.s32.totalorder %s716, %s730
      %p732 = scmp.eq.s32.totalorder %s92, 0
      %p733 = por %p731, %p732
      %s735 = sadd.s32 %s734, 1
      %p738 = scmp.eq.s32.totalorder %s86, 1
      %p739 = scmp.ne.s32.totalorder %s734, %s736
      %p740 = scmp.eq.s32.totalorder %s86, 0
      %p741 = por %p739, %p740
      %p742 = scmp.ne.s32.totalorder %s734, %s736
      %p743 = scmp.eq.s32.totalorder %s91, 1
      %p744 = por %p742, %p743
      %p745 = scmp.ne.s32.totalorder %s736, %s737
      %p746 = scmp.eq.s32.totalorder %s91, 0
      %p747 = por %p745, %p746
      %p748 = scmp.ne.s32.totalorder %s736, %s737
      %p749 = scmp.eq.s32.totalorder %s92, 1
      %p750 = por %p748, %p749
      %p752 = scmp.ne.s32.totalorder %s737, %s751
      %p753 = scmp.eq.s32.totalorder %s92, 0
      %p754 = por %p752, %p753
      %s756 = sadd.s32 %s755, 1
      %p759 = scmp.eq.s32.totalorder %s86, 1
      %p760 = scmp.ne.s32.totalorder %s755, %s757
      %p761 = scmp.eq.s32.totalorder %s86, 0
      %p762 = por %p760, %p761
      %p763 = scmp.ne.s32.totalorder %s755, %s757
      %p764 = scmp.eq.s32.totalorder %s91, 1
      %p765 = por %p763, %p764
      %p766 = scmp.ne.s32.totalorder %s757, %s758
      %p767 = scmp.eq.s32.totalorder %s91, 0
      %p768 = por %p766, %p767
      %p769 = scmp.ne.s32.totalorder %s757, %s758
      %p770 = scmp.eq.s32.totalorder %s92, 1
      %p771 = por %p769, %p770
      %p773 = scmp.ne.s32.totalorder %s758, %s772
      %p774 = scmp.eq.s32.totalorder %s92, 0
      %p775 = por %p773, %p774
      %s777 = sadd.s32 %s776, 1
      %p780 = scmp.eq.s32.totalorder %s86, 1
      %p781 = scmp.ne.s32.totalorder %s776, %s778
      %p782 = scmp.eq.s32.totalorder %s86, 0
      %p783 = por %p781, %p782
      %p784 = scmp.ne.s32.totalorder %s776, %s778
      %p785 = scmp.eq.s32.totalorder %s91, 1
      %p786 = por %p784, %p785
      %p787 = scmp.ne.s32.totalorder %s778, %s779
      %p788 = scmp.eq.s32.totalorder %s91, 0
      %p789 = por %p787, %p788
      %p790 = scmp.ne.s32.totalorder %s778, %s779
      %p791 = scmp.eq.s32.totalorder %s92, 1
      %p792 = por %p790, %p791
      %p794 = scmp.ne.s32.totalorder %s779, %s793
      %p795 = scmp.eq.s32.totalorder %s92, 0
      %p796 = por %p794, %p795
      %s798 = sadd.s32 %s797, 1
      %p801 = scmp.eq.s32.totalorder %s86, 1
      %p802 = scmp.ne.s32.totalorder %s797, %s799
      %p803 = scmp.eq.s32.totalorder %s86, 0
      %p804 = por %p802, %p803
      %p805 = scmp.ne.s32.totalorder %s797, %s799
      %p806 = scmp.eq.s32.totalorder %s91, 1
      %p807 = por %p805, %p806
      %p808 = scmp.ne.s32.totalorder %s799, %s800
      %p809 = scmp.eq.s32.totalorder %s91, 0
      %p810 = por %p808, %p809
      %p811 = scmp.ne.s32.totalorder %s799, %s800
      %p812 = scmp.eq.s32.totalorder %s92, 1
      %p813 = por %p811, %p812
      %p815 = scmp.ne.s32.totalorder %s800, %s814
      %p816 = scmp.eq.s32.totalorder %s92, 0
      %p817 = por %p815, %p816
      %s818 = ssub.s32 %s86, %s93
      %p819 = scmp.eq.s32.totalorder %s818, 0
      %s821 = sadd.s32 %s820, 1
      %s822 = scalar_select %p819, %s820, %s821
      %p825 = pneg %p819
      %p826 = scmp.eq.s32.totalorder %s86, 1
      %p827 = por %p825, %p826
      %p828 = scmp.ne.s32.totalorder %s820, %s823
      %p829 = scmp.eq.s32.totalorder %s86, 0
      %p830 = por %p828, %p829
      %p831 = scmp.ne.s32.totalorder %s820, %s823
      %p832 = scmp.eq.s32.totalorder %s91, 1
      %p833 = por %p831, %p832
      %p834 = scmp.ne.s32.totalorder %s823, %s824
      %p835 = scmp.eq.s32.totalorder %s91, 0
      %p836 = por %p834, %p835
      %p837 = scmp.ne.s32.totalorder %s823, %s824
      %p838 = scmp.eq.s32.totalorder %s92, 1
      %p839 = por %p837, %p838
      %p841 = scmp.ne.s32.totalorder %s824, %s840
      %p842 = scmp.eq.s32.totalorder %s92, 0
      %p843 = por %p841, %p842
      %s844 = ssub.s32 %s86, %s93
      %p845 = scmp.eq.s32.totalorder %s844, 0
      %s847 = sadd.s32 %s846, 1
      %s848 = scalar_select %p845, %s846, %s847
      %p851 = pneg %p845
      %p852 = scmp.eq.s32.totalorder %s86, 1
      %p853 = por %p851, %p852
      %p854 = scmp.ne.s32.totalorder %s846, %s849
      %p855 = scmp.eq.s32.totalorder %s86, 0
      %p856 = por %p854, %p855
      %p857 = scmp.ne.s32.totalorder %s846, %s849
      %p858 = scmp.eq.s32.totalorder %s91, 1
      %p859 = por %p857, %p858
      %p860 = scmp.ne.s32.totalorder %s849, %s850
      %p861 = scmp.eq.s32.totalorder %s91, 0
      %p862 = por %p860, %p861
      %p863 = scmp.ne.s32.totalorder %s849, %s850
      %p864 = scmp.eq.s32.totalorder %s92, 1
      %p865 = por %p863, %p864
      %p867 = scmp.ne.s32.totalorder %s850, %s866
      %p868 = scmp.eq.s32.totalorder %s92, 0
      %p869 = por %p867, %p868
      %s870 = ssub.s32 %s86, %s93
      %p871 = scmp.eq.s32.totalorder %s870, 0
      %s873 = sadd.s32 %s872, 1
      %s874 = scalar_select %p871, %s872, %s873
      %p877 = pneg %p871
      %p878 = scmp.eq.s32.totalorder %s86, 1
      %p879 = por %p877, %p878
      %p880 = scmp.ne.s32.totalorder %s872, %s875
      %p881 = scmp.eq.s32.totalorder %s86, 0
      %p882 = por %p880, %p881
      %p883 = scmp.ne.s32.totalorder %s872, %s875
      %p884 = scmp.eq.s32.totalorder %s91, 1
      %p885 = por %p883, %p884
      %p886 = scmp.ne.s32.totalorder %s875, %s876
      %p887 = scmp.eq.s32.totalorder %s91, 0
      %p888 = por %p886, %p887
      %p889 = scmp.ne.s32.totalorder %s875, %s876
      %p890 = scmp.eq.s32.totalorder %s92, 1
      %p891 = por %p889, %p890
      %p893 = scmp.ne.s32.totalorder %s876, %s892
      %p894 = scmp.eq.s32.totalorder %s92, 0
      %p895 = por %p893, %p894
      %p896 = scmp.le.s32.totalorder 1, %s86
      %p897 = scmp.lt.s32.totalorder %s86, 3
      %p898 = pnand %p896, %p897
      %p899 = pneg %p898
      // Predicated region
      $region9: #{_backbone_saits_forward.1} parent=5 // pred_check
        _
      $region10: #{_backbone_saits_forward.1} parent=5 // pred_check_branch
        %901 = sbr.rel (%p898) target = $region12
      $region11: #{_backbone_saits_forward.1} parent=5 // pred_region
        %s902 = ssub.s32 %s86, 1
        // Predicated region
        $region13: #{_backbone_saits_forward.1} parent=11 // pred_check
          %p903 = pneg %p159
        $region14: #{_backbone_saits_forward.1} parent=11 // pred_check_branch
          %905 = sbr.rel (%p903) target = $region16
        $region15: #{_backbone_saits_forward.1} parent=11 // pred_region
          _
        $region16: #{_backbone_saits_forward.1} parent=11 // pred_fallthru
          _
        // Predicated region
        $region17: #{_backbone_saits_forward.1} parent=11 // pred_check
          %p906 = pneg %p180
        $region18: #{_backbone_saits_forward.1} parent=11 // pred_check_branch
          %908 = sbr.rel (%p906) target = $region20
        $region19: #{_backbone_saits_forward.1} parent=11 // pred_region
          _
        $region20: #{_backbone_saits_forward.1} parent=11 // pred_fallthru
          _
        // Predicated region
        $region21: #{_backbone_saits_forward.1} parent=11 // pred_check
          %p909 = pneg %p201
        $region22: #{_backbone_saits_forward.1} parent=11 // pred_check_branch
          %911 = sbr.rel (%p909) target = $region24
        $region23: #{_backbone_saits_forward.1} parent=11 // pred_region
          _
        $region24: #{_backbone_saits_forward.1} parent=11 // pred_fallthru
          _
        // Predicated region
        $region25: #{_backbone_saits_forward.1} parent=11 // pred_check
          %p912 = pneg %p222
        $region26: #{_backbone_saits_forward.1} parent=11 // pred_check_branch
          %914 = sbr.rel (%p912) target = $region28
        $region27: #{_backbone_saits_forward.1} parent=11 // pred_region
          _
        $region28: #{_backbone_saits_forward.1} parent=11 // pred_fallthru
          _
        // Predicated region
        $region29: #{_backbone_saits_forward.1} parent=11 // pred_check
          %p915 = pneg %p243
        $region30: #{_backbone_saits_forward.1} parent=11 // pred_check_branch
          %917 = sbr.rel (%p915) target = $region32
        $region31: #{_backbone_saits_forward.1} parent=11 // pred_region
          _
        $region32: #{_backbone_saits_forward.1} parent=11 // pred_fallthru
          _
        // Predicated region
        $region33: #{_backbone_saits_forward.1} parent=11 // pred_check
          %p918 = pneg %p264
        $region34: #{_backbone_saits_forward.1} parent=11 // pred_check_branch
          %920 = sbr.rel (%p918) target = $region36
        $region35: #{_backbone_saits_forward.1} parent=11 // pred_region
          _
        $region36: #{_backbone_saits_forward.1} parent=11 // pred_fallthru
          _
        // Predicated region
        $region37: #{_backbone_saits_forward.1} parent=11 // pred_check
          %p921 = pneg %p285
        $region38: #{_backbone_saits_forward.1} parent=11 // pred_check_branch
          %923 = sbr.rel (%p921) target = $region40
        $region39: #{_backbone_saits_forward.1} parent=11 // pred_region
          _
        $region40: #{_backbone_saits_forward.1} parent=11 // pred_fallthru
          _
        // Predicated region
        $region41: #{_backbone_saits_forward.1} parent=11 // pred_check
          %p924 = pneg %p306
        $region42: #{_backbone_saits_forward.1} parent=11 // pred_check_branch
          %926 = sbr.rel (%p924) target = $region44
        $region43: #{_backbone_saits_forward.1} parent=11 // pred_region
          _
        $region44: #{_backbone_saits_forward.1} parent=11 // pred_fallthru
          _
        // Predicated region
        $region45: #{_backbone_saits_forward.1} parent=11 // pred_check
          %p927 = pneg %p327
        $region46: #{_backbone_saits_forward.1} parent=11 // pred_check_branch
          %929 = sbr.rel (%p927) target = $region48
        $region47: #{_backbone_saits_forward.1} parent=11 // pred_region
          _
        $region48: #{_backbone_saits_forward.1} parent=11 // pred_fallthru
          _
        // Predicated region
        $region49: #{_backbone_saits_forward.1} parent=11 // pred_check
          %p930 = pneg %p348
        $region50: #{_backbone_saits_forward.1} parent=11 // pred_check_branch
          %932 = sbr.rel (%p930) target = $region52
        $region51: #{_backbone_saits_forward.1} parent=11 // pred_region
          _
        $region52: #{_backbone_saits_forward.1} parent=11 // pred_fallthru
          _
        // Predicated region
        $region53: #{_backbone_saits_forward.1} parent=11 // pred_check
          %p933 = pneg %p369
        $region54: #{_backbone_saits_forward.1} parent=11 // pred_check_branch
          %935 = sbr.rel (%p933) target = $region56
        $region55: #{_backbone_saits_forward.1} parent=11 // pred_region
          _
        $region56: #{_backbone_saits_forward.1} parent=11 // pred_fallthru
          _
        // Predicated region
        $region57: #{_backbone_saits_forward.1} parent=11 // pred_check
          %p936 = pneg %p390
        $region58: #{_backbone_saits_forward.1} parent=11 // pred_check_branch
          %938 = sbr.rel (%p936) target = $region60
        $region59: #{_backbone_saits_forward.1} parent=11 // pred_region
          _
        $region60: #{_backbone_saits_forward.1} parent=11 // pred_fallthru
          _
        // Predicated region
        $region61: #{_backbone_saits_forward.1} parent=11 // pred_check
          %p939 = pneg %p411
        $region62: #{_backbone_saits_forward.1} parent=11 // pred_check_branch
          %941 = sbr.rel (%p939) target = $region64
        $region63: #{_backbone_saits_forward.1} parent=11 // pred_region
          _
        $region64: #{_backbone_saits_forward.1} parent=11 // pred_fallthru
          _
        // Predicated region
        $region65: #{_backbone_saits_forward.1} parent=11 // pred_check
          %p942 = pneg %p432
        $region66: #{_backbone_saits_forward.1} parent=11 // pred_check_branch
          %944 = sbr.rel (%p942) target = $region68
        $region67: #{_backbone_saits_forward.1} parent=11 // pred_region
          _
        $region68: #{_backbone_saits_forward.1} parent=11 // pred_fallthru
          _
        // Predicated region
        $region69: #{_backbone_saits_forward.1} parent=11 // pred_check
          %p945 = pneg %p453
        $region70: #{_backbone_saits_forward.1} parent=11 // pred_check_branch
          %947 = sbr.rel (%p945) target = $region72
        $region71: #{_backbone_saits_forward.1} parent=11 // pred_region
          _
        $region72: #{_backbone_saits_forward.1} parent=11 // pred_fallthru
          _
        // Predicated region
        $region73: #{_backbone_saits_forward.1} parent=11 // pred_check
          %p948 = pneg %p474
        $region74: #{_backbone_saits_forward.1} parent=11 // pred_check_branch
          %950 = sbr.rel (%p948) target = $region76
        $region75: #{_backbone_saits_forward.1} parent=11 // pred_region
          _
        $region76: #{_backbone_saits_forward.1} parent=11 // pred_fallthru
          _
        // Predicated region
        $region77: #{_backbone_saits_forward.1} parent=11 // pred_check
          %p951 = pneg %p495
        $region78: #{_backbone_saits_forward.1} parent=11 // pred_check_branch
          %953 = sbr.rel (%p951) target = $region80
        $region79: #{_backbone_saits_forward.1} parent=11 // pred_region
          _
        $region80: #{_backbone_saits_forward.1} parent=11 // pred_fallthru
          _
        // Predicated region
        $region81: #{_backbone_saits_forward.1} parent=11 // pred_check
          %p954 = pneg %p516
        $region82: #{_backbone_saits_forward.1} parent=11 // pred_check_branch
          %956 = sbr.rel (%p954) target = $region84
        $region83: #{_backbone_saits_forward.1} parent=11 // pred_region
          _
        $region84: #{_backbone_saits_forward.1} parent=11 // pred_fallthru
          _
        // Predicated region
        $region85: #{_backbone_saits_forward.1} parent=11 // pred_check
          %p957 = pneg %p537
        $region86: #{_backbone_saits_forward.1} parent=11 // pred_check_branch
          %959 = sbr.rel (%p957) target = $region88
        $region87: #{_backbone_saits_forward.1} parent=11 // pred_region
          _
        $region88: #{_backbone_saits_forward.1} parent=11 // pred_fallthru
          _
        // Predicated region
        $region89: #{_backbone_saits_forward.1} parent=11 // pred_check
          %p960 = pneg %p558
        $region90: #{_backbone_saits_forward.1} parent=11 // pred_check_branch
          %962 = sbr.rel (%p960) target = $region92
        $region91: #{_backbone_saits_forward.1} parent=11 // pred_region
          _
        $region92: #{_backbone_saits_forward.1} parent=11 // pred_fallthru
          _
        // Predicated region
        $region93: #{_backbone_saits_forward.1} parent=11 // pred_check
          %p963 = pneg %p579
        $region94: #{_backbone_saits_forward.1} parent=11 // pred_check_branch
          %965 = sbr.rel (%p963) target = $region96
        $region95: #{_backbone_saits_forward.1} parent=11 // pred_region
          _
        $region96: #{_backbone_saits_forward.1} parent=11 // pred_fallthru
          _
        // Predicated region
        $region97: #{_backbone_saits_forward.1} parent=11 // pred_check
          %p966 = pneg %p600
        $region98: #{_backbone_saits_forward.1} parent=11 // pred_check_branch
          %968 = sbr.rel (%p966) target = $region100
        $region99: #{_backbone_saits_forward.1} parent=11 // pred_region
          _
        $region100: #{_backbone_saits_forward.1} parent=11 // pred_fallthru
          _
        // Predicated region
        $region101: #{_backbone_saits_forward.1} parent=11 // pred_check
          %p969 = pneg %p621
        $region102: #{_backbone_saits_forward.1} parent=11 // pred_check_branch
          %971 = sbr.rel (%p969) target = $region104
        $region103: #{_backbone_saits_forward.1} parent=11 // pred_region
          _
        $region104: #{_backbone_saits_forward.1} parent=11 // pred_fallthru
          _
        // Predicated region
        $region105: #{_backbone_saits_forward.1} parent=11 // pred_check
          %p972 = pneg %p642
        $region106: #{_backbone_saits_forward.1} parent=11 // pred_check_branch
          %974 = sbr.rel (%p972) target = $region108
        $region107: #{_backbone_saits_forward.1} parent=11 // pred_region
          _
        $region108: #{_backbone_saits_forward.1} parent=11 // pred_fallthru
          _
        // Predicated region
        $region109: #{_backbone_saits_forward.1} parent=11 // pred_check
          %p975 = pneg %p663
        $region110: #{_backbone_saits_forward.1} parent=11 // pred_check_branch
          %977 = sbr.rel (%p975) target = $region112
        $region111: #{_backbone_saits_forward.1} parent=11 // pred_region
          _
        $region112: #{_backbone_saits_forward.1} parent=11 // pred_fallthru
          _
        // Predicated region
        $region113: #{_backbone_saits_forward.1} parent=11 // pred_check
          %p978 = pneg %p684
        $region114: #{_backbone_saits_forward.1} parent=11 // pred_check_branch
          %980 = sbr.rel (%p978) target = $region116
        $region115: #{_backbone_saits_forward.1} parent=11 // pred_region
          _
        $region116: #{_backbone_saits_forward.1} parent=11 // pred_fallthru
          _
        // Predicated region
        $region117: #{_backbone_saits_forward.1} parent=11 // pred_check
          %p981 = pneg %p705
        $region118: #{_backbone_saits_forward.1} parent=11 // pred_check_branch
          %983 = sbr.rel (%p981) target = $region120
        $region119: #{_backbone_saits_forward.1} parent=11 // pred_region
          _
        $region120: #{_backbone_saits_forward.1} parent=11 // pred_fallthru
          _
        // Predicated region
        $region121: #{_backbone_saits_forward.1} parent=11 // pred_check
          %p984 = pneg %p726
        $region122: #{_backbone_saits_forward.1} parent=11 // pred_check_branch
          %986 = sbr.rel (%p984) target = $region124
        $region123: #{_backbone_saits_forward.1} parent=11 // pred_region
          _
        $region124: #{_backbone_saits_forward.1} parent=11 // pred_fallthru
          _
        // Predicated region
        $region125: #{_backbone_saits_forward.1} parent=11 // pred_check
          %p987 = pneg %p747
        $region126: #{_backbone_saits_forward.1} parent=11 // pred_check_branch
          %989 = sbr.rel (%p987) target = $region128
        $region127: #{_backbone_saits_forward.1} parent=11 // pred_region
          _
        $region128: #{_backbone_saits_forward.1} parent=11 // pred_fallthru
          _
        // Predicated region
        $region129: #{_backbone_saits_forward.1} parent=11 // pred_check
          %p990 = pneg %p768
        $region130: #{_backbone_saits_forward.1} parent=11 // pred_check_branch
          %992 = sbr.rel (%p990) target = $region132
        $region131: #{_backbone_saits_forward.1} parent=11 // pred_region
          _
        $region132: #{_backbone_saits_forward.1} parent=11 // pred_fallthru
          _
        // Predicated region
        $region133: #{_backbone_saits_forward.1} parent=11 // pred_check
          %p993 = pneg %p789
        $region134: #{_backbone_saits_forward.1} parent=11 // pred_check_branch
          %995 = sbr.rel (%p993) target = $region136
        $region135: #{_backbone_saits_forward.1} parent=11 // pred_region
          _
        $region136: #{_backbone_saits_forward.1} parent=11 // pred_fallthru
          _
        // Predicated region
        $region137: #{_backbone_saits_forward.1} parent=11 // pred_check
          %p996 = pneg %p810
        $region138: #{_backbone_saits_forward.1} parent=11 // pred_check_branch
          %998 = sbr.rel (%p996) target = $region140
        $region139: #{_backbone_saits_forward.1} parent=11 // pred_region
          _
        $region140: #{_backbone_saits_forward.1} parent=11 // pred_fallthru
          _
      $region12: #{_backbone_saits_forward.1} parent=5 // pred_fallthru
        _
      %p999 = scmp.lt.s32.totalorder %s86, 2
      // Predicated region
      $region141: #{_backbone_saits_forward.1} parent=5 // pred_check
        %p1000 = pneg %p999
      $region142: #{_backbone_saits_forward.1} parent=5 // pred_check_branch
        %1002 = sbr.rel (%p1000) target = $region144
      $region143: #{_backbone_saits_forward.1} parent=5 // pred_region
        // Predicated region
        $region145: #{_backbone_saits_forward.1} parent=143 // pred_check
          %p1003 = pneg %p106
        $region146: #{_backbone_saits_forward.1} parent=143 // pred_check_branch
          %1005 = sbr.rel (%p1003) target = $region148
        $region147: #{_backbone_saits_forward.1} parent=143 // pred_region
          %s1006 = smul.u32 2, %s86
          %p1007 = scmp.lt.s32.totalorder %s1006, 3
          %s1008 = scalar_select %p1007, %s1006, 3
          %s1009 = smul.addr %s1008, 8
          %s1010 = scalar_lea.vmem %s1, %s1009
          %s1011 = smul.u32 2, %s86
        $region148: #{_backbone_saits_forward.1} parent=143 // pred_fallthru
          _
        // Predicated region
        $region149: #{_backbone_saits_forward.1} parent=143 // pred_check
          %p1012 = pneg %p132
        $region150: #{_backbone_saits_forward.1} parent=143 // pred_check_branch
          %1014 = sbr.rel (%p1012) target = $region152
        $region151: #{_backbone_saits_forward.1} parent=143 // pred_region
          %s1015 = smul.u32 2, %s86
          %p1016 = scmp.lt.s32.totalorder %s1015, 3
          %s1017 = scalar_select %p1016, %s1015, 3
          %s1018 = smul.addr %s1017, 8
          %s1019 = scalar_lea.vmem %s3, %s1018
          %s1020 = smul.u32 2, %s86
        $region152: #{_backbone_saits_forward.1} parent=143 // pred_fallthru
          _
      $region144: #{_backbone_saits_forward.1} parent=5 // pred_fallthru
        _
      %p1021 = scmp.le.s32.totalorder 1, %s86
      %p1022 = scmp.lt.s32.totalorder %s86, 3
      %p1023 = pnand %p1021, %p1022
      %p1024 = pneg %p1023
      // Predicated region
      $region153: #{_backbone_saits_forward.1} parent=5 // pred_check
        _
      $region154: #{_backbone_saits_forward.1} parent=5 // pred_check_branch
        %1026 = sbr.rel (%p1023) target = $region156
      $region155: #{_backbone_saits_forward.1} parent=5 // pred_region
        %s1027 = ssub.s32 %s86, 1
        %s1028 = smul.u32 2, %s91
        %p1029 = scmp.lt.s32.totalorder %s1028, 3
        %s1030 = scalar_select %p1029, %s1028, 3
        %s1031 = smul.addr %s1030, 8
        %s1032 = scalar_lea.vmem %s1, %s1031
        %p1033 = pneg %p112
        %p1034 = pneg %p109
        %s1035 = smul.u32 2, %s91
        %p1036 = scmp.lt.s32.totalorder %s1035, 3
        %s1037 = scalar_select %p1036, %s1035, 3
        %s1038 = smul.addr %s1037, 8
        %s1039 = scalar_lea.vmem %s3, %s1038
        %p1040 = pneg %p138
        %p1041 = pneg %p135
        %p1042 = pneg %p159
        %p1043 = pneg %p156
        %p1044 = pneg %p180
        %p1045 = pneg %p177
        %p1046 = pneg %p201
        %p1047 = pneg %p198
        %p1048 = pneg %p222
        %p1049 = pneg %p219
        %p1050 = pneg %p243
        %p1051 = pneg %p240
        %p1052 = pneg %p264
        %p1053 = pneg %p261
        %p1054 = pneg %p285
        %p1055 = pneg %p282
        %p1056 = pneg %p306
        %p1057 = pneg %p303
        %p1058 = pneg %p327
        %p1059 = pneg %p324
        %p1060 = pneg %p348
        %p1061 = pneg %p345
        %p1062 = pneg %p369
        %p1063 = pneg %p366
        %p1064 = pneg %p390
        %p1065 = pneg %p387
        %p1066 = pneg %p411
        %p1067 = pneg %p408
        %p1068 = pneg %p432
        %p1069 = pneg %p429
        %p1070 = pneg %p453
        %p1071 = pneg %p450
        %p1072 = pneg %p474
        %p1073 = pneg %p471
        %p1074 = pneg %p495
        %p1075 = pneg %p492
        %p1076 = pneg %p516
        %p1077 = pneg %p513
        %p1078 = pneg %p537
        %p1079 = pneg %p534
        %p1080 = pneg %p558
        %p1081 = pneg %p555
        %p1082 = pneg %p579
        %p1083 = pneg %p576
        %p1084 = pneg %p600
        %p1085 = pneg %p597
        %p1086 = pneg %p621
        %p1087 = pneg %p618
        %p1088 = pneg %p642
        %p1089 = pneg %p639
        %p1090 = pneg %p663
        %p1091 = pneg %p660
        %p1092 = pneg %p684
        %p1093 = pneg %p681
        %p1094 = pneg %p705
        %p1095 = pneg %p702
        %p1096 = pneg %p726
        %p1097 = pneg %p723
        %p1098 = pneg %p747
        %p1099 = pneg %p744
        %p1100 = pneg %p768
        %p1101 = pneg %p765
        %p1102 = pneg %p789
        %p1103 = pneg %p786
        %p1104 = pneg %p810
        %p1105 = pneg %p807
        %p1106 = pneg %p836
        %p1107 = pneg %p833
        %s1108 = smul.u32 2, %s91
        %p1109 = scmp.lt.s32.totalorder %s1108, 3
        %s1110 = scalar_select %p1109, %s1108, 3
        %s1111 = smul.addr %s1110, 8
        %s1112 = scalar_lea.vmem %s69, %s1111
        %p1113 = pneg %p862
        %p1114 = pneg %p859
        %s1115 = sand.u32 %s849, 1
        %s1116 = scalar_lea.sflag [#allocation3], %s1115
        %s1117 = sand.u32 %s849, 1
        %s1118 = smul.addr %s1117, 32
        %s1119 = scalar_lea.vmem [#allocation2], %s1118
        %p1120 = pneg %p888
        %p1121 = pneg %p885
        %s1122 = sand.u32 %s875, 1
        %s1123 = scalar_lea.sflag [#allocation5], %s1122
        %s1124 = sand.u32 %s875, 1
        %s1125 = smul.addr %s1124, 32
        %s1126 = scalar_lea.vmem [#allocation4], %s1125
        %s1127 = smul.u32 2, %s91
        %p1128 = scmp.lt.s32.totalorder %s1127, 3
        %s1129 = scalar_select %p1128, %s1127, 3
        %s1130 = smul.addr %s1129, 8
        %s1131 = scalar_lea.vmem %s1, %s1130
        %s1132 = smul.u32 2, %s91
        %s1133 = smul.u32 2, %s91
        %p1134 = scmp.lt.s32.totalorder %s1133, 3
        %s1135 = scalar_select %p1134, %s1133, 3
        %s1136 = smul.addr %s1135, 8
        %s1137 = scalar_lea.vmem %s3, %s1136
        %s1138 = smul.u32 2, %s91
        %s1139 = smul.u32 2, %s91
        %p1140 = scmp.lt.s32.totalorder %s1139, 3
        %s1141 = scalar_select %p1140, %s1139, 3
        %s1142 = smul.addr %s1141, 8
        %s1143 = scalar_lea.vmem %s69, %s1142
        %s1144 = smul.u32 2, %s91
        %s1145 = smul.u32 2, %s91
        %s1146 = smul.u32 2, %s91
        %v1148 = vld [vmem:[%s1131] sm:$0xff]
        %v1149 = vld [vmem:[%s1131 + $0x8] sm:$0xff]
        %v1150 = vld [vmem:[%s1137] sm:$0xff]
        %v1151 = vld [vmem:[%s1137 + $0x8] sm:$0xff]
        %v1152 = vld [vmem:[%s49] sm:$0xff]
        %v1153 = vld [vmem:[%s41] sm:$0x7]
        %v1154 = vpack.c.bf16 %v1149, %v1148
        %v1155 = vld [vmem:[%s39] sm:$0x7]
        %v1156 = vpack.c.bf16 %v1151, %v1150
        %vm1157 = vcmask 39936
        %v1159 = vsel %vm1157, %v1156, 0
        %vm1161 = vcmask 1041408
        %vm1162 = vcmask 1042432
        %v1163 = vsel %vm1161, 4294967295, 65535
        %v1164 = vsel %vm1162, %v1163, 0
        %v1166 = vand.u32 %v1155, %v1164
        %1168 = vmatprep.subr.bf16.mxu0 0
        %1169 = vmatpush1.bf16.msra.mxu0 %v1166
        %1170 = vmatprep.subr.bf16.mxu0 0
        %1171 = vmatpush1.bf16.msra.mxu0 0
        %1172 = vmatprep.subr.bf16.mxu0 0
        %1173 = vmatpush1.bf16.msra.mxu0 0
        %1174 = vmatprep.subr.bf16.mxu0 0
        %1175 = vmatpush1.bf16.msra.mxu0 0
        %1176 = vmatprep.subr.bf16.mxu0 0
        %1177 = vmatpush1.bf16.msra.mxu0 0
        %1178 = vmatprep.subr.bf16.mxu0 0
        %1179 = vmatpush1.bf16.msra.mxu0 0
        %1180 = vmatprep.subr.bf16.mxu0 0
        %1181 = vmatpush1.bf16.msra.mxu0 0
        %1182 = vmatprep.subr.bf16.mxu0 0
        %1183 = vmatpush1.bf16.msra.mxu0 0
        %1184 = vmatprep.subr.bf16.mxu0 0
        %1185 = vmatpush1.bf16.msra.mxu0 0
        %1186 = vmatprep.subr.bf16.mxu0 0
        %1187 = vmatpush1.bf16.msra.mxu0 0
        %1188 = vmatprep.subr.bf16.mxu0 0
        %1189 = vmatpush1.bf16.msra.mxu0 0
        %1190 = vmatprep.subr.bf16.mxu0 0
        %1191 = vmatpush1.bf16.msra.mxu0 0
        %1192 = vmatprep.subr.bf16.mxu0 0
        %1193 = vmatpush1.bf16.msra.mxu0 0
        %1194 = vmatprep.subr.bf16.mxu0 0
        %1195 = vmatpush1.bf16.msra.mxu0 0
        %1196 = vmatprep.subr.bf16.mxu0 0
        %1197 = vmatpush1.bf16.msra.mxu0 0
        %1198 = vmatprep.subr.bf16.mxu0 0
        %1199 = vmatpush1.bf16.msra.mxu0 0
        %1200 = vmatprep.mubr.bf16.mxu0 0
        %1201 = vmatmul.mubr.bf16.gmra.mrb[0].mxu0 %v1159
        %v1202 = vpop.f32.mrb[0].mxu0
        %v1203 = vadd.f32 0.0, %v1202
        %v1204 = vpop.f32.mrb[0].mxu0
        %v1205 = vpop.f32.mrb[0].mxu0
        %v1206 = vadd.f32 0.0, %v1205
        %v1207 = vpop.f32.mrb[0].mxu0
        %1208 = vdwg.mxu0
        %v1210 = vsel %vm1157, %v1154, 0
        %v1213 = vand.u32 %v1153, %v1164
        %1215 = vmatprep.subr.bf16.mxu0 0
        %1216 = vmatpush1.bf16.msra.mxu0 %v1213
        %1217 = vmatprep.subr.bf16.mxu0 0
        %1218 = vmatpush1.bf16.msra.mxu0 0
        %1219 = vmatprep.subr.bf16.mxu0 0
        %1220 = vmatpush1.bf16.msra.mxu0 0
        %1221 = vmatprep.subr.bf16.mxu0 0
        %1222 = vmatpush1.bf16.msra.mxu0 0
        %1223 = vmatprep.subr.bf16.mxu0 0
        %1224 = vmatpush1.bf16.msra.mxu0 0
        %1225 = vmatprep.subr.bf16.mxu0 0
        %1226 = vmatpush1.bf16.msra.mxu0 0
        %1227 = vmatprep.subr.bf16.mxu0 0
        %1228 = vmatpush1.bf16.msra.mxu0 0
        %1229 = vmatprep.subr.bf16.mxu0 0
        %1230 = vmatpush1.bf16.msra.mxu0 0
        %1231 = vmatprep.subr.bf16.mxu0 0
        %1232 = vmatpush1.bf16.msra.mxu0 0
        %1233 = vmatprep.subr.bf16.mxu0 0
        %1234 = vmatpush1.bf16.msra.mxu0 0
        %1235 = vmatprep.subr.bf16.mxu0 0
        %1236 = vmatpush1.bf16.msra.mxu0 0
        %1237 = vmatprep.subr.bf16.mxu0 0
        %1238 = vmatpush1.bf16.msra.mxu0 0
        %1239 = vmatprep.subr.bf16.mxu0 0
        %1240 = vmatpush1.bf16.msra.mxu0 0
        %1241 = vmatprep.subr.bf16.mxu0 0
        %1242 = vmatpush1.bf16.msra.mxu0 0
        %1243 = vmatprep.subr.bf16.mxu0 0
        %1244 = vmatpush1.bf16.msra.mxu0 0
        %1245 = vmatprep.subr.bf16.mxu0 0
        %1246 = vmatpush1.bf16.msra.mxu0 0
        %1247 = vmatprep.mubr.bf16.mxu0 0
        %1248 = vmatmul.mubr.bf16.gmra.mrb[0].mxu0 %v1210
        %v1249 = vpop.f32.mrb[0].mxu0
        %v1250 = vadd.f32 %v1203, %v1249
        %v1251 = vpop.f32.mrb[0].mxu0
        %v1252 = vpop.f32.mrb[0].mxu0
        %v1253 = vadd.f32 %v1206, %v1252
        %v1254 = vpop.f32.mrb[0].mxu0
        %1255 = vdwg.mxu0
        %v1256 = vld [vmem:[%s37] sm:$0x1]
        %v1258 = vlaneseq
        %v1259 = vshrl.u32 %v1258, 7
        %v1260 = vsub.s32 0, %v1259
        %v1261 = vrot.slane %v1256, %v1260
        %v1263 = vadd.f32 %v1250, %v1261
        %v1264 = vadd.f32 %v1253, %v1261
        %v1265 = vadd.f32 %v1263, %v1152
        %v1266 = vadd.f32 %v1264, %v1152
        %v1267 = vld [vmem:[%s11] sm:$0x1f]
        %v1268 = vld [vmem:[%s17] sm:$0xf]
        %v1269 = vld [vmem:[%s17 + $0x4] sm:$0xf]
        %v1270 = vld [vmem:[%s17 + $0x8] sm:$0xf]
        %v1271 = vld [vmem:[%s17 + $0xc] sm:$0xf]
        %v1272 = vpack.c.bf16 %v1266, %v1265
        %v1277 = vunpack.c.l.b16 %v1268
        %v1278 = vunpack.c.l.b16 %v1269
        %v1279 = vunpack.c.l.b16 %v1270
        %v1280 = vunpack.c.l.b16 %v1271
        %v1281 = vpack.c.b16 %v1278, %v1277
        %v1282 = vpack.c.b16 %v1280, %v1279
        %vm1285 = vcmask 261120
        %v1287 = vsel %vm1285, %v1272, 0
        %1289 = vmatprep.subr.bf16.mxu0 0
        %1290 = vmatpush1.bf16.msra.mxu0 %v1281
        %1291 = vmatprep.subr.bf16.mxu0 0
        %1292 = vmatpush1.bf16.msra.mxu0 %v1282
        %1293 = vmatprep.subr.bf16.mxu0 0
        %1294 = vmatpush1.bf16.msra.mxu0 0
        %1295 = vmatprep.subr.bf16.mxu0 0
        %1296 = vmatpush1.bf16.msra.mxu0 0
        %1297 = vmatprep.subr.bf16.mxu0 0
        %1298 = vmatpush1.bf16.msra.mxu0 0
        %1299 = vmatprep.subr.bf16.mxu0 0
        %1300 = vmatpush1.bf16.msra.mxu0 0
        %1301 = vmatprep.subr.bf16.mxu0 0
        %1302 = vmatpush1.bf16.msra.mxu0 0
        %1303 = vmatprep.subr.bf16.mxu0 0
        %1304 = vmatpush1.bf16.msra.mxu0 0
        %1305 = vmatprep.subr.bf16.mxu0 0
        %1306 = vmatpush1.bf16.msra.mxu0 0
        %1307 = vmatprep.subr.bf16.mxu0 0
        %1308 = vmatpush1.bf16.msra.mxu0 0
        %1309 = vmatprep.subr.bf16.mxu0 0
        %1310 = vmatpush1.bf16.msra.mxu0 0
        %1311 = vmatprep.subr.bf16.mxu0 0
        %1312 = vmatpush1.bf16.msra.mxu0 0
        %1313 = vmatprep.subr.bf16.mxu0 0
        %1314 = vmatpush1.bf16.msra.mxu0 0
        %1315 = vmatprep.subr.bf16.mxu0 0
        %1316 = vmatpush1.bf16.msra.mxu0 0
        %1317 = vmatprep.subr.bf16.mxu0 0
        %1318 = vmatpush1.bf16.msra.mxu0 0
        %1319 = vmatprep.subr.bf16.mxu0 0
        %1320 = vmatpush1.bf16.msra.mxu0 0
        %1321 = vmatprep.mubr.bf16.mxu0 0
        %1322 = vmatmul.mubr.bf16.gmra.mrb[0].mxu0 %v1287
        %v1323 = vpop.f32.mrb[0].mxu0
        %v1324 = vadd.f32 0.0, %v1323
        %v1325 = vpop.f32.mrb[0].mxu0
        %v1326 = vpop.f32.mrb[0].mxu0
        %v1327 = vadd.f32 0.0, %v1326
        %v1328 = vpop.f32.mrb[0].mxu0
        %1329 = vdwg.mxu0
        %v1330 = vld [vmem:[%s15] sm:$0xf]
        %v1331 = vld [vmem:[%s15 + $0x4] sm:$0xf]
        %v1332 = vld [vmem:[%s15 + $0x8] sm:$0xf]
        %v1333 = vld [vmem:[%s15 + $0xc] sm:$0xf]
        %v1338 = vunpack.c.l.b16 %v1330
        %v1339 = vunpack.c.l.b16 %v1331
        %v1340 = vunpack.c.l.b16 %v1332
        %v1341 = vunpack.c.l.b16 %v1333
        %v1342 = vpack.c.b16 %v1339, %v1338
        %v1343 = vpack.c.b16 %v1341, %v1340
        %1346 = vmatprep.subr.bf16.mxu0 0
        %1347 = vmatpush1.bf16.msra.mxu0 %v1342
        %1348 = vmatprep.subr.bf16.mxu0 0
        %1349 = vmatpush1.bf16.msra.mxu0 %v1343
        %1350 = vmatprep.subr.bf16.mxu0 0
        %1351 = vmatpush1.bf16.msra.mxu0 0
        %1352 = vmatprep.subr.bf16.mxu0 0
        %1353 = vmatpush1.bf16.msra.mxu0 0
        %1354 = vmatprep.subr.bf16.mxu0 0
        %1355 = vmatpush1.bf16.msra.mxu0 0
        %1356 = vmatprep.subr.bf16.mxu0 0
        %1357 = vmatpush1.bf16.msra.mxu0 0
        %1358 = vmatprep.subr.bf16.mxu0 0
        %1359 = vmatpush1.bf16.msra.mxu0 0
        %1360 = vmatprep.subr.bf16.mxu0 0
        %1361 = vmatpush1.bf16.msra.mxu0 0
        %1362 = vmatprep.subr.bf16.mxu0 0
        %1363 = vmatpush1.bf16.msra.mxu0 0
        %1364 = vmatprep.subr.bf16.mxu0 0
        %1365 = vmatpush1.bf16.msra.mxu0 0
        %1366 = vmatprep.subr.bf16.mxu0 0
        %1367 = vmatpush1.bf16.msra.mxu0 0
        %1368 = vmatprep.subr.bf16.mxu0 0
        %1369 = vmatpush1.bf16.msra.mxu0 0
        %1370 = vmatprep.subr.bf16.mxu0 0
        %1371 = vmatpush1.bf16.msra.mxu0 0
        %1372 = vmatprep.subr.bf16.mxu0 0
        %1373 = vmatpush1.bf16.msra.mxu0 0
        %1374 = vmatprep.subr.bf16.mxu0 0
        %1375 = vmatpush1.bf16.msra.mxu0 0
        %1376 = vmatprep.subr.bf16.mxu0 0
        %1377 = vmatpush1.bf16.msra.mxu0 0
        %1378 = vmatprep.mubr.bf16.mxu0 0
        %1379 = vmatmul.mubr.bf16.gmra.mrb[0].mxu0 %v1287
        %v1380 = vpop.f32.mrb[0].mxu0
        %v1381 = vadd.f32 0.0, %v1380
        %v1382 = vpop.f32.mrb[0].mxu0
        %v1383 = vpop.f32.mrb[0].mxu0
        %v1384 = vadd.f32 0.0, %v1383
        %v1385 = vpop.f32.mrb[0].mxu0
        %1386 = vdwg.mxu0
        %v1387 = vld [vmem:[%s19] sm:$0xf]
        %v1388 = vld [vmem:[%s19 + $0x4] sm:$0xf]
        %v1389 = vld [vmem:[%s19 + $0x8] sm:$0xf]
        %v1390 = vld [vmem:[%s19 + $0xc] sm:$0xf]
        %v1395 = vunpack.c.l.b16 %v1387
        %v1396 = vunpack.c.l.b16 %v1388
        %v1397 = vunpack.c.l.b16 %v1389
        %v1398 = vunpack.c.l.b16 %v1390
        %v1399 = vpack.c.b16 %v1396, %v1395
        %v1400 = vpack.c.b16 %v1398, %v1397
        %1403 = vmatprep.subr.bf16.mxu0 0
        %1404 = vmatpush1.bf16.msra.mxu0 %v1399
        %1405 = vmatprep.subr.bf16.mxu0 0
        %1406 = vmatpush1.bf16.msra.mxu0 %v1400
        %1407 = vmatprep.subr.bf16.mxu0 0
        %1408 = vmatpush1.bf16.msra.mxu0 0
        %1409 = vmatprep.subr.bf16.mxu0 0
        %1410 = vmatpush1.bf16.msra.mxu0 0
        %1411 = vmatprep.subr.bf16.mxu0 0
        %1412 = vmatpush1.bf16.msra.mxu0 0
        %1413 = vmatprep.subr.bf16.mxu0 0
        %1414 = vmatpush1.bf16.msra.mxu0 0
        %1415 = vmatprep.subr.bf16.mxu0 0
        %1416 = vmatpush1.bf16.msra.mxu0 0
        %1417 = vmatprep.subr.bf16.mxu0 0
        %1418 = vmatpush1.bf16.msra.mxu0 0
        %1419 = vmatprep.subr.bf16.mxu0 0
        %1420 = vmatpush1.bf16.msra.mxu0 0
        %1421 = vmatprep.subr.bf16.mxu0 0
        %1422 = vmatpush1.bf16.msra.mxu0 0
        %1423 = vmatprep.subr.bf16.mxu0 0
        %1424 = vmatpush1.bf16.msra.mxu0 0
        %1425 = vmatprep.subr.bf16.mxu0 0
        %1426 = vmatpush1.bf16.msra.mxu0 0
        %1427 = vmatprep.subr.bf16.mxu0 0
        %1428 = vmatpush1.bf16.msra.mxu0 0
        %1429 = vmatprep.subr.bf16.mxu0 0
        %1430 = vmatpush1.bf16.msra.mxu0 0
        %1431 = vmatprep.subr.bf16.mxu0 0
        %1432 = vmatpush1.bf16.msra.mxu0 0
        %1433 = vmatprep.subr.bf16.mxu0 0
        %1434 = vmatpush1.bf16.msra.mxu0 0
        %1435 = vmatprep.mubr.bf16.mxu0 0
        %1436 = vmatmul.mubr.bf16.gmra.mrb[0].mxu0 %v1287
        %v1437 = vpop.f32.mrb[0].mxu0
        %v1438 = vadd.f32 0.0, %v1437
        %v1439 = vpop.f32.mrb[0].mxu0
        %v1440 = vpop.f32.mrb[0].mxu0
        %v1441 = vadd.f32 0.0, %v1440
        %v1442 = vpop.f32.mrb[0].mxu0
        %1443 = vdwg.mxu0
        %v1444 = vpack.c.bf16 %v1324, %v1324
        %v1445 = vpack.c.bf16 %v1327, %v1327
        %v1446 = vpack.c.bf16 %v1381, %v1381
        %v1447 = vpack.c.bf16 %v1384, %v1384
        %vm1448 = vcmask 130048
        %v1450 = vsel %vm1448, %v1444, 0
        %v1453 = vsel %vm1448, %v1446, 0
        %1455 = vmatprep.subr.bf16.mxu0 0
        %1456 = vmatpush1.bf16.xpose.msra.mxu0 %v1453
        %1457 = vmatprep.subr.bf16.mxu0 0
        %1458 = vmatpush1.bf16.xpose.msra.mxu0 0
        %1459 = vmatprep.subr.bf16.mxu0 0
        %1460 = vmatpush1.bf16.xpose.msra.mxu0 0
        %1461 = vmatprep.subr.bf16.mxu0 0
        %1462 = vmatpush1.bf16.xpose.msra.mxu0 0
        %1463 = vmatprep.subr.bf16.mxu0 0
        %1464 = vmatpush1.bf16.xpose.msra.mxu0 0
        %1465 = vmatprep.subr.bf16.mxu0 0
        %1466 = vmatpush1.bf16.xpose.msra.mxu0 0
        %1467 = vmatprep.subr.bf16.mxu0 0
        %1468 = vmatpush1.bf16.xpose.msra.mxu0 0
        %1469 = vmatprep.subr.bf16.mxu0 0
        %1470 = vmatpush1.bf16.xpose.msra.mxu0 0
        %1471 = vmatprep.subr.bf16.mxu0 0
        %1472 = vmatpush1.bf16.xpose.msra.mxu0 0
        %1473 = vmatprep.subr.bf16.mxu0 0
        %1474 = vmatpush1.bf16.xpose.msra.mxu0 0
        %1475 = vmatprep.subr.bf16.mxu0 0
        %1476 = vmatpush1.bf16.xpose.msra.mxu0 0
        %1477 = vmatprep.subr.bf16.mxu0 0
        %1478 = vmatpush1.bf16.xpose.msra.mxu0 0
        %1479 = vmatprep.subr.bf16.mxu0 0
        %1480 = vmatpush1.bf16.xpose.msra.mxu0 0
        %1481 = vmatprep.subr.bf16.mxu0 0
        %1482 = vmatpush1.bf16.xpose.msra.mxu0 0
        %1483 = vmatprep.subr.bf16.mxu0 0
        %1484 = vmatpush1.bf16.xpose.msra.mxu0 0
        %1485 = vmatprep.subr.bf16.mxu0 0
        %1486 = vmatpush1.bf16.xpose.msra.mxu0 0
        %1487 = vmatprep.mubr.bf16.mxu0 0
        %1488 = vmatmul.mubr.bf16.gmra.mrb[0].mxu0 %v1450
        %v1489 = vpop.f32.mrb[0].mxu0
        %v1490 = vadd.f32 0.0, %v1489
        %v1491 = vpop.f32.mrb[0].mxu0
        %v1492 = vpop.f32.mrb[0].mxu0
        %v1493 = vpop.f32.mrb[0].mxu0
        %1494 = vdwg.mxu0
        %v1496 = vsel %vm1448, %v1445, 0
        %v1499 = vsel %vm1448, %v1447, 0
        %1501 = vmatprep.subr.bf16.mxu0 0
        %1502 = vmatpush1.bf16.xpose.msra.mxu0 %v1499
        %1503 = vmatprep.subr.bf16.mxu0 0
        %1504 = vmatpush1.bf16.xpose.msra.mxu0 0
        %1505 = vmatprep.subr.bf16.mxu0 0
        %1506 = vmatpush1.bf16.xpose.msra.mxu0 0
        %1507 = vmatprep.subr.bf16.mxu0 0
        %1508 = vmatpush1.bf16.xpose.msra.mxu0 0
        %1509 = vmatprep.subr.bf16.mxu0 0
        %1510 = vmatpush1.bf16.xpose.msra.mxu0 0
        %1511 = vmatprep.subr.bf16.mxu0 0
        %1512 = vmatpush1.bf16.xpose.msra.mxu0 0
        %1513 = vmatprep.subr.bf16.mxu0 0
        %1514 = vmatpush1.bf16.xpose.msra.mxu0 0
        %1515 = vmatprep.subr.bf16.mxu0 0
        %1516 = vmatpush1.bf16.xpose.msra.mxu0 0
        %1517 = vmatprep.subr.bf16.mxu0 0
        %1518 = vmatpush1.bf16.xpose.msra.mxu0 0
        %1519 = vmatprep.subr.bf16.mxu0 0
        %1520 = vmatpush1.bf16.xpose.msra.mxu0 0
        %1521 = vmatprep.subr.bf16.mxu0 0
        %1522 = vmatpush1.bf16.xpose.msra.mxu0 0
        %1523 = vmatprep.subr.bf16.mxu0 0
        %1524 = vmatpush1.bf16.xpose.msra.mxu0 0
        %1525 = vmatprep.subr.bf16.mxu0 0
        %1526 = vmatpush1.bf16.xpose.msra.mxu0 0
        %1527 = vmatprep.subr.bf16.mxu0 0
        %1528 = vmatpush1.bf16.xpose.msra.mxu0 0
        %1529 = vmatprep.subr.bf16.mxu0 0
        %1530 = vmatpush1.bf16.xpose.msra.mxu0 0
        %1531 = vmatprep.subr.bf16.mxu0 0
        %1532 = vmatpush1.bf16.xpose.msra.mxu0 0
        %1533 = vmatprep.mubr.bf16.mxu0 0
        %1534 = vmatmul.mubr.bf16.gmra.mrb[0].mxu0 %v1496
        %v1535 = vpop.f32.mrb[0].mxu0
        %v1536 = vadd.f32 0.0, %v1535
        %v1537 = vpop.f32.mrb[0].mxu0
        %v1538 = vpop.f32.mrb[0].mxu0
        %v1539 = vpop.f32.mrb[0].mxu0
        %1540 = vdwg.mxu0
        %vm1541 = vcmask 64512
        %v1542 = vsel %vm1541, %v1490, -inf
        %1543 = vmax.xlane.f32.xlu0 %v1542
        %v1544 = vpop.xlane.xlu0 %1543
        %v1545 = vsel %vm1541, %v1536, -inf
        %1546 = vmax.xlane.f32.xlu0 %v1545
        %v1547 = vpop.xlane.xlu0 %1546
        %v1548 = vsub.f32 %v1490, %v1544
        %v1549 = vsub.f32 %v1536, %v1547
        %v1550 = vmul.f32 %v1548, 1.442695
        %v1551 = vpow.pop %v1550
        %v1552 = vmul.f32 %v1549, 1.442695
        %v1553 = vpow.pop %v1552
        %v1554 = vsel %vm1541, %v1551, 0.0
        %1555 = vadd.xlane.f32.xlu0 %v1554
        %v1556 = vpop.xlane.xlu0 %1555
        %v1557 = vsel %vm1541, %v1553, 0.0
        %1558 = vadd.xlane.f32.xlu0 %v1557
        %v1559 = vpop.xlane.xlu0 %1558
        %v1560 = vrcp.pop %v1556
        %v1561 = vrcp.pop %v1559
        %v1562 = vmul.f32 %v1551, %v1560
        %v1563 = vmul.f32 %v1553, %v1561
        %v1564 = vpack.c.bf16 %v1562, %v1562
        %v1565 = vpack.c.bf16 %v1563, %v1563
        %v1566 = vpack.c.bf16 %v1438, %v1438
        %v1567 = vpack.c.bf16 %v1441, %v1441
        %v1569 = vsel %vm1541, %v1564, 0
        %vm1571 = vcmask 1043456
        %v1573 = vsel %vm1571, %v1566, 0
        %1575 = vmatprep.subr.bf16.mxu0 0
        %1576 = vmatpush1.bf16.msra.mxu0 %v1573
        %1577 = vmatprep.subr.bf16.mxu0 0
        %1578 = vmatpush1.bf16.msra.mxu0 0
        %1579 = vmatprep.subr.bf16.mxu0 0
        %1580 = vmatpush1.bf16.msra.mxu0 0
        %1581 = vmatprep.subr.bf16.mxu0 0
        %1582 = vmatpush1.bf16.msra.mxu0 0
        %1583 = vmatprep.subr.bf16.mxu0 0
        %1584 = vmatpush1.bf16.msra.mxu0 0
        %1585 = vmatprep.subr.bf16.mxu0 0
        %1586 = vmatpush1.bf16.msra.mxu0 0
        %1587 = vmatprep.subr.bf16.mxu0 0
        %1588 = vmatpush1.bf16.msra.mxu0 0
        %1589 = vmatprep.subr.bf16.mxu0 0
        %1590 = vmatpush1.bf16.msra.mxu0 0
        %1591 = vmatprep.subr.bf16.mxu0 0
        %1592 = vmatpush1.bf16.msra.mxu0 0
        %1593 = vmatprep.subr.bf16.mxu0 0
        %1594 = vmatpush1.bf16.msra.mxu0 0
        %1595 = vmatprep.subr.bf16.mxu0 0
        %1596 = vmatpush1.bf16.msra.mxu0 0
        %1597 = vmatprep.subr.bf16.mxu0 0
        %1598 = vmatpush1.bf16.msra.mxu0 0
        %1599 = vmatprep.subr.bf16.mxu0 0
        %1600 = vmatpush1.bf16.msra.mxu0 0
        %1601 = vmatprep.subr.bf16.mxu0 0
        %1602 = vmatpush1.bf16.msra.mxu0 0
        %1603 = vmatprep.subr.bf16.mxu0 0
        %1604 = vmatpush1.bf16.msra.mxu0 0
        %1605 = vmatprep.subr.bf16.mxu0 0
        %1606 = vmatpush1.bf16.msra.mxu0 0
        %1607 = vmatprep.mubr.bf16.mxu0 0
        %1608 = vmatmul.mubr.bf16.gmra.mrb[0].mxu0 %v1569
        %v1609 = vpop.f32.mrb[0].mxu0
        %v1610 = vadd.f32 0.0, %v1609
        %v1611 = vpop.f32.mrb[0].mxu0
        %v1612 = vpop.f32.mrb[0].mxu0
        %v1613 = vpop.f32.mrb[0].mxu0
        %1614 = vdwg.mxu0
        %v1616 = vsel %vm1541, %v1565, 0
        %v1619 = vsel %vm1571, %v1567, 0
        %1621 = vmatprep.subr.bf16.mxu0 0
        %1622 = vmatpush1.bf16.msra.mxu0 %v1619
        %1623 = vmatprep.subr.bf16.mxu0 0
        %1624 = vmatpush1.bf16.msra.mxu0 0
        %1625 = vmatprep.subr.bf16.mxu0 0
        %1626 = vmatpush1.bf16.msra.mxu0 0
        %1627 = vmatprep.subr.bf16.mxu0 0
        %1628 = vmatpush1.bf16.msra.mxu0 0
        %1629 = vmatprep.subr.bf16.mxu0 0
        %1630 = vmatpush1.bf16.msra.mxu0 0
        %1631 = vmatprep.subr.bf16.mxu0 0
        %1632 = vmatpush1.bf16.msra.mxu0 0
        %1633 = vmatprep.subr.bf16.mxu0 0
        %1634 = vmatpush1.bf16.msra.mxu0 0
        %1635 = vmatprep.subr.bf16.mxu0 0
        %1636 = vmatpush1.bf16.msra.mxu0 0
        %1637 = vmatprep.subr.bf16.mxu0 0
        %1638 = vmatpush1.bf16.msra.mxu0 0
        %1639 = vmatprep.subr.bf16.mxu0 0
        %1640 = vmatpush1.bf16.msra.mxu0 0
        %1641 = vmatprep.subr.bf16.mxu0 0
        %1642 = vmatpush1.bf16.msra.mxu0 0
        %1643 = vmatprep.subr.bf16.mxu0 0
        %1644 = vmatpush1.bf16.msra.mxu0 0
        %1645 = vmatprep.subr.bf16.mxu0 0
        %1646 = vmatpush1.bf16.msra.mxu0 0
        %1647 = vmatprep.subr.bf16.mxu0 0
        %1648 = vmatpush1.bf16.msra.mxu0 0
        %1649 = vmatprep.subr.bf16.mxu0 0
        %1650 = vmatpush1.bf16.msra.mxu0 0
        %1651 = vmatprep.subr.bf16.mxu0 0
        %1652 = vmatpush1.bf16.msra.mxu0 0
        %1653 = vmatprep.mubr.bf16.mxu0 0
        %1654 = vmatmul.mubr.bf16.gmra.mrb[0].mxu0 %v1616
        %v1655 = vpop.f32.mrb[0].mxu0
        %v1656 = vadd.f32 0.0, %v1655
        %v1657 = vpop.f32.mrb[0].mxu0
        %v1658 = vpop.f32.mrb[0].mxu0
        %v1659 = vpop.f32.mrb[0].mxu0
        %1660 = vdwg.mxu0
        %v1661 = vld [vmem:[%s13] sm:$0xf]
        %v1662 = vld [vmem:[%s13 + $0x4] sm:$0xf]
        %v1663 = vpack.c.bf16 %v1656, %v1610
        %s1664 = scalar_lea.vmem %s17, 16
        %v1665 = vld [vmem:[%s1664] sm:$0xf]
        %v1666 = vld [vmem:[%s1664 + $0x4] sm:$0xf]
        %v1667 = vld [vmem:[%s1664 + $0x8] sm:$0xf]
        %v1668 = vld [vmem:[%s1664 + $0xc] sm:$0xf]
        %v1673 = vunpack.c.l.b16 %v1665
        %v1674 = vunpack.c.l.b16 %v1666
        %v1675 = vunpack.c.l.b16 %v1667
        %v1676 = vunpack.c.l.b16 %v1668
        %v1677 = vpack.c.b16 %v1674, %v1673
        %v1678 = vpack.c.b16 %v1676, %v1675
        %1681 = vmatprep.subr.bf16.mxu0 0
        %1682 = vmatpush1.bf16.msra.mxu0 %v1677
        %1683 = vmatprep.subr.bf16.mxu0 0
        %1684 = vmatpush1.bf16.msra.mxu0 %v1678
        %1685 = vmatprep.subr.bf16.mxu0 0
        %1686 = vmatpush1.bf16.msra.mxu0 0
        %1687 = vmatprep.subr.bf16.mxu0 0
        %1688 = vmatpush1.bf16.msra.mxu0 0
        %1689 = vmatprep.subr.bf16.mxu0 0
        %1690 = vmatpush1.bf16.msra.mxu0 0
        %1691 = vmatprep.subr.bf16.mxu0 0
        %1692 = vmatpush1.bf16.msra.mxu0 0
        %1693 = vmatprep.subr.bf16.mxu0 0
        %1694 = vmatpush1.bf16.msra.mxu0 0
        %1695 = vmatprep.subr.bf16.mxu0 0
        %1696 = vmatpush1.bf16.msra.mxu0 0
        %1697 = vmatprep.subr.bf16.mxu0 0
        %1698 = vmatpush1.bf16.msra.mxu0 0
        %1699 = vmatprep.subr.bf16.mxu0 0
        %1700 = vmatpush1.bf16.msra.mxu0 0
        %1701 = vmatprep.subr.bf16.mxu0 0
        %1702 = vmatpush1.bf16.msra.mxu0 0
        %1703 = vmatprep.subr.bf16.mxu0 0
        %1704 = vmatpush1.bf16.msra.mxu0 0
        %1705 = vmatprep.subr.bf16.mxu0 0
        %1706 = vmatpush1.bf16.msra.mxu0 0
        %1707 = vmatprep.subr.bf16.mxu0 0
        %1708 = vmatpush1.bf16.msra.mxu0 0
        %1709 = vmatprep.subr.bf16.mxu0 0
        %1710 = vmatpush1.bf16.msra.mxu0 0
        %1711 = vmatprep.subr.bf16.mxu0 0
        %1712 = vmatpush1.bf16.msra.mxu0 0
        %1713 = vmatprep.mubr.bf16.mxu0 0
        %1714 = vmatmul.mubr.bf16.gmra.mrb[0].mxu0 %v1287
        %v1715 = vpop.f32.mrb[0].mxu0
        %v1716 = vadd.f32 0.0, %v1715
        %v1717 = vpop.f32.mrb[0].mxu0
        %v1718 = vpop.f32.mrb[0].mxu0
        %v1719 = vadd.f32 0.0, %v1718
        %v1720 = vpop.f32.mrb[0].mxu0
        %1721 = vdwg.mxu0
        %s1722 = scalar_lea.vmem %s15, 16
        %v1723 = vld [vmem:[%s1722] sm:$0xf]
        %v1724 = vld [vmem:[%s1722 + $0x4] sm:$0xf]
        %v1725 = vld [vmem:[%s1722 + $0x8] sm:$0xf]
        %v1726 = vld [vmem:[%s1722 + $0xc] sm:$0xf]
        %v1731 = vunpack.c.l.b16 %v1723
        %v1732 = vunpack.c.l.b16 %v1724
        %v1733 = vunpack.c.l.b16 %v1725
        %v1734 = vunpack.c.l.b16 %v1726
        %v1735 = vpack.c.b16 %v1732, %v1731
        %v1736 = vpack.c.b16 %v1734, %v1733
        %1739 = vmatprep.subr.bf16.mxu0 0
        %1740 = vmatpush1.bf16.msra.mxu0 %v1735
        %1741 = vmatprep.subr.bf16.mxu0 0
        %1742 = vmatpush1.bf16.msra.mxu0 %v1736
        %1743 = vmatprep.subr.bf16.mxu0 0
        %1744 = vmatpush1.bf16.msra.mxu0 0
        %1745 = vmatprep.subr.bf16.mxu0 0
        %1746 = vmatpush1.bf16.msra.mxu0 0
        %1747 = vmatprep.subr.bf16.mxu0 0
        %1748 = vmatpush1.bf16.msra.mxu0 0
        %1749 = vmatprep.subr.bf16.mxu0 0
        %1750 = vmatpush1.bf16.msra.mxu0 0
        %1751 = vmatprep.subr.bf16.mxu0 0
        %1752 = vmatpush1.bf16.msra.mxu0 0
        %1753 = vmatprep.subr.bf16.mxu0 0
        %1754 = vmatpush1.bf16.msra.mxu0 0
        %1755 = vmatprep.subr.bf16.mxu0 0
        %1756 = vmatpush1.bf16.msra.mxu0 0
        %1757 = vmatprep.subr.bf16.mxu0 0
        %1758 = vmatpush1.bf16.msra.mxu0 0
        %1759 = vmatprep.subr.bf16.mxu0 0
        %1760 = vmatpush1.bf16.msra.mxu0 0
        %1761 = vmatprep.subr.bf16.mxu0 0
        %1762 = vmatpush1.bf16.msra.mxu0 0
        %1763 = vmatprep.subr.bf16.mxu0 0
        %1764 = vmatpush1.bf16.msra.mxu0 0
        %1765 = vmatprep.subr.bf16.mxu0 0
        %1766 = vmatpush1.bf16.msra.mxu0 0
        %1767 = vmatprep.subr.bf16.mxu0 0
        %1768 = vmatpush1.bf16.msra.mxu0 0
        %1769 = vmatprep.subr.bf16.mxu0 0
        %1770 = vmatpush1.bf16.msra.mxu0 0
        %1771 = vmatprep.mubr.bf16.mxu0 0
        %1772 = vmatmul.mubr.bf16.gmra.mrb[0].mxu0 %v1287
        %v1773 = vpop.f32.mrb[0].mxu0
        %v1774 = vadd.f32 0.0, %v1773
        %v1775 = vpop.f32.mrb[0].mxu0
        %v1776 = vpop.f32.mrb[0].mxu0
        %v1777 = vadd.f32 0.0, %v1776
        %v1778 = vpop.f32.mrb[0].mxu0
        %1779 = vdwg.mxu0
        %s1780 = scalar_lea.vmem %s19, 16
        %v1781 = vld [vmem:[%s1780] sm:$0xf]
        %v1782 = vld [vmem:[%s1780 + $0x4] sm:$0xf]
        %v1783 = vld [vmem:[%s1780 + $0x8] sm:$0xf]
        %v1784 = vld [vmem:[%s1780 + $0xc] sm:$0xf]
        %v1789 = vunpack.c.l.b16 %v1781
        %v1790 = vunpack.c.l.b16 %v1782
        %v1791 = vunpack.c.l.b16 %v1783
        %v1792 = vunpack.c.l.b16 %v1784
        %v1793 = vpack.c.b16 %v1790, %v1789
        %v1794 = vpack.c.b16 %v1792, %v1791
        %1797 = vmatprep.subr.bf16.mxu0 0
        %1798 = vmatpush1.bf16.msra.mxu0 %v1793
        %1799 = vmatprep.subr.bf16.mxu0 0
        %1800 = vmatpush1.bf16.msra.mxu0 %v1794
        %1801 = vmatprep.subr.bf16.mxu0 0
        %1802 = vmatpush1.bf16.msra.mxu0 0
        %1803 = vmatprep.subr.bf16.mxu0 0
        %1804 = vmatpush1.bf16.msra.mxu0 0
        %1805 = vmatprep.subr.bf16.mxu0 0
        %1806 = vmatpush1.bf16.msra.mxu0 0
        %1807 = vmatprep.subr.bf16.mxu0 0
        %1808 = vmatpush1.bf16.msra.mxu0 0
        %1809 = vmatprep.subr.bf16.mxu0 0
        %1810 = vmatpush1.bf16.msra.mxu0 0
        %1811 = vmatprep.subr.bf16.mxu0 0
        %1812 = vmatpush1.bf16.msra.mxu0 0
        %1813 = vmatprep.subr.bf16.mxu0 0
        %1814 = vmatpush1.bf16.msra.mxu0 0
        %1815 = vmatprep.subr.bf16.mxu0 0
        %1816 = vmatpush1.bf16.msra.mxu0 0
        %1817 = vmatprep.subr.bf16.mxu0 0
        %1818 = vmatpush1.bf16.msra.mxu0 0
        %1819 = vmatprep.subr.bf16.mxu0 0
        %1820 = vmatpush1.bf16.msra.mxu0 0
        %1821 = vmatprep.subr.bf16.mxu0 0
        %1822 = vmatpush1.bf16.msra.mxu0 0
        %1823 = vmatprep.subr.bf16.mxu0 0
        %1824 = vmatpush1.bf16.msra.mxu0 0
        %1825 = vmatprep.subr.bf16.mxu0 0
        %1826 = vmatpush1.bf16.msra.mxu0 0
        %1827 = vmatprep.subr.bf16.mxu0 0
        %1828 = vmatpush1.bf16.msra.mxu0 0
        %1829 = vmatprep.mubr.bf16.mxu0 0
        %1830 = vmatmul.mubr.bf16.gmra.mrb[0].mxu0 %v1287
        %v1831 = vpop.f32.mrb[0].mxu0
        %v1832 = vadd.f32 0.0, %v1831
        %v1833 = vpop.f32.mrb[0].mxu0
        %v1834 = vpop.f32.mrb[0].mxu0
        %v1835 = vadd.f32 0.0, %v1834
        %v1836 = vpop.f32.mrb[0].mxu0
        %1837 = vdwg.mxu0
        %v1838 = vpack.c.bf16 %v1716, %v1716
        %v1839 = vpack.c.bf16 %v1719, %v1719
        %v1840 = vpack.c.bf16 %v1774, %v1774
        %v1841 = vpack.c.bf16 %v1777, %v1777
        %v1843 = vsel %vm1448, %v1838, 0
        %v1846 = vsel %vm1448, %v1840, 0
        %1848 = vmatprep.subr.bf16.mxu0 0
        %1849 = vmatpush1.bf16.xpose.msra.mxu0 %v1846
        %1850 = vmatprep.subr.bf16.mxu0 0
        %1851 = vmatpush1.bf16.xpose.msra.mxu0 0
        %1852 = vmatprep.subr.bf16.mxu0 0
        %1853 = vmatpush1.bf16.xpose.msra.mxu0 0
        %1854 = vmatprep.subr.bf16.mxu0 0
        %1855 = vmatpush1.bf16.xpose.msra.mxu0 0
        %1856 = vmatprep.subr.bf16.mxu0 0
        %1857 = vmatpush1.bf16.xpose.msra.mxu0 0
        %1858 = vmatprep.subr.bf16.mxu0 0
        %1859 = vmatpush1.bf16.xpose.msra.mxu0 0
        %1860 = vmatprep.subr.bf16.mxu0 0
        %1861 = vmatpush1.bf16.xpose.msra.mxu0 0
        %1862 = vmatprep.subr.bf16.mxu0 0
        %1863 = vmatpush1.bf16.xpose.msra.mxu0 0
        %1864 = vmatprep.subr.bf16.mxu0 0
        %1865 = vmatpush1.bf16.xpose.msra.mxu0 0
        %1866 = vmatprep.subr.bf16.mxu0 0
        %1867 = vmatpush1.bf16.xpose.msra.mxu0 0
        %1868 = vmatprep.subr.bf16.mxu0 0
        %1869 = vmatpush1.bf16.xpose.msra.mxu0 0
        %1870 = vmatprep.subr.bf16.mxu0 0
        %1871 = vmatpush1.bf16.xpose.msra.mxu0 0
        %1872 = vmatprep.subr.bf16.mxu0 0
        %1873 = vmatpush1.bf16.xpose.msra.mxu0 0
        %1874 = vmatprep.subr.bf16.mxu0 0
        %1875 = vmatpush1.bf16.xpose.msra.mxu0 0
        %1876 = vmatprep.subr.bf16.mxu0 0
        %1877 = vmatpush1.bf16.xpose.msra.mxu0 0
        %1878 = vmatprep.subr.bf16.mxu0 0
        %1879 = vmatpush1.bf16.xpose.msra.mxu0 0
        %1880 = vmatprep.mubr.bf16.mxu0 0
        %1881 = vmatmul.mubr.bf16.gmra.mrb[0].mxu0 %v1843
        %v1882 = vpop.f32.mrb[0].mxu0
        %v1883 = vadd.f32 0.0, %v1882
        %v1884 = vpop.f32.mrb[0].mxu0
        %v1885 = vpop.f32.mrb[0].mxu0
        %v1886 = vpop.f32.mrb[0].mxu0
        %1887 = vdwg.mxu0
        %v1889 = vsel %vm1448, %v1839, 0
        %v1892 = vsel %vm1448, %v1841, 0
        %1894 = vmatprep.subr.bf16.mxu0 0
        %1895 = vmatpush1.bf16.xpose.msra.mxu0 %v1892
        %1896 = vmatprep.subr.bf16.mxu0 0
        %1897 = vmatpush1.bf16.xpose.msra.mxu0 0
        %1898 = vmatprep.subr.bf16.mxu0 0
        %1899 = vmatpush1.bf16.xpose.msra.mxu0 0
        %1900 = vmatprep.subr.bf16.mxu0 0
        %1901 = vmatpush1.bf16.xpose.msra.mxu0 0
        %1902 = vmatprep.subr.bf16.mxu0 0
        %1903 = vmatpush1.bf16.xpose.msra.mxu0 0
        %1904 = vmatprep.subr.bf16.mxu0 0
        %1905 = vmatpush1.bf16.xpose.msra.mxu0 0
        %1906 = vmatprep.subr.bf16.mxu0 0
        %1907 = vmatpush1.bf16.xpose.msra.mxu0 0
        %1908 = vmatprep.subr.bf16.mxu0 0
        %1909 = vmatpush1.bf16.xpose.msra.mxu0 0
        %1910 = vmatprep.subr.bf16.mxu0 0
        %1911 = vmatpush1.bf16.xpose.msra.mxu0 0
        %1912 = vmatprep.subr.bf16.mxu0 0
        %1913 = vmatpush1.bf16.xpose.msra.mxu0 0
        %1914 = vmatprep.subr.bf16.mxu0 0
        %1915 = vmatpush1.bf16.xpose.msra.mxu0 0
        %1916 = vmatprep.subr.bf16.mxu0 0
        %1917 = vmatpush1.bf16.xpose.msra.mxu0 0
        %1918 = vmatprep.subr.bf16.mxu0 0
        %1919 = vmatpush1.bf16.xpose.msra.mxu0 0
        %1920 = vmatprep.subr.bf16.mxu0 0
        %1921 = vmatpush1.bf16.xpose.msra.mxu0 0
        %1922 = vmatprep.subr.bf16.mxu0 0
        %1923 = vmatpush1.bf16.xpose.msra.mxu0 0
        %1924 = vmatprep.subr.bf16.mxu0 0
        %1925 = vmatpush1.bf16.xpose.msra.mxu0 0
        %1926 = vmatprep.mubr.bf16.mxu0 0
        %1927 = vmatmul.mubr.bf16.gmra.mrb[0].mxu0 %v1889
        %v1928 = vpop.f32.mrb[0].mxu0
        %v1929 = vadd.f32 0.0, %v1928
        %v1930 = vpop.f32.mrb[0].mxu0
        %v1931 = vpop.f32.mrb[0].mxu0
        %v1932 = vpop.f32.mrb[0].mxu0
        %1933 = vdwg.mxu0
        %v1934 = vsel %vm1541, %v1883, -inf
        %1935 = vmax.xlane.f32.xlu0 %v1934
        %v1936 = vpop.xlane.xlu0 %1935
        %v1937 = vsel %vm1541, %v1929, -inf
        %1938 = vmax.xlane.f32.xlu0 %v1937
        %v1939 = vpop.xlane.xlu0 %1938
        %v1940 = vsub.f32 %v1883, %v1936
        %v1941 = vsub.f32 %v1929, %v1939
        %v1942 = vmul.f32 %v1940, 1.442695
        %v1943 = vpow.pop %v1942
        %v1944 = vmul.f32 %v1941, 1.442695
        %v1945 = vpow.pop %v1944
        %v1946 = vsel %vm1541, %v1943, 0.0
        %1947 = vadd.xlane.f32.xlu0 %v1946
        %v1948 = vpop.xlane.xlu0 %1947
        %v1949 = vsel %vm1541, %v1945, 0.0
        %1950 = vadd.xlane.f32.xlu0 %v1949
        %v1951 = vpop.xlane.xlu0 %1950
        %v1952 = vrcp.pop %v1948
        %v1953 = vrcp.pop %v1951
        %v1954 = vmul.f32 %v1943, %v1952
        %v1955 = vmul.f32 %v1945, %v1953
        %v1956 = vpack.c.bf16 %v1954, %v1954
        %v1957 = vpack.c.bf16 %v1955, %v1955
        %v1958 = vpack.c.bf16 %v1832, %v1832
        %v1959 = vpack.c.bf16 %v1835, %v1835
        %v1961 = vsel %vm1541, %v1956, 0
        %v1964 = vsel %vm1571, %v1958, 0
        %1966 = vmatprep.subr.bf16.mxu0 0
        %1967 = vmatpush1.bf16.msra.mxu0 %v1964
        %1968 = vmatprep.subr.bf16.mxu0 0
        %1969 = vmatpush1.bf16.msra.mxu0 0
        %1970 = vmatprep.subr.bf16.mxu0 0
        %1971 = vmatpush1.bf16.msra.mxu0 0
        %1972 = vmatprep.subr.bf16.mxu0 0
        %1973 = vmatpush1.bf16.msra.mxu0 0
        %1974 = vmatprep.subr.bf16.mxu0 0
        %1975 = vmatpush1.bf16.msra.mxu0 0
        %1976 = vmatprep.subr.bf16.mxu0 0
        %1977 = vmatpush1.bf16.msra.mxu0 0
        %1978 = vmatprep.subr.bf16.mxu0 0
        %1979 = vmatpush1.bf16.msra.mxu0 0
        %1980 = vmatprep.subr.bf16.mxu0 0
        %1981 = vmatpush1.bf16.msra.mxu0 0
        %1982 = vmatprep.subr.bf16.mxu0 0
        %1983 = vmatpush1.bf16.msra.mxu0 0
        %1984 = vmatprep.subr.bf16.mxu0 0
        %1985 = vmatpush1.bf16.msra.mxu0 0
        %1986 = vmatprep.subr.bf16.mxu0 0
        %1987 = vmatpush1.bf16.msra.mxu0 0
        %1988 = vmatprep.subr.bf16.mxu0 0
        %1989 = vmatpush1.bf16.msra.mxu0 0
        %1990 = vmatprep.subr.bf16.mxu0 0
        %1991 = vmatpush1.bf16.msra.mxu0 0
        %1992 = vmatprep.subr.bf16.mxu0 0
        %1993 = vmatpush1.bf16.msra.mxu0 0
        %1994 = vmatprep.subr.bf16.mxu0 0
        %1995 = vmatpush1.bf16.msra.mxu0 0
        %1996 = vmatprep.subr.bf16.mxu0 0
        %1997 = vmatpush1.bf16.msra.mxu0 0
        %1998 = vmatprep.mubr.bf16.mxu0 0
        %1999 = vmatmul.mubr.bf16.gmra.mrb[0].mxu0 %v1961
        %v2000 = vpop.f32.mrb[0].mxu0
        %v2001 = vadd.f32 0.0, %v2000
        %v2002 = vpop.f32.mrb[0].mxu0
        %v2003 = vpop.f32.mrb[0].mxu0
        %v2004 = vpop.f32.mrb[0].mxu0
        %2005 = vdwg.mxu0
        %v2007 = vsel %vm1541, %v1957, 0
        %v2010 = vsel %vm1571, %v1959, 0
        %2012 = vmatprep.subr.bf16.mxu0 0
        %2013 = vmatpush1.bf16.msra.mxu0 %v2010
        %2014 = vmatprep.subr.bf16.mxu0 0
        %2015 = vmatpush1.bf16.msra.mxu0 0
        %2016 = vmatprep.subr.bf16.mxu0 0
        %2017 = vmatpush1.bf16.msra.mxu0 0
        %2018 = vmatprep.subr.bf16.mxu0 0
        %2019 = vmatpush1.bf16.msra.mxu0 0
        %2020 = vmatprep.subr.bf16.mxu0 0
        %2021 = vmatpush1.bf16.msra.mxu0 0
        %2022 = vmatprep.subr.bf16.mxu0 0
        %2023 = vmatpush1.bf16.msra.mxu0 0
        %2024 = vmatprep.subr.bf16.mxu0 0
        %2025 = vmatpush1.bf16.msra.mxu0 0
        %2026 = vmatprep.subr.bf16.mxu0 0
        %2027 = vmatpush1.bf16.msra.mxu0 0
        %2028 = vmatprep.subr.bf16.mxu0 0
        %2029 = vmatpush1.bf16.msra.mxu0 0
        %2030 = vmatprep.subr.bf16.mxu0 0
        %2031 = vmatpush1.bf16.msra.mxu0 0
        %2032 = vmatprep.subr.bf16.mxu0 0
        %2033 = vmatpush1.bf16.msra.mxu0 0
        %2034 = vmatprep.subr.bf16.mxu0 0
        %2035 = vmatpush1.bf16.msra.mxu0 0
        %2036 = vmatprep.subr.bf16.mxu0 0
        %2037 = vmatpush1.bf16.msra.mxu0 0
        %2038 = vmatprep.subr.bf16.mxu0 0
        %2039 = vmatpush1.bf16.msra.mxu0 0
        %2040 = vmatprep.subr.bf16.mxu0 0
        %2041 = vmatpush1.bf16.msra.mxu0 0
        %2042 = vmatprep.subr.bf16.mxu0 0
        %2043 = vmatpush1.bf16.msra.mxu0 0
        %2044 = vmatprep.mubr.bf16.mxu0 0
        %2045 = vmatmul.mubr.bf16.gmra.mrb[0].mxu0 %v2007
        %v2046 = vpop.f32.mrb[0].mxu0
        %v2047 = vadd.f32 0.0, %v2046
        %v2048 = vpop.f32.mrb[0].mxu0
        %v2049 = vpop.f32.mrb[0].mxu0
        %v2050 = vpop.f32.mrb[0].mxu0
        %2051 = vdwg.mxu0
        %s2052 = scalar_lea.vmem %s13, 8
        %v2053 = vld [vmem:[%s2052] sm:$0xf]
        %v2054 = vld [vmem:[%s2052 + $0x4] sm:$0xf]
        %v2055 = vpack.c.bf16 %v2047, %v2001
        %v2058 = vunpack.c.l.b16 %v2053
        %v2059 = vunpack.c.l.b16 %v2054
        %v2060 = vpack.c.b16 %v2059, %v2058
        %v2063 = vsel %vm1448, %v2055, 0
        %2065 = vmatprep.subr.bf16.mxu0 0
        %2066 = vmatpush1.bf16.msra.mxu0 %v2060
        %2067 = vmatprep.subr.bf16.mxu0 0
        %2068 = vmatpush1.bf16.msra.mxu0 0
        %2069 = vmatprep.subr.bf16.mxu0 0
        %2070 = vmatpush1.bf16.msra.mxu0 0
        %2071 = vmatprep.subr.bf16.mxu0 0
        %2072 = vmatpush1.bf16.msra.mxu0 0
        %2073 = vmatprep.subr.bf16.mxu0 0
        %2074 = vmatpush1.bf16.msra.mxu0 0
        %2075 = vmatprep.subr.bf16.mxu0 0
        %2076 = vmatpush1.bf16.msra.mxu0 0
        %2077 = vmatprep.subr.bf16.mxu0 0
        %2078 = vmatpush1.bf16.msra.mxu0 0
        %2079 = vmatprep.subr.bf16.mxu0 0
        %2080 = vmatpush1.bf16.msra.mxu0 0
        %2081 = vmatprep.subr.bf16.mxu0 0
        %2082 = vmatpush1.bf16.msra.mxu0 0
        %2083 = vmatprep.subr.bf16.mxu0 0
        %2084 = vmatpush1.bf16.msra.mxu0 0
        %2085 = vmatprep.subr.bf16.mxu0 0
        %2086 = vmatpush1.bf16.msra.mxu0 0
        %2087 = vmatprep.subr.bf16.mxu0 0
        %2088 = vmatpush1.bf16.msra.mxu0 0
        %2089 = vmatprep.subr.bf16.mxu0 0
        %2090 = vmatpush1.bf16.msra.mxu0 0
        %2091 = vmatprep.subr.bf16.mxu0 0
        %2092 = vmatpush1.bf16.msra.mxu0 0
        %2093 = vmatprep.subr.bf16.mxu0 0
        %2094 = vmatpush1.bf16.msra.mxu0 0
        %2095 = vmatprep.subr.bf16.mxu0 0
        %2096 = vmatpush1.bf16.msra.mxu0 0
        %2097 = vmatprep.mubr.bf16.mxu0 0
        %2098 = vmatmul.mubr.bf16.gmra.mrb[0].mxu0 %v2063
        %v2099 = vpop.f32.mrb[0].mxu0
        %v2100 = vadd.f32 0.0, %v2099
        %v2101 = vpop.f32.mrb[0].mxu0
        %v2102 = vpop.f32.mrb[0].mxu0
        %v2103 = vadd.f32 0.0, %v2102
        %v2104 = vpop.f32.mrb[0].mxu0
        %2105 = vdwg.mxu0
        %v2108 = vunpack.c.l.b16 %v1661
        %v2109 = vunpack.c.l.b16 %v1662
        %v2110 = vpack.c.b16 %v2109, %v2108
        %v2113 = vsel %vm1448, %v1663, 0
        %2115 = vmatprep.subr.bf16.mxu0 0
        %2116 = vmatpush1.bf16.msra.mxu0 %v2110
        %2117 = vmatprep.subr.bf16.mxu0 0
        %2118 = vmatpush1.bf16.msra.mxu0 0
        %2119 = vmatprep.subr.bf16.mxu0 0
        %2120 = vmatpush1.bf16.msra.mxu0 0
        %2121 = vmatprep.subr.bf16.mxu0 0
        %2122 = vmatpush1.bf16.msra.mxu0 0
        %2123 = vmatprep.subr.bf16.mxu0 0
        %2124 = vmatpush1.bf16.msra.mxu0 0
        %2125 = vmatprep.subr.bf16.mxu0 0
        %2126 = vmatpush1.bf16.msra.mxu0 0
        %2127 = vmatprep.subr.bf16.mxu0 0
        %2128 = vmatpush1.bf16.msra.mxu0 0
        %2129 = vmatprep.subr.bf16.mxu0 0
        %2130 = vmatpush1.bf16.msra.mxu0 0
        %2131 = vmatprep.subr.bf16.mxu0 0
        %2132 = vmatpush1.bf16.msra.mxu0 0
        %2133 = vmatprep.subr.bf16.mxu0 0
        %2134 = vmatpush1.bf16.msra.mxu0 0
        %2135 = vmatprep.subr.bf16.mxu0 0
        %2136 = vmatpush1.bf16.msra.mxu0 0
        %2137 = vmatprep.subr.bf16.mxu0 0
        %2138 = vmatpush1.bf16.msra.mxu0 0
        %2139 = vmatprep.subr.bf16.mxu0 0
        %2140 = vmatpush1.bf16.msra.mxu0 0
        %2141 = vmatprep.subr.bf16.mxu0 0
        %2142 = vmatpush1.bf16.msra.mxu0 0
        %2143 = vmatprep.subr.bf16.mxu0 0
        %2144 = vmatpush1.bf16.msra.mxu0 0
        %2145 = vmatprep.subr.bf16.mxu0 0
        %2146 = vmatpush1.bf16.msra.mxu0 0
        %2147 = vmatprep.mubr.bf16.mxu0 0
        %2148 = vmatmul.mubr.bf16.gmra.mrb[0].mxu0 %v2113
        %v2149 = vpop.f32.mrb[0].mxu0
        %v2150 = vadd.f32 %v2100, %v2149
        %v2151 = vpop.f32.mrb[0].mxu0
        %v2152 = vpop.f32.mrb[0].mxu0
        %v2153 = vadd.f32 %v2103, %v2152
        %v2154 = vpop.f32.mrb[0].mxu0
        %2155 = vdwg.mxu0
        %v2156 = vadd.f32 %v2150, %v1265
        %v2157 = vadd.f32 %v2153, %v1266
        %v2158 = vsel %vm1285, %v2156, 0.0
        %2159 = vadd.xlane.f32.xlu0 %v2158
        %v2160 = vpop.xlane.xlu0 %2159
        %v2161 = vsel %vm1285, %v2157, 0.0
        %2162 = vadd.xlane.f32.xlu0 %v2161
        %v2163 = vpop.xlane.xlu0 %2162
        %v2164 = vrcp.pop 32.0
        %v2165 = vmul.f32 %v2160, %v2164
        %v2166 = vmul.f32 %v2163, %v2164
        %v2167 = vsub.f32 %v2156, %v2165
        %v2168 = vsub.f32 %v2157, %v2166
        %v2169 = vmul.f32 %v2167, %v2167
        %v2170 = vmul.f32 %v2168, %v2168
        %v2171 = vsel %vm1285, %v2169, 0.0
        %2172 = vadd.xlane.f32.xlu0 %v2171
        %v2173 = vpop.xlane.xlu0 %2172
        %v2174 = vsel %vm1285, %v2170, 0.0
        %2175 = vadd.xlane.f32.xlu0 %v2174
        %v2176 = vpop.xlane.xlu0 %2175
        %v2177 = vmul.f32 %v2173, %v2164
        %v2178 = vmul.f32 %v2176, %v2164
        %v2179 = vadd.f32 %v2177, 1e-06
        %v2180 = vadd.f32 %v2178, 1e-06
        %v2181 = vrsqrt.pop %v2179
        %v2182 = vrsqrt.pop %v2180
        %v2183 = vmul.f32 %v2167, %v2181
        %v2184 = vmul.f32 %v2168, %v2182
        %v2185 = vlaneseq
        %v2186 = vshrl.u32 %v2185, 7
        %v2187 = vsub.s32 0, %v2186
        %v2188 = vrot.slane %v1267, %v2187
        %v2189 = vmul.f32 %v2183, %v2188
        %v2190 = vmul.f32 %v2184, %v2188
        %v2191 = vlaneseq
        %v2192 = vshrl.u32 %v2191, 7
        %v2193 = vsub.s32 1, %v2192
        %v2194 = vrot.slane %v1267, %v2193
        %v2195 = vadd.f32 %v2189, %v2194
        %v2196 = vadd.f32 %v2190, %v2194
        %v2197 = vld [vmem:[%s7] sm:$0xf]
        %v2198 = vld [vmem:[%s7 + $0x4] sm:$0xf]
        %v2199 = vld [vmem:[%s7 + $0x8] sm:$0xf]
        %v2200 = vld [vmem:[%s7 + $0xc] sm:$0xf]
        %v2201 = vpack.c.bf16 %v2196, %v2195
        %v2202 = vld [vmem:[%s5] sm:$0x1]
        %v2204 = vlaneseq
        %v2205 = vshrl.u32 %v2204, 7
        %v2206 = vsub.s32 0, %v2205
        %v2207 = vrot.slane %v2202, %v2206
        %v2213 = vunpack.c.l.b16 %v2197
        %v2214 = vunpack.c.l.b16 %v2198
        %v2215 = vunpack.c.l.b16 %v2199
        %v2216 = vunpack.c.l.b16 %v2200
        %v2217 = vpack.c.b16 %v2214, %v2213
        %v2218 = vpack.c.b16 %v2216, %v2215
        %v2222 = vsel %vm1285, %v2201, 0
        %2224 = vmatprep.subr.bf16.mxu0 0
        %2225 = vmatpush1.bf16.msra.mxu0 %v2217
        %2226 = vmatprep.subr.bf16.mxu0 0
        %2227 = vmatpush1.bf16.msra.mxu0 %v2218
        %2228 = vmatprep.subr.bf16.mxu0 0
        %2229 = vmatpush1.bf16.msra.mxu0 0
        %2230 = vmatprep.subr.bf16.mxu0 0
        %2231 = vmatpush1.bf16.msra.mxu0 0
        %2232 = vmatprep.subr.bf16.mxu0 0
        %2233 = vmatpush1.bf16.msra.mxu0 0
        %2234 = vmatprep.subr.bf16.mxu0 0
        %2235 = vmatpush1.bf16.msra.mxu0 0
        %2236 = vmatprep.subr.bf16.mxu0 0
        %2237 = vmatpush1.bf16.msra.mxu0 0
        %2238 = vmatprep.subr.bf16.mxu0 0
        %2239 = vmatpush1.bf16.msra.mxu0 0
        %2240 = vmatprep.subr.bf16.mxu0 0
        %2241 = vmatpush1.bf16.msra.mxu0 0
        %2242 = vmatprep.subr.bf16.mxu0 0
        %2243 = vmatpush1.bf16.msra.mxu0 0
        %2244 = vmatprep.subr.bf16.mxu0 0
        %2245 = vmatpush1.bf16.msra.mxu0 0
        %2246 = vmatprep.subr.bf16.mxu0 0
        %2247 = vmatpush1.bf16.msra.mxu0 0
        %2248 = vmatprep.subr.bf16.mxu0 0
        %2249 = vmatpush1.bf16.msra.mxu0 0
        %2250 = vmatprep.subr.bf16.mxu0 0
        %2251 = vmatpush1.bf16.msra.mxu0 0
        %2252 = vmatprep.subr.bf16.mxu0 0
        %2253 = vmatpush1.bf16.msra.mxu0 0
        %2254 = vmatprep.subr.bf16.mxu0 0
        %2255 = vmatpush1.bf16.msra.mxu0 0
        %2256 = vmatprep.mubr.bf16.mxu0 0
        %2257 = vmatmul.mubr.bf16.gmra.mrb[0].mxu0 %v2222
        %v2258 = vpop.f32.mrb[0].mxu0
        %v2259 = vadd.f32 %v2207, %v2258
        %v2260 = vpop.f32.mrb[0].mxu0
        %v2261 = vpop.f32.mrb[0].mxu0
        %v2262 = vadd.f32 %v2207, %v2261
        %v2263 = vpop.f32.mrb[0].mxu0
        %2264 = vdwg.mxu0
        %v2265 = vmax.f32 %v2259, 0.0
        %v2266 = vmax.f32 %v2262, 0.0
        %v2267 = vld [vmem:[%s9] sm:$0xf]
        %v2268 = vld [vmem:[%s9 + $0x4] sm:$0xf]
        %v2269 = vld [vmem:[%s9 + $0x8] sm:$0xf]
        %v2270 = vld [vmem:[%s9 + $0xc] sm:$0xf]
        %v2271 = vld [vmem:[%s9 + $0x10] sm:$0xf]
        %v2272 = vld [vmem:[%s9 + $0x14] sm:$0xf]
        %v2273 = vld [vmem:[%s9 + $0x18] sm:$0xf]
        %v2274 = vld [vmem:[%s9 + $0x1c] sm:$0xf]
        %v2275 = vpack.c.bf16 %v2266, %v2265
        %v2276 = vlaneseq
        %v2277 = vshrl.u32 %v2276, 7
        %v2278 = vsub.s32 4, %v2277
        %v2279 = vrot.slane %v1267, %v2278
        %v2288 = vunpack.c.l.b16 %v2267
        %v2289 = vunpack.c.l.b16 %v2268
        %v2290 = vunpack.c.l.b16 %v2269
        %v2291 = vunpack.c.l.b16 %v2270
        %v2292 = vunpack.c.l.b16 %v2271
        %v2293 = vunpack.c.l.b16 %v2272
        %v2294 = vunpack.c.l.b16 %v2273
        %v2295 = vunpack.c.l.b16 %v2274
        %v2296 = vpack.c.b16 %v2289, %v2288
        %v2297 = vpack.c.b16 %v2291, %v2290
        %v2298 = vpack.c.b16 %v2293, %v2292
        %v2299 = vpack.c.b16 %v2295, %v2294
        %vm2304 = vcmask 523264
        %v2306 = vsel %vm2304, %v2275, 0
        %2308 = vmatprep.subr.bf16.mxu0 0
        %2309 = vmatpush1.bf16.msra.mxu0 %v2296
        %2310 = vmatprep.subr.bf16.mxu0 0
        %2311 = vmatpush1.bf16.msra.mxu0 %v2297
        %2312 = vmatprep.subr.bf16.mxu0 0
        %2313 = vmatpush1.bf16.msra.mxu0 %v2298
        %2314 = vmatprep.subr.bf16.mxu0 0
        %2315 = vmatpush1.bf16.msra.mxu0 %v2299
        %2316 = vmatprep.subr.bf16.mxu0 0
        %2317 = vmatpush1.bf16.msra.mxu0 0
        %2318 = vmatprep.subr.bf16.mxu0 0
        %2319 = vmatpush1.bf16.msra.mxu0 0
        %2320 = vmatprep.subr.bf16.mxu0 0
        %2321 = vmatpush1.bf16.msra.mxu0 0
        %2322 = vmatprep.subr.bf16.mxu0 0
        %2323 = vmatpush1.bf16.msra.mxu0 0
        %2324 = vmatprep.subr.bf16.mxu0 0
        %2325 = vmatpush1.bf16.msra.mxu0 0
        %2326 = vmatprep.subr.bf16.mxu0 0
        %2327 = vmatpush1.bf16.msra.mxu0 0
        %2328 = vmatprep.subr.bf16.mxu0 0
        %2329 = vmatpush1.bf16.msra.mxu0 0
        %2330 = vmatprep.subr.bf16.mxu0 0
        %2331 = vmatpush1.bf16.msra.mxu0 0
        %2332 = vmatprep.subr.bf16.mxu0 0
        %2333 = vmatpush1.bf16.msra.mxu0 0
        %2334 = vmatprep.subr.bf16.mxu0 0
        %2335 = vmatpush1.bf16.msra.mxu0 0
        %2336 = vmatprep.subr.bf16.mxu0 0
        %2337 = vmatpush1.bf16.msra.mxu0 0
        %2338 = vmatprep.subr.bf16.mxu0 0
        %2339 = vmatpush1.bf16.msra.mxu0 0
        %2340 = vmatprep.mubr.bf16.mxu0 0
        %2341 = vmatmul.mubr.bf16.gmra.mrb[0].mxu0 %v2306
        %v2342 = vpop.f32.mrb[0].mxu0
        %v2343 = vadd.f32 %v2279, %v2342
        %v2344 = vpop.f32.mrb[0].mxu0
        %v2345 = vpop.f32.mrb[0].mxu0
        %v2346 = vadd.f32 %v2279, %v2345
        %v2347 = vpop.f32.mrb[0].mxu0
        %2348 = vdwg.mxu0
        %v2349 = vadd.f32 %v2343, %v2195
        %v2350 = vadd.f32 %v2346, %v2196
        %v2351 = vsel %vm1285, %v2349, 0.0
        %2352 = vadd.xlane.f32.xlu0 %v2351
        %v2353 = vpop.xlane.xlu0 %2352
        %v2354 = vsel %vm1285, %v2350, 0.0
        %2355 = vadd.xlane.f32.xlu0 %v2354
        %v2356 = vpop.xlane.xlu0 %2355
        %v2357 = vmul.f32 %v2353, %v2164
        %v2358 = vmul.f32 %v2356, %v2164
        %v2359 = vsub.f32 %v2349, %v2357
        %v2360 = vsub.f32 %v2350, %v2358
        %v2361 = vmul.f32 %v2359, %v2359
        %v2362 = vmul.f32 %v2360, %v2360
        %v2363 = vsel %vm1285, %v2361, 0.0
        %2364 = vadd.xlane.f32.xlu0 %v2363
        %v2365 = vpop.xlane.xlu0 %2364
        %v2366 = vsel %vm1285, %v2362, 0.0
        %2367 = vadd.xlane.f32.xlu0 %v2366
        %v2368 = vpop.xlane.xlu0 %2367
        %v2369 = vmul.f32 %v2365, %v2164
        %v2370 = vmul.f32 %v2368, %v2164
        %v2371 = vadd.f32 %v2369, 1e-06
        %v2372 = vadd.f32 %v2370, 1e-06
        %v2373 = vrsqrt.pop %v2371
        %v2374 = vrsqrt.pop %v2372
        %v2375 = vmul.f32 %v2359, %v2373
        %v2376 = vmul.f32 %v2360, %v2374
        %v2377 = vlaneseq
        %v2378 = vshrl.u32 %v2377, 7
        %v2379 = vsub.s32 2, %v2378
        %v2380 = vrot.slane %v1267, %v2379
        %v2381 = vmul.f32 %v2375, %v2380
        %v2382 = vmul.f32 %v2376, %v2380
        %v2383 = vlaneseq
        %v2384 = vshrl.u32 %v2383, 7
        %v2385 = vsub.s32 3, %v2384
        %v2386 = vrot.slane %v1267, %v2385
        %v2387 = vadd.f32 %v2381, %v2386
        %v2388 = vadd.f32 %v2382, %v2386
        %s2389 = scalar_lea.vmem %s11, 8
        %v2390 = vld [vmem:[%s2389] sm:$0x1f]
        %s2391 = scalar_lea.vmem %s17, 32
        %v2392 = vld [vmem:[%s2391] sm:$0xf]
        %v2393 = vld [vmem:[%s2391 + $0x4] sm:$0xf]
        %v2394 = vld [vmem:[%s2391 + $0x8] sm:$0xf]
        %v2395 = vld [vmem:[%s2391 + $0xc] sm:$0xf]
        %v2396 = vpack.c.bf16 %v2388, %v2387
        %v2401 = vunpack.c.l.b16 %v2392
        %v2402 = vunpack.c.l.b16 %v2393
        %v2403 = vunpack.c.l.b16 %v2394
        %v2404 = vunpack.c.l.b16 %v2395
        %v2405 = vpack.c.b16 %v2402, %v2401
        %v2406 = vpack.c.b16 %v2404, %v2403
        %v2410 = vsel %vm1285, %v2396, 0
        %2412 = vmatprep.subr.bf16.mxu0 0
        %2413 = vmatpush1.bf16.msra.mxu0 %v2405
        %2414 = vmatprep.subr.bf16.mxu0 0
        %2415 = vmatpush1.bf16.msra.mxu0 %v2406
        %2416 = vmatprep.subr.bf16.mxu0 0
        %2417 = vmatpush1.bf16.msra.mxu0 0
        %2418 = vmatprep.subr.bf16.mxu0 0
        %2419 = vmatpush1.bf16.msra.mxu0 0
        %2420 = vmatprep.subr.bf16.mxu0 0
        %2421 = vmatpush1.bf16.msra.mxu0 0
        %2422 = vmatprep.subr.bf16.mxu0 0
        %2423 = vmatpush1.bf16.msra.mxu0 0
        %2424 = vmatprep.subr.bf16.mxu0 0
        %2425 = vmatpush1.bf16.msra.mxu0 0
        %2426 = vmatprep.subr.bf16.mxu0 0
        %2427 = vmatpush1.bf16.msra.mxu0 0
        %2428 = vmatprep.subr.bf16.mxu0 0
        %2429 = vmatpush1.bf16.msra.mxu0 0
        %2430 = vmatprep.subr.bf16.mxu0 0
        %2431 = vmatpush1.bf16.msra.mxu0 0
        %2432 = vmatprep.subr.bf16.mxu0 0
        %2433 = vmatpush1.bf16.msra.mxu0 0
        %2434 = vmatprep.subr.bf16.mxu0 0
        %2435 = vmatpush1.bf16.msra.mxu0 0
        %2436 = vmatprep.subr.bf16.mxu0 0
        %2437 = vmatpush1.bf16.msra.mxu0 0
        %2438 = vmatprep.subr.bf16.mxu0 0
        %2439 = vmatpush1.bf16.msra.mxu0 0
        %2440 = vmatprep.subr.bf16.mxu0 0
        %2441 = vmatpush1.bf16.msra.mxu0 0
        %2442 = vmatprep.subr.bf16.mxu0 0
        %2443 = vmatpush1.bf16.msra.mxu0 0
        %2444 = vmatprep.mubr.bf16.mxu0 0
        %2445 = vmatmul.mubr.bf16.gmra.mrb[0].mxu0 %v2410
        %v2446 = vpop.f32.mrb[0].mxu0
        %v2447 = vadd.f32 0.0, %v2446
        %v2448 = vpop.f32.mrb[0].mxu0
        %v2449 = vpop.f32.mrb[0].mxu0
        %v2450 = vadd.f32 0.0, %v2449
        %v2451 = vpop.f32.mrb[0].mxu0
        %2452 = vdwg.mxu0
        %s2453 = scalar_lea.vmem %s15, 32
        %v2454 = vld [vmem:[%s2453] sm:$0xf]
        %v2455 = vld [vmem:[%s2453 + $0x4] sm:$0xf]
        %v2456 = vld [vmem:[%s2453 + $0x8] sm:$0xf]
        %v2457 = vld [vmem:[%s2453 + $0xc] sm:$0xf]
        %v2462 = vunpack.c.l.b16 %v2454
        %v2463 = vunpack.c.l.b16 %v2455
        %v2464 = vunpack.c.l.b16 %v2456
        %v2465 = vunpack.c.l.b16 %v2457
        %v2466 = vpack.c.b16 %v2463, %v2462
        %v2467 = vpack.c.b16 %v2465, %v2464
        %2470 = vmatprep.subr.bf16.mxu0 0
        %2471 = vmatpush1.bf16.msra.mxu0 %v2466
        %2472 = vmatprep.subr.bf16.mxu0 0
        %2473 = vmatpush1.bf16.msra.mxu0 %v2467
        %2474 = vmatprep.subr.bf16.mxu0 0
        %2475 = vmatpush1.bf16.msra.mxu0 0
        %2476 = vmatprep.subr.bf16.mxu0 0
        %2477 = vmatpush1.bf16.msra.mxu0 0
        %2478 = vmatprep.subr.bf16.mxu0 0
        %2479 = vmatpush1.bf16.msra.mxu0 0
        %2480 = vmatprep.subr.bf16.mxu0 0
        %2481 = vmatpush1.bf16.msra.mxu0 0
        %2482 = vmatprep.subr.bf16.mxu0 0
        %2483 = vmatpush1.bf16.msra.mxu0 0
        %2484 = vmatprep.subr.bf16.mxu0 0
        %2485 = vmatpush1.bf16.msra.mxu0 0
        %2486 = vmatprep.subr.bf16.mxu0 0
        %2487 = vmatpush1.bf16.msra.mxu0 0
        %2488 = vmatprep.subr.bf16.mxu0 0
        %2489 = vmatpush1.bf16.msra.mxu0 0
        %2490 = vmatprep.subr.bf16.mxu0 0
        %2491 = vmatpush1.bf16.msra.mxu0 0
        %2492 = vmatprep.subr.bf16.mxu0 0
        %2493 = vmatpush1.bf16.msra.mxu0 0
        %2494 = vmatprep.subr.bf16.mxu0 0
        %2495 = vmatpush1.bf16.msra.mxu0 0
        %2496 = vmatprep.subr.bf16.mxu0 0
        %2497 = vmatpush1.bf16.msra.mxu0 0
        %2498 = vmatprep.subr.bf16.mxu0 0
        %2499 = vmatpush1.bf16.msra.mxu0 0
        %2500 = vmatprep.subr.bf16.mxu0 0
        %2501 = vmatpush1.bf16.msra.mxu0 0
        %2502 = vmatprep.mubr.bf16.mxu0 0
        %2503 = vmatmul.mubr.bf16.gmra.mrb[0].mxu0 %v2410
        %v2504 = vpop.f32.mrb[0].mxu0
        %v2505 = vadd.f32 0.0, %v2504
        %v2506 = vpop.f32.mrb[0].mxu0
        %v2507 = vpop.f32.mrb[0].mxu0
        %v2508 = vadd.f32 0.0, %v2507
        %v2509 = vpop.f32.mrb[0].mxu0
        %2510 = vdwg.mxu0
        %s2511 = scalar_lea.vmem %s19, 32
        %v2512 = vld [vmem:[%s2511] sm:$0xf]
        %v2513 = vld [vmem:[%s2511 + $0x4] sm:$0xf]
        %v2514 = vld [vmem:[%s2511 + $0x8] sm:$0xf]
        %v2515 = vld [vmem:[%s2511 + $0xc] sm:$0xf]
        %v2520 = vunpack.c.l.b16 %v2512
        %v2521 = vunpack.c.l.b16 %v2513
        %v2522 = vunpack.c.l.b16 %v2514
        %v2523 = vunpack.c.l.b16 %v2515
        %v2524 = vpack.c.b16 %v2521, %v2520
        %v2525 = vpack.c.b16 %v2523, %v2522
        %2528 = vmatprep.subr.bf16.mxu0 0
        %2529 = vmatpush1.bf16.msra.mxu0 %v2524
        %2530 = vmatprep.subr.bf16.mxu0 0
        %2531 = vmatpush1.bf16.msra.mxu0 %v2525
        %2532 = vmatprep.subr.bf16.mxu0 0
        %2533 = vmatpush1.bf16.msra.mxu0 0
        %2534 = vmatprep.subr.bf16.mxu0 0
        %2535 = vmatpush1.bf16.msra.mxu0 0
        %2536 = vmatprep.subr.bf16.mxu0 0
        %2537 = vmatpush1.bf16.msra.mxu0 0
        %2538 = vmatprep.subr.bf16.mxu0 0
        %2539 = vmatpush1.bf16.msra.mxu0 0
        %2540 = vmatprep.subr.bf16.mxu0 0
        %2541 = vmatpush1.bf16.msra.mxu0 0
        %2542 = vmatprep.subr.bf16.mxu0 0
        %2543 = vmatpush1.bf16.msra.mxu0 0
        %2544 = vmatprep.subr.bf16.mxu0 0
        %2545 = vmatpush1.bf16.msra.mxu0 0
        %2546 = vmatprep.subr.bf16.mxu0 0
        %2547 = vmatpush1.bf16.msra.mxu0 0
        %2548 = vmatprep.subr.bf16.mxu0 0
        %2549 = vmatpush1.bf16.msra.mxu0 0
        %2550 = vmatprep.subr.bf16.mxu0 0
        %2551 = vmatpush1.bf16.msra.mxu0 0
        %2552 = vmatprep.subr.bf16.mxu0 0
        %2553 = vmatpush1.bf16.msra.mxu0 0
        %2554 = vmatprep.subr.bf16.mxu0 0
        %2555 = vmatpush1.bf16.msra.mxu0 0
        %2556 = vmatprep.subr.bf16.mxu0 0
        %2557 = vmatpush1.bf16.msra.mxu0 0
        %2558 = vmatprep.subr.bf16.mxu0 0
        %2559 = vmatpush1.bf16.msra.mxu0 0
        %2560 = vmatprep.mubr.bf16.mxu0 0
        %2561 = vmatmul.mubr.bf16.gmra.mrb[0].mxu0 %v2410
        %v2562 = vpop.f32.mrb[0].mxu0
        %v2563 = vadd.f32 0.0, %v2562
        %v2564 = vpop.f32.mrb[0].mxu0
        %v2565 = vpop.f32.mrb[0].mxu0
        %v2566 = vadd.f32 0.0, %v2565
        %v2567 = vpop.f32.mrb[0].mxu0
        %2568 = vdwg.mxu0
        %v2569 = vpack.c.bf16 %v2447, %v2447
        %v2570 = vpack.c.bf16 %v2450, %v2450
        %v2571 = vpack.c.bf16 %v2505, %v2505
        %v2572 = vpack.c.bf16 %v2508, %v2508
        %v2574 = vsel %vm1448, %v2569, 0
        %v2577 = vsel %vm1448, %v2571, 0
        %2579 = vmatprep.subr.bf16.mxu0 0
        %2580 = vmatpush1.bf16.xpose.msra.mxu0 %v2577
        %2581 = vmatprep.subr.bf16.mxu0 0
        %2582 = vmatpush1.bf16.xpose.msra.mxu0 0
        %2583 = vmatprep.subr.bf16.mxu0 0
        %2584 = vmatpush1.bf16.xpose.msra.mxu0 0
        %2585 = vmatprep.subr.bf16.mxu0 0
        %2586 = vmatpush1.bf16.xpose.msra.mxu0 0
        %2587 = vmatprep.subr.bf16.mxu0 0
        %2588 = vmatpush1.bf16.xpose.msra.mxu0 0
        %2589 = vmatprep.subr.bf16.mxu0 0
        %2590 = vmatpush1.bf16.xpose.msra.mxu0 0
        %2591 = vmatprep.subr.bf16.mxu0 0
        %2592 = vmatpush1.bf16.xpose.msra.mxu0 0
        %2593 = vmatprep.subr.bf16.mxu0 0
        %2594 = vmatpush1.bf16.xpose.msra.mxu0 0
        %2595 = vmatprep.subr.bf16.mxu0 0
        %2596 = vmatpush1.bf16.xpose.msra.mxu0 0
        %2597 = vmatprep.subr.bf16.mxu0 0
        %2598 = vmatpush1.bf16.xpose.msra.mxu0 0
        %2599 = vmatprep.subr.bf16.mxu0 0
        %2600 = vmatpush1.bf16.xpose.msra.mxu0 0
        %2601 = vmatprep.subr.bf16.mxu0 0
        %2602 = vmatpush1.bf16.xpose.msra.mxu0 0
        %2603 = vmatprep.subr.bf16.mxu0 0
        %2604 = vmatpush1.bf16.xpose.msra.mxu0 0
        %2605 = vmatprep.subr.bf16.mxu0 0
        %2606 = vmatpush1.bf16.xpose.msra.mxu0 0
        %2607 = vmatprep.subr.bf16.mxu0 0
        %2608 = vmatpush1.bf16.xpose.msra.mxu0 0
        %2609 = vmatprep.subr.bf16.mxu0 0
        %2610 = vmatpush1.bf16.xpose.msra.mxu0 0
        %2611 = vmatprep.mubr.bf16.mxu0 0
        %2612 = vmatmul.mubr.bf16.gmra.mrb[0].mxu0 %v2574
        %v2613 = vpop.f32.mrb[0].mxu0
        %v2614 = vadd.f32 0.0, %v2613
        %v2615 = vpop.f32.mrb[0].mxu0
        %v2616 = vpop.f32.mrb[0].mxu0
        %v2617 = vpop.f32.mrb[0].mxu0
        %2618 = vdwg.mxu0
        %v2620 = vsel %vm1448, %v2570, 0
        %v2623 = vsel %vm1448, %v2572, 0
        %2625 = vmatprep.subr.bf16.mxu0 0
        %2626 = vmatpush1.bf16.xpose.msra.mxu0 %v2623
        %2627 = vmatprep.subr.bf16.mxu0 0
        %2628 = vmatpush1.bf16.xpose.msra.mxu0 0
        %2629 = vmatprep.subr.bf16.mxu0 0
        %2630 = vmatpush1.bf16.xpose.msra.mxu0 0
        %2631 = vmatprep.subr.bf16.mxu0 0
        %2632 = vmatpush1.bf16.xpose.msra.mxu0 0
        %2633 = vmatprep.subr.bf16.mxu0 0
        %2634 = vmatpush1.bf16.xpose.msra.mxu0 0
        %2635 = vmatprep.subr.bf16.mxu0 0
        %2636 = vmatpush1.bf16.xpose.msra.mxu0 0
        %2637 = vmatprep.subr.bf16.mxu0 0
        %2638 = vmatpush1.bf16.xpose.msra.mxu0 0
        %2639 = vmatprep.subr.bf16.mxu0 0
        %2640 = vmatpush1.bf16.xpose.msra.mxu0 0
        %2641 = vmatprep.subr.bf16.mxu0 0
        %2642 = vmatpush1.bf16.xpose.msra.mxu0 0
        %2643 = vmatprep.subr.bf16.mxu0 0
        %2644 = vmatpush1.bf16.xpose.msra.mxu0 0
        %2645 = vmatprep.subr.bf16.mxu0 0
        %2646 = vmatpush1.bf16.xpose.msra.mxu0 0
        %2647 = vmatprep.subr.bf16.mxu0 0
        %2648 = vmatpush1.bf16.xpose.msra.mxu0 0
        %2649 = vmatprep.subr.bf16.mxu0 0
        %2650 = vmatpush1.bf16.xpose.msra.mxu0 0
        %2651 = vmatprep.subr.bf16.mxu0 0
        %2652 = vmatpush1.bf16.xpose.msra.mxu0 0
        %2653 = vmatprep.subr.bf16.mxu0 0
        %2654 = vmatpush1.bf16.xpose.msra.mxu0 0
        %2655 = vmatprep.subr.bf16.mxu0 0
        %2656 = vmatpush1.bf16.xpose.msra.mxu0 0
        %2657 = vmatprep.mubr.bf16.mxu0 0
        %2658 = vmatmul.mubr.bf16.gmra.mrb[0].mxu0 %v2620
        %v2659 = vpop.f32.mrb[0].mxu0
        %v2660 = vadd.f32 0.0, %v2659
        %v2661 = vpop.f32.mrb[0].mxu0
        %v2662 = vpop.f32.mrb[0].mxu0
        %v2663 = vpop.f32.mrb[0].mxu0
        %2664 = vdwg.mxu0
        %v2665 = vsel %vm1541, %v2614, -inf
        %2666 = vmax.xlane.f32.xlu0 %v2665
        %v2667 = vpop.xlane.xlu0 %2666
        %v2668 = vsel %vm1541, %v2660, -inf
        %2669 = vmax.xlane.f32.xlu0 %v2668
        %v2670 = vpop.xlane.xlu0 %2669
        %v2671 = vsub.f32 %v2614, %v2667
        %v2672 = vsub.f32 %v2660, %v2670
        %v2673 = vmul.f32 %v2671, 1.442695
        %v2674 = vpow.pop %v2673
        %v2675 = vmul.f32 %v2672, 1.442695
        %v2676 = vpow.pop %v2675
        %v2677 = vsel %vm1541, %v2674, 0.0
        %2678 = vadd.xlane.f32.xlu0 %v2677
        %v2679 = vpop.xlane.xlu0 %2678
        %v2680 = vsel %vm1541, %v2676, 0.0
        %2681 = vadd.xlane.f32.xlu0 %v2680
        %v2682 = vpop.xlane.xlu0 %2681
        %v2683 = vrcp.pop %v2679
        %v2684 = vrcp.pop %v2682
        %v2685 = vmul.f32 %v2674, %v2683
        %v2686 = vmul.f32 %v2676, %v2684
        %2687 = vst.msk [vmem:[%s1119] sm:$0xff] %vm1541, %v2685
        %2688 = vst.msk [vmem:[%s1119 + $0x10] sm:$0xff] %vm1541, %v2686
        %v2689 = vpack.c.bf16 %v2685, %v2685
        %v2690 = vpack.c.bf16 %v2686, %v2686
        %v2691 = vpack.c.bf16 %v2563, %v2563
        %v2692 = vpack.c.bf16 %v2566, %v2566
        %v2694 = vsel %vm1541, %v2689, 0
        %v2697 = vsel %vm1571, %v2691, 0
        %2699 = vmatprep.subr.bf16.mxu0 0
        %2700 = vmatpush1.bf16.msra.mxu0 %v2697
        %2701 = vmatprep.subr.bf16.mxu0 0
        %2702 = vmatpush1.bf16.msra.mxu0 0
        %2703 = vmatprep.subr.bf16.mxu0 0
        %2704 = vmatpush1.bf16.msra.mxu0 0
        %2705 = vmatprep.subr.bf16.mxu0 0
        %2706 = vmatpush1.bf16.msra.mxu0 0
        %2707 = vmatprep.subr.bf16.mxu0 0
        %2708 = vmatpush1.bf16.msra.mxu0 0
        %2709 = vmatprep.subr.bf16.mxu0 0
        %2710 = vmatpush1.bf16.msra.mxu0 0
        %2711 = vmatprep.subr.bf16.mxu0 0
        %2712 = vmatpush1.bf16.msra.mxu0 0
        %2713 = vmatprep.subr.bf16.mxu0 0
        %2714 = vmatpush1.bf16.msra.mxu0 0
        %2715 = vmatprep.subr.bf16.mxu0 0
        %2716 = vmatpush1.bf16.msra.mxu0 0
        %2717 = vmatprep.subr.bf16.mxu0 0
        %2718 = vmatpush1.bf16.msra.mxu0 0
        %2719 = vmatprep.subr.bf16.mxu0 0
        %2720 = vmatpush1.bf16.msra.mxu0 0
        %2721 = vmatprep.subr.bf16.mxu0 0
        %2722 = vmatpush1.bf16.msra.mxu0 0
        %2723 = vmatprep.subr.bf16.mxu0 0
        %2724 = vmatpush1.bf16.msra.mxu0 0
        %2725 = vmatprep.subr.bf16.mxu0 0
        %2726 = vmatpush1.bf16.msra.mxu0 0
        %2727 = vmatprep.subr.bf16.mxu0 0
        %2728 = vmatpush1.bf16.msra.mxu0 0
        %2729 = vmatprep.subr.bf16.mxu0 0
        %2730 = vmatpush1.bf16.msra.mxu0 0
        %2731 = vmatprep.mubr.bf16.mxu0 0
        %2732 = vmatmul.mubr.bf16.gmra.mrb[0].mxu0 %v2694
        %v2733 = vpop.f32.mrb[0].mxu0
        %v2734 = vadd.f32 0.0, %v2733
        %v2735 = vpop.f32.mrb[0].mxu0
        %v2736 = vpop.f32.mrb[0].mxu0
        %v2737 = vpop.f32.mrb[0].mxu0
        %2738 = vdwg.mxu0
        %v2740 = vsel %vm1541, %v2690, 0
        %v2743 = vsel %vm1571, %v2692, 0
        %2745 = vmatprep.subr.bf16.mxu0 0
        %2746 = vmatpush1.bf16.msra.mxu0 %v2743
        %2747 = vmatprep.subr.bf16.mxu0 0
        %2748 = vmatpush1.bf16.msra.mxu0 0
        %2749 = vmatprep.subr.bf16.mxu0 0
        %2750 = vmatpush1.bf16.msra.mxu0 0
        %2751 = vmatprep.subr.bf16.mxu0 0
        %2752 = vmatpush1.bf16.msra.mxu0 0
        %2753 = vmatprep.subr.bf16.mxu0 0
        %2754 = vmatpush1.bf16.msra.mxu0 0
        %2755 = vmatprep.subr.bf16.mxu0 0
        %2756 = vmatpush1.bf16.msra.mxu0 0
        %2757 = vmatprep.subr.bf16.mxu0 0
        %2758 = vmatpush1.bf16.msra.mxu0 0
        %2759 = vmatprep.subr.bf16.mxu0 0
        %2760 = vmatpush1.bf16.msra.mxu0 0
        %2761 = vmatprep.subr.bf16.mxu0 0
        %2762 = vmatpush1.bf16.msra.mxu0 0
        %2763 = vmatprep.subr.bf16.mxu0 0
        %2764 = vmatpush1.bf16.msra.mxu0 0
        %2765 = vmatprep.subr.bf16.mxu0 0
        %2766 = vmatpush1.bf16.msra.mxu0 0
        %2767 = vmatprep.subr.bf16.mxu0 0
        %2768 = vmatpush1.bf16.msra.mxu0 0
        %2769 = vmatprep.subr.bf16.mxu0 0
        %2770 = vmatpush1.bf16.msra.mxu0 0
        %2771 = vmatprep.subr.bf16.mxu0 0
        %2772 = vmatpush1.bf16.msra.mxu0 0
        %2773 = vmatprep.subr.bf16.mxu0 0
        %2774 = vmatpush1.bf16.msra.mxu0 0
        %2775 = vmatprep.subr.bf16.mxu0 0
        %2776 = vmatpush1.bf16.msra.mxu0 0
        %2777 = vmatprep.mubr.bf16.mxu0 0
        %2778 = vmatmul.mubr.bf16.gmra.mrb[0].mxu0 %v2740
        %v2779 = vpop.f32.mrb[0].mxu0
        %v2780 = vadd.f32 0.0, %v2779
        %v2781 = vpop.f32.mrb[0].mxu0
        %v2782 = vpop.f32.mrb[0].mxu0
        %v2783 = vpop.f32.mrb[0].mxu0
        %2784 = vdwg.mxu0
        %s2785 = scalar_lea.vmem %s13, 16
        %v2786 = vld [vmem:[%s2785] sm:$0xf]
        %v2787 = vld [vmem:[%s2785 + $0x4] sm:$0xf]
        %v2788 = vpack.c.bf16 %v2780, %v2734
        %s2789 = scalar_lea.vmem %s17, 48
        %v2790 = vld [vmem:[%s2789] sm:$0xf]
        %v2791 = vld [vmem:[%s2789 + $0x4] sm:$0xf]
        %v2792 = vld [vmem:[%s2789 + $0x8] sm:$0xf]
        %v2793 = vld [vmem:[%s2789 + $0xc] sm:$0xf]
        %v2798 = vunpack.c.l.b16 %v2790
        %v2799 = vunpack.c.l.b16 %v2791
        %v2800 = vunpack.c.l.b16 %v2792
        %v2801 = vunpack.c.l.b16 %v2793
        %v2802 = vpack.c.b16 %v2799, %v2798
        %v2803 = vpack.c.b16 %v2801, %v2800
        %2806 = vmatprep.subr.bf16.mxu0 0
        %2807 = vmatpush1.bf16.msra.mxu0 %v2802
        %2808 = vmatprep.subr.bf16.mxu0 0
        %2809 = vmatpush1.bf16.msra.mxu0 %v2803
        %2810 = vmatprep.subr.bf16.mxu0 0
        %2811 = vmatpush1.bf16.msra.mxu0 0
        %2812 = vmatprep.subr.bf16.mxu0 0
        %2813 = vmatpush1.bf16.msra.mxu0 0
        %2814 = vmatprep.subr.bf16.mxu0 0
        %2815 = vmatpush1.bf16.msra.mxu0 0
        %2816 = vmatprep.subr.bf16.mxu0 0
        %2817 = vmatpush1.bf16.msra.mxu0 0
        %2818 = vmatprep.subr.bf16.mxu0 0
        %2819 = vmatpush1.bf16.msra.mxu0 0
        %2820 = vmatprep.subr.bf16.mxu0 0
        %2821 = vmatpush1.bf16.msra.mxu0 0
        %2822 = vmatprep.subr.bf16.mxu0 0
        %2823 = vmatpush1.bf16.msra.mxu0 0
        %2824 = vmatprep.subr.bf16.mxu0 0
        %2825 = vmatpush1.bf16.msra.mxu0 0
        %2826 = vmatprep.subr.bf16.mxu0 0
        %2827 = vmatpush1.bf16.msra.mxu0 0
        %2828 = vmatprep.subr.bf16.mxu0 0
        %2829 = vmatpush1.bf16.msra.mxu0 0
        %2830 = vmatprep.subr.bf16.mxu0 0
        %2831 = vmatpush1.bf16.msra.mxu0 0
        %2832 = vmatprep.subr.bf16.mxu0 0
        %2833 = vmatpush1.bf16.msra.mxu0 0
        %2834 = vmatprep.subr.bf16.mxu0 0
        %2835 = vmatpush1.bf16.msra.mxu0 0
        %2836 = vmatprep.subr.bf16.mxu0 0
        %2837 = vmatpush1.bf16.msra.mxu0 0
        %2838 = vmatprep.mubr.bf16.mxu0 0
        %2839 = vmatmul.mubr.bf16.gmra.mrb[0].mxu0 %v2410
        %v2840 = vpop.f32.mrb[0].mxu0
        %v2841 = vadd.f32 0.0, %v2840
        %v2842 = vpop.f32.mrb[0].mxu0
        %v2843 = vpop.f32.mrb[0].mxu0
        %v2844 = vadd.f32 0.0, %v2843
        %v2845 = vpop.f32.mrb[0].mxu0
        %2846 = vdwg.mxu0
        %s2847 = scalar_lea.vmem %s15, 48
        %v2848 = vld [vmem:[%s2847] sm:$0xf]
        %v2849 = vld [vmem:[%s2847 + $0x4] sm:$0xf]
        %v2850 = vld [vmem:[%s2847 + $0x8] sm:$0xf]
        %v2851 = vld [vmem:[%s2847 + $0xc] sm:$0xf]
        %v2856 = vunpack.c.l.b16 %v2848
        %v2857 = vunpack.c.l.b16 %v2849
        %v2858 = vunpack.c.l.b16 %v2850
        %v2859 = vunpack.c.l.b16 %v2851
        %v2860 = vpack.c.b16 %v2857, %v2856
        %v2861 = vpack.c.b16 %v2859, %v2858
        %2864 = vmatprep.subr.bf16.mxu0 0
        %2865 = vmatpush1.bf16.msra.mxu0 %v2860
        %2866 = vmatprep.subr.bf16.mxu0 0
        %2867 = vmatpush1.bf16.msra.mxu0 %v2861
        %2868 = vmatprep.subr.bf16.mxu0 0
        %2869 = vmatpush1.bf16.msra.mxu0 0
        %2870 = vmatprep.subr.bf16.mxu0 0
        %2871 = vmatpush1.bf16.msra.mxu0 0
        %2872 = vmatprep.subr.bf16.mxu0 0
        %2873 = vmatpush1.bf16.msra.mxu0 0
        %2874 = vmatprep.subr.bf16.mxu0 0
        %2875 = vmatpush1.bf16.msra.mxu0 0
        %2876 = vmatprep.subr.bf16.mxu0 0
        %2877 = vmatpush1.bf16.msra.mxu0 0
        %2878 = vmatprep.subr.bf16.mxu0 0
        %2879 = vmatpush1.bf16.msra.mxu0 0
        %2880 = vmatprep.subr.bf16.mxu0 0
        %2881 = vmatpush1.bf16.msra.mxu0 0
        %2882 = vmatprep.subr.bf16.mxu0 0
        %2883 = vmatpush1.bf16.msra.mxu0 0
        %2884 = vmatprep.subr.bf16.mxu0 0
        %2885 = vmatpush1.bf16.msra.mxu0 0
        %2886 = vmatprep.subr.bf16.mxu0 0
        %2887 = vmatpush1.bf16.msra.mxu0 0
        %2888 = vmatprep.subr.bf16.mxu0 0
        %2889 = vmatpush1.bf16.msra.mxu0 0
        %2890 = vmatprep.subr.bf16.mxu0 0
        %2891 = vmatpush1.bf16.msra.mxu0 0
        %2892 = vmatprep.subr.bf16.mxu0 0
        %2893 = vmatpush1.bf16.msra.mxu0 0
        %2894 = vmatprep.subr.bf16.mxu0 0
        %2895 = vmatpush1.bf16.msra.mxu0 0
        %2896 = vmatprep.mubr.bf16.mxu0 0
        %2897 = vmatmul.mubr.bf16.gmra.mrb[0].mxu0 %v2410
        %v2898 = vpop.f32.mrb[0].mxu0
        %v2899 = vadd.f32 0.0, %v2898
        %v2900 = vpop.f32.mrb[0].mxu0
        %v2901 = vpop.f32.mrb[0].mxu0
        %v2902 = vadd.f32 0.0, %v2901
        %v2903 = vpop.f32.mrb[0].mxu0
        %2904 = vdwg.mxu0
        %s2905 = scalar_lea.vmem %s19, 48
        %v2906 = vld [vmem:[%s2905] sm:$0xf]
        %v2907 = vld [vmem:[%s2905 + $0x4] sm:$0xf]
        %v2908 = vld [vmem:[%s2905 + $0x8] sm:$0xf]
        %v2909 = vld [vmem:[%s2905 + $0xc] sm:$0xf]
        %v2914 = vunpack.c.l.b16 %v2906
        %v2915 = vunpack.c.l.b16 %v2907
        %v2916 = vunpack.c.l.b16 %v2908
        %v2917 = vunpack.c.l.b16 %v2909
        %v2918 = vpack.c.b16 %v2915, %v2914
        %v2919 = vpack.c.b16 %v2917, %v2916
        %2922 = vmatprep.subr.bf16.mxu0 0
        %2923 = vmatpush1.bf16.msra.mxu0 %v2918
        %2924 = vmatprep.subr.bf16.mxu0 0
        %2925 = vmatpush1.bf16.msra.mxu0 %v2919
        %2926 = vmatprep.subr.bf16.mxu0 0
        %2927 = vmatpush1.bf16.msra.mxu0 0
        %2928 = vmatprep.subr.bf16.mxu0 0
        %2929 = vmatpush1.bf16.msra.mxu0 0
        %2930 = vmatprep.subr.bf16.mxu0 0
        %2931 = vmatpush1.bf16.msra.mxu0 0
        %2932 = vmatprep.subr.bf16.mxu0 0
        %2933 = vmatpush1.bf16.msra.mxu0 0
        %2934 = vmatprep.subr.bf16.mxu0 0
        %2935 = vmatpush1.bf16.msra.mxu0 0
        %2936 = vmatprep.subr.bf16.mxu0 0
        %2937 = vmatpush1.bf16.msra.mxu0 0
        %2938 = vmatprep.subr.bf16.mxu0 0
        %2939 = vmatpush1.bf16.msra.mxu0 0
        %2940 = vmatprep.subr.bf16.mxu0 0
        %2941 = vmatpush1.bf16.msra.mxu0 0
        %2942 = vmatprep.subr.bf16.mxu0 0
        %2943 = vmatpush1.bf16.msra.mxu0 0
        %2944 = vmatprep.subr.bf16.mxu0 0
        %2945 = vmatpush1.bf16.msra.mxu0 0
        %2946 = vmatprep.subr.bf16.mxu0 0
        %2947 = vmatpush1.bf16.msra.mxu0 0
        %2948 = vmatprep.subr.bf16.mxu0 0
        %2949 = vmatpush1.bf16.msra.mxu0 0
        %2950 = vmatprep.subr.bf16.mxu0 0
        %2951 = vmatpush1.bf16.msra.mxu0 0
        %2952 = vmatprep.subr.bf16.mxu0 0
        %2953 = vmatpush1.bf16.msra.mxu0 0
        %2954 = vmatprep.mubr.bf16.mxu0 0
        %2955 = vmatmul.mubr.bf16.gmra.mrb[0].mxu0 %v2410
        %v2956 = vpop.f32.mrb[0].mxu0
        %v2957 = vadd.f32 0.0, %v2956
        %v2958 = vpop.f32.mrb[0].mxu0
        %v2959 = vpop.f32.mrb[0].mxu0
        %v2960 = vadd.f32 0.0, %v2959
        %v2961 = vpop.f32.mrb[0].mxu0
        %2962 = vdwg.mxu0
        %v2963 = vpack.c.bf16 %v2841, %v2841
        %v2964 = vpack.c.bf16 %v2844, %v2844
        %v2965 = vpack.c.bf16 %v2899, %v2899
        %v2966 = vpack.c.bf16 %v2902, %v2902
        %v2968 = vsel %vm1448, %v2963, 0
        %v2971 = vsel %vm1448, %v2965, 0
        %2973 = vmatprep.subr.bf16.mxu0 0
        %2974 = vmatpush1.bf16.xpose.msra.mxu0 %v2971
        %2975 = vmatprep.subr.bf16.mxu0 0
        %2976 = vmatpush1.bf16.xpose.msra.mxu0 0
        %2977 = vmatprep.subr.bf16.mxu0 0
        %2978 = vmatpush1.bf16.xpose.msra.mxu0 0
        %2979 = vmatprep.subr.bf16.mxu0 0
        %2980 = vmatpush1.bf16.xpose.msra.mxu0 0
        %2981 = vmatprep.subr.bf16.mxu0 0
        %2982 = vmatpush1.bf16.xpose.msra.mxu0 0
        %2983 = vmatprep.subr.bf16.mxu0 0
        %2984 = vmatpush1.bf16.xpose.msra.mxu0 0
        %2985 = vmatprep.subr.bf16.mxu0 0
        %2986 = vmatpush1.bf16.xpose.msra.mxu0 0
        %2987 = vmatprep.subr.bf16.mxu0 0
        %2988 = vmatpush1.bf16.xpose.msra.mxu0 0
        %2989 = vmatprep.subr.bf16.mxu0 0
        %2990 = vmatpush1.bf16.xpose.msra.mxu0 0
        %2991 = vmatprep.subr.bf16.mxu0 0
        %2992 = vmatpush1.bf16.xpose.msra.mxu0 0
        %2993 = vmatprep.subr.bf16.mxu0 0
        %2994 = vmatpush1.bf16.xpose.msra.mxu0 0
        %2995 = vmatprep.subr.bf16.mxu0 0
        %2996 = vmatpush1.bf16.xpose.msra.mxu0 0
        %2997 = vmatprep.subr.bf16.mxu0 0
        %2998 = vmatpush1.bf16.xpose.msra.mxu0 0
        %2999 = vmatprep.subr.bf16.mxu0 0
        %3000 = vmatpush1.bf16.xpose.msra.mxu0 0
        %3001 = vmatprep.subr.bf16.mxu0 0
        %3002 = vmatpush1.bf16.xpose.msra.mxu0 0
        %3003 = vmatprep.subr.bf16.mxu0 0
        %3004 = vmatpush1.bf16.xpose.msra.mxu0 0
        %3005 = vmatprep.mubr.bf16.mxu0 0
        %3006 = vmatmul.mubr.bf16.gmra.mrb[0].mxu0 %v2968
        %v3007 = vpop.f32.mrb[0].mxu0
        %v3008 = vadd.f32 0.0, %v3007
        %v3009 = vpop.f32.mrb[0].mxu0
        %v3010 = vpop.f32.mrb[0].mxu0
        %v3011 = vpop.f32.mrb[0].mxu0
        %3012 = vdwg.mxu0
        %v3014 = vsel %vm1448, %v2964, 0
        %v3017 = vsel %vm1448, %v2966, 0
        %3019 = vmatprep.subr.bf16.mxu0 0
        %3020 = vmatpush1.bf16.xpose.msra.mxu0 %v3017
        %3021 = vmatprep.subr.bf16.mxu0 0
        %3022 = vmatpush1.bf16.xpose.msra.mxu0 0
        %3023 = vmatprep.subr.bf16.mxu0 0
        %3024 = vmatpush1.bf16.xpose.msra.mxu0 0
        %3025 = vmatprep.subr.bf16.mxu0 0
        %3026 = vmatpush1.bf16.xpose.msra.mxu0 0
        %3027 = vmatprep.subr.bf16.mxu0 0
        %3028 = vmatpush1.bf16.xpose.msra.mxu0 0
        %3029 = vmatprep.subr.bf16.mxu0 0
        %3030 = vmatpush1.bf16.xpose.msra.mxu0 0
        %3031 = vmatprep.subr.bf16.mxu0 0
        %3032 = vmatpush1.bf16.xpose.msra.mxu0 0
        %3033 = vmatprep.subr.bf16.mxu0 0
        %3034 = vmatpush1.bf16.xpose.msra.mxu0 0
        %3035 = vmatprep.subr.bf16.mxu0 0
        %3036 = vmatpush1.bf16.xpose.msra.mxu0 0
        %3037 = vmatprep.subr.bf16.mxu0 0
        %3038 = vmatpush1.bf16.xpose.msra.mxu0 0
        %3039 = vmatprep.subr.bf16.mxu0 0
        %3040 = vmatpush1.bf16.xpose.msra.mxu0 0
        %3041 = vmatprep.subr.bf16.mxu0 0
        %3042 = vmatpush1.bf16.xpose.msra.mxu0 0
        %3043 = vmatprep.subr.bf16.mxu0 0
        %3044 = vmatpush1.bf16.xpose.msra.mxu0 0
        %3045 = vmatprep.subr.bf16.mxu0 0
        %3046 = vmatpush1.bf16.xpose.msra.mxu0 0
        %3047 = vmatprep.subr.bf16.mxu0 0
        %3048 = vmatpush1.bf16.xpose.msra.mxu0 0
        %3049 = vmatprep.subr.bf16.mxu0 0
        %3050 = vmatpush1.bf16.xpose.msra.mxu0 0
        %3051 = vmatprep.mubr.bf16.mxu0 0
        %3052 = vmatmul.mubr.bf16.gmra.mrb[0].mxu0 %v3014
        %v3053 = vpop.f32.mrb[0].mxu0
        %v3054 = vadd.f32 0.0, %v3053
        %v3055 = vpop.f32.mrb[0].mxu0
        %v3056 = vpop.f32.mrb[0].mxu0
        %v3057 = vpop.f32.mrb[0].mxu0
        %3058 = vdwg.mxu0
        %v3059 = vsel %vm1541, %v3008, -inf
        %3060 = vmax.xlane.f32.xlu0 %v3059
        %v3061 = vpop.xlane.xlu0 %3060
        %v3062 = vsel %vm1541, %v3054, -inf
        %3063 = vmax.xlane.f32.xlu0 %v3062
        %v3064 = vpop.xlane.xlu0 %3063
        %v3065 = vsub.f32 %v3008, %v3061
        %v3066 = vsub.f32 %v3054, %v3064
        %v3067 = vmul.f32 %v3065, 1.442695
        %v3068 = vpow.pop %v3067
        %v3069 = vmul.f32 %v3066, 1.442695
        %v3070 = vpow.pop %v3069
        %v3071 = vsel %vm1541, %v3068, 0.0
        %3072 = vadd.xlane.f32.xlu0 %v3071
        %v3073 = vpop.xlane.xlu0 %3072
        %v3074 = vsel %vm1541, %v3070, 0.0
        %3075 = vadd.xlane.f32.xlu0 %v3074
        %v3076 = vpop.xlane.xlu0 %3075
        %v3077 = vrcp.pop %v3073
        %v3078 = vrcp.pop %v3076
        %v3079 = vmul.f32 %v3068, %v3077
        %v3080 = vmul.f32 %v3070, %v3078
        %s3081 = scalar_lea.vmem %s1119, 8 [#allocation2]
        %3082 = vst.msk [vmem:[%s3081] sm:$0xff] %vm1541, %v3079
        %3083 = vst.msk [vmem:[%s3081 + $0x10] sm:$0xff] %vm1541, %v3080
        %v3084 = vpack.c.bf16 %v3079, %v3079
        %v3085 = vpack.c.bf16 %v3080, %v3080
        %v3086 = vpack.c.bf16 %v2957, %v2957
        %v3087 = vpack.c.bf16 %v2960, %v2960
        %v3089 = vsel %vm1541, %v3084, 0
        %v3092 = vsel %vm1571, %v3086, 0
        %3094 = vmatprep.subr.bf16.mxu0 0
        %3095 = vmatpush1.bf16.msra.mxu0 %v3092
        %3096 = vmatprep.subr.bf16.mxu0 0
        %3097 = vmatpush1.bf16.msra.mxu0 0
        %3098 = vmatprep.subr.bf16.mxu0 0
        %3099 = vmatpush1.bf16.msra.mxu0 0
        %3100 = vmatprep.subr.bf16.mxu0 0
        %3101 = vmatpush1.bf16.msra.mxu0 0
        %3102 = vmatprep.subr.bf16.mxu0 0
        %3103 = vmatpush1.bf16.msra.mxu0 0
        %3104 = vmatprep.subr.bf16.mxu0 0
        %3105 = vmatpush1.bf16.msra.mxu0 0
        %3106 = vmatprep.subr.bf16.mxu0 0
        %3107 = vmatpush1.bf16.msra.mxu0 0
        %3108 = vmatprep.subr.bf16.mxu0 0
        %3109 = vmatpush1.bf16.msra.mxu0 0
        %3110 = vmatprep.subr.bf16.mxu0 0
        %3111 = vmatpush1.bf16.msra.mxu0 0
        %3112 = vmatprep.subr.bf16.mxu0 0
        %3113 = vmatpush1.bf16.msra.mxu0 0
        %3114 = vmatprep.subr.bf16.mxu0 0
        %3115 = vmatpush1.bf16.msra.mxu0 0
        %3116 = vmatprep.subr.bf16.mxu0 0
        %3117 = vmatpush1.bf16.msra.mxu0 0
        %3118 = vmatprep.subr.bf16.mxu0 0
        %3119 = vmatpush1.bf16.msra.mxu0 0
        %3120 = vmatprep.subr.bf16.mxu0 0
        %3121 = vmatpush1.bf16.msra.mxu0 0
        %3122 = vmatprep.subr.bf16.mxu0 0
        %3123 = vmatpush1.bf16.msra.mxu0 0
        %3124 = vmatprep.subr.bf16.mxu0 0
        %3125 = vmatpush1.bf16.msra.mxu0 0
        %3126 = vmatprep.mubr.bf16.mxu0 0
        %3127 = vmatmul.mubr.bf16.gmra.mrb[0].mxu0 %v3089
        %v3128 = vpop.f32.mrb[0].mxu0
        %v3129 = vadd.f32 0.0, %v3128
        %v3130 = vpop.f32.mrb[0].mxu0
        %v3131 = vpop.f32.mrb[0].mxu0
        %v3132 = vpop.f32.mrb[0].mxu0
        %3133 = vdwg.mxu0
        %v3135 = vsel %vm1541, %v3085, 0
        %v3138 = vsel %vm1571, %v3087, 0
        %3140 = vmatprep.subr.bf16.mxu0 0
        %3141 = vmatpush1.bf16.msra.mxu0 %v3138
        %3142 = vmatprep.subr.bf16.mxu0 0
        %3143 = vmatpush1.bf16.msra.mxu0 0
        %3144 = vmatprep.subr.bf16.mxu0 0
        %3145 = vmatpush1.bf16.msra.mxu0 0
        %3146 = vmatprep.subr.bf16.mxu0 0
        %3147 = vmatpush1.bf16.msra.mxu0 0
        %3148 = vmatprep.subr.bf16.mxu0 0
        %3149 = vmatpush1.bf16.msra.mxu0 0
        %3150 = vmatprep.subr.bf16.mxu0 0
        %3151 = vmatpush1.bf16.msra.mxu0 0
        %3152 = vmatprep.subr.bf16.mxu0 0
        %3153 = vmatpush1.bf16.msra.mxu0 0
        %3154 = vmatprep.subr.bf16.mxu0 0
        %3155 = vmatpush1.bf16.msra.mxu0 0
        %3156 = vmatprep.subr.bf16.mxu0 0
        %3157 = vmatpush1.bf16.msra.mxu0 0
        %3158 = vmatprep.subr.bf16.mxu0 0
        %3159 = vmatpush1.bf16.msra.mxu0 0
        %3160 = vmatprep.subr.bf16.mxu0 0
        %3161 = vmatpush1.bf16.msra.mxu0 0
        %3162 = vmatprep.subr.bf16.mxu0 0
        %3163 = vmatpush1.bf16.msra.mxu0 0
        %3164 = vmatprep.subr.bf16.mxu0 0
        %3165 = vmatpush1.bf16.msra.mxu0 0
        %3166 = vmatprep.subr.bf16.mxu0 0
        %3167 = vmatpush1.bf16.msra.mxu0 0
        %3168 = vmatprep.subr.bf16.mxu0 0
        %3169 = vmatpush1.bf16.msra.mxu0 0
        %3170 = vmatprep.subr.bf16.mxu0 0
        %3171 = vmatpush1.bf16.msra.mxu0 0
        %3172 = vmatprep.mubr.bf16.mxu0 0
        %3173 = vmatmul.mubr.bf16.gmra.mrb[0].mxu0 %v3135
        %v3174 = vpop.f32.mrb[0].mxu0
        %v3175 = vadd.f32 0.0, %v3174
        %v3176 = vpop.f32.mrb[0].mxu0
        %v3177 = vpop.f32.mrb[0].mxu0
        %v3178 = vpop.f32.mrb[0].mxu0
        %3179 = vdwg.mxu0
        %s3180 = scalar_lea.vmem %s13, 24
        %v3181 = vld [vmem:[%s3180] sm:$0xf]
        %v3182 = vld [vmem:[%s3180 + $0x4] sm:$0xf]
        %v3183 = vpack.c.bf16 %v3175, %v3129
        %v3186 = vunpack.c.l.b16 %v3181
        %v3187 = vunpack.c.l.b16 %v3182
        %v3188 = vpack.c.b16 %v3187, %v3186
        %v3191 = vsel %vm1448, %v3183, 0
        %3193 = vmatprep.subr.bf16.mxu0 0
        %3194 = vmatpush1.bf16.msra.mxu0 %v3188
        %3195 = vmatprep.subr.bf16.mxu0 0
        %3196 = vmatpush1.bf16.msra.mxu0 0
        %3197 = vmatprep.subr.bf16.mxu0 0
        %3198 = vmatpush1.bf16.msra.mxu0 0
        %3199 = vmatprep.subr.bf16.mxu0 0
        %3200 = vmatpush1.bf16.msra.mxu0 0
        %3201 = vmatprep.subr.bf16.mxu0 0
        %3202 = vmatpush1.bf16.msra.mxu0 0
        %3203 = vmatprep.subr.bf16.mxu0 0
        %3204 = vmatpush1.bf16.msra.mxu0 0
        %3205 = vmatprep.subr.bf16.mxu0 0
        %3206 = vmatpush1.bf16.msra.mxu0 0
        %3207 = vmatprep.subr.bf16.mxu0 0
        %3208 = vmatpush1.bf16.msra.mxu0 0
        %3209 = vmatprep.subr.bf16.mxu0 0
        %3210 = vmatpush1.bf16.msra.mxu0 0
        %3211 = vmatprep.subr.bf16.mxu0 0
        %3212 = vmatpush1.bf16.msra.mxu0 0
        %3213 = vmatprep.subr.bf16.mxu0 0
        %3214 = vmatpush1.bf16.msra.mxu0 0
        %3215 = vmatprep.subr.bf16.mxu0 0
        %3216 = vmatpush1.bf16.msra.mxu0 0
        %3217 = vmatprep.subr.bf16.mxu0 0
        %3218 = vmatpush1.bf16.msra.mxu0 0
        %3219 = vmatprep.subr.bf16.mxu0 0
        %3220 = vmatpush1.bf16.msra.mxu0 0
        %3221 = vmatprep.subr.bf16.mxu0 0
        %3222 = vmatpush1.bf16.msra.mxu0 0
        %3223 = vmatprep.subr.bf16.mxu0 0
        %3224 = vmatpush1.bf16.msra.mxu0 0
        %3225 = vmatprep.mubr.bf16.mxu0 0
        %3226 = vmatmul.mubr.bf16.gmra.mrb[0].mxu0 %v3191
        %v3227 = vpop.f32.mrb[0].mxu0
        %v3228 = vadd.f32 0.0, %v3227
        %v3229 = vpop.f32.mrb[0].mxu0
        %v3230 = vpop.f32.mrb[0].mxu0
        %v3231 = vadd.f32 0.0, %v3230
        %v3232 = vpop.f32.mrb[0].mxu0
        %3233 = vdwg.mxu0
        %v3236 = vunpack.c.l.b16 %v2786
        %v3237 = vunpack.c.l.b16 %v2787
        %v3238 = vpack.c.b16 %v3237, %v3236
        %v3241 = vsel %vm1448, %v2788, 0
        %3243 = vmatprep.subr.bf16.mxu0 0
        %3244 = vmatpush1.bf16.msra.mxu0 %v3238
        %3245 = vmatprep.subr.bf16.mxu0 0
        %3246 = vmatpush1.bf16.msra.mxu0 0
        %3247 = vmatprep.subr.bf16.mxu0 0
        %3248 = vmatpush1.bf16.msra.mxu0 0
        %3249 = vmatprep.subr.bf16.mxu0 0
        %3250 = vmatpush1.bf16.msra.mxu0 0
        %3251 = vmatprep.subr.bf16.mxu0 0
        %3252 = vmatpush1.bf16.msra.mxu0 0
        %3253 = vmatprep.subr.bf16.mxu0 0
        %3254 = vmatpush1.bf16.msra.mxu0 0
        %3255 = vmatprep.subr.bf16.mxu0 0
        %3256 = vmatpush1.bf16.msra.mxu0 0
        %3257 = vmatprep.subr.bf16.mxu0 0
        %3258 = vmatpush1.bf16.msra.mxu0 0
        %3259 = vmatprep.subr.bf16.mxu0 0
        %3260 = vmatpush1.bf16.msra.mxu0 0
        %3261 = vmatprep.subr.bf16.mxu0 0
        %3262 = vmatpush1.bf16.msra.mxu0 0
        %3263 = vmatprep.subr.bf16.mxu0 0
        %3264 = vmatpush1.bf16.msra.mxu0 0
        %3265 = vmatprep.subr.bf16.mxu0 0
        %3266 = vmatpush1.bf16.msra.mxu0 0
        %3267 = vmatprep.subr.bf16.mxu0 0
        %3268 = vmatpush1.bf16.msra.mxu0 0
        %3269 = vmatprep.subr.bf16.mxu0 0
        %3270 = vmatpush1.bf16.msra.mxu0 0
        %3271 = vmatprep.subr.bf16.mxu0 0
        %3272 = vmatpush1.bf16.msra.mxu0 0
        %3273 = vmatprep.subr.bf16.mxu0 0
        %3274 = vmatpush1.bf16.msra.mxu0 0
        %3275 = vmatprep.mubr.bf16.mxu0 0
        %3276 = vmatmul.mubr.bf16.gmra.mrb[0].mxu0 %v3241
        %v3277 = vpop.f32.mrb[0].mxu0
        %v3278 = vadd.f32 %v3228, %v3277
        %v3279 = vpop.f32.mrb[0].mxu0
        %v3280 = vpop.f32.mrb[0].mxu0
        %v3281 = vadd.f32 %v3231, %v3280
        %v3282 = vpop.f32.mrb[0].mxu0
        %3283 = vdwg.mxu0
        %v3284 = vadd.f32 %v3278, %v2387
        %v3285 = vadd.f32 %v3281, %v2388
        %v3286 = vsel %vm1285, %v3284, 0.0
        %3287 = vadd.xlane.f32.xlu0 %v3286
        %v3288 = vpop.xlane.xlu0 %3287
        %v3289 = vsel %vm1285, %v3285, 0.0
        %3290 = vadd.xlane.f32.xlu0 %v3289
        %v3291 = vpop.xlane.xlu0 %3290
        %v3292 = vmul.f32 %v3288, %v2164
        %v3293 = vmul.f32 %v3291, %v2164
        %v3294 = vsub.f32 %v3284, %v3292
        %v3295 = vsub.f32 %v3285, %v3293
        %v3296 = vmul.f32 %v3294, %v3294
        %v3297 = vmul.f32 %v3295, %v3295
        %v3298 = vsel %vm1285, %v3296, 0.0
        %3299 = vadd.xlane.f32.xlu0 %v3298
        %v3300 = vpop.xlane.xlu0 %3299
        %v3301 = vsel %vm1285, %v3297, 0.0
        %3302 = vadd.xlane.f32.xlu0 %v3301
        %v3303 = vpop.xlane.xlu0 %3302
        %v3304 = vmul.f32 %v3300, %v2164
        %v3305 = vmul.f32 %v3303, %v2164
        %v3306 = vadd.f32 %v3304, 1e-06
        %v3307 = vadd.f32 %v3305, 1e-06
        %v3308 = vrsqrt.pop %v3306
        %v3309 = vrsqrt.pop %v3307
        %v3310 = vmul.f32 %v3294, %v3308
        %v3311 = vmul.f32 %v3295, %v3309
        %v3312 = vlaneseq
        %v3313 = vshrl.u32 %v3312, 7
        %v3314 = vsub.s32 0, %v3313
        %v3315 = vrot.slane %v2390, %v3314
        %v3316 = vmul.f32 %v3310, %v3315
        %v3317 = vmul.f32 %v3311, %v3315
        %v3318 = vlaneseq
        %v3319 = vshrl.u32 %v3318, 7
        %v3320 = vsub.s32 1, %v3319
        %v3321 = vrot.slane %v2390, %v3320
        %v3322 = vadd.f32 %v3316, %v3321
        %v3323 = vadd.f32 %v3317, %v3321
        %s3324 = scalar_lea.vmem %s7, 16
        %v3325 = vld [vmem:[%s3324] sm:$0xf]
        %v3326 = vld [vmem:[%s3324 + $0x4] sm:$0xf]
        %v3327 = vld [vmem:[%s3324 + $0x8] sm:$0xf]
        %v3328 = vld [vmem:[%s3324 + $0xc] sm:$0xf]
        %v3329 = vpack.c.bf16 %v3323, %v3322
        %s3330 = scalar_lea.vmem %s5, 1
        %v3331 = vld [vmem:[%s3330] sm:$0x1]
        %v3333 = vlaneseq
        %v3334 = vshrl.u32 %v3333, 7
        %v3335 = vsub.s32 0, %v3334
        %v3336 = vrot.slane %v3331, %v3335
        %v3342 = vunpack.c.l.b16 %v3325
        %v3343 = vunpack.c.l.b16 %v3326
        %v3344 = vunpack.c.l.b16 %v3327
        %v3345 = vunpack.c.l.b16 %v3328
        %v3346 = vpack.c.b16 %v3343, %v3342
        %v3347 = vpack.c.b16 %v3345, %v3344
        %v3351 = vsel %vm1285, %v3329, 0
        %3353 = vmatprep.subr.bf16.mxu0 0
        %3354 = vmatpush1.bf16.msra.mxu0 %v3346
        %3355 = vmatprep.subr.bf16.mxu0 0
        %3356 = vmatpush1.bf16.msra.mxu0 %v3347
        %3357 = vmatprep.subr.bf16.mxu0 0
        %3358 = vmatpush1.bf16.msra.mxu0 0
        %3359 = vmatprep.subr.bf16.mxu0 0
        %3360 = vmatpush1.bf16.msra.mxu0 0
        %3361 = vmatprep.subr.bf16.mxu0 0
        %3362 = vmatpush1.bf16.msra.mxu0 0
        %3363 = vmatprep.subr.bf16.mxu0 0
        %3364 = vmatpush1.bf16.msra.mxu0 0
        %3365 = vmatprep.subr.bf16.mxu0 0
        %3366 = vmatpush1.bf16.msra.mxu0 0
        %3367 = vmatprep.subr.bf16.mxu0 0
        %3368 = vmatpush1.bf16.msra.mxu0 0
        %3369 = vmatprep.subr.bf16.mxu0 0
        %3370 = vmatpush1.bf16.msra.mxu0 0
        %3371 = vmatprep.subr.bf16.mxu0 0
        %3372 = vmatpush1.bf16.msra.mxu0 0
        %3373 = vmatprep.subr.bf16.mxu0 0
        %3374 = vmatpush1.bf16.msra.mxu0 0
        %3375 = vmatprep.subr.bf16.mxu0 0
        %3376 = vmatpush1.bf16.msra.mxu0 0
        %3377 = vmatprep.subr.bf16.mxu0 0
        %3378 = vmatpush1.bf16.msra.mxu0 0
        %3379 = vmatprep.subr.bf16.mxu0 0
        %3380 = vmatpush1.bf16.msra.mxu0 0
        %3381 = vmatprep.subr.bf16.mxu0 0
        %3382 = vmatpush1.bf16.msra.mxu0 0
        %3383 = vmatprep.subr.bf16.mxu0 0
        %3384 = vmatpush1.bf16.msra.mxu0 0
        %3385 = vmatprep.mubr.bf16.mxu0 0
        %3386 = vmatmul.mubr.bf16.gmra.mrb[0].mxu0 %v3351
        %v3387 = vpop.f32.mrb[0].mxu0
        %v3388 = vadd.f32 %v3336, %v3387
        %v3389 = vpop.f32.mrb[0].mxu0
        %v3390 = vpop.f32.mrb[0].mxu0
        %v3391 = vadd.f32 %v3336, %v3390
        %v3392 = vpop.f32.mrb[0].mxu0
        %3393 = vdwg.mxu0
        %v3394 = vmax.f32 %v3388, 0.0
        %v3395 = vmax.f32 %v3391, 0.0
        %s3396 = scalar_lea.vmem %s9, 32
        %v3397 = vld [vmem:[%s3396] sm:$0xf]
        %v3398 = vld [vmem:[%s3396 + $0x4] sm:$0xf]
        %v3399 = vld [vmem:[%s3396 + $0x8] sm:$0xf]
        %v3400 = vld [vmem:[%s3396 + $0xc] sm:$0xf]
        %v3401 = vld [vmem:[%s3396 + $0x10] sm:$0xf]
        %v3402 = vld [vmem:[%s3396 + $0x14] sm:$0xf]
        %v3403 = vld [vmem:[%s3396 + $0x18] sm:$0xf]
        %v3404 = vld [vmem:[%s3396 + $0x1c] sm:$0xf]
        %v3405 = vpack.c.bf16 %v3395, %v3394
        %v3406 = vlaneseq
        %v3407 = vshrl.u32 %v3406, 7
        %v3408 = vsub.s32 4, %v3407
        %v3409 = vrot.slane %v2390, %v3408
        %v3418 = vunpack.c.l.b16 %v3397
        %v3419 = vunpack.c.l.b16 %v3398
        %v3420 = vunpack.c.l.b16 %v3399
        %v3421 = vunpack.c.l.b16 %v3400
        %v3422 = vunpack.c.l.b16 %v3401
        %v3423 = vunpack.c.l.b16 %v3402
        %v3424 = vunpack.c.l.b16 %v3403
        %v3425 = vunpack.c.l.b16 %v3404
        %v3426 = vpack.c.b16 %v3419, %v3418
        %v3427 = vpack.c.b16 %v3421, %v3420
        %v3428 = vpack.c.b16 %v3423, %v3422
        %v3429 = vpack.c.b16 %v3425, %v3424
        %v3435 = vsel %vm2304, %v3405, 0
        %3437 = vmatprep.subr.bf16.mxu0 0
        %3438 = vmatpush1.bf16.msra.mxu0 %v3426
        %3439 = vmatprep.subr.bf16.mxu0 0
        %3440 = vmatpush1.bf16.msra.mxu0 %v3427
        %3441 = vmatprep.subr.bf16.mxu0 0
        %3442 = vmatpush1.bf16.msra.mxu0 %v3428
        %3443 = vmatprep.subr.bf16.mxu0 0
        %3444 = vmatpush1.bf16.msra.mxu0 %v3429
        %3445 = vmatprep.subr.bf16.mxu0 0
        %3446 = vmatpush1.bf16.msra.mxu0 0
        %3447 = vmatprep.subr.bf16.mxu0 0
        %3448 = vmatpush1.bf16.msra.mxu0 0
        %3449 = vmatprep.subr.bf16.mxu0 0
        %3450 = vmatpush1.bf16.msra.mxu0 0
        %3451 = vmatprep.subr.bf16.mxu0 0
        %3452 = vmatpush1.bf16.msra.mxu0 0
        %3453 = vmatprep.subr.bf16.mxu0 0
        %3454 = vmatpush1.bf16.msra.mxu0 0
        %3455 = vmatprep.subr.bf16.mxu0 0
        %3456 = vmatpush1.bf16.msra.mxu0 0
        %3457 = vmatprep.subr.bf16.mxu0 0
        %3458 = vmatpush1.bf16.msra.mxu0 0
        %3459 = vmatprep.subr.bf16.mxu0 0
        %3460 = vmatpush1.bf16.msra.mxu0 0
        %3461 = vmatprep.subr.bf16.mxu0 0
        %3462 = vmatpush1.bf16.msra.mxu0 0
        %3463 = vmatprep.subr.bf16.mxu0 0
        %3464 = vmatpush1.bf16.msra.mxu0 0
        %3465 = vmatprep.subr.bf16.mxu0 0
        %3466 = vmatpush1.bf16.msra.mxu0 0
        %3467 = vmatprep.subr.bf16.mxu0 0
        %3468 = vmatpush1.bf16.msra.mxu0 0
        %3469 = vmatprep.mubr.bf16.mxu0 0
        %3470 = vmatmul.mubr.bf16.gmra.mrb[0].mxu0 %v3435
        %v3471 = vpop.f32.mrb[0].mxu0
        %v3472 = vadd.f32 %v3409, %v3471
        %v3473 = vpop.f32.mrb[0].mxu0
        %v3474 = vpop.f32.mrb[0].mxu0
        %v3475 = vadd.f32 %v3409, %v3474
        %v3476 = vpop.f32.mrb[0].mxu0
        %3477 = vdwg.mxu0
        %v3478 = vadd.f32 %v3472, %v3322
        %v3479 = vadd.f32 %v3475, %v3323
        %v3480 = vsel %vm1285, %v3478, 0.0
        %3481 = vadd.xlane.f32.xlu0 %v3480
        %v3482 = vpop.xlane.xlu0 %3481
        %v3483 = vsel %vm1285, %v3479, 0.0
        %3484 = vadd.xlane.f32.xlu0 %v3483
        %v3485 = vpop.xlane.xlu0 %3484
        %v3486 = vmul.f32 %v3482, %v2164
        %v3487 = vmul.f32 %v3485, %v2164
        %v3488 = vsub.f32 %v3478, %v3486
        %v3489 = vsub.f32 %v3479, %v3487
        %v3490 = vmul.f32 %v3488, %v3488
        %v3491 = vmul.f32 %v3489, %v3489
        %v3492 = vsel %vm1285, %v3490, 0.0
        %3493 = vadd.xlane.f32.xlu0 %v3492
        %v3494 = vpop.xlane.xlu0 %3493
        %v3495 = vsel %vm1285, %v3491, 0.0
        %3496 = vadd.xlane.f32.xlu0 %v3495
        %v3497 = vpop.xlane.xlu0 %3496
        %v3498 = vmul.f32 %v3494, %v2164
        %v3499 = vmul.f32 %v3497, %v2164
        %v3500 = vadd.f32 %v3498, 1e-06
        %v3501 = vadd.f32 %v3499, 1e-06
        %v3502 = vrsqrt.pop %v3500
        %v3503 = vrsqrt.pop %v3501
        %v3504 = vmul.f32 %v3488, %v3502
        %v3505 = vmul.f32 %v3489, %v3503
        %v3506 = vlaneseq
        %v3507 = vshrl.u32 %v3506, 7
        %v3508 = vsub.s32 2, %v3507
        %v3509 = vrot.slane %v2390, %v3508
        %v3510 = vmul.f32 %v3504, %v3509
        %v3511 = vmul.f32 %v3505, %v3509
        %v3512 = vlaneseq
        %v3513 = vshrl.u32 %v3512, 7
        %v3514 = vsub.s32 3, %v3513
        %v3515 = vrot.slane %v2390, %v3514
        %v3516 = vadd.f32 %v3510, %v3515
        %v3517 = vadd.f32 %v3511, %v3515
        %v3518 = vld [vmem:[%s61] sm:$0xf]
        %v3519 = vld [vmem:[%s61 + $0x4] sm:$0xf]
        %v3520 = vld [vmem:[%s61 + $0x8] sm:$0xf]
        %v3521 = vld [vmem:[%s61 + $0xc] sm:$0xf]
        %v3522 = vpack.c.bf16 %v3517, %v3516
        %v3523 = vld [vmem:[%s59] sm:$0x1]
        %v3525 = vlaneseq
        %v3526 = vshrl.u32 %v3525, 7
        %v3527 = vsub.s32 0, %v3526
        %v3528 = vrot.slane %v3523, %v3527
        %v3534 = vunpack.c.l.b16 %v3518
        %v3535 = vunpack.c.l.b16 %v3519
        %v3536 = vunpack.c.l.b16 %v3520
        %v3537 = vunpack.c.l.b16 %v3521
        %v3538 = vpack.c.b16 %v3535, %v3534
        %v3539 = vpack.c.b16 %v3537, %v3536
        %v3543 = vsel %vm1285, %v3522, 0
        %3545 = vmatprep.subr.bf16.mxu0 0
        %3546 = vmatpush1.bf16.msra.mxu0 %v3538
        %3547 = vmatprep.subr.bf16.mxu0 0
        %3548 = vmatpush1.bf16.msra.mxu0 %v3539
        %3549 = vmatprep.subr.bf16.mxu0 0
        %3550 = vmatpush1.bf16.msra.mxu0 0
        %3551 = vmatprep.subr.bf16.mxu0 0
        %3552 = vmatpush1.bf16.msra.mxu0 0
        %3553 = vmatprep.subr.bf16.mxu0 0
        %3554 = vmatpush1.bf16.msra.mxu0 0
        %3555 = vmatprep.subr.bf16.mxu0 0
        %3556 = vmatpush1.bf16.msra.mxu0 0
        %3557 = vmatprep.subr.bf16.mxu0 0
        %3558 = vmatpush1.bf16.msra.mxu0 0
        %3559 = vmatprep.subr.bf16.mxu0 0
        %3560 = vmatpush1.bf16.msra.mxu0 0
        %3561 = vmatprep.subr.bf16.mxu0 0
        %3562 = vmatpush1.bf16.msra.mxu0 0
        %3563 = vmatprep.subr.bf16.mxu0 0
        %3564 = vmatpush1.bf16.msra.mxu0 0
        %3565 = vmatprep.subr.bf16.mxu0 0
        %3566 = vmatpush1.bf16.msra.mxu0 0
        %3567 = vmatprep.subr.bf16.mxu0 0
        %3568 = vmatpush1.bf16.msra.mxu0 0
        %3569 = vmatprep.subr.bf16.mxu0 0
        %3570 = vmatpush1.bf16.msra.mxu0 0
        %3571 = vmatprep.subr.bf16.mxu0 0
        %3572 = vmatpush1.bf16.msra.mxu0 0
        %3573 = vmatprep.subr.bf16.mxu0 0
        %3574 = vmatpush1.bf16.msra.mxu0 0
        %3575 = vmatprep.subr.bf16.mxu0 0
        %3576 = vmatpush1.bf16.msra.mxu0 0
        %3577 = vmatprep.mubr.bf16.mxu0 0
        %3578 = vmatmul.mubr.bf16.gmra.mrb[0].mxu0 %v3543
        %v3579 = vpop.f32.mrb[0].mxu0
        %v3580 = vadd.f32 %v3528, %v3579
        %v3581 = vpop.f32.mrb[0].mxu0
        %v3582 = vpop.f32.mrb[0].mxu0
        %v3583 = vadd.f32 %v3528, %v3582
        %v3584 = vpop.f32.mrb[0].mxu0
        %3585 = vdwg.mxu0
        %v3586 = vmul.f32 %v1150, %v1148
        %v3587 = vmul.f32 %v1151, %v1149
        %v3588 = vsub.f32 1.0, %v1150
        %v3589 = vsub.f32 1.0, %v1151
        %v3590 = vmul.f32 %v3588, %v3580
        %v3591 = vmul.f32 %v3589, %v3583
        %v3592 = vadd.f32 %v3586, %v3590
        %v3593 = vadd.f32 %v3587, %v3591
        %v3594 = vld [vmem:[%s47] sm:$0x7]
        %v3595 = vpack.c.bf16 %v3593, %v3592
        %v3596 = vld [vmem:[%s45] sm:$0x7]
        %v3598 = vand.u32 %v3596, %v1164
        %3600 = vmatprep.subr.bf16.mxu0 0
        %3601 = vmatpush1.bf16.msra.mxu0 %v3598
        %3602 = vmatprep.subr.bf16.mxu0 0
        %3603 = vmatpush1.bf16.msra.mxu0 0
        %3604 = vmatprep.subr.bf16.mxu0 0
        %3605 = vmatpush1.bf16.msra.mxu0 0
        %3606 = vmatprep.subr.bf16.mxu0 0
        %3607 = vmatpush1.bf16.msra.mxu0 0
        %3608 = vmatprep.subr.bf16.mxu0 0
        %3609 = vmatpush1.bf16.msra.mxu0 0
        %3610 = vmatprep.subr.bf16.mxu0 0
        %3611 = vmatpush1.bf16.msra.mxu0 0
        %3612 = vmatprep.subr.bf16.mxu0 0
        %3613 = vmatpush1.bf16.msra.mxu0 0
        %3614 = vmatprep.subr.bf16.mxu0 0
        %3615 = vmatpush1.bf16.msra.mxu0 0
        %3616 = vmatprep.subr.bf16.mxu0 0
        %3617 = vmatpush1.bf16.msra.mxu0 0
        %3618 = vmatprep.subr.bf16.mxu0 0
        %3619 = vmatpush1.bf16.msra.mxu0 0
        %3620 = vmatprep.subr.bf16.mxu0 0
        %3621 = vmatpush1.bf16.msra.mxu0 0
        %3622 = vmatprep.subr.bf16.mxu0 0
        %3623 = vmatpush1.bf16.msra.mxu0 0
        %3624 = vmatprep.subr.bf16.mxu0 0
        %3625 = vmatpush1.bf16.msra.mxu0 0
        %3626 = vmatprep.subr.bf16.mxu0 0
        %3627 = vmatpush1.bf16.msra.mxu0 0
        %3628 = vmatprep.subr.bf16.mxu0 0
        %3629 = vmatpush1.bf16.msra.mxu0 0
        %3630 = vmatprep.subr.bf16.mxu0 0
        %3631 = vmatpush1.bf16.msra.mxu0 0
        %3632 = vmatprep.mubr.bf16.mxu0 0
        %3633 = vmatmul.mubr.bf16.gmra.mrb[0].mxu0 %v1159
        %v3634 = vpop.f32.mrb[0].mxu0
        %v3635 = vadd.f32 0.0, %v3634
        %v3636 = vpop.f32.mrb[0].mxu0
        %v3637 = vpop.f32.mrb[0].mxu0
        %v3638 = vadd.f32 0.0, %v3637
        %v3639 = vpop.f32.mrb[0].mxu0
        %3640 = vdwg.mxu0
        %v3642 = vsel %vm1157, %v3595, 0
        %v3645 = vand.u32 %v3594, %v1164
        %3647 = vmatprep.subr.bf16.mxu0 0
        %3648 = vmatpush1.bf16.msra.mxu0 %v3645
        %3649 = vmatprep.subr.bf16.mxu0 0
        %3650 = vmatpush1.bf16.msra.mxu0 0
        %3651 = vmatprep.subr.bf16.mxu0 0
        %3652 = vmatpush1.bf16.msra.mxu0 0
        %3653 = vmatprep.subr.bf16.mxu0 0
        %3654 = vmatpush1.bf16.msra.mxu0 0
        %3655 = vmatprep.subr.bf16.mxu0 0
        %3656 = vmatpush1.bf16.msra.mxu0 0
        %3657 = vmatprep.subr.bf16.mxu0 0
        %3658 = vmatpush1.bf16.msra.mxu0 0
        %3659 = vmatprep.subr.bf16.mxu0 0
        %3660 = vmatpush1.bf16.msra.mxu0 0
        %3661 = vmatprep.subr.bf16.mxu0 0
        %3662 = vmatpush1.bf16.msra.mxu0 0
        %3663 = vmatprep.subr.bf16.mxu0 0
        %3664 = vmatpush1.bf16.msra.mxu0 0
        %3665 = vmatprep.subr.bf16.mxu0 0
        %3666 = vmatpush1.bf16.msra.mxu0 0
        %3667 = vmatprep.subr.bf16.mxu0 0
        %3668 = vmatpush1.bf16.msra.mxu0 0
        %3669 = vmatprep.subr.bf16.mxu0 0
        %3670 = vmatpush1.bf16.msra.mxu0 0
        %3671 = vmatprep.subr.bf16.mxu0 0
        %3672 = vmatpush1.bf16.msra.mxu0 0
        %3673 = vmatprep.subr.bf16.mxu0 0
        %3674 = vmatpush1.bf16.msra.mxu0 0
        %3675 = vmatprep.subr.bf16.mxu0 0
        %3676 = vmatpush1.bf16.msra.mxu0 0
        %3677 = vmatprep.subr.bf16.mxu0 0
        %3678 = vmatpush1.bf16.msra.mxu0 0
        %3679 = vmatprep.mubr.bf16.mxu0 0
        %3680 = vmatmul.mubr.bf16.gmra.mrb[0].mxu0 %v3642
        %v3681 = vpop.f32.mrb[0].mxu0
        %v3682 = vadd.f32 %v3635, %v3681
        %v3683 = vpop.f32.mrb[0].mxu0
        %v3684 = vpop.f32.mrb[0].mxu0
        %v3685 = vadd.f32 %v3638, %v3684
        %v3686 = vpop.f32.mrb[0].mxu0
        %3687 = vdwg.mxu0
        %v3688 = vld [vmem:[%s43] sm:$0x1]
        %v3690 = vlaneseq
        %v3691 = vshrl.u32 %v3690, 7
        %v3692 = vsub.s32 0, %v3691
        %v3693 = vrot.slane %v3688, %v3692
        %v3695 = vadd.f32 %v3682, %v3693
        %v3696 = vadd.f32 %v3685, %v3693
        %v3697 = vadd.f32 %v3695, %v1152
        %v3698 = vadd.f32 %v3696, %v1152
        %v3699 = vld [vmem:[%s27] sm:$0x1f]
        %v3700 = vld [vmem:[%s33] sm:$0xf]
        %v3701 = vld [vmem:[%s33 + $0x4] sm:$0xf]
        %v3702 = vld [vmem:[%s33 + $0x8] sm:$0xf]
        %v3703 = vld [vmem:[%s33 + $0xc] sm:$0xf]
        %v3704 = vpack.c.bf16 %v3698, %v3697
        %v3709 = vunpack.c.l.b16 %v3700
        %v3710 = vunpack.c.l.b16 %v3701
        %v3711 = vunpack.c.l.b16 %v3702
        %v3712 = vunpack.c.l.b16 %v3703
        %v3713 = vpack.c.b16 %v3710, %v3709
        %v3714 = vpack.c.b16 %v3712, %v3711
        %v3718 = vsel %vm1285, %v3704, 0
        %3720 = vmatprep.subr.bf16.mxu0 0
        %3721 = vmatpush1.bf16.msra.mxu0 %v3713
        %3722 = vmatprep.subr.bf16.mxu0 0
        %3723 = vmatpush1.bf16.msra.mxu0 %v3714
        %3724 = vmatprep.subr.bf16.mxu0 0
        %3725 = vmatpush1.bf16.msra.mxu0 0
        %3726 = vmatprep.subr.bf16.mxu0 0
        %3727 = vmatpush1.bf16.msra.mxu0 0
        %3728 = vmatprep.subr.bf16.mxu0 0
        %3729 = vmatpush1.bf16.msra.mxu0 0
        %3730 = vmatprep.subr.bf16.mxu0 0
        %3731 = vmatpush1.bf16.msra.mxu0 0
        %3732 = vmatprep.subr.bf16.mxu0 0
        %3733 = vmatpush1.bf16.msra.mxu0 0
        %3734 = vmatprep.subr.bf16.mxu0 0
        %3735 = vmatpush1.bf16.msra.mxu0 0
        %3736 = vmatprep.subr.bf16.mxu0 0
        %3737 = vmatpush1.bf16.msra.mxu0 0
        %3738 = vmatprep.subr.bf16.mxu0 0
        %3739 = vmatpush1.bf16.msra.mxu0 0
        %3740 = vmatprep.subr.bf16.mxu0 0
        %3741 = vmatpush1.bf16.msra.mxu0 0
        %3742 = vmatprep.subr.bf16.mxu0 0
        %3743 = vmatpush1.bf16.msra.mxu0 0
        %3744 = vmatprep.subr.bf16.mxu0 0
        %3745 = vmatpush1.bf16.msra.mxu0 0
        %3746 = vmatprep.subr.bf16.mxu0 0
        %3747 = vmatpush1.bf16.msra.mxu0 0
        %3748 = vmatprep.subr.bf16.mxu0 0
        %3749 = vmatpush1.bf16.msra.mxu0 0
        %3750 = vmatprep.subr.bf16.mxu0 0
        %3751 = vmatpush1.bf16.msra.mxu0 0
        %3752 = vmatprep.mubr.bf16.mxu0 0
        %3753 = vmatmul.mubr.bf16.gmra.mrb[0].mxu0 %v3718
        %v3754 = vpop.f32.mrb[0].mxu0
        %v3755 = vadd.f32 0.0, %v3754
        %v3756 = vpop.f32.mrb[0].mxu0
        %v3757 = vpop.f32.mrb[0].mxu0
        %v3758 = vadd.f32 0.0, %v3757
        %v3759 = vpop.f32.mrb[0].mxu0
        %3760 = vdwg.mxu0
        %v3761 = vld [vmem:[%s31] sm:$0xf]
        %v3762 = vld [vmem:[%s31 + $0x4] sm:$0xf]
        %v3763 = vld [vmem:[%s31 + $0x8] sm:$0xf]
        %v3764 = vld [vmem:[%s31 + $0xc] sm:$0xf]
        %v3769 = vunpack.c.l.b16 %v3761
        %v3770 = vunpack.c.l.b16 %v3762
        %v3771 = vunpack.c.l.b16 %v3763
        %v3772 = vunpack.c.l.b16 %v3764
        %v3773 = vpack.c.b16 %v3770, %v3769
        %v3774 = vpack.c.b16 %v3772, %v3771
        %3777 = vmatprep.subr.bf16.mxu0 0
        %3778 = vmatpush1.bf16.msra.mxu0 %v3773
        %3779 = vmatprep.subr.bf16.mxu0 0
        %3780 = vmatpush1.bf16.msra.mxu0 %v3774
        %3781 = vmatprep.subr.bf16.mxu0 0
        %3782 = vmatpush1.bf16.msra.mxu0 0
        %3783 = vmatprep.subr.bf16.mxu0 0
        %3784 = vmatpush1.bf16.msra.mxu0 0
        %3785 = vmatprep.subr.bf16.mxu0 0
        %3786 = vmatpush1.bf16.msra.mxu0 0
        %3787 = vmatprep.subr.bf16.mxu0 0
        %3788 = vmatpush1.bf16.msra.mxu0 0
        %3789 = vmatprep.subr.bf16.mxu0 0
        %3790 = vmatpush1.bf16.msra.mxu0 0
        %3791 = vmatprep.subr.bf16.mxu0 0
        %3792 = vmatpush1.bf16.msra.mxu0 0
        %3793 = vmatprep.subr.bf16.mxu0 0
        %3794 = vmatpush1.bf16.msra.mxu0 0
        %3795 = vmatprep.subr.bf16.mxu0 0
        %3796 = vmatpush1.bf16.msra.mxu0 0
        %3797 = vmatprep.subr.bf16.mxu0 0
        %3798 = vmatpush1.bf16.msra.mxu0 0
        %3799 = vmatprep.subr.bf16.mxu0 0
        %3800 = vmatpush1.bf16.msra.mxu0 0
        %3801 = vmatprep.subr.bf16.mxu0 0
        %3802 = vmatpush1.bf16.msra.mxu0 0
        %3803 = vmatprep.subr.bf16.mxu0 0
        %3804 = vmatpush1.bf16.msra.mxu0 0
        %3805 = vmatprep.subr.bf16.mxu0 0
        %3806 = vmatpush1.bf16.msra.mxu0 0
        %3807 = vmatprep.subr.bf16.mxu0 0
        %3808 = vmatpush1.bf16.msra.mxu0 0
        %3809 = vmatprep.mubr.bf16.mxu0 0
        %3810 = vmatmul.mubr.bf16.gmra.mrb[0].mxu0 %v3718
        %v3811 = vpop.f32.mrb[0].mxu0
        %v3812 = vadd.f32 0.0, %v3811
        %v3813 = vpop.f32.mrb[0].mxu0
        %v3814 = vpop.f32.mrb[0].mxu0
        %v3815 = vadd.f32 0.0, %v3814
        %v3816 = vpop.f32.mrb[0].mxu0
        %3817 = vdwg.mxu0
        %v3818 = vld [vmem:[%s35] sm:$0xf]
        %v3819 = vld [vmem:[%s35 + $0x4] sm:$0xf]
        %v3820 = vld [vmem:[%s35 + $0x8] sm:$0xf]
        %v3821 = vld [vmem:[%s35 + $0xc] sm:$0xf]
        %v3826 = vunpack.c.l.b16 %v3818
        %v3827 = vunpack.c.l.b16 %v3819
        %v3828 = vunpack.c.l.b16 %v3820
        %v3829 = vunpack.c.l.b16 %v3821
        %v3830 = vpack.c.b16 %v3827, %v3826
        %v3831 = vpack.c.b16 %v3829, %v3828
        %3834 = vmatprep.subr.bf16.mxu0 0
        %3835 = vmatpush1.bf16.msra.mxu0 %v3830
        %3836 = vmatprep.subr.bf16.mxu0 0
        %3837 = vmatpush1.bf16.msra.mxu0 %v3831
        %3838 = vmatprep.subr.bf16.mxu0 0
        %3839 = vmatpush1.bf16.msra.mxu0 0
        %3840 = vmatprep.subr.bf16.mxu0 0
        %3841 = vmatpush1.bf16.msra.mxu0 0
        %3842 = vmatprep.subr.bf16.mxu0 0
        %3843 = vmatpush1.bf16.msra.mxu0 0
        %3844 = vmatprep.subr.bf16.mxu0 0
        %3845 = vmatpush1.bf16.msra.mxu0 0
        %3846 = vmatprep.subr.bf16.mxu0 0
        %3847 = vmatpush1.bf16.msra.mxu0 0
        %3848 = vmatprep.subr.bf16.mxu0 0
        %3849 = vmatpush1.bf16.msra.mxu0 0
        %3850 = vmatprep.subr.bf16.mxu0 0
        %3851 = vmatpush1.bf16.msra.mxu0 0
        %3852 = vmatprep.subr.bf16.mxu0 0
        %3853 = vmatpush1.bf16.msra.mxu0 0
        %3854 = vmatprep.subr.bf16.mxu0 0
        %3855 = vmatpush1.bf16.msra.mxu0 0
        %3856 = vmatprep.subr.bf16.mxu0 0
        %3857 = vmatpush1.bf16.msra.mxu0 0
        %3858 = vmatprep.subr.bf16.mxu0 0
        %3859 = vmatpush1.bf16.msra.mxu0 0
        %3860 = vmatprep.subr.bf16.mxu0 0
        %3861 = vmatpush1.bf16.msra.mxu0 0
        %3862 = vmatprep.subr.bf16.mxu0 0
        %3863 = vmatpush1.bf16.msra.mxu0 0
        %3864 = vmatprep.subr.bf16.mxu0 0
        %3865 = vmatpush1.bf16.msra.mxu0 0
        %3866 = vmatprep.mubr.bf16.mxu0 0
        %3867 = vmatmul.mubr.bf16.gmra.mrb[0].mxu0 %v3718
        %v3868 = vpop.f32.mrb[0].mxu0
        %v3869 = vadd.f32 0.0, %v3868
        %v3870 = vpop.f32.mrb[0].mxu0
        %v3871 = vpop.f32.mrb[0].mxu0
        %v3872 = vadd.f32 0.0, %v3871
        %v3873 = vpop.f32.mrb[0].mxu0
        %3874 = vdwg.mxu0
        %v3875 = vpack.c.bf16 %v3755, %v3755
        %v3876 = vpack.c.bf16 %v3758, %v3758
        %v3877 = vpack.c.bf16 %v3812, %v3812
        %v3878 = vpack.c.bf16 %v3815, %v3815
        %v3880 = vsel %vm1448, %v3875, 0
        %v3883 = vsel %vm1448, %v3877, 0
        %3885 = vmatprep.subr.bf16.mxu0 0
        %3886 = vmatpush1.bf16.xpose.msra.mxu0 %v3883
        %3887 = vmatprep.subr.bf16.mxu0 0
        %3888 = vmatpush1.bf16.xpose.msra.mxu0 0
        %3889 = vmatprep.subr.bf16.mxu0 0
        %3890 = vmatpush1.bf16.xpose.msra.mxu0 0
        %3891 = vmatprep.subr.bf16.mxu0 0
        %3892 = vmatpush1.bf16.xpose.msra.mxu0 0
        %3893 = vmatprep.subr.bf16.mxu0 0
        %3894 = vmatpush1.bf16.xpose.msra.mxu0 0
        %3895 = vmatprep.subr.bf16.mxu0 0
        %3896 = vmatpush1.bf16.xpose.msra.mxu0 0
        %3897 = vmatprep.subr.bf16.mxu0 0
        %3898 = vmatpush1.bf16.xpose.msra.mxu0 0
        %3899 = vmatprep.subr.bf16.mxu0 0
        %3900 = vmatpush1.bf16.xpose.msra.mxu0 0
        %3901 = vmatprep.subr.bf16.mxu0 0
        %3902 = vmatpush1.bf16.xpose.msra.mxu0 0
        %3903 = vmatprep.subr.bf16.mxu0 0
        %3904 = vmatpush1.bf16.xpose.msra.mxu0 0
        %3905 = vmatprep.subr.bf16.mxu0 0
        %3906 = vmatpush1.bf16.xpose.msra.mxu0 0
        %3907 = vmatprep.subr.bf16.mxu0 0
        %3908 = vmatpush1.bf16.xpose.msra.mxu0 0
        %3909 = vmatprep.subr.bf16.mxu0 0
        %3910 = vmatpush1.bf16.xpose.msra.mxu0 0
        %3911 = vmatprep.subr.bf16.mxu0 0
        %3912 = vmatpush1.bf16.xpose.msra.mxu0 0
        %3913 = vmatprep.subr.bf16.mxu0 0
        %3914 = vmatpush1.bf16.xpose.msra.mxu0 0
        %3915 = vmatprep.subr.bf16.mxu0 0
        %3916 = vmatpush1.bf16.xpose.msra.mxu0 0
        %3917 = vmatprep.mubr.bf16.mxu0 0
        %3918 = vmatmul.mubr.bf16.gmra.mrb[0].mxu0 %v3880
        %v3919 = vpop.f32.mrb[0].mxu0
        %v3920 = vadd.f32 0.0, %v3919
        %v3921 = vpop.f32.mrb[0].mxu0
        %v3922 = vpop.f32.mrb[0].mxu0
        %v3923 = vpop.f32.mrb[0].mxu0
        %3924 = vdwg.mxu0
        %v3926 = vsel %vm1448, %v3876, 0
        %v3929 = vsel %vm1448, %v3878, 0
        %3931 = vmatprep.subr.bf16.mxu0 0
        %3932 = vmatpush1.bf16.xpose.msra.mxu0 %v3929
        %3933 = vmatprep.subr.bf16.mxu0 0
        %3934 = vmatpush1.bf16.xpose.msra.mxu0 0
        %3935 = vmatprep.subr.bf16.mxu0 0
        %3936 = vmatpush1.bf16.xpose.msra.mxu0 0
        %3937 = vmatprep.subr.bf16.mxu0 0
        %3938 = vmatpush1.bf16.xpose.msra.mxu0 0
        %3939 = vmatprep.subr.bf16.mxu0 0
        %3940 = vmatpush1.bf16.xpose.msra.mxu0 0
        %3941 = vmatprep.subr.bf16.mxu0 0
        %3942 = vmatpush1.bf16.xpose.msra.mxu0 0
        %3943 = vmatprep.subr.bf16.mxu0 0
        %3944 = vmatpush1.bf16.xpose.msra.mxu0 0
        %3945 = vmatprep.subr.bf16.mxu0 0
        %3946 = vmatpush1.bf16.xpose.msra.mxu0 0
        %3947 = vmatprep.subr.bf16.mxu0 0
        %3948 = vmatpush1.bf16.xpose.msra.mxu0 0
        %3949 = vmatprep.subr.bf16.mxu0 0
        %3950 = vmatpush1.bf16.xpose.msra.mxu0 0
        %3951 = vmatprep.subr.bf16.mxu0 0
        %3952 = vmatpush1.bf16.xpose.msra.mxu0 0
        %3953 = vmatprep.subr.bf16.mxu0 0
        %3954 = vmatpush1.bf16.xpose.msra.mxu0 0
        %3955 = vmatprep.subr.bf16.mxu0 0
        %3956 = vmatpush1.bf16.xpose.msra.mxu0 0
        %3957 = vmatprep.subr.bf16.mxu0 0
        %3958 = vmatpush1.bf16.xpose.msra.mxu0 0
        %3959 = vmatprep.subr.bf16.mxu0 0
        %3960 = vmatpush1.bf16.xpose.msra.mxu0 0
        %3961 = vmatprep.subr.bf16.mxu0 0
        %3962 = vmatpush1.bf16.xpose.msra.mxu0 0
        %3963 = vmatprep.mubr.bf16.mxu0 0
        %3964 = vmatmul.mubr.bf16.gmra.mrb[0].mxu0 %v3926
        %v3965 = vpop.f32.mrb[0].mxu0
        %v3966 = vadd.f32 0.0, %v3965
        %v3967 = vpop.f32.mrb[0].mxu0
        %v3968 = vpop.f32.mrb[0].mxu0
        %v3969 = vpop.f32.mrb[0].mxu0
        %3970 = vdwg.mxu0
        %v3971 = vsel %vm1541, %v3920, -inf
        %3972 = vmax.xlane.f32.xlu0 %v3971
        %v3973 = vpop.xlane.xlu0 %3972
        %v3974 = vsel %vm1541, %v3966, -inf
        %3975 = vmax.xlane.f32.xlu0 %v3974
        %v3976 = vpop.xlane.xlu0 %3975
        %v3977 = vsub.f32 %v3920, %v3973
        %v3978 = vsub.f32 %v3966, %v3976
        %v3979 = vmul.f32 %v3977, 1.442695
        %v3980 = vpow.pop %v3979
        %v3981 = vmul.f32 %v3978, 1.442695
        %v3982 = vpow.pop %v3981
        %v3983 = vsel %vm1541, %v3980, 0.0
        %3984 = vadd.xlane.f32.xlu0 %v3983
        %v3985 = vpop.xlane.xlu0 %3984
        %v3986 = vsel %vm1541, %v3982, 0.0
        %3987 = vadd.xlane.f32.xlu0 %v3986
        %v3988 = vpop.xlane.xlu0 %3987
        %v3989 = vrcp.pop %v3985
        %v3990 = vrcp.pop %v3988
        %v3991 = vmul.f32 %v3980, %v3989
        %v3992 = vmul.f32 %v3982, %v3990
        %v3993 = vpack.c.bf16 %v3991, %v3991
        %v3994 = vpack.c.bf16 %v3992, %v3992
        %v3995 = vpack.c.bf16 %v3869, %v3869
        %v3996 = vpack.c.bf16 %v3872, %v3872
        %v3998 = vsel %vm1541, %v3993, 0
        %v4001 = vsel %vm1571, %v3995, 0
        %4003 = vmatprep.subr.bf16.mxu0 0
        %4004 = vmatpush1.bf16.msra.mxu0 %v4001
        %4005 = vmatprep.subr.bf16.mxu0 0
        %4006 = vmatpush1.bf16.msra.mxu0 0
        %4007 = vmatprep.subr.bf16.mxu0 0
        %4008 = vmatpush1.bf16.msra.mxu0 0
        %4009 = vmatprep.subr.bf16.mxu0 0
        %4010 = vmatpush1.bf16.msra.mxu0 0
        %4011 = vmatprep.subr.bf16.mxu0 0
        %4012 = vmatpush1.bf16.msra.mxu0 0
        %4013 = vmatprep.subr.bf16.mxu0 0
        %4014 = vmatpush1.bf16.msra.mxu0 0
        %4015 = vmatprep.subr.bf16.mxu0 0
        %4016 = vmatpush1.bf16.msra.mxu0 0
        %4017 = vmatprep.subr.bf16.mxu0 0
        %4018 = vmatpush1.bf16.msra.mxu0 0
        %4019 = vmatprep.subr.bf16.mxu0 0
        %4020 = vmatpush1.bf16.msra.mxu0 0
        %4021 = vmatprep.subr.bf16.mxu0 0
        %4022 = vmatpush1.bf16.msra.mxu0 0
        %4023 = vmatprep.subr.bf16.mxu0 0
        %4024 = vmatpush1.bf16.msra.mxu0 0
        %4025 = vmatprep.subr.bf16.mxu0 0
        %4026 = vmatpush1.bf16.msra.mxu0 0
        %4027 = vmatprep.subr.bf16.mxu0 0
        %4028 = vmatpush1.bf16.msra.mxu0 0
        %4029 = vmatprep.subr.bf16.mxu0 0
        %4030 = vmatpush1.bf16.msra.mxu0 0
        %4031 = vmatprep.subr.bf16.mxu0 0
        %4032 = vmatpush1.bf16.msra.mxu0 0
        %4033 = vmatprep.subr.bf16.mxu0 0
        %4034 = vmatpush1.bf16.msra.mxu0 0
        %4035 = vmatprep.mubr.bf16.mxu0 0
        %4036 = vmatmul.mubr.bf16.gmra.mrb[0].mxu0 %v3998
        %v4037 = vpop.f32.mrb[0].mxu0
        %v4038 = vadd.f32 0.0, %v4037
        %v4039 = vpop.f32.mrb[0].mxu0
        %v4040 = vpop.f32.mrb[0].mxu0
        %v4041 = vpop.f32.mrb[0].mxu0
        %4042 = vdwg.mxu0
        %v4044 = vsel %vm1541, %v3994, 0
        %v4047 = vsel %vm1571, %v3996, 0
        %4049 = vmatprep.subr.bf16.mxu0 0
        %4050 = vmatpush1.bf16.msra.mxu0 %v4047
        %4051 = vmatprep.subr.bf16.mxu0 0
        %4052 = vmatpush1.bf16.msra.mxu0 0
        %4053 = vmatprep.subr.bf16.mxu0 0
        %4054 = vmatpush1.bf16.msra.mxu0 0
        %4055 = vmatprep.subr.bf16.mxu0 0
        %4056 = vmatpush1.bf16.msra.mxu0 0
        %4057 = vmatprep.subr.bf16.mxu0 0
        %4058 = vmatpush1.bf16.msra.mxu0 0
        %4059 = vmatprep.subr.bf16.mxu0 0
        %4060 = vmatpush1.bf16.msra.mxu0 0
        %4061 = vmatprep.subr.bf16.mxu0 0
        %4062 = vmatpush1.bf16.msra.mxu0 0
        %4063 = vmatprep.subr.bf16.mxu0 0
        %4064 = vmatpush1.bf16.msra.mxu0 0
        %4065 = vmatprep.subr.bf16.mxu0 0
        %4066 = vmatpush1.bf16.msra.mxu0 0
        %4067 = vmatprep.subr.bf16.mxu0 0
        %4068 = vmatpush1.bf16.msra.mxu0 0
        %4069 = vmatprep.subr.bf16.mxu0 0
        %4070 = vmatpush1.bf16.msra.mxu0 0
        %4071 = vmatprep.subr.bf16.mxu0 0
        %4072 = vmatpush1.bf16.msra.mxu0 0
        %4073 = vmatprep.subr.bf16.mxu0 0
        %4074 = vmatpush1.bf16.msra.mxu0 0
        %4075 = vmatprep.subr.bf16.mxu0 0
        %4076 = vmatpush1.bf16.msra.mxu0 0
        %4077 = vmatprep.subr.bf16.mxu0 0
        %4078 = vmatpush1.bf16.msra.mxu0 0
        %4079 = vmatprep.subr.bf16.mxu0 0
        %4080 = vmatpush1.bf16.msra.mxu0 0
        %4081 = vmatprep.mubr.bf16.mxu0 0
        %4082 = vmatmul.mubr.bf16.gmra.mrb[0].mxu0 %v4044
        %v4083 = vpop.f32.mrb[0].mxu0
        %v4084 = vadd.f32 0.0, %v4083
        %v4085 = vpop.f32.mrb[0].mxu0
        %v4086 = vpop.f32.mrb[0].mxu0
        %v4087 = vpop.f32.mrb[0].mxu0
        %4088 = vdwg.mxu0
        %v4089 = vld [vmem:[%s29] sm:$0xf]
        %v4090 = vld [vmem:[%s29 + $0x4] sm:$0xf]
        %v4091 = vpack.c.bf16 %v4084, %v4038
        %s4092 = scalar_lea.vmem %s33, 16
        %v4093 = vld [vmem:[%s4092] sm:$0xf]
        %v4094 = vld [vmem:[%s4092 + $0x4] sm:$0xf]
        %v4095 = vld [vmem:[%s4092 + $0x8] sm:$0xf]
        %v4096 = vld [vmem:[%s4092 + $0xc] sm:$0xf]
        %v4101 = vunpack.c.l.b16 %v4093
        %v4102 = vunpack.c.l.b16 %v4094
        %v4103 = vunpack.c.l.b16 %v4095
        %v4104 = vunpack.c.l.b16 %v4096
        %v4105 = vpack.c.b16 %v4102, %v4101
        %v4106 = vpack.c.b16 %v4104, %v4103
        %4109 = vmatprep.subr.bf16.mxu0 0
        %4110 = vmatpush1.bf16.msra.mxu0 %v4105
        %4111 = vmatprep.subr.bf16.mxu0 0
        %4112 = vmatpush1.bf16.msra.mxu0 %v4106
        %4113 = vmatprep.subr.bf16.mxu0 0
        %4114 = vmatpush1.bf16.msra.mxu0 0
        %4115 = vmatprep.subr.bf16.mxu0 0
        %4116 = vmatpush1.bf16.msra.mxu0 0
        %4117 = vmatprep.subr.bf16.mxu0 0
        %4118 = vmatpush1.bf16.msra.mxu0 0
        %4119 = vmatprep.subr.bf16.mxu0 0
        %4120 = vmatpush1.bf16.msra.mxu0 0
        %4121 = vmatprep.subr.bf16.mxu0 0
        %4122 = vmatpush1.bf16.msra.mxu0 0
        %4123 = vmatprep.subr.bf16.mxu0 0
        %4124 = vmatpush1.bf16.msra.mxu0 0
        %4125 = vmatprep.subr.bf16.mxu0 0
        %4126 = vmatpush1.bf16.msra.mxu0 0
        %4127 = vmatprep.subr.bf16.mxu0 0
        %4128 = vmatpush1.bf16.msra.mxu0 0
        %4129 = vmatprep.subr.bf16.mxu0 0
        %4130 = vmatpush1.bf16.msra.mxu0 0
        %4131 = vmatprep.subr.bf16.mxu0 0
        %4132 = vmatpush1.bf16.msra.mxu0 0
        %4133 = vmatprep.subr.bf16.mxu0 0
        %4134 = vmatpush1.bf16.msra.mxu0 0
        %4135 = vmatprep.subr.bf16.mxu0 0
        %4136 = vmatpush1.bf16.msra.mxu0 0
        %4137 = vmatprep.subr.bf16.mxu0 0
        %4138 = vmatpush1.bf16.msra.mxu0 0
        %4139 = vmatprep.subr.bf16.mxu0 0
        %4140 = vmatpush1.bf16.msra.mxu0 0
        %4141 = vmatprep.mubr.bf16.mxu0 0
        %4142 = vmatmul.mubr.bf16.gmra.mrb[0].mxu0 %v3718
        %v4143 = vpop.f32.mrb[0].mxu0
        %v4144 = vadd.f32 0.0, %v4143
        %v4145 = vpop.f32.mrb[0].mxu0
        %v4146 = vpop.f32.mrb[0].mxu0
        %v4147 = vadd.f32 0.0, %v4146
        %v4148 = vpop.f32.mrb[0].mxu0
        %4149 = vdwg.mxu0
        %s4150 = scalar_lea.vmem %s31, 16
        %v4151 = vld [vmem:[%s4150] sm:$0xf]
        %v4152 = vld [vmem:[%s4150 + $0x4] sm:$0xf]
        %v4153 = vld [vmem:[%s4150 + $0x8] sm:$0xf]
        %v4154 = vld [vmem:[%s4150 + $0xc] sm:$0xf]
        %v4159 = vunpack.c.l.b16 %v4151
        %v4160 = vunpack.c.l.b16 %v4152
        %v4161 = vunpack.c.l.b16 %v4153
        %v4162 = vunpack.c.l.b16 %v4154
        %v4163 = vpack.c.b16 %v4160, %v4159
        %v4164 = vpack.c.b16 %v4162, %v4161
        %4167 = vmatprep.subr.bf16.mxu0 0
        %4168 = vmatpush1.bf16.msra.mxu0 %v4163
        %4169 = vmatprep.subr.bf16.mxu0 0
        %4170 = vmatpush1.bf16.msra.mxu0 %v4164
        %4171 = vmatprep.subr.bf16.mxu0 0
        %4172 = vmatpush1.bf16.msra.mxu0 0
        %4173 = vmatprep.subr.bf16.mxu0 0
        %4174 = vmatpush1.bf16.msra.mxu0 0
        %4175 = vmatprep.subr.bf16.mxu0 0
        %4176 = vmatpush1.bf16.msra.mxu0 0
        %4177 = vmatprep.subr.bf16.mxu0 0
        %4178 = vmatpush1.bf16.msra.mxu0 0
        %4179 = vmatprep.subr.bf16.mxu0 0
        %4180 = vmatpush1.bf16.msra.mxu0 0
        %4181 = vmatprep.subr.bf16.mxu0 0
        %4182 = vmatpush1.bf16.msra.mxu0 0
        %4183 = vmatprep.subr.bf16.mxu0 0
        %4184 = vmatpush1.bf16.msra.mxu0 0
        %4185 = vmatprep.subr.bf16.mxu0 0
        %4186 = vmatpush1.bf16.msra.mxu0 0
        %4187 = vmatprep.subr.bf16.mxu0 0
        %4188 = vmatpush1.bf16.msra.mxu0 0
        %4189 = vmatprep.subr.bf16.mxu0 0
        %4190 = vmatpush1.bf16.msra.mxu0 0
        %4191 = vmatprep.subr.bf16.mxu0 0
        %4192 = vmatpush1.bf16.msra.mxu0 0
        %4193 = vmatprep.subr.bf16.mxu0 0
        %4194 = vmatpush1.bf16.msra.mxu0 0
        %4195 = vmatprep.subr.bf16.mxu0 0
        %4196 = vmatpush1.bf16.msra.mxu0 0
        %4197 = vmatprep.subr.bf16.mxu0 0
        %4198 = vmatpush1.bf16.msra.mxu0 0
        %4199 = vmatprep.mubr.bf16.mxu0 0
        %4200 = vmatmul.mubr.bf16.gmra.mrb[0].mxu0 %v3718
        %v4201 = vpop.f32.mrb[0].mxu0
        %v4202 = vadd.f32 0.0, %v4201
        %v4203 = vpop.f32.mrb[0].mxu0
        %v4204 = vpop.f32.mrb[0].mxu0
        %v4205 = vadd.f32 0.0, %v4204
        %v4206 = vpop.f32.mrb[0].mxu0
        %4207 = vdwg.mxu0
        %s4208 = scalar_lea.vmem %s35, 16
        %v4209 = vld [vmem:[%s4208] sm:$0xf]
        %v4210 = vld [vmem:[%s4208 + $0x4] sm:$0xf]
        %v4211 = vld [vmem:[%s4208 + $0x8] sm:$0xf]
        %v4212 = vld [vmem:[%s4208 + $0xc] sm:$0xf]
        %v4217 = vunpack.c.l.b16 %v4209
        %v4218 = vunpack.c.l.b16 %v4210
        %v4219 = vunpack.c.l.b16 %v4211
        %v4220 = vunpack.c.l.b16 %v4212
        %v4221 = vpack.c.b16 %v4218, %v4217
        %v4222 = vpack.c.b16 %v4220, %v4219
        %4225 = vmatprep.subr.bf16.mxu0 0
        %4226 = vmatpush1.bf16.msra.mxu0 %v4221
        %4227 = vmatprep.subr.bf16.mxu0 0
        %4228 = vmatpush1.bf16.msra.mxu0 %v4222
        %4229 = vmatprep.subr.bf16.mxu0 0
        %4230 = vmatpush1.bf16.msra.mxu0 0
        %4231 = vmatprep.subr.bf16.mxu0 0
        %4232 = vmatpush1.bf16.msra.mxu0 0
        %4233 = vmatprep.subr.bf16.mxu0 0
        %4234 = vmatpush1.bf16.msra.mxu0 0
        %4235 = vmatprep.subr.bf16.mxu0 0
        %4236 = vmatpush1.bf16.msra.mxu0 0
        %4237 = vmatprep.subr.bf16.mxu0 0
        %4238 = vmatpush1.bf16.msra.mxu0 0
        %4239 = vmatprep.subr.bf16.mxu0 0
        %4240 = vmatpush1.bf16.msra.mxu0 0
        %4241 = vmatprep.subr.bf16.mxu0 0
        %4242 = vmatpush1.bf16.msra.mxu0 0
        %4243 = vmatprep.subr.bf16.mxu0 0
        %4244 = vmatpush1.bf16.msra.mxu0 0
        %4245 = vmatprep.subr.bf16.mxu0 0
        %4246 = vmatpush1.bf16.msra.mxu0 0
        %4247 = vmatprep.subr.bf16.mxu0 0
        %4248 = vmatpush1.bf16.msra.mxu0 0
        %4249 = vmatprep.subr.bf16.mxu0 0
        %4250 = vmatpush1.bf16.msra.mxu0 0
        %4251 = vmatprep.subr.bf16.mxu0 0
        %4252 = vmatpush1.bf16.msra.mxu0 0
        %4253 = vmatprep.subr.bf16.mxu0 0
        %4254 = vmatpush1.bf16.msra.mxu0 0
        %4255 = vmatprep.subr.bf16.mxu0 0
        %4256 = vmatpush1.bf16.msra.mxu0 0
        %4257 = vmatprep.mubr.bf16.mxu0 0
        %4258 = vmatmul.mubr.bf16.gmra.mrb[0].mxu0 %v3718
        %v4259 = vpop.f32.mrb[0].mxu0
        %v4260 = vadd.f32 0.0, %v4259
        %v4261 = vpop.f32.mrb[0].mxu0
        %v4262 = vpop.f32.mrb[0].mxu0
        %v4263 = vadd.f32 0.0, %v4262
        %v4264 = vpop.f32.mrb[0].mxu0
        %4265 = vdwg.mxu0
        %v4266 = vpack.c.bf16 %v4144, %v4144
        %v4267 = vpack.c.bf16 %v4147, %v4147
        %v4268 = vpack.c.bf16 %v4202, %v4202
        %v4269 = vpack.c.bf16 %v4205, %v4205
        %v4271 = vsel %vm1448, %v4266, 0
        %v4274 = vsel %vm1448, %v4268, 0
        %4276 = vmatprep.subr.bf16.mxu0 0
        %4277 = vmatpush1.bf16.xpose.msra.mxu0 %v4274
        %4278 = vmatprep.subr.bf16.mxu0 0
        %4279 = vmatpush1.bf16.xpose.msra.mxu0 0
        %4280 = vmatprep.subr.bf16.mxu0 0
        %4281 = vmatpush1.bf16.xpose.msra.mxu0 0
        %4282 = vmatprep.subr.bf16.mxu0 0
        %4283 = vmatpush1.bf16.xpose.msra.mxu0 0
        %4284 = vmatprep.subr.bf16.mxu0 0
        %4285 = vmatpush1.bf16.xpose.msra.mxu0 0
        %4286 = vmatprep.subr.bf16.mxu0 0
        %4287 = vmatpush1.bf16.xpose.msra.mxu0 0
        %4288 = vmatprep.subr.bf16.mxu0 0
        %4289 = vmatpush1.bf16.xpose.msra.mxu0 0
        %4290 = vmatprep.subr.bf16.mxu0 0
        %4291 = vmatpush1.bf16.xpose.msra.mxu0 0
        %4292 = vmatprep.subr.bf16.mxu0 0
        %4293 = vmatpush1.bf16.xpose.msra.mxu0 0
        %4294 = vmatprep.subr.bf16.mxu0 0
        %4295 = vmatpush1.bf16.xpose.msra.mxu0 0
        %4296 = vmatprep.subr.bf16.mxu0 0
        %4297 = vmatpush1.bf16.xpose.msra.mxu0 0
        %4298 = vmatprep.subr.bf16.mxu0 0
        %4299 = vmatpush1.bf16.xpose.msra.mxu0 0
        %4300 = vmatprep.subr.bf16.mxu0 0
        %4301 = vmatpush1.bf16.xpose.msra.mxu0 0
        %4302 = vmatprep.subr.bf16.mxu0 0
        %4303 = vmatpush1.bf16.xpose.msra.mxu0 0
        %4304 = vmatprep.subr.bf16.mxu0 0
        %4305 = vmatpush1.bf16.xpose.msra.mxu0 0
        %4306 = vmatprep.subr.bf16.mxu0 0
        %4307 = vmatpush1.bf16.xpose.msra.mxu0 0
        %4308 = vmatprep.mubr.bf16.mxu0 0
        %4309 = vmatmul.mubr.bf16.gmra.mrb[0].mxu0 %v4271
        %v4310 = vpop.f32.mrb[0].mxu0
        %v4311 = vadd.f32 0.0, %v4310
        %v4312 = vpop.f32.mrb[0].mxu0
        %v4313 = vpop.f32.mrb[0].mxu0
        %v4314 = vpop.f32.mrb[0].mxu0
        %4315 = vdwg.mxu0
        %v4317 = vsel %vm1448, %v4267, 0
        %v4320 = vsel %vm1448, %v4269, 0
        %4322 = vmatprep.subr.bf16.mxu0 0
        %4323 = vmatpush1.bf16.xpose.msra.mxu0 %v4320
        %4324 = vmatprep.subr.bf16.mxu0 0
        %4325 = vmatpush1.bf16.xpose.msra.mxu0 0
        %4326 = vmatprep.subr.bf16.mxu0 0
        %4327 = vmatpush1.bf16.xpose.msra.mxu0 0
        %4328 = vmatprep.subr.bf16.mxu0 0
        %4329 = vmatpush1.bf16.xpose.msra.mxu0 0
        %4330 = vmatprep.subr.bf16.mxu0 0
        %4331 = vmatpush1.bf16.xpose.msra.mxu0 0
        %4332 = vmatprep.subr.bf16.mxu0 0
        %4333 = vmatpush1.bf16.xpose.msra.mxu0 0
        %4334 = vmatprep.subr.bf16.mxu0 0
        %4335 = vmatpush1.bf16.xpose.msra.mxu0 0
        %4336 = vmatprep.subr.bf16.mxu0 0
        %4337 = vmatpush1.bf16.xpose.msra.mxu0 0
        %4338 = vmatprep.subr.bf16.mxu0 0
        %4339 = vmatpush1.bf16.xpose.msra.mxu0 0
        %4340 = vmatprep.subr.bf16.mxu0 0
        %4341 = vmatpush1.bf16.xpose.msra.mxu0 0
        %4342 = vmatprep.subr.bf16.mxu0 0
        %4343 = vmatpush1.bf16.xpose.msra.mxu0 0
        %4344 = vmatprep.subr.bf16.mxu0 0
        %4345 = vmatpush1.bf16.xpose.msra.mxu0 0
        %4346 = vmatprep.subr.bf16.mxu0 0
        %4347 = vmatpush1.bf16.xpose.msra.mxu0 0
        %4348 = vmatprep.subr.bf16.mxu0 0
        %4349 = vmatpush1.bf16.xpose.msra.mxu0 0
        %4350 = vmatprep.subr.bf16.mxu0 0
        %4351 = vmatpush1.bf16.xpose.msra.mxu0 0
        %4352 = vmatprep.subr.bf16.mxu0 0
        %4353 = vmatpush1.bf16.xpose.msra.mxu0 0
        %4354 = vmatprep.mubr.bf16.mxu0 0
        %4355 = vmatmul.mubr.bf16.gmra.mrb[0].mxu0 %v4317
        %v4356 = vpop.f32.mrb[0].mxu0
        %v4357 = vadd.f32 0.0, %v4356
        %v4358 = vpop.f32.mrb[0].mxu0
        %v4359 = vpop.f32.mrb[0].mxu0
        %v4360 = vpop.f32.mrb[0].mxu0
        %4361 = vdwg.mxu0
        %v4362 = vsel %vm1541, %v4311, -inf
        %4363 = vmax.xlane.f32.xlu0 %v4362
        %v4364 = vpop.xlane.xlu0 %4363
        %v4365 = vsel %vm1541, %v4357, -inf
        %4366 = vmax.xlane.f32.xlu0 %v4365
        %v4367 = vpop.xlane.xlu0 %4366
        %v4368 = vsub.f32 %v4311, %v4364
        %v4369 = vsub.f32 %v4357, %v4367
        %v4370 = vmul.f32 %v4368, 1.442695
        %v4371 = vpow.pop %v4370
        %v4372 = vmul.f32 %v4369, 1.442695
        %v4373 = vpow.pop %v4372
        %v4374 = vsel %vm1541, %v4371, 0.0
        %4375 = vadd.xlane.f32.xlu0 %v4374
        %v4376 = vpop.xlane.xlu0 %4375
        %v4377 = vsel %vm1541, %v4373, 0.0
        %4378 = vadd.xlane.f32.xlu0 %v4377
        %v4379 = vpop.xlane.xlu0 %4378
        %v4380 = vrcp.pop %v4376
        %v4381 = vrcp.pop %v4379
        %v4382 = vmul.f32 %v4371, %v4380
        %v4383 = vmul.f32 %v4373, %v4381
        %v4384 = vpack.c.bf16 %v4382, %v4382
        %v4385 = vpack.c.bf16 %v4383, %v4383
        %v4386 = vpack.c.bf16 %v4260, %v4260
        %v4387 = vpack.c.bf16 %v4263, %v4263
        %v4389 = vsel %vm1541, %v4384, 0
        %v4392 = vsel %vm1571, %v4386, 0
        %4394 = vmatprep.subr.bf16.mxu0 0
        %4395 = vmatpush1.bf16.msra.mxu0 %v4392
        %4396 = vmatprep.subr.bf16.mxu0 0
        %4397 = vmatpush1.bf16.msra.mxu0 0
        %4398 = vmatprep.subr.bf16.mxu0 0
        %4399 = vmatpush1.bf16.msra.mxu0 0
        %4400 = vmatprep.subr.bf16.mxu0 0
        %4401 = vmatpush1.bf16.msra.mxu0 0
        %4402 = vmatprep.subr.bf16.mxu0 0
        %4403 = vmatpush1.bf16.msra.mxu0 0
        %4404 = vmatprep.subr.bf16.mxu0 0
        %4405 = vmatpush1.bf16.msra.mxu0 0
        %4406 = vmatprep.subr.bf16.mxu0 0
        %4407 = vmatpush1.bf16.msra.mxu0 0
        %4408 = vmatprep.subr.bf16.mxu0 0
        %4409 = vmatpush1.bf16.msra.mxu0 0
        %4410 = vmatprep.subr.bf16.mxu0 0
        %4411 = vmatpush1.bf16.msra.mxu0 0
        %4412 = vmatprep.subr.bf16.mxu0 0
        %4413 = vmatpush1.bf16.msra.mxu0 0
        %4414 = vmatprep.subr.bf16.mxu0 0
        %4415 = vmatpush1.bf16.msra.mxu0 0
        %4416 = vmatprep.subr.bf16.mxu0 0
        %4417 = vmatpush1.bf16.msra.mxu0 0
        %4418 = vmatprep.subr.bf16.mxu0 0
        %4419 = vmatpush1.bf16.msra.mxu0 0
        %4420 = vmatprep.subr.bf16.mxu0 0
        %4421 = vmatpush1.bf16.msra.mxu0 0
        %4422 = vmatprep.subr.bf16.mxu0 0
        %4423 = vmatpush1.bf16.msra.mxu0 0
        %4424 = vmatprep.subr.bf16.mxu0 0
        %4425 = vmatpush1.bf16.msra.mxu0 0
        %4426 = vmatprep.mubr.bf16.mxu0 0
        %4427 = vmatmul.mubr.bf16.gmra.mrb[0].mxu0 %v4389
        %v4428 = vpop.f32.mrb[0].mxu0
        %v4429 = vadd.f32 0.0, %v4428
        %v4430 = vpop.f32.mrb[0].mxu0
        %v4431 = vpop.f32.mrb[0].mxu0
        %v4432 = vpop.f32.mrb[0].mxu0
        %4433 = vdwg.mxu0
        %v4435 = vsel %vm1541, %v4385, 0
        %v4438 = vsel %vm1571, %v4387, 0
        %4440 = vmatprep.subr.bf16.mxu0 0
        %4441 = vmatpush1.bf16.msra.mxu0 %v4438
        %4442 = vmatprep.subr.bf16.mxu0 0
        %4443 = vmatpush1.bf16.msra.mxu0 0
        %4444 = vmatprep.subr.bf16.mxu0 0
        %4445 = vmatpush1.bf16.msra.mxu0 0
        %4446 = vmatprep.subr.bf16.mxu0 0
        %4447 = vmatpush1.bf16.msra.mxu0 0
        %4448 = vmatprep.subr.bf16.mxu0 0
        %4449 = vmatpush1.bf16.msra.mxu0 0
        %4450 = vmatprep.subr.bf16.mxu0 0
        %4451 = vmatpush1.bf16.msra.mxu0 0
        %4452 = vmatprep.subr.bf16.mxu0 0
        %4453 = vmatpush1.bf16.msra.mxu0 0
        %4454 = vmatprep.subr.bf16.mxu0 0
        %4455 = vmatpush1.bf16.msra.mxu0 0
        %4456 = vmatprep.subr.bf16.mxu0 0
        %4457 = vmatpush1.bf16.msra.mxu0 0
        %4458 = vmatprep.subr.bf16.mxu0 0
        %4459 = vmatpush1.bf16.msra.mxu0 0
        %4460 = vmatprep.subr.bf16.mxu0 0
        %4461 = vmatpush1.bf16.msra.mxu0 0
        %4462 = vmatprep.subr.bf16.mxu0 0
        %4463 = vmatpush1.bf16.msra.mxu0 0
        %4464 = vmatprep.subr.bf16.mxu0 0
        %4465 = vmatpush1.bf16.msra.mxu0 0
        %4466 = vmatprep.subr.bf16.mxu0 0
        %4467 = vmatpush1.bf16.msra.mxu0 0
        %4468 = vmatprep.subr.bf16.mxu0 0
        %4469 = vmatpush1.bf16.msra.mxu0 0
        %4470 = vmatprep.subr.bf16.mxu0 0
        %4471 = vmatpush1.bf16.msra.mxu0 0
        %4472 = vmatprep.mubr.bf16.mxu0 0
        %4473 = vmatmul.mubr.bf16.gmra.mrb[0].mxu0 %v4435
        %v4474 = vpop.f32.mrb[0].mxu0
        %v4475 = vadd.f32 0.0, %v4474
        %v4476 = vpop.f32.mrb[0].mxu0
        %v4477 = vpop.f32.mrb[0].mxu0
        %v4478 = vpop.f32.mrb[0].mxu0
        %4479 = vdwg.mxu0
        %s4480 = scalar_lea.vmem %s29, 8
        %v4481 = vld [vmem:[%s4480] sm:$0xf]
        %v4482 = vld [vmem:[%s4480 + $0x4] sm:$0xf]
        %v4483 = vpack.c.bf16 %v4475, %v4429
        %v4486 = vunpack.c.l.b16 %v4481
        %v4487 = vunpack.c.l.b16 %v4482
        %v4488 = vpack.c.b16 %v4487, %v4486
        %v4491 = vsel %vm1448, %v4483, 0
        %4493 = vmatprep.subr.bf16.mxu0 0
        %4494 = vmatpush1.bf16.msra.mxu0 %v4488
        %4495 = vmatprep.subr.bf16.mxu0 0
        %4496 = vmatpush1.bf16.msra.mxu0 0
        %4497 = vmatprep.subr.bf16.mxu0 0
        %4498 = vmatpush1.bf16.msra.mxu0 0
        %4499 = vmatprep.subr.bf16.mxu0 0
        %4500 = vmatpush1.bf16.msra.mxu0 0
        %4501 = vmatprep.subr.bf16.mxu0 0
        %4502 = vmatpush1.bf16.msra.mxu0 0
        %4503 = vmatprep.subr.bf16.mxu0 0
        %4504 = vmatpush1.bf16.msra.mxu0 0
        %4505 = vmatprep.subr.bf16.mxu0 0
        %4506 = vmatpush1.bf16.msra.mxu0 0
        %4507 = vmatprep.subr.bf16.mxu0 0
        %4508 = vmatpush1.bf16.msra.mxu0 0
        %4509 = vmatprep.subr.bf16.mxu0 0
        %4510 = vmatpush1.bf16.msra.mxu0 0
        %4511 = vmatprep.subr.bf16.mxu0 0
        %4512 = vmatpush1.bf16.msra.mxu0 0
        %4513 = vmatprep.subr.bf16.mxu0 0
        %4514 = vmatpush1.bf16.msra.mxu0 0
        %4515 = vmatprep.subr.bf16.mxu0 0
        %4516 = vmatpush1.bf16.msra.mxu0 0
        %4517 = vmatprep.subr.bf16.mxu0 0
        %4518 = vmatpush1.bf16.msra.mxu0 0
        %4519 = vmatprep.subr.bf16.mxu0 0
        %4520 = vmatpush1.bf16.msra.mxu0 0
        %4521 = vmatprep.subr.bf16.mxu0 0
        %4522 = vmatpush1.bf16.msra.mxu0 0
        %4523 = vmatprep.subr.bf16.mxu0 0
        %4524 = vmatpush1.bf16.msra.mxu0 0
        %4525 = vmatprep.mubr.bf16.mxu0 0
        %4526 = vmatmul.mubr.bf16.gmra.mrb[0].mxu0 %v4491
        %v4527 = vpop.f32.mrb[0].mxu0
        %v4528 = vadd.f32 0.0, %v4527
        %v4529 = vpop.f32.mrb[0].mxu0
        %v4530 = vpop.f32.mrb[0].mxu0
        %v4531 = vadd.f32 0.0, %v4530
        %v4532 = vpop.f32.mrb[0].mxu0
        %4533 = vdwg.mxu0
        %v4536 = vunpack.c.l.b16 %v4089
        %v4537 = vunpack.c.l.b16 %v4090
        %v4538 = vpack.c.b16 %v4537, %v4536
        %v4541 = vsel %vm1448, %v4091, 0
        %4543 = vmatprep.subr.bf16.mxu0 0
        %4544 = vmatpush1.bf16.msra.mxu0 %v4538
        %4545 = vmatprep.subr.bf16.mxu0 0
        %4546 = vmatpush1.bf16.msra.mxu0 0
        %4547 = vmatprep.subr.bf16.mxu0 0
        %4548 = vmatpush1.bf16.msra.mxu0 0
        %4549 = vmatprep.subr.bf16.mxu0 0
        %4550 = vmatpush1.bf16.msra.mxu0 0
        %4551 = vmatprep.subr.bf16.mxu0 0
        %4552 = vmatpush1.bf16.msra.mxu0 0
        %4553 = vmatprep.subr.bf16.mxu0 0
        %4554 = vmatpush1.bf16.msra.mxu0 0
        %4555 = vmatprep.subr.bf16.mxu0 0
        %4556 = vmatpush1.bf16.msra.mxu0 0
        %4557 = vmatprep.subr.bf16.mxu0 0
        %4558 = vmatpush1.bf16.msra.mxu0 0
        %4559 = vmatprep.subr.bf16.mxu0 0
        %4560 = vmatpush1.bf16.msra.mxu0 0
        %4561 = vmatprep.subr.bf16.mxu0 0
        %4562 = vmatpush1.bf16.msra.mxu0 0
        %4563 = vmatprep.subr.bf16.mxu0 0
        %4564 = vmatpush1.bf16.msra.mxu0 0
        %4565 = vmatprep.subr.bf16.mxu0 0
        %4566 = vmatpush1.bf16.msra.mxu0 0
        %4567 = vmatprep.subr.bf16.mxu0 0
        %4568 = vmatpush1.bf16.msra.mxu0 0
        %4569 = vmatprep.subr.bf16.mxu0 0
        %4570 = vmatpush1.bf16.msra.mxu0 0
        %4571 = vmatprep.subr.bf16.mxu0 0
        %4572 = vmatpush1.bf16.msra.mxu0 0
        %4573 = vmatprep.subr.bf16.mxu0 0
        %4574 = vmatpush1.bf16.msra.mxu0 0
        %4575 = vmatprep.mubr.bf16.mxu0 0
        %4576 = vmatmul.mubr.bf16.gmra.mrb[0].mxu0 %v4541
        %v4577 = vpop.f32.mrb[0].mxu0
        %v4578 = vadd.f32 %v4528, %v4577
        %v4579 = vpop.f32.mrb[0].mxu0
        %v4580 = vpop.f32.mrb[0].mxu0
        %v4581 = vadd.f32 %v4531, %v4580
        %v4582 = vpop.f32.mrb[0].mxu0
        %4583 = vdwg.mxu0
        %v4584 = vadd.f32 %v4578, %v3697
        %v4585 = vadd.f32 %v4581, %v3698
        %v4586 = vsel %vm1285, %v4584, 0.0
        %4587 = vadd.xlane.f32.xlu0 %v4586
        %v4588 = vpop.xlane.xlu0 %4587
        %v4589 = vsel %vm1285, %v4585, 0.0
        %4590 = vadd.xlane.f32.xlu0 %v4589
        %v4591 = vpop.xlane.xlu0 %4590
        %v4592 = vmul.f32 %v4588, %v2164
        %v4593 = vmul.f32 %v4591, %v2164
        %v4594 = vsub.f32 %v4584, %v4592
        %v4595 = vsub.f32 %v4585, %v4593
        %v4596 = vmul.f32 %v4594, %v4594
        %v4597 = vmul.f32 %v4595, %v4595
        %v4598 = vsel %vm1285, %v4596, 0.0
        %4599 = vadd.xlane.f32.xlu0 %v4598
        %v4600 = vpop.xlane.xlu0 %4599
        %v4601 = vsel %vm1285, %v4597, 0.0
        %4602 = vadd.xlane.f32.xlu0 %v4601
        %v4603 = vpop.xlane.xlu0 %4602
        %v4604 = vmul.f32 %v4600, %v2164
        %v4605 = vmul.f32 %v4603, %v2164
        %v4606 = vadd.f32 %v4604, 1e-06
        %v4607 = vadd.f32 %v4605, 1e-06
        %v4608 = vrsqrt.pop %v4606
        %v4609 = vrsqrt.pop %v4607
        %v4610 = vmul.f32 %v4594, %v4608
        %v4611 = vmul.f32 %v4595, %v4609
        %v4612 = vlaneseq
        %v4613 = vshrl.u32 %v4612, 7
        %v4614 = vsub.s32 0, %v4613
        %v4615 = vrot.slane %v3699, %v4614
        %v4616 = vmul.f32 %v4610, %v4615
        %v4617 = vmul.f32 %v4611, %v4615
        %v4618 = vlaneseq
        %v4619 = vshrl.u32 %v4618, 7
        %v4620 = vsub.s32 1, %v4619
        %v4621 = vrot.slane %v3699, %v4620
        %v4622 = vadd.f32 %v4616, %v4621
        %v4623 = vadd.f32 %v4617, %v4621
        %v4624 = vld [vmem:[%s23] sm:$0xf]
        %v4625 = vld [vmem:[%s23 + $0x4] sm:$0xf]
        %v4626 = vld [vmem:[%s23 + $0x8] sm:$0xf]
        %v4627 = vld [vmem:[%s23 + $0xc] sm:$0xf]
        %v4628 = vpack.c.bf16 %v4623, %v4622
        %v4629 = vld [vmem:[%s21] sm:$0x1]
        %v4631 = vlaneseq
        %v4632 = vshrl.u32 %v4631, 7
        %v4633 = vsub.s32 0, %v4632
        %v4634 = vrot.slane %v4629, %v4633
        %v4640 = vunpack.c.l.b16 %v4624
        %v4641 = vunpack.c.l.b16 %v4625
        %v4642 = vunpack.c.l.b16 %v4626
        %v4643 = vunpack.c.l.b16 %v4627
        %v4644 = vpack.c.b16 %v4641, %v4640
        %v4645 = vpack.c.b16 %v4643, %v4642
        %v4649 = vsel %vm1285, %v4628, 0
        %4651 = vmatprep.subr.bf16.mxu0 0
        %4652 = vmatpush1.bf16.msra.mxu0 %v4644
        %4653 = vmatprep.subr.bf16.mxu0 0
        %4654 = vmatpush1.bf16.msra.mxu0 %v4645
        %4655 = vmatprep.subr.bf16.mxu0 0
        %4656 = vmatpush1.bf16.msra.mxu0 0
        %4657 = vmatprep.subr.bf16.mxu0 0
        %4658 = vmatpush1.bf16.msra.mxu0 0
        %4659 = vmatprep.subr.bf16.mxu0 0
        %4660 = vmatpush1.bf16.msra.mxu0 0
        %4661 = vmatprep.subr.bf16.mxu0 0
        %4662 = vmatpush1.bf16.msra.mxu0 0
        %4663 = vmatprep.subr.bf16.mxu0 0
        %4664 = vmatpush1.bf16.msra.mxu0 0
        %4665 = vmatprep.subr.bf16.mxu0 0
        %4666 = vmatpush1.bf16.msra.mxu0 0
        %4667 = vmatprep.subr.bf16.mxu0 0
        %4668 = vmatpush1.bf16.msra.mxu0 0
        %4669 = vmatprep.subr.bf16.mxu0 0
        %4670 = vmatpush1.bf16.msra.mxu0 0
        %4671 = vmatprep.subr.bf16.mxu0 0
        %4672 = vmatpush1.bf16.msra.mxu0 0
        %4673 = vmatprep.subr.bf16.mxu0 0
        %4674 = vmatpush1.bf16.msra.mxu0 0
        %4675 = vmatprep.subr.bf16.mxu0 0
        %4676 = vmatpush1.bf16.msra.mxu0 0
        %4677 = vmatprep.subr.bf16.mxu0 0
        %4678 = vmatpush1.bf16.msra.mxu0 0
        %4679 = vmatprep.subr.bf16.mxu0 0
        %4680 = vmatpush1.bf16.msra.mxu0 0
        %4681 = vmatprep.subr.bf16.mxu0 0
        %4682 = vmatpush1.bf16.msra.mxu0 0
        %4683 = vmatprep.mubr.bf16.mxu0 0
        %4684 = vmatmul.mubr.bf16.gmra.mrb[0].mxu0 %v4649
        %v4685 = vpop.f32.mrb[0].mxu0
        %v4686 = vadd.f32 %v4634, %v4685
        %v4687 = vpop.f32.mrb[0].mxu0
        %v4688 = vpop.f32.mrb[0].mxu0
        %v4689 = vadd.f32 %v4634, %v4688
        %v4690 = vpop.f32.mrb[0].mxu0
        %4691 = vdwg.mxu0
        %v4692 = vmax.f32 %v4686, 0.0
        %v4693 = vmax.f32 %v4689, 0.0
        %v4694 = vld [vmem:[%s25] sm:$0xf]
        %v4695 = vld [vmem:[%s25 + $0x4] sm:$0xf]
        %v4696 = vld [vmem:[%s25 + $0x8] sm:$0xf]
        %v4697 = vld [vmem:[%s25 + $0xc] sm:$0xf]
        %v4698 = vld [vmem:[%s25 + $0x10] sm:$0xf]
        %v4699 = vld [vmem:[%s25 + $0x14] sm:$0xf]
        %v4700 = vld [vmem:[%s25 + $0x18] sm:$0xf]
        %v4701 = vld [vmem:[%s25 + $0x1c] sm:$0xf]
        %v4702 = vpack.c.bf16 %v4693, %v4692
        %v4703 = vlaneseq
        %v4704 = vshrl.u32 %v4703, 7
        %v4705 = vsub.s32 4, %v4704
        %v4706 = vrot.slane %v3699, %v4705
        %v4715 = vunpack.c.l.b16 %v4694
        %v4716 = vunpack.c.l.b16 %v4695
        %v4717 = vunpack.c.l.b16 %v4696
        %v4718 = vunpack.c.l.b16 %v4697
        %v4719 = vunpack.c.l.b16 %v4698
        %v4720 = vunpack.c.l.b16 %v4699
        %v4721 = vunpack.c.l.b16 %v4700
        %v4722 = vunpack.c.l.b16 %v4701
        %v4723 = vpack.c.b16 %v4716, %v4715
        %v4724 = vpack.c.b16 %v4718, %v4717
        %v4725 = vpack.c.b16 %v4720, %v4719
        %v4726 = vpack.c.b16 %v4722, %v4721
        %v4732 = vsel %vm2304, %v4702, 0
        %4734 = vmatprep.subr.bf16.mxu0 0
        %4735 = vmatpush1.bf16.msra.mxu0 %v4723
        %4736 = vmatprep.subr.bf16.mxu0 0
        %4737 = vmatpush1.bf16.msra.mxu0 %v4724
        %4738 = vmatprep.subr.bf16.mxu0 0
        %4739 = vmatpush1.bf16.msra.mxu0 %v4725
        %4740 = vmatprep.subr.bf16.mxu0 0
        %4741 = vmatpush1.bf16.msra.mxu0 %v4726
        %4742 = vmatprep.subr.bf16.mxu0 0
        %4743 = vmatpush1.bf16.msra.mxu0 0
        %4744 = vmatprep.subr.bf16.mxu0 0
        %4745 = vmatpush1.bf16.msra.mxu0 0
        %4746 = vmatprep.subr.bf16.mxu0 0
        %4747 = vmatpush1.bf16.msra.mxu0 0
        %4748 = vmatprep.subr.bf16.mxu0 0
        %4749 = vmatpush1.bf16.msra.mxu0 0
        %4750 = vmatprep.subr.bf16.mxu0 0
        %4751 = vmatpush1.bf16.msra.mxu0 0
        %4752 = vmatprep.subr.bf16.mxu0 0
        %4753 = vmatpush1.bf16.msra.mxu0 0
        %4754 = vmatprep.subr.bf16.mxu0 0
        %4755 = vmatpush1.bf16.msra.mxu0 0
        %4756 = vmatprep.subr.bf16.mxu0 0
        %4757 = vmatpush1.bf16.msra.mxu0 0
        %4758 = vmatprep.subr.bf16.mxu0 0
        %4759 = vmatpush1.bf16.msra.mxu0 0
        %4760 = vmatprep.subr.bf16.mxu0 0
        %4761 = vmatpush1.bf16.msra.mxu0 0
        %4762 = vmatprep.subr.bf16.mxu0 0
        %4763 = vmatpush1.bf16.msra.mxu0 0
        %4764 = vmatprep.subr.bf16.mxu0 0
        %4765 = vmatpush1.bf16.msra.mxu0 0
        %4766 = vmatprep.mubr.bf16.mxu0 0
        %4767 = vmatmul.mubr.bf16.gmra.mrb[0].mxu0 %v4732
        %v4768 = vpop.f32.mrb[0].mxu0
        %v4769 = vadd.f32 %v4706, %v4768
        %v4770 = vpop.f32.mrb[0].mxu0
        %v4771 = vpop.f32.mrb[0].mxu0
        %v4772 = vadd.f32 %v4706, %v4771
        %v4773 = vpop.f32.mrb[0].mxu0
        %4774 = vdwg.mxu0
        %v4775 = vadd.f32 %v4769, %v4622
        %v4776 = vadd.f32 %v4772, %v4623
        %v4777 = vsel %vm1285, %v4775, 0.0
        %4778 = vadd.xlane.f32.xlu0 %v4777
        %v4779 = vpop.xlane.xlu0 %4778
        %v4780 = vsel %vm1285, %v4776, 0.0
        %4781 = vadd.xlane.f32.xlu0 %v4780
        %v4782 = vpop.xlane.xlu0 %4781
        %v4783 = vmul.f32 %v4779, %v2164
        %v4784 = vmul.f32 %v4782, %v2164
        %v4785 = vsub.f32 %v4775, %v4783
        %v4786 = vsub.f32 %v4776, %v4784
        %v4787 = vmul.f32 %v4785, %v4785
        %v4788 = vmul.f32 %v4786, %v4786
        %v4789 = vsel %vm1285, %v4787, 0.0
        %4790 = vadd.xlane.f32.xlu0 %v4789
        %v4791 = vpop.xlane.xlu0 %4790
        %v4792 = vsel %vm1285, %v4788, 0.0
        %4793 = vadd.xlane.f32.xlu0 %v4792
        %v4794 = vpop.xlane.xlu0 %4793
        %v4795 = vmul.f32 %v4791, %v2164
        %v4796 = vmul.f32 %v4794, %v2164
        %v4797 = vadd.f32 %v4795, 1e-06
        %v4798 = vadd.f32 %v4796, 1e-06
        %v4799 = vrsqrt.pop %v4797
        %v4800 = vrsqrt.pop %v4798
        %v4801 = vmul.f32 %v4785, %v4799
        %v4802 = vmul.f32 %v4786, %v4800
        %v4803 = vlaneseq
        %v4804 = vshrl.u32 %v4803, 7
        %v4805 = vsub.s32 2, %v4804
        %v4806 = vrot.slane %v3699, %v4805
        %v4807 = vmul.f32 %v4801, %v4806
        %v4808 = vmul.f32 %v4802, %v4806
        %v4809 = vlaneseq
        %v4810 = vshrl.u32 %v4809, 7
        %v4811 = vsub.s32 3, %v4810
        %v4812 = vrot.slane %v3699, %v4811
        %v4813 = vadd.f32 %v4807, %v4812
        %v4814 = vadd.f32 %v4808, %v4812
        %s4815 = scalar_lea.vmem %s27, 8
        %v4816 = vld [vmem:[%s4815] sm:$0x1f]
        %s4817 = scalar_lea.vmem %s33, 32
        %v4818 = vld [vmem:[%s4817] sm:$0xf]
        %v4819 = vld [vmem:[%s4817 + $0x4] sm:$0xf]
        %v4820 = vld [vmem:[%s4817 + $0x8] sm:$0xf]
        %v4821 = vld [vmem:[%s4817 + $0xc] sm:$0xf]
        %v4822 = vpack.c.bf16 %v4814, %v4813
        %v4827 = vunpack.c.l.b16 %v4818
        %v4828 = vunpack.c.l.b16 %v4819
        %v4829 = vunpack.c.l.b16 %v4820
        %v4830 = vunpack.c.l.b16 %v4821
        %v4831 = vpack.c.b16 %v4828, %v4827
        %v4832 = vpack.c.b16 %v4830, %v4829
        %v4836 = vsel %vm1285, %v4822, 0
        %4838 = vmatprep.subr.bf16.mxu0 0
        %4839 = vmatpush1.bf16.msra.mxu0 %v4831
        %4840 = vmatprep.subr.bf16.mxu0 0
        %4841 = vmatpush1.bf16.msra.mxu0 %v4832
        %4842 = vmatprep.subr.bf16.mxu0 0
        %4843 = vmatpush1.bf16.msra.mxu0 0
        %4844 = vmatprep.subr.bf16.mxu0 0
        %4845 = vmatpush1.bf16.msra.mxu0 0
        %4846 = vmatprep.subr.bf16.mxu0 0
        %4847 = vmatpush1.bf16.msra.mxu0 0
        %4848 = vmatprep.subr.bf16.mxu0 0
        %4849 = vmatpush1.bf16.msra.mxu0 0
        %4850 = vmatprep.subr.bf16.mxu0 0
        %4851 = vmatpush1.bf16.msra.mxu0 0
        %4852 = vmatprep.subr.bf16.mxu0 0
        %4853 = vmatpush1.bf16.msra.mxu0 0
        %4854 = vmatprep.subr.bf16.mxu0 0
        %4855 = vmatpush1.bf16.msra.mxu0 0
        %4856 = vmatprep.subr.bf16.mxu0 0
        %4857 = vmatpush1.bf16.msra.mxu0 0
        %4858 = vmatprep.subr.bf16.mxu0 0
        %4859 = vmatpush1.bf16.msra.mxu0 0
        %4860 = vmatprep.subr.bf16.mxu0 0
        %4861 = vmatpush1.bf16.msra.mxu0 0
        %4862 = vmatprep.subr.bf16.mxu0 0
        %4863 = vmatpush1.bf16.msra.mxu0 0
        %4864 = vmatprep.subr.bf16.mxu0 0
        %4865 = vmatpush1.bf16.msra.mxu0 0
        %4866 = vmatprep.subr.bf16.mxu0 0
        %4867 = vmatpush1.bf16.msra.mxu0 0
        %4868 = vmatprep.subr.bf16.mxu0 0
        %4869 = vmatpush1.bf16.msra.mxu0 0
        %4870 = vmatprep.mubr.bf16.mxu0 0
        %4871 = vmatmul.mubr.bf16.gmra.mrb[0].mxu0 %v4836
        %v4872 = vpop.f32.mrb[0].mxu0
        %v4873 = vadd.f32 0.0, %v4872
        %v4874 = vpop.f32.mrb[0].mxu0
        %v4875 = vpop.f32.mrb[0].mxu0
        %v4876 = vadd.f32 0.0, %v4875
        %v4877 = vpop.f32.mrb[0].mxu0
        %4878 = vdwg.mxu0
        %s4879 = scalar_lea.vmem %s31, 32
        %v4880 = vld [vmem:[%s4879] sm:$0xf]
        %v4881 = vld [vmem:[%s4879 + $0x4] sm:$0xf]
        %v4882 = vld [vmem:[%s4879 + $0x8] sm:$0xf]
        %v4883 = vld [vmem:[%s4879 + $0xc] sm:$0xf]
        %v4888 = vunpack.c.l.b16 %v4880
        %v4889 = vunpack.c.l.b16 %v4881
        %v4890 = vunpack.c.l.b16 %v4882
        %v4891 = vunpack.c.l.b16 %v4883
        %v4892 = vpack.c.b16 %v4889, %v4888
        %v4893 = vpack.c.b16 %v4891, %v4890
        %4896 = vmatprep.subr.bf16.mxu0 0
        %4897 = vmatpush1.bf16.msra.mxu0 %v4892
        %4898 = vmatprep.subr.bf16.mxu0 0
        %4899 = vmatpush1.bf16.msra.mxu0 %v4893
        %4900 = vmatprep.subr.bf16.mxu0 0
        %4901 = vmatpush1.bf16.msra.mxu0 0
        %4902 = vmatprep.subr.bf16.mxu0 0
        %4903 = vmatpush1.bf16.msra.mxu0 0
        %4904 = vmatprep.subr.bf16.mxu0 0
        %4905 = vmatpush1.bf16.msra.mxu0 0
        %4906 = vmatprep.subr.bf16.mxu0 0
        %4907 = vmatpush1.bf16.msra.mxu0 0
        %4908 = vmatprep.subr.bf16.mxu0 0
        %4909 = vmatpush1.bf16.msra.mxu0 0
        %4910 = vmatprep.subr.bf16.mxu0 0
        %4911 = vmatpush1.bf16.msra.mxu0 0
        %4912 = vmatprep.subr.bf16.mxu0 0
        %4913 = vmatpush1.bf16.msra.mxu0 0
        %4914 = vmatprep.subr.bf16.mxu0 0
        %4915 = vmatpush1.bf16.msra.mxu0 0
        %4916 = vmatprep.subr.bf16.mxu0 0
        %4917 = vmatpush1.bf16.msra.mxu0 0
        %4918 = vmatprep.subr.bf16.mxu0 0
        %4919 = vmatpush1.bf16.msra.mxu0 0
        %4920 = vmatprep.subr.bf16.mxu0 0
        %4921 = vmatpush1.bf16.msra.mxu0 0
        %4922 = vmatprep.subr.bf16.mxu0 0
        %4923 = vmatpush1.bf16.msra.mxu0 0
        %4924 = vmatprep.subr.bf16.mxu0 0
        %4925 = vmatpush1.bf16.msra.mxu0 0
        %4926 = vmatprep.subr.bf16.mxu0 0
        %4927 = vmatpush1.bf16.msra.mxu0 0
        %4928 = vmatprep.mubr.bf16.mxu0 0
        %4929 = vmatmul.mubr.bf16.gmra.mrb[0].mxu0 %v4836
        %v4930 = vpop.f32.mrb[0].mxu0
        %v4931 = vadd.f32 0.0, %v4930
        %v4932 = vpop.f32.mrb[0].mxu0
        %v4933 = vpop.f32.mrb[0].mxu0
        %v4934 = vadd.f32 0.0, %v4933
        %v4935 = vpop.f32.mrb[0].mxu0
        %4936 = vdwg.mxu0
        %s4937 = scalar_lea.vmem %s35, 32
        %v4938 = vld [vmem:[%s4937] sm:$0xf]
        %v4939 = vld [vmem:[%s4937 + $0x4] sm:$0xf]
        %v4940 = vld [vmem:[%s4937 + $0x8] sm:$0xf]
        %v4941 = vld [vmem:[%s4937 + $0xc] sm:$0xf]
        %v4946 = vunpack.c.l.b16 %v4938
        %v4947 = vunpack.c.l.b16 %v4939
        %v4948 = vunpack.c.l.b16 %v4940
        %v4949 = vunpack.c.l.b16 %v4941
        %v4950 = vpack.c.b16 %v4947, %v4946
        %v4951 = vpack.c.b16 %v4949, %v4948
        %4954 = vmatprep.subr.bf16.mxu0 0
        %4955 = vmatpush1.bf16.msra.mxu0 %v4950
        %4956 = vmatprep.subr.bf16.mxu0 0
        %4957 = vmatpush1.bf16.msra.mxu0 %v4951
        %4958 = vmatprep.subr.bf16.mxu0 0
        %4959 = vmatpush1.bf16.msra.mxu0 0
        %4960 = vmatprep.subr.bf16.mxu0 0
        %4961 = vmatpush1.bf16.msra.mxu0 0
        %4962 = vmatprep.subr.bf16.mxu0 0
        %4963 = vmatpush1.bf16.msra.mxu0 0
        %4964 = vmatprep.subr.bf16.mxu0 0
        %4965 = vmatpush1.bf16.msra.mxu0 0
        %4966 = vmatprep.subr.bf16.mxu0 0
        %4967 = vmatpush1.bf16.msra.mxu0 0
        %4968 = vmatprep.subr.bf16.mxu0 0
        %4969 = vmatpush1.bf16.msra.mxu0 0
        %4970 = vmatprep.subr.bf16.mxu0 0
        %4971 = vmatpush1.bf16.msra.mxu0 0
        %4972 = vmatprep.subr.bf16.mxu0 0
        %4973 = vmatpush1.bf16.msra.mxu0 0
        %4974 = vmatprep.subr.bf16.mxu0 0
        %4975 = vmatpush1.bf16.msra.mxu0 0
        %4976 = vmatprep.subr.bf16.mxu0 0
        %4977 = vmatpush1.bf16.msra.mxu0 0
        %4978 = vmatprep.subr.bf16.mxu0 0
        %4979 = vmatpush1.bf16.msra.mxu0 0
        %4980 = vmatprep.subr.bf16.mxu0 0
        %4981 = vmatpush1.bf16.msra.mxu0 0
        %4982 = vmatprep.subr.bf16.mxu0 0
        %4983 = vmatpush1.bf16.msra.mxu0 0
        %4984 = vmatprep.subr.bf16.mxu0 0
        %4985 = vmatpush1.bf16.msra.mxu0 0
        %4986 = vmatprep.mubr.bf16.mxu0 0
        %4987 = vmatmul.mubr.bf16.gmra.mrb[0].mxu0 %v4836
        %v4988 = vpop.f32.mrb[0].mxu0
        %v4989 = vadd.f32 0.0, %v4988
        %v4990 = vpop.f32.mrb[0].mxu0
        %v4991 = vpop.f32.mrb[0].mxu0
        %v4992 = vadd.f32 0.0, %v4991
        %v4993 = vpop.f32.mrb[0].mxu0
        %4994 = vdwg.mxu0
        %v4995 = vpack.c.bf16 %v4873, %v4873
        %v4996 = vpack.c.bf16 %v4876, %v4876
        %v4997 = vpack.c.bf16 %v4931, %v4931
        %v4998 = vpack.c.bf16 %v4934, %v4934
        %v5000 = vsel %vm1448, %v4995, 0
        %v5003 = vsel %vm1448, %v4997, 0
        %5005 = vmatprep.subr.bf16.mxu0 0
        %5006 = vmatpush1.bf16.xpose.msra.mxu0 %v5003
        %5007 = vmatprep.subr.bf16.mxu0 0
        %5008 = vmatpush1.bf16.xpose.msra.mxu0 0
        %5009 = vmatprep.subr.bf16.mxu0 0
        %5010 = vmatpush1.bf16.xpose.msra.mxu0 0
        %5011 = vmatprep.subr.bf16.mxu0 0
        %5012 = vmatpush1.bf16.xpose.msra.mxu0 0
        %5013 = vmatprep.subr.bf16.mxu0 0
        %5014 = vmatpush1.bf16.xpose.msra.mxu0 0
        %5015 = vmatprep.subr.bf16.mxu0 0
        %5016 = vmatpush1.bf16.xpose.msra.mxu0 0
        %5017 = vmatprep.subr.bf16.mxu0 0
        %5018 = vmatpush1.bf16.xpose.msra.mxu0 0
        %5019 = vmatprep.subr.bf16.mxu0 0
        %5020 = vmatpush1.bf16.xpose.msra.mxu0 0
        %5021 = vmatprep.subr.bf16.mxu0 0
        %5022 = vmatpush1.bf16.xpose.msra.mxu0 0
        %5023 = vmatprep.subr.bf16.mxu0 0
        %5024 = vmatpush1.bf16.xpose.msra.mxu0 0
        %5025 = vmatprep.subr.bf16.mxu0 0
        %5026 = vmatpush1.bf16.xpose.msra.mxu0 0
        %5027 = vmatprep.subr.bf16.mxu0 0
        %5028 = vmatpush1.bf16.xpose.msra.mxu0 0
        %5029 = vmatprep.subr.bf16.mxu0 0
        %5030 = vmatpush1.bf16.xpose.msra.mxu0 0
        %5031 = vmatprep.subr.bf16.mxu0 0
        %5032 = vmatpush1.bf16.xpose.msra.mxu0 0
        %5033 = vmatprep.subr.bf16.mxu0 0
        %5034 = vmatpush1.bf16.xpose.msra.mxu0 0
        %5035 = vmatprep.subr.bf16.mxu0 0
        %5036 = vmatpush1.bf16.xpose.msra.mxu0 0
        %5037 = vmatprep.mubr.bf16.mxu0 0
        %5038 = vmatmul.mubr.bf16.gmra.mrb[0].mxu0 %v5000
        %v5039 = vpop.f32.mrb[0].mxu0
        %v5040 = vadd.f32 0.0, %v5039
        %v5041 = vpop.f32.mrb[0].mxu0
        %v5042 = vpop.f32.mrb[0].mxu0
        %v5043 = vpop.f32.mrb[0].mxu0
        %5044 = vdwg.mxu0
        %v5046 = vsel %vm1448, %v4996, 0
        %v5049 = vsel %vm1448, %v4998, 0
        %5051 = vmatprep.subr.bf16.mxu0 0
        %5052 = vmatpush1.bf16.xpose.msra.mxu0 %v5049
        %5053 = vmatprep.subr.bf16.mxu0 0
        %5054 = vmatpush1.bf16.xpose.msra.mxu0 0
        %5055 = vmatprep.subr.bf16.mxu0 0
        %5056 = vmatpush1.bf16.xpose.msra.mxu0 0
        %5057 = vmatprep.subr.bf16.mxu0 0
        %5058 = vmatpush1.bf16.xpose.msra.mxu0 0
        %5059 = vmatprep.subr.bf16.mxu0 0
        %5060 = vmatpush1.bf16.xpose.msra.mxu0 0
        %5061 = vmatprep.subr.bf16.mxu0 0
        %5062 = vmatpush1.bf16.xpose.msra.mxu0 0
        %5063 = vmatprep.subr.bf16.mxu0 0
        %5064 = vmatpush1.bf16.xpose.msra.mxu0 0
        %5065 = vmatprep.subr.bf16.mxu0 0
        %5066 = vmatpush1.bf16.xpose.msra.mxu0 0
        %5067 = vmatprep.subr.bf16.mxu0 0
        %5068 = vmatpush1.bf16.xpose.msra.mxu0 0
        %5069 = vmatprep.subr.bf16.mxu0 0
        %5070 = vmatpush1.bf16.xpose.msra.mxu0 0
        %5071 = vmatprep.subr.bf16.mxu0 0
        %5072 = vmatpush1.bf16.xpose.msra.mxu0 0
        %5073 = vmatprep.subr.bf16.mxu0 0
        %5074 = vmatpush1.bf16.xpose.msra.mxu0 0
        %5075 = vmatprep.subr.bf16.mxu0 0
        %5076 = vmatpush1.bf16.xpose.msra.mxu0 0
        %5077 = vmatprep.subr.bf16.mxu0 0
        %5078 = vmatpush1.bf16.xpose.msra.mxu0 0
        %5079 = vmatprep.subr.bf16.mxu0 0
        %5080 = vmatpush1.bf16.xpose.msra.mxu0 0
        %5081 = vmatprep.subr.bf16.mxu0 0
        %5082 = vmatpush1.bf16.xpose.msra.mxu0 0
        %5083 = vmatprep.mubr.bf16.mxu0 0
        %5084 = vmatmul.mubr.bf16.gmra.mrb[0].mxu0 %v5046
        %v5085 = vpop.f32.mrb[0].mxu0
        %v5086 = vadd.f32 0.0, %v5085
        %v5087 = vpop.f32.mrb[0].mxu0
        %v5088 = vpop.f32.mrb[0].mxu0
        %v5089 = vpop.f32.mrb[0].mxu0
        %5090 = vdwg.mxu0
        %v5091 = vsel %vm1541, %v5040, -inf
        %5092 = vmax.xlane.f32.xlu0 %v5091
        %v5093 = vpop.xlane.xlu0 %5092
        %v5094 = vsel %vm1541, %v5086, -inf
        %5095 = vmax.xlane.f32.xlu0 %v5094
        %v5096 = vpop.xlane.xlu0 %5095
        %v5097 = vsub.f32 %v5040, %v5093
        %v5098 = vsub.f32 %v5086, %v5096
        %v5099 = vmul.f32 %v5097, 1.442695
        %v5100 = vpow.pop %v5099
        %v5101 = vmul.f32 %v5098, 1.442695
        %v5102 = vpow.pop %v5101
        %v5103 = vsel %vm1541, %v5100, 0.0
        %5104 = vadd.xlane.f32.xlu0 %v5103
        %v5105 = vpop.xlane.xlu0 %5104
        %v5106 = vsel %vm1541, %v5102, 0.0
        %5107 = vadd.xlane.f32.xlu0 %v5106
        %v5108 = vpop.xlane.xlu0 %5107
        %v5109 = vrcp.pop %v5105
        %v5110 = vrcp.pop %v5108
        %v5111 = vmul.f32 %v5100, %v5109
        %v5112 = vmul.f32 %v5102, %v5110
        %5113 = vst.msk [vmem:[%s1126] sm:$0xff] %vm1541, %v5111
        %5114 = vst.msk [vmem:[%s1126 + $0x10] sm:$0xff] %vm1541, %v5112
        %v5115 = vadd.f32 %v5111, 0.0
        %v5116 = vadd.f32 %v5112, 0.0
        %v5117 = vpack.c.bf16 %v5111, %v5111
        %v5118 = vpack.c.bf16 %v5112, %v5112
        %v5119 = vpack.c.bf16 %v4989, %v4989
        %v5120 = vpack.c.bf16 %v4992, %v4992
        %v5122 = vsel %vm1541, %v5117, 0
        %v5125 = vsel %vm1571, %v5119, 0
        %5127 = vmatprep.subr.bf16.mxu0 0
        %5128 = vmatpush1.bf16.msra.mxu0 %v5125
        %5129 = vmatprep.subr.bf16.mxu0 0
        %5130 = vmatpush1.bf16.msra.mxu0 0
        %5131 = vmatprep.subr.bf16.mxu0 0
        %5132 = vmatpush1.bf16.msra.mxu0 0
        %5133 = vmatprep.subr.bf16.mxu0 0
        %5134 = vmatpush1.bf16.msra.mxu0 0
        %5135 = vmatprep.subr.bf16.mxu0 0
        %5136 = vmatpush1.bf16.msra.mxu0 0
        %5137 = vmatprep.subr.bf16.mxu0 0
        %5138 = vmatpush1.bf16.msra.mxu0 0
        %5139 = vmatprep.subr.bf16.mxu0 0
        %5140 = vmatpush1.bf16.msra.mxu0 0
        %5141 = vmatprep.subr.bf16.mxu0 0
        %5142 = vmatpush1.bf16.msra.mxu0 0
        %5143 = vmatprep.subr.bf16.mxu0 0
        %5144 = vmatpush1.bf16.msra.mxu0 0
        %5145 = vmatprep.subr.bf16.mxu0 0
        %5146 = vmatpush1.bf16.msra.mxu0 0
        %5147 = vmatprep.subr.bf16.mxu0 0
        %5148 = vmatpush1.bf16.msra.mxu0 0
        %5149 = vmatprep.subr.bf16.mxu0 0
        %5150 = vmatpush1.bf16.msra.mxu0 0
        %5151 = vmatprep.subr.bf16.mxu0 0
        %5152 = vmatpush1.bf16.msra.mxu0 0
        %5153 = vmatprep.subr.bf16.mxu0 0
        %5154 = vmatpush1.bf16.msra.mxu0 0
        %5155 = vmatprep.subr.bf16.mxu0 0
        %5156 = vmatpush1.bf16.msra.mxu0 0
        %5157 = vmatprep.subr.bf16.mxu0 0
        %5158 = vmatpush1.bf16.msra.mxu0 0
        %5159 = vmatprep.mubr.bf16.mxu0 0
        %5160 = vmatmul.mubr.bf16.gmra.mrb[0].mxu0 %v5122
        %v5161 = vpop.f32.mrb[0].mxu0
        %v5162 = vadd.f32 0.0, %v5161
        %v5163 = vpop.f32.mrb[0].mxu0
        %v5164 = vpop.f32.mrb[0].mxu0
        %v5165 = vpop.f32.mrb[0].mxu0
        %5166 = vdwg.mxu0
        %v5168 = vsel %vm1541, %v5118, 0
        %v5171 = vsel %vm1571, %v5120, 0
        %5173 = vmatprep.subr.bf16.mxu0 0
        %5174 = vmatpush1.bf16.msra.mxu0 %v5171
        %5175 = vmatprep.subr.bf16.mxu0 0
        %5176 = vmatpush1.bf16.msra.mxu0 0
        %5177 = vmatprep.subr.bf16.mxu0 0
        %5178 = vmatpush1.bf16.msra.mxu0 0
        %5179 = vmatprep.subr.bf16.mxu0 0
        %5180 = vmatpush1.bf16.msra.mxu0 0
        %5181 = vmatprep.subr.bf16.mxu0 0
        %5182 = vmatpush1.bf16.msra.mxu0 0
        %5183 = vmatprep.subr.bf16.mxu0 0
        %5184 = vmatpush1.bf16.msra.mxu0 0
        %5185 = vmatprep.subr.bf16.mxu0 0
        %5186 = vmatpush1.bf16.msra.mxu0 0
        %5187 = vmatprep.subr.bf16.mxu0 0
        %5188 = vmatpush1.bf16.msra.mxu0 0
        %5189 = vmatprep.subr.bf16.mxu0 0
        %5190 = vmatpush1.bf16.msra.mxu0 0
        %5191 = vmatprep.subr.bf16.mxu0 0
        %5192 = vmatpush1.bf16.msra.mxu0 0
        %5193 = vmatprep.subr.bf16.mxu0 0
        %5194 = vmatpush1.bf16.msra.mxu0 0
        %5195 = vmatprep.subr.bf16.mxu0 0
        %5196 = vmatpush1.bf16.msra.mxu0 0
        %5197 = vmatprep.subr.bf16.mxu0 0
        %5198 = vmatpush1.bf16.msra.mxu0 0
        %5199 = vmatprep.subr.bf16.mxu0 0
        %5200 = vmatpush1.bf16.msra.mxu0 0
        %5201 = vmatprep.subr.bf16.mxu0 0
        %5202 = vmatpush1.bf16.msra.mxu0 0
        %5203 = vmatprep.subr.bf16.mxu0 0
        %5204 = vmatpush1.bf16.msra.mxu0 0
        %5205 = vmatprep.mubr.bf16.mxu0 0
        %5206 = vmatmul.mubr.bf16.gmra.mrb[0].mxu0 %v5168
        %v5207 = vpop.f32.mrb[0].mxu0
        %v5208 = vadd.f32 0.0, %v5207
        %v5209 = vpop.f32.mrb[0].mxu0
        %v5210 = vpop.f32.mrb[0].mxu0
        %v5211 = vpop.f32.mrb[0].mxu0
        %5212 = vdwg.mxu0
        %s5213 = scalar_lea.vmem %s29, 16
        %v5214 = vld [vmem:[%s5213] sm:$0xf]
        %v5215 = vld [vmem:[%s5213 + $0x4] sm:$0xf]
        %v5216 = vpack.c.bf16 %v5208, %v5162
        %s5217 = scalar_lea.vmem %s33, 48
        %v5218 = vld [vmem:[%s5217] sm:$0xf]
        %v5219 = vld [vmem:[%s5217 + $0x4] sm:$0xf]
        %v5220 = vld [vmem:[%s5217 + $0x8] sm:$0xf]
        %v5221 = vld [vmem:[%s5217 + $0xc] sm:$0xf]
        %v5226 = vunpack.c.l.b16 %v5218
        %v5227 = vunpack.c.l.b16 %v5219
        %v5228 = vunpack.c.l.b16 %v5220
        %v5229 = vunpack.c.l.b16 %v5221
        %v5230 = vpack.c.b16 %v5227, %v5226
        %v5231 = vpack.c.b16 %v5229, %v5228
        %5234 = vmatprep.subr.bf16.mxu0 0
        %5235 = vmatpush1.bf16.msra.mxu0 %v5230
        %5236 = vmatprep.subr.bf16.mxu0 0
        %5237 = vmatpush1.bf16.msra.mxu0 %v5231
        %5238 = vmatprep.subr.bf16.mxu0 0
        %5239 = vmatpush1.bf16.msra.mxu0 0
        %5240 = vmatprep.subr.bf16.mxu0 0
        %5241 = vmatpush1.bf16.msra.mxu0 0
        %5242 = vmatprep.subr.bf16.mxu0 0
        %5243 = vmatpush1.bf16.msra.mxu0 0
        %5244 = vmatprep.subr.bf16.mxu0 0
        %5245 = vmatpush1.bf16.msra.mxu0 0
        %5246 = vmatprep.subr.bf16.mxu0 0
        %5247 = vmatpush1.bf16.msra.mxu0 0
        %5248 = vmatprep.subr.bf16.mxu0 0
        %5249 = vmatpush1.bf16.msra.mxu0 0
        %5250 = vmatprep.subr.bf16.mxu0 0
        %5251 = vmatpush1.bf16.msra.mxu0 0
        %5252 = vmatprep.subr.bf16.mxu0 0
        %5253 = vmatpush1.bf16.msra.mxu0 0
        %5254 = vmatprep.subr.bf16.mxu0 0
        %5255 = vmatpush1.bf16.msra.mxu0 0
        %5256 = vmatprep.subr.bf16.mxu0 0
        %5257 = vmatpush1.bf16.msra.mxu0 0
        %5258 = vmatprep.subr.bf16.mxu0 0
        %5259 = vmatpush1.bf16.msra.mxu0 0
        %5260 = vmatprep.subr.bf16.mxu0 0
        %5261 = vmatpush1.bf16.msra.mxu0 0
        %5262 = vmatprep.subr.bf16.mxu0 0
        %5263 = vmatpush1.bf16.msra.mxu0 0
        %5264 = vmatprep.subr.bf16.mxu0 0
        %5265 = vmatpush1.bf16.msra.mxu0 0
        %5266 = vmatprep.mubr.bf16.mxu0 0
        %5267 = vmatmul.mubr.bf16.gmra.mrb[0].mxu0 %v4836
        %v5268 = vpop.f32.mrb[0].mxu0
        %v5269 = vadd.f32 0.0, %v5268
        %v5270 = vpop.f32.mrb[0].mxu0
        %v5271 = vpop.f32.mrb[0].mxu0
        %v5272 = vadd.f32 0.0, %v5271
        %v5273 = vpop.f32.mrb[0].mxu0
        %5274 = vdwg.mxu0
        %s5275 = scalar_lea.vmem %s31, 48
        %v5276 = vld [vmem:[%s5275] sm:$0xf]
        %v5277 = vld [vmem:[%s5275 + $0x4] sm:$0xf]
        %v5278 = vld [vmem:[%s5275 + $0x8] sm:$0xf]
        %v5279 = vld [vmem:[%s5275 + $0xc] sm:$0xf]
        %v5284 = vunpack.c.l.b16 %v5276
        %v5285 = vunpack.c.l.b16 %v5277
        %v5286 = vunpack.c.l.b16 %v5278
        %v5287 = vunpack.c.l.b16 %v5279
        %v5288 = vpack.c.b16 %v5285, %v5284
        %v5289 = vpack.c.b16 %v5287, %v5286
        %5292 = vmatprep.subr.bf16.mxu0 0
        %5293 = vmatpush1.bf16.msra.mxu0 %v5288
        %5294 = vmatprep.subr.bf16.mxu0 0
        %5295 = vmatpush1.bf16.msra.mxu0 %v5289
        %5296 = vmatprep.subr.bf16.mxu0 0
        %5297 = vmatpush1.bf16.msra.mxu0 0
        %5298 = vmatprep.subr.bf16.mxu0 0
        %5299 = vmatpush1.bf16.msra.mxu0 0
        %5300 = vmatprep.subr.bf16.mxu0 0
        %5301 = vmatpush1.bf16.msra.mxu0 0
        %5302 = vmatprep.subr.bf16.mxu0 0
        %5303 = vmatpush1.bf16.msra.mxu0 0
        %5304 = vmatprep.subr.bf16.mxu0 0
        %5305 = vmatpush1.bf16.msra.mxu0 0
        %5306 = vmatprep.subr.bf16.mxu0 0
        %5307 = vmatpush1.bf16.msra.mxu0 0
        %5308 = vmatprep.subr.bf16.mxu0 0
        %5309 = vmatpush1.bf16.msra.mxu0 0
        %5310 = vmatprep.subr.bf16.mxu0 0
        %5311 = vmatpush1.bf16.msra.mxu0 0
        %5312 = vmatprep.subr.bf16.mxu0 0
        %5313 = vmatpush1.bf16.msra.mxu0 0
        %5314 = vmatprep.subr.bf16.mxu0 0
        %5315 = vmatpush1.bf16.msra.mxu0 0
        %5316 = vmatprep.subr.bf16.mxu0 0
        %5317 = vmatpush1.bf16.msra.mxu0 0
        %5318 = vmatprep.subr.bf16.mxu0 0
        %5319 = vmatpush1.bf16.msra.mxu0 0
        %5320 = vmatprep.subr.bf16.mxu0 0
        %5321 = vmatpush1.bf16.msra.mxu0 0
        %5322 = vmatprep.subr.bf16.mxu0 0
        %5323 = vmatpush1.bf16.msra.mxu0 0
        %5324 = vmatprep.mubr.bf16.mxu0 0
        %5325 = vmatmul.mubr.bf16.gmra.mrb[0].mxu0 %v4836
        %v5326 = vpop.f32.mrb[0].mxu0
        %v5327 = vadd.f32 0.0, %v5326
        %v5328 = vpop.f32.mrb[0].mxu0
        %v5329 = vpop.f32.mrb[0].mxu0
        %v5330 = vadd.f32 0.0, %v5329
        %v5331 = vpop.f32.mrb[0].mxu0
        %5332 = vdwg.mxu0
        %s5333 = scalar_lea.vmem %s35, 48
        %v5334 = vld [vmem:[%s5333] sm:$0xf]
        %v5335 = vld [vmem:[%s5333 + $0x4] sm:$0xf]
        %v5336 = vld [vmem:[%s5333 + $0x8] sm:$0xf]
        %v5337 = vld [vmem:[%s5333 + $0xc] sm:$0xf]
        %v5342 = vunpack.c.l.b16 %v5334
        %v5343 = vunpack.c.l.b16 %v5335
        %v5344 = vunpack.c.l.b16 %v5336
        %v5345 = vunpack.c.l.b16 %v5337
        %v5346 = vpack.c.b16 %v5343, %v5342
        %v5347 = vpack.c.b16 %v5345, %v5344
        %5350 = vmatprep.subr.bf16.mxu0 0
        %5351 = vmatpush1.bf16.msra.mxu0 %v5346
        %5352 = vmatprep.subr.bf16.mxu0 0
        %5353 = vmatpush1.bf16.msra.mxu0 %v5347
        %5354 = vmatprep.subr.bf16.mxu0 0
        %5355 = vmatpush1.bf16.msra.mxu0 0
        %5356 = vmatprep.subr.bf16.mxu0 0
        %5357 = vmatpush1.bf16.msra.mxu0 0
        %5358 = vmatprep.subr.bf16.mxu0 0
        %5359 = vmatpush1.bf16.msra.mxu0 0
        %5360 = vmatprep.subr.bf16.mxu0 0
        %5361 = vmatpush1.bf16.msra.mxu0 0
        %5362 = vmatprep.subr.bf16.mxu0 0
        %5363 = vmatpush1.bf16.msra.mxu0 0
        %5364 = vmatprep.subr.bf16.mxu0 0
        %5365 = vmatpush1.bf16.msra.mxu0 0
        %5366 = vmatprep.subr.bf16.mxu0 0
        %5367 = vmatpush1.bf16.msra.mxu0 0
        %5368 = vmatprep.subr.bf16.mxu0 0
        %5369 = vmatpush1.bf16.msra.mxu0 0
        %5370 = vmatprep.subr.bf16.mxu0 0
        %5371 = vmatpush1.bf16.msra.mxu0 0
        %5372 = vmatprep.subr.bf16.mxu0 0
        %5373 = vmatpush1.bf16.msra.mxu0 0
        %5374 = vmatprep.subr.bf16.mxu0 0
        %5375 = vmatpush1.bf16.msra.mxu0 0
        %5376 = vmatprep.subr.bf16.mxu0 0
        %5377 = vmatpush1.bf16.msra.mxu0 0
        %5378 = vmatprep.subr.bf16.mxu0 0
        %5379 = vmatpush1.bf16.msra.mxu0 0
        %5380 = vmatprep.subr.bf16.mxu0 0
        %5381 = vmatpush1.bf16.msra.mxu0 0
        %5382 = vmatprep.mubr.bf16.mxu0 0
        %5383 = vmatmul.mubr.bf16.gmra.mrb[0].mxu0 %v4836
        %v5384 = vpop.f32.mrb[0].mxu0
        %v5385 = vadd.f32 0.0, %v5384
        %v5386 = vpop.f32.mrb[0].mxu0
        %v5387 = vpop.f32.mrb[0].mxu0
        %v5388 = vadd.f32 0.0, %v5387
        %v5389 = vpop.f32.mrb[0].mxu0
        %5390 = vdwg.mxu0
        %v5391 = vpack.c.bf16 %v5269, %v5269
        %v5392 = vpack.c.bf16 %v5272, %v5272
        %v5393 = vpack.c.bf16 %v5327, %v5327
        %v5394 = vpack.c.bf16 %v5330, %v5330
        %v5396 = vsel %vm1448, %v5391, 0
        %v5399 = vsel %vm1448, %v5393, 0
        %5401 = vmatprep.subr.bf16.mxu0 0
        %5402 = vmatpush1.bf16.xpose.msra.mxu0 %v5399
        %5403 = vmatprep.subr.bf16.mxu0 0
        %5404 = vmatpush1.bf16.xpose.msra.mxu0 0
        %5405 = vmatprep.subr.bf16.mxu0 0
        %5406 = vmatpush1.bf16.xpose.msra.mxu0 0
        %5407 = vmatprep.subr.bf16.mxu0 0
        %5408 = vmatpush1.bf16.xpose.msra.mxu0 0
        %5409 = vmatprep.subr.bf16.mxu0 0
        %5410 = vmatpush1.bf16.xpose.msra.mxu0 0
        %5411 = vmatprep.subr.bf16.mxu0 0
        %5412 = vmatpush1.bf16.xpose.msra.mxu0 0
        %5413 = vmatprep.subr.bf16.mxu0 0
        %5414 = vmatpush1.bf16.xpose.msra.mxu0 0
        %5415 = vmatprep.subr.bf16.mxu0 0
        %5416 = vmatpush1.bf16.xpose.msra.mxu0 0
        %5417 = vmatprep.subr.bf16.mxu0 0
        %5418 = vmatpush1.bf16.xpose.msra.mxu0 0
        %5419 = vmatprep.subr.bf16.mxu0 0
        %5420 = vmatpush1.bf16.xpose.msra.mxu0 0
        %5421 = vmatprep.subr.bf16.mxu0 0
        %5422 = vmatpush1.bf16.xpose.msra.mxu0 0
        %5423 = vmatprep.subr.bf16.mxu0 0
        %5424 = vmatpush1.bf16.xpose.msra.mxu0 0
        %5425 = vmatprep.subr.bf16.mxu0 0
        %5426 = vmatpush1.bf16.xpose.msra.mxu0 0
        %5427 = vmatprep.subr.bf16.mxu0 0
        %5428 = vmatpush1.bf16.xpose.msra.mxu0 0
        %5429 = vmatprep.subr.bf16.mxu0 0
        %5430 = vmatpush1.bf16.xpose.msra.mxu0 0
        %5431 = vmatprep.subr.bf16.mxu0 0
        %5432 = vmatpush1.bf16.xpose.msra.mxu0 0
        %5433 = vmatprep.mubr.bf16.mxu0 0
        %5434 = vmatmul.mubr.bf16.gmra.mrb[0].mxu0 %v5396
        %v5435 = vpop.f32.mrb[0].mxu0
        %v5436 = vadd.f32 0.0, %v5435
        %v5437 = vpop.f32.mrb[0].mxu0
        %v5438 = vpop.f32.mrb[0].mxu0
        %v5439 = vpop.f32.mrb[0].mxu0
        %5440 = vdwg.mxu0
        %v5442 = vsel %vm1448, %v5392, 0
        %v5445 = vsel %vm1448, %v5394, 0
        %5447 = vmatprep.subr.bf16.mxu0 0
        %5448 = vmatpush1.bf16.xpose.msra.mxu0 %v5445
        %5449 = vmatprep.subr.bf16.mxu0 0
        %5450 = vmatpush1.bf16.xpose.msra.mxu0 0
        %5451 = vmatprep.subr.bf16.mxu0 0
        %5452 = vmatpush1.bf16.xpose.msra.mxu0 0
        %5453 = vmatprep.subr.bf16.mxu0 0
        %5454 = vmatpush1.bf16.xpose.msra.mxu0 0
        %5455 = vmatprep.subr.bf16.mxu0 0
        %5456 = vmatpush1.bf16.xpose.msra.mxu0 0
        %5457 = vmatprep.subr.bf16.mxu0 0
        %5458 = vmatpush1.bf16.xpose.msra.mxu0 0
        %5459 = vmatprep.subr.bf16.mxu0 0
        %5460 = vmatpush1.bf16.xpose.msra.mxu0 0
        %5461 = vmatprep.subr.bf16.mxu0 0
        %5462 = vmatpush1.bf16.xpose.msra.mxu0 0
        %5463 = vmatprep.subr.bf16.mxu0 0
        %5464 = vmatpush1.bf16.xpose.msra.mxu0 0
        %5465 = vmatprep.subr.bf16.mxu0 0
        %5466 = vmatpush1.bf16.xpose.msra.mxu0 0
        %5467 = vmatprep.subr.bf16.mxu0 0
        %5468 = vmatpush1.bf16.xpose.msra.mxu0 0
        %5469 = vmatprep.subr.bf16.mxu0 0
        %5470 = vmatpush1.bf16.xpose.msra.mxu0 0
        %5471 = vmatprep.subr.bf16.mxu0 0
        %5472 = vmatpush1.bf16.xpose.msra.mxu0 0
        %5473 = vmatprep.subr.bf16.mxu0 0
        %5474 = vmatpush1.bf16.xpose.msra.mxu0 0
        %5475 = vmatprep.subr.bf16.mxu0 0
        %5476 = vmatpush1.bf16.xpose.msra.mxu0 0
        %5477 = vmatprep.subr.bf16.mxu0 0
        %5478 = vmatpush1.bf16.xpose.msra.mxu0 0
        %5479 = vmatprep.mubr.bf16.mxu0 0
        %5480 = vmatmul.mubr.bf16.gmra.mrb[0].mxu0 %v5442
        %v5481 = vpop.f32.mrb[0].mxu0
        %v5482 = vadd.f32 0.0, %v5481
        %v5483 = vpop.f32.mrb[0].mxu0
        %v5484 = vpop.f32.mrb[0].mxu0
        %v5485 = vpop.f32.mrb[0].mxu0
        %5486 = vdwg.mxu0
        %v5487 = vsel %vm1541, %v5436, -inf
        %5488 = vmax.xlane.f32.xlu0 %v5487
        %v5489 = vpop.xlane.xlu0 %5488
        %v5490 = vsel %vm1541, %v5482, -inf
        %5491 = vmax.xlane.f32.xlu0 %v5490
        %v5492 = vpop.xlane.xlu0 %5491
        %v5493 = vsub.f32 %v5436, %v5489
        %v5494 = vsub.f32 %v5482, %v5492
        %v5495 = vmul.f32 %v5493, 1.442695
        %v5496 = vpow.pop %v5495
        %v5497 = vmul.f32 %v5494, 1.442695
        %v5498 = vpow.pop %v5497
        %v5499 = vsel %vm1541, %v5496, 0.0
        %5500 = vadd.xlane.f32.xlu0 %v5499
        %v5501 = vpop.xlane.xlu0 %5500
        %v5502 = vsel %vm1541, %v5498, 0.0
        %5503 = vadd.xlane.f32.xlu0 %v5502
        %v5504 = vpop.xlane.xlu0 %5503
        %v5505 = vrcp.pop %v5501
        %v5506 = vrcp.pop %v5504
        %v5507 = vmul.f32 %v5496, %v5505
        %v5508 = vmul.f32 %v5498, %v5506
        %s5509 = scalar_lea.vmem %s1126, 8 [#allocation4]
        %5510 = vst.msk [vmem:[%s5509] sm:$0xff] %vm1541, %v5507
        %5511 = vst.msk [vmem:[%s5509 + $0x10] sm:$0xff] %vm1541, %v5508
        %v5512 = vadd.f32 %v5115, %v5507
        %v5513 = vadd.f32 %v5116, %v5508
        %v5514 = vpack.c.bf16 %v5507, %v5507
        %v5515 = vpack.c.bf16 %v5508, %v5508
        %v5516 = vpack.c.bf16 %v5385, %v5385
        %v5517 = vpack.c.bf16 %v5388, %v5388
        %v5519 = vsel %vm1541, %v5514, 0
        %v5522 = vsel %vm1571, %v5516, 0
        %5524 = vmatprep.subr.bf16.mxu0 0
        %5525 = vmatpush1.bf16.msra.mxu0 %v5522
        %5526 = vmatprep.subr.bf16.mxu0 0
        %5527 = vmatpush1.bf16.msra.mxu0 0
        %5528 = vmatprep.subr.bf16.mxu0 0
        %5529 = vmatpush1.bf16.msra.mxu0 0
        %5530 = vmatprep.subr.bf16.mxu0 0
        %5531 = vmatpush1.bf16.msra.mxu0 0
        %5532 = vmatprep.subr.bf16.mxu0 0
        %5533 = vmatpush1.bf16.msra.mxu0 0
        %5534 = vmatprep.subr.bf16.mxu0 0
        %5535 = vmatpush1.bf16.msra.mxu0 0
        %5536 = vmatprep.subr.bf16.mxu0 0
        %5537 = vmatpush1.bf16.msra.mxu0 0
        %5538 = vmatprep.subr.bf16.mxu0 0
        %5539 = vmatpush1.bf16.msra.mxu0 0
        %5540 = vmatprep.subr.bf16.mxu0 0
        %5541 = vmatpush1.bf16.msra.mxu0 0
        %5542 = vmatprep.subr.bf16.mxu0 0
        %5543 = vmatpush1.bf16.msra.mxu0 0
        %5544 = vmatprep.subr.bf16.mxu0 0
        %5545 = vmatpush1.bf16.msra.mxu0 0
        %5546 = vmatprep.subr.bf16.mxu0 0
        %5547 = vmatpush1.bf16.msra.mxu0 0
        %5548 = vmatprep.subr.bf16.mxu0 0
        %5549 = vmatpush1.bf16.msra.mxu0 0
        %5550 = vmatprep.subr.bf16.mxu0 0
        %5551 = vmatpush1.bf16.msra.mxu0 0
        %5552 = vmatprep.subr.bf16.mxu0 0
        %5553 = vmatpush1.bf16.msra.mxu0 0
        %5554 = vmatprep.subr.bf16.mxu0 0
        %5555 = vmatpush1.bf16.msra.mxu0 0
        %5556 = vmatprep.mubr.bf16.mxu0 0
        %5557 = vmatmul.mubr.bf16.gmra.mrb[0].mxu0 %v5519
        %v5558 = vpop.f32.mrb[0].mxu0
        %v5559 = vadd.f32 0.0, %v5558
        %v5560 = vpop.f32.mrb[0].mxu0
        %v5561 = vpop.f32.mrb[0].mxu0
        %v5562 = vpop.f32.mrb[0].mxu0
        %5563 = vdwg.mxu0
        %v5565 = vsel %vm1541, %v5515, 0
        %v5568 = vsel %vm1571, %v5517, 0
        %5570 = vmatprep.subr.bf16.mxu0 0
        %5571 = vmatpush1.bf16.msra.mxu0 %v5568
        %5572 = vmatprep.subr.bf16.mxu0 0
        %5573 = vmatpush1.bf16.msra.mxu0 0
        %5574 = vmatprep.subr.bf16.mxu0 0
        %5575 = vmatpush1.bf16.msra.mxu0 0
        %5576 = vmatprep.subr.bf16.mxu0 0
        %5577 = vmatpush1.bf16.msra.mxu0 0
        %5578 = vmatprep.subr.bf16.mxu0 0
        %5579 = vmatpush1.bf16.msra.mxu0 0
        %5580 = vmatprep.subr.bf16.mxu0 0
        %5581 = vmatpush1.bf16.msra.mxu0 0
        %5582 = vmatprep.subr.bf16.mxu0 0
        %5583 = vmatpush1.bf16.msra.mxu0 0
        %5584 = vmatprep.subr.bf16.mxu0 0
        %5585 = vmatpush1.bf16.msra.mxu0 0
        %5586 = vmatprep.subr.bf16.mxu0 0
        %5587 = vmatpush1.bf16.msra.mxu0 0
        %5588 = vmatprep.subr.bf16.mxu0 0
        %5589 = vmatpush1.bf16.msra.mxu0 0
        %5590 = vmatprep.subr.bf16.mxu0 0
        %5591 = vmatpush1.bf16.msra.mxu0 0
        %5592 = vmatprep.subr.bf16.mxu0 0
        %5593 = vmatpush1.bf16.msra.mxu0 0
        %5594 = vmatprep.subr.bf16.mxu0 0
        %5595 = vmatpush1.bf16.msra.mxu0 0
        %5596 = vmatprep.subr.bf16.mxu0 0
        %5597 = vmatpush1.bf16.msra.mxu0 0
        %5598 = vmatprep.subr.bf16.mxu0 0
        %5599 = vmatpush1.bf16.msra.mxu0 0
        %5600 = vmatprep.subr.bf16.mxu0 0
        %5601 = vmatpush1.bf16.msra.mxu0 0
        %5602 = vmatprep.mubr.bf16.mxu0 0
        %5603 = vmatmul.mubr.bf16.gmra.mrb[0].mxu0 %v5565
        %v5604 = vpop.f32.mrb[0].mxu0
        %v5605 = vadd.f32 0.0, %v5604
        %v5606 = vpop.f32.mrb[0].mxu0
        %v5607 = vpop.f32.mrb[0].mxu0
        %v5608 = vpop.f32.mrb[0].mxu0
        %5609 = vdwg.mxu0
        %s5610 = scalar_lea.vmem %s29, 24
        %v5611 = vld [vmem:[%s5610] sm:$0xf]
        %v5612 = vld [vmem:[%s5610 + $0x4] sm:$0xf]
        %v5613 = vpack.c.bf16 %v5605, %v5559
        %v5616 = vunpack.c.l.b16 %v5611
        %v5617 = vunpack.c.l.b16 %v5612
        %v5618 = vpack.c.b16 %v5617, %v5616
        %v5621 = vsel %vm1448, %v5613, 0
        %5623 = vmatprep.subr.bf16.mxu0 0
        %5624 = vmatpush1.bf16.msra.mxu0 %v5618
        %5625 = vmatprep.subr.bf16.mxu0 0
        %5626 = vmatpush1.bf16.msra.mxu0 0
        %5627 = vmatprep.subr.bf16.mxu0 0
        %5628 = vmatpush1.bf16.msra.mxu0 0
        %5629 = vmatprep.subr.bf16.mxu0 0
        %5630 = vmatpush1.bf16.msra.mxu0 0
        %5631 = vmatprep.subr.bf16.mxu0 0
        %5632 = vmatpush1.bf16.msra.mxu0 0
        %5633 = vmatprep.subr.bf16.mxu0 0
        %5634 = vmatpush1.bf16.msra.mxu0 0
        %5635 = vmatprep.subr.bf16.mxu0 0
        %5636 = vmatpush1.bf16.msra.mxu0 0
        %5637 = vmatprep.subr.bf16.mxu0 0
        %5638 = vmatpush1.bf16.msra.mxu0 0
        %5639 = vmatprep.subr.bf16.mxu0 0
        %5640 = vmatpush1.bf16.msra.mxu0 0
        %5641 = vmatprep.subr.bf16.mxu0 0
        %5642 = vmatpush1.bf16.msra.mxu0 0
        %5643 = vmatprep.subr.bf16.mxu0 0
        %5644 = vmatpush1.bf16.msra.mxu0 0
        %5645 = vmatprep.subr.bf16.mxu0 0
        %5646 = vmatpush1.bf16.msra.mxu0 0
        %5647 = vmatprep.subr.bf16.mxu0 0
        %5648 = vmatpush1.bf16.msra.mxu0 0
        %5649 = vmatprep.subr.bf16.mxu0 0
        %5650 = vmatpush1.bf16.msra.mxu0 0
        %5651 = vmatprep.subr.bf16.mxu0 0
        %5652 = vmatpush1.bf16.msra.mxu0 0
        %5653 = vmatprep.subr.bf16.mxu0 0
        %5654 = vmatpush1.bf16.msra.mxu0 0
        %5655 = vmatprep.mubr.bf16.mxu0 0
        %5656 = vmatmul.mubr.bf16.gmra.mrb[0].mxu0 %v5621
        %v5657 = vpop.f32.mrb[0].mxu0
        %v5658 = vadd.f32 0.0, %v5657
        %v5659 = vpop.f32.mrb[0].mxu0
        %v5660 = vpop.f32.mrb[0].mxu0
        %v5661 = vadd.f32 0.0, %v5660
        %v5662 = vpop.f32.mrb[0].mxu0
        %5663 = vdwg.mxu0
        %v5666 = vunpack.c.l.b16 %v5214
        %v5667 = vunpack.c.l.b16 %v5215
        %v5668 = vpack.c.b16 %v5667, %v5666
        %v5671 = vsel %vm1448, %v5216, 0
        %5673 = vmatprep.subr.bf16.mxu0 0
        %5674 = vmatpush1.bf16.msra.mxu0 %v5668
        %5675 = vmatprep.subr.bf16.mxu0 0
        %5676 = vmatpush1.bf16.msra.mxu0 0
        %5677 = vmatprep.subr.bf16.mxu0 0
        %5678 = vmatpush1.bf16.msra.mxu0 0
        %5679 = vmatprep.subr.bf16.mxu0 0
        %5680 = vmatpush1.bf16.msra.mxu0 0
        %5681 = vmatprep.subr.bf16.mxu0 0
        %5682 = vmatpush1.bf16.msra.mxu0 0
        %5683 = vmatprep.subr.bf16.mxu0 0
        %5684 = vmatpush1.bf16.msra.mxu0 0
        %5685 = vmatprep.subr.bf16.mxu0 0
        %5686 = vmatpush1.bf16.msra.mxu0 0
        %5687 = vmatprep.subr.bf16.mxu0 0
        %5688 = vmatpush1.bf16.msra.mxu0 0
        %5689 = vmatprep.subr.bf16.mxu0 0
        %5690 = vmatpush1.bf16.msra.mxu0 0
        %5691 = vmatprep.subr.bf16.mxu0 0
        %5692 = vmatpush1.bf16.msra.mxu0 0
        %5693 = vmatprep.subr.bf16.mxu0 0
        %5694 = vmatpush1.bf16.msra.mxu0 0
        %5695 = vmatprep.subr.bf16.mxu0 0
        %5696 = vmatpush1.bf16.msra.mxu0 0
        %5697 = vmatprep.subr.bf16.mxu0 0
        %5698 = vmatpush1.bf16.msra.mxu0 0
        %5699 = vmatprep.subr.bf16.mxu0 0
        %5700 = vmatpush1.bf16.msra.mxu0 0
        %5701 = vmatprep.subr.bf16.mxu0 0
        %5702 = vmatpush1.bf16.msra.mxu0 0
        %5703 = vmatprep.subr.bf16.mxu0 0
        %5704 = vmatpush1.bf16.msra.mxu0 0
        %5705 = vmatprep.mubr.bf16.mxu0 0
        %5706 = vmatmul.mubr.bf16.gmra.mrb[0].mxu0 %v5671
        %v5707 = vpop.f32.mrb[0].mxu0
        %v5708 = vadd.f32 %v5658, %v5707
        %v5709 = vpop.f32.mrb[0].mxu0
        %v5710 = vpop.f32.mrb[0].mxu0
        %v5711 = vadd.f32 %v5661, %v5710
        %v5712 = vpop.f32.mrb[0].mxu0
        %5713 = vdwg.mxu0
        %v5714 = vadd.f32 %v5708, %v4813
        %v5715 = vadd.f32 %v5711, %v4814
        %v5716 = vsel %vm1285, %v5714, 0.0
        %5717 = vadd.xlane.f32.xlu0 %v5716
        %v5718 = vpop.xlane.xlu0 %5717
        %v5719 = vsel %vm1285, %v5715, 0.0
        %5720 = vadd.xlane.f32.xlu0 %v5719
        %v5721 = vpop.xlane.xlu0 %5720
        %v5722 = vmul.f32 %v5718, %v2164
        %v5723 = vmul.f32 %v5721, %v2164
        %v5724 = vsub.f32 %v5714, %v5722
        %v5725 = vsub.f32 %v5715, %v5723
        %v5726 = vmul.f32 %v5724, %v5724
        %v5727 = vmul.f32 %v5725, %v5725
        %v5728 = vsel %vm1285, %v5726, 0.0
        %5729 = vadd.xlane.f32.xlu0 %v5728
        %v5730 = vpop.xlane.xlu0 %5729
        %v5731 = vsel %vm1285, %v5727, 0.0
        %5732 = vadd.xlane.f32.xlu0 %v5731
        %v5733 = vpop.xlane.xlu0 %5732
        %v5734 = vmul.f32 %v5730, %v2164
        %v5735 = vmul.f32 %v5733, %v2164
        %v5736 = vadd.f32 %v5734, 1e-06
        %v5737 = vadd.f32 %v5735, 1e-06
        %v5738 = vrsqrt.pop %v5736
        %v5739 = vrsqrt.pop %v5737
        %v5740 = vmul.f32 %v5724, %v5738
        %v5741 = vmul.f32 %v5725, %v5739
        %v5742 = vlaneseq
        %v5743 = vshrl.u32 %v5742, 7
        %v5744 = vsub.s32 0, %v5743
        %v5745 = vrot.slane %v4816, %v5744
        %v5746 = vmul.f32 %v5740, %v5745
        %v5747 = vmul.f32 %v5741, %v5745
        %v5748 = vlaneseq
        %v5749 = vshrl.u32 %v5748, 7
        %v5750 = vsub.s32 1, %v5749
        %v5751 = vrot.slane %v4816, %v5750
        %v5752 = vadd.f32 %v5746, %v5751
        %v5753 = vadd.f32 %v5747, %v5751
        %s5754 = scalar_lea.vmem %s23, 16
        %v5755 = vld [vmem:[%s5754] sm:$0xf]
        %v5756 = vld [vmem:[%s5754 + $0x4] sm:$0xf]
        %v5757 = vld [vmem:[%s5754 + $0x8] sm:$0xf]
        %v5758 = vld [vmem:[%s5754 + $0xc] sm:$0xf]
        %v5759 = vpack.c.bf16 %v5753, %v5752
        %s5760 = scalar_lea.vmem %s21, 1
        %v5761 = vld [vmem:[%s5760] sm:$0x1]
        %v5763 = vlaneseq
        %v5764 = vshrl.u32 %v5763, 7
        %v5765 = vsub.s32 0, %v5764
        %v5766 = vrot.slane %v5761, %v5765
        %v5772 = vunpack.c.l.b16 %v5755
        %v5773 = vunpack.c.l.b16 %v5756
        %v5774 = vunpack.c.l.b16 %v5757
        %v5775 = vunpack.c.l.b16 %v5758
        %v5776 = vpack.c.b16 %v5773, %v5772
        %v5777 = vpack.c.b16 %v5775, %v5774
        %v5781 = vsel %vm1285, %v5759, 0
        %5783 = vmatprep.subr.bf16.mxu0 0
        %5784 = vmatpush1.bf16.msra.mxu0 %v5776
        %5785 = vmatprep.subr.bf16.mxu0 0
        %5786 = vmatpush1.bf16.msra.mxu0 %v5777
        %5787 = vmatprep.subr.bf16.mxu0 0
        %5788 = vmatpush1.bf16.msra.mxu0 0
        %5789 = vmatprep.subr.bf16.mxu0 0
        %5790 = vmatpush1.bf16.msra.mxu0 0
        %5791 = vmatprep.subr.bf16.mxu0 0
        %5792 = vmatpush1.bf16.msra.mxu0 0
        %5793 = vmatprep.subr.bf16.mxu0 0
        %5794 = vmatpush1.bf16.msra.mxu0 0
        %5795 = vmatprep.subr.bf16.mxu0 0
        %5796 = vmatpush1.bf16.msra.mxu0 0
        %5797 = vmatprep.subr.bf16.mxu0 0
        %5798 = vmatpush1.bf16.msra.mxu0 0
        %5799 = vmatprep.subr.bf16.mxu0 0
        %5800 = vmatpush1.bf16.msra.mxu0 0
        %5801 = vmatprep.subr.bf16.mxu0 0
        %5802 = vmatpush1.bf16.msra.mxu0 0
        %5803 = vmatprep.subr.bf16.mxu0 0
        %5804 = vmatpush1.bf16.msra.mxu0 0
        %5805 = vmatprep.subr.bf16.mxu0 0
        %5806 = vmatpush1.bf16.msra.mxu0 0
        %5807 = vmatprep.subr.bf16.mxu0 0
        %5808 = vmatpush1.bf16.msra.mxu0 0
        %5809 = vmatprep.subr.bf16.mxu0 0
        %5810 = vmatpush1.bf16.msra.mxu0 0
        %5811 = vmatprep.subr.bf16.mxu0 0
        %5812 = vmatpush1.bf16.msra.mxu0 0
        %5813 = vmatprep.subr.bf16.mxu0 0
        %5814 = vmatpush1.bf16.msra.mxu0 0
        %5815 = vmatprep.mubr.bf16.mxu0 0
        %5816 = vmatmul.mubr.bf16.gmra.mrb[0].mxu0 %v5781
        %v5817 = vpop.f32.mrb[0].mxu0
        %v5818 = vadd.f32 %v5766, %v5817
        %v5819 = vpop.f32.mrb[0].mxu0
        %v5820 = vpop.f32.mrb[0].mxu0
        %v5821 = vadd.f32 %v5766, %v5820
        %v5822 = vpop.f32.mrb[0].mxu0
        %5823 = vdwg.mxu0
        %v5824 = vmax.f32 %v5818, 0.0
        %v5825 = vmax.f32 %v5821, 0.0
        %s5826 = scalar_lea.vmem %s25, 32
        %v5827 = vld [vmem:[%s5826] sm:$0xf]
        %v5828 = vld [vmem:[%s5826 + $0x4] sm:$0xf]
        %v5829 = vld [vmem:[%s5826 + $0x8] sm:$0xf]
        %v5830 = vld [vmem:[%s5826 + $0xc] sm:$0xf]
        %v5831 = vld [vmem:[%s5826 + $0x10] sm:$0xf]
        %v5832 = vld [vmem:[%s5826 + $0x14] sm:$0xf]
        %v5833 = vld [vmem:[%s5826 + $0x18] sm:$0xf]
        %v5834 = vld [vmem:[%s5826 + $0x1c] sm:$0xf]
        %v5835 = vpack.c.bf16 %v5825, %v5824
        %v5836 = vlaneseq
        %v5837 = vshrl.u32 %v5836, 7
        %v5838 = vsub.s32 4, %v5837
        %v5839 = vrot.slane %v4816, %v5838
        %v5848 = vunpack.c.l.b16 %v5827
        %v5849 = vunpack.c.l.b16 %v5828
        %v5850 = vunpack.c.l.b16 %v5829
        %v5851 = vunpack.c.l.b16 %v5830
        %v5852 = vunpack.c.l.b16 %v5831
        %v5853 = vunpack.c.l.b16 %v5832
        %v5854 = vunpack.c.l.b16 %v5833
        %v5855 = vunpack.c.l.b16 %v5834
        %v5856 = vpack.c.b16 %v5849, %v5848
        %v5857 = vpack.c.b16 %v5851, %v5850
        %v5858 = vpack.c.b16 %v5853, %v5852
        %v5859 = vpack.c.b16 %v5855, %v5854
        %v5865 = vsel %vm2304, %v5835, 0
        %5867 = vmatprep.subr.bf16.mxu0 0
        %5868 = vmatpush1.bf16.msra.mxu0 %v5856
        %5869 = vmatprep.subr.bf16.mxu0 0
        %5870 = vmatpush1.bf16.msra.mxu0 %v5857
        %5871 = vmatprep.subr.bf16.mxu0 0
        %5872 = vmatpush1.bf16.msra.mxu0 %v5858
        %5873 = vmatprep.subr.bf16.mxu0 0
        %5874 = vmatpush1.bf16.msra.mxu0 %v5859
        %5875 = vmatprep.subr.bf16.mxu0 0
        %5876 = vmatpush1.bf16.msra.mxu0 0
        %5877 = vmatprep.subr.bf16.mxu0 0
        %5878 = vmatpush1.bf16.msra.mxu0 0
        %5879 = vmatprep.subr.bf16.mxu0 0
        %5880 = vmatpush1.bf16.msra.mxu0 0
        %5881 = vmatprep.subr.bf16.mxu0 0
        %5882 = vmatpush1.bf16.msra.mxu0 0
        %5883 = vmatprep.subr.bf16.mxu0 0
        %5884 = vmatpush1.bf16.msra.mxu0 0
        %5885 = vmatprep.subr.bf16.mxu0 0
        %5886 = vmatpush1.bf16.msra.mxu0 0
        %5887 = vmatprep.subr.bf16.mxu0 0
        %5888 = vmatpush1.bf16.msra.mxu0 0
        %5889 = vmatprep.subr.bf16.mxu0 0
        %5890 = vmatpush1.bf16.msra.mxu0 0
        %5891 = vmatprep.subr.bf16.mxu0 0
        %5892 = vmatpush1.bf16.msra.mxu0 0
        %5893 = vmatprep.subr.bf16.mxu0 0
        %5894 = vmatpush1.bf16.msra.mxu0 0
        %5895 = vmatprep.subr.bf16.mxu0 0
        %5896 = vmatpush1.bf16.msra.mxu0 0
        %5897 = vmatprep.subr.bf16.mxu0 0
        %5898 = vmatpush1.bf16.msra.mxu0 0
        %5899 = vmatprep.mubr.bf16.mxu0 0
        %5900 = vmatmul.mubr.bf16.gmra.mrb[0].mxu0 %v5865
        %v5901 = vpop.f32.mrb[0].mxu0
        %v5902 = vadd.f32 %v5839, %v5901
        %v5903 = vpop.f32.mrb[0].mxu0
        %v5904 = vpop.f32.mrb[0].mxu0
        %v5905 = vadd.f32 %v5839, %v5904
        %v5906 = vpop.f32.mrb[0].mxu0
        %5907 = vdwg.mxu0
        %v5908 = vadd.f32 %v5902, %v5752
        %v5909 = vadd.f32 %v5905, %v5753
        %v5910 = vsel %vm1285, %v5908, 0.0
        %5911 = vadd.xlane.f32.xlu0 %v5910
        %v5912 = vpop.xlane.xlu0 %5911
        %v5913 = vsel %vm1285, %v5909, 0.0
        %5914 = vadd.xlane.f32.xlu0 %v5913
        %v5915 = vpop.xlane.xlu0 %5914
        %v5916 = vmul.f32 %v5912, %v2164
        %v5917 = vmul.f32 %v5915, %v2164
        %v5918 = vsub.f32 %v5908, %v5916
        %v5919 = vsub.f32 %v5909, %v5917
        %v5920 = vmul.f32 %v5918, %v5918
        %v5921 = vmul.f32 %v5919, %v5919
        %v5922 = vsel %vm1285, %v5920, 0.0
        %5923 = vadd.xlane.f32.xlu0 %v5922
        %v5924 = vpop.xlane.xlu0 %5923
        %v5925 = vsel %vm1285, %v5921, 0.0
        %5926 = vadd.xlane.f32.xlu0 %v5925
        %v5927 = vpop.xlane.xlu0 %5926
        %v5928 = vmul.f32 %v5924, %v2164
        %v5929 = vmul.f32 %v5927, %v2164
        %v5930 = vadd.f32 %v5928, 1e-06
        %v5931 = vadd.f32 %v5929, 1e-06
        %v5932 = vrsqrt.pop %v5930
        %v5933 = vrsqrt.pop %v5931
        %v5934 = vmul.f32 %v5918, %v5932
        %v5935 = vmul.f32 %v5919, %v5933
        %v5936 = vlaneseq
        %v5937 = vshrl.u32 %v5936, 7
        %v5938 = vsub.s32 2, %v5937
        %v5939 = vrot.slane %v4816, %v5938
        %v5940 = vmul.f32 %v5934, %v5939
        %v5941 = vmul.f32 %v5935, %v5939
        %v5942 = vlaneseq
        %v5943 = vshrl.u32 %v5942, 7
        %v5944 = vsub.s32 3, %v5943
        %v5945 = vrot.slane %v4816, %v5944
        %v5946 = vadd.f32 %v5940, %v5945
        %v5947 = vadd.f32 %v5941, %v5945
        %v5948 = vld [vmem:[%s53] sm:$0xf]
        %v5949 = vld [vmem:[%s53 + $0x4] sm:$0xf]
        %v5950 = vld [vmem:[%s53 + $0x8] sm:$0xf]
        %v5951 = vld [vmem:[%s53 + $0xc] sm:$0xf]
        %v5952 = vpack.c.bf16 %v5947, %v5946
        %v5953 = vld [vmem:[%s51] sm:$0x1]
        %v5955 = vlaneseq
        %v5956 = vshrl.u32 %v5955, 7
        %v5957 = vsub.s32 0, %v5956
        %v5958 = vrot.slane %v5953, %v5957
        %v5964 = vunpack.c.l.b16 %v5948
        %v5965 = vunpack.c.l.b16 %v5949
        %v5966 = vunpack.c.l.b16 %v5950
        %v5967 = vunpack.c.l.b16 %v5951
        %v5968 = vpack.c.b16 %v5965, %v5964
        %v5969 = vpack.c.b16 %v5967, %v5966
        %v5973 = vsel %vm1285, %v5952, 0
        %5975 = vmatprep.subr.bf16.mxu0 0
        %5976 = vmatpush1.bf16.msra.mxu0 %v5968
        %5977 = vmatprep.subr.bf16.mxu0 0
        %5978 = vmatpush1.bf16.msra.mxu0 %v5969
        %5979 = vmatprep.subr.bf16.mxu0 0
        %5980 = vmatpush1.bf16.msra.mxu0 0
        %5981 = vmatprep.subr.bf16.mxu0 0
        %5982 = vmatpush1.bf16.msra.mxu0 0
        %5983 = vmatprep.subr.bf16.mxu0 0
        %5984 = vmatpush1.bf16.msra.mxu0 0
        %5985 = vmatprep.subr.bf16.mxu0 0
        %5986 = vmatpush1.bf16.msra.mxu0 0
        %5987 = vmatprep.subr.bf16.mxu0 0
        %5988 = vmatpush1.bf16.msra.mxu0 0
        %5989 = vmatprep.subr.bf16.mxu0 0
        %5990 = vmatpush1.bf16.msra.mxu0 0
        %5991 = vmatprep.subr.bf16.mxu0 0
        %5992 = vmatpush1.bf16.msra.mxu0 0
        %5993 = vmatprep.subr.bf16.mxu0 0
        %5994 = vmatpush1.bf16.msra.mxu0 0
        %5995 = vmatprep.subr.bf16.mxu0 0
        %5996 = vmatpush1.bf16.msra.mxu0 0
        %5997 = vmatprep.subr.bf16.mxu0 0
        %5998 = vmatpush1.bf16.msra.mxu0 0
        %5999 = vmatprep.subr.bf16.mxu0 0
        %6000 = vmatpush1.bf16.msra.mxu0 0
        %6001 = vmatprep.subr.bf16.mxu0 0
        %6002 = vmatpush1.bf16.msra.mxu0 0
        %6003 = vmatprep.subr.bf16.mxu0 0
        %6004 = vmatpush1.bf16.msra.mxu0 0
        %6005 = vmatprep.subr.bf16.mxu0 0
        %6006 = vmatpush1.bf16.msra.mxu0 0
        %6007 = vmatprep.mubr.bf16.mxu0 0
        %6008 = vmatmul.mubr.bf16.gmra.mrb[0].mxu0 %v5973
        %v6009 = vpop.f32.mrb[0].mxu0
        %v6010 = vadd.f32 %v5958, %v6009
        %v6011 = vpop.f32.mrb[0].mxu0
        %v6012 = vpop.f32.mrb[0].mxu0
        %v6013 = vadd.f32 %v5958, %v6012
        %v6014 = vpop.f32.mrb[0].mxu0
        %6015 = vdwg.mxu0
        %v6016 = vmax.f32 %v6010, 0.0
        %v6017 = vmax.f32 %v6013, 0.0
        %v6018 = vld [vmem:[%s57] sm:$0x7]
        %v6019 = vpack.c.bf16 %v6017, %v6016
        %v6020 = vld [vmem:[%s55] sm:$0x1]
        %v6022 = vlaneseq
        %v6023 = vshrl.u32 %v6022, 7
        %v6024 = vsub.s32 0, %v6023
        %v6025 = vrot.slane %v6020, %v6024
        %v6028 = vsel %vm1157, %v6019, 0
        %v6031 = vand.u32 %v6018, %v1164
        %6033 = vmatprep.subr.bf16.mxu0 0
        %6034 = vmatpush1.bf16.msra.mxu0 %v6031
        %6035 = vmatprep.subr.bf16.mxu0 0
        %6036 = vmatpush1.bf16.msra.mxu0 0
        %6037 = vmatprep.subr.bf16.mxu0 0
        %6038 = vmatpush1.bf16.msra.mxu0 0
        %6039 = vmatprep.subr.bf16.mxu0 0
        %6040 = vmatpush1.bf16.msra.mxu0 0
        %6041 = vmatprep.subr.bf16.mxu0 0
        %6042 = vmatpush1.bf16.msra.mxu0 0
        %6043 = vmatprep.subr.bf16.mxu0 0
        %6044 = vmatpush1.bf16.msra.mxu0 0
        %6045 = vmatprep.subr.bf16.mxu0 0
        %6046 = vmatpush1.bf16.msra.mxu0 0
        %6047 = vmatprep.subr.bf16.mxu0 0
        %6048 = vmatpush1.bf16.msra.mxu0 0
        %6049 = vmatprep.subr.bf16.mxu0 0
        %6050 = vmatpush1.bf16.msra.mxu0 0
        %6051 = vmatprep.subr.bf16.mxu0 0
        %6052 = vmatpush1.bf16.msra.mxu0 0
        %6053 = vmatprep.subr.bf16.mxu0 0
        %6054 = vmatpush1.bf16.msra.mxu0 0
        %6055 = vmatprep.subr.bf16.mxu0 0
        %6056 = vmatpush1.bf16.msra.mxu0 0
        %6057 = vmatprep.subr.bf16.mxu0 0
        %6058 = vmatpush1.bf16.msra.mxu0 0
        %6059 = vmatprep.subr.bf16.mxu0 0
        %6060 = vmatpush1.bf16.msra.mxu0 0
        %6061 = vmatprep.subr.bf16.mxu0 0
        %6062 = vmatpush1.bf16.msra.mxu0 0
        %6063 = vmatprep.subr.bf16.mxu0 0
        %6064 = vmatpush1.bf16.msra.mxu0 0
        %6065 = vmatprep.mubr.bf16.mxu0 0
        %6066 = vmatmul.mubr.bf16.gmra.mrb[0].mxu0 %v6028
        %v6067 = vpop.f32.mrb[0].mxu0
        %v6068 = vadd.f32 %v6025, %v6067
        %v6069 = vpop.f32.mrb[0].mxu0
        %v6070 = vpop.f32.mrb[0].mxu0
        %v6071 = vadd.f32 %v6025, %v6070
        %v6072 = vpop.f32.mrb[0].mxu0
        %6073 = vdwg.mxu0
        %v6074 = vmul.f32 %v5512, 0.5
        %v6075 = vmul.f32 %v5513, 0.5
        %v6076 = vld [vmem:[%s67] sm:$0x7]
        %v6077 = vld [vmem:[%s65] sm:$0xf]
        %v6078 = vpack.c.bf16 %v6075, %v6074
        %v6080 = vsel %vm1541, %v6078, 0
        %v6083 = vsel %vm1571, %v6077, 0
        %6085 = vmatprep.subr.bf16.mxu0 0
        %6086 = vmatpush1.bf16.msra.mxu0 %v6083
        %6087 = vmatprep.subr.bf16.mxu0 0
        %6088 = vmatpush1.bf16.msra.mxu0 0
        %6089 = vmatprep.subr.bf16.mxu0 0
        %6090 = vmatpush1.bf16.msra.mxu0 0
        %6091 = vmatprep.subr.bf16.mxu0 0
        %6092 = vmatpush1.bf16.msra.mxu0 0
        %6093 = vmatprep.subr.bf16.mxu0 0
        %6094 = vmatpush1.bf16.msra.mxu0 0
        %6095 = vmatprep.subr.bf16.mxu0 0
        %6096 = vmatpush1.bf16.msra.mxu0 0
        %6097 = vmatprep.subr.bf16.mxu0 0
        %6098 = vmatpush1.bf16.msra.mxu0 0
        %6099 = vmatprep.subr.bf16.mxu0 0
        %6100 = vmatpush1.bf16.msra.mxu0 0
        %6101 = vmatprep.subr.bf16.mxu0 0
        %6102 = vmatpush1.bf16.msra.mxu0 0
        %6103 = vmatprep.subr.bf16.mxu0 0
        %6104 = vmatpush1.bf16.msra.mxu0 0
        %6105 = vmatprep.subr.bf16.mxu0 0
        %6106 = vmatpush1.bf16.msra.mxu0 0
        %6107 = vmatprep.subr.bf16.mxu0 0
        %6108 = vmatpush1.bf16.msra.mxu0 0
        %6109 = vmatprep.subr.bf16.mxu0 0
        %6110 = vmatpush1.bf16.msra.mxu0 0
        %6111 = vmatprep.subr.bf16.mxu0 0
        %6112 = vmatpush1.bf16.msra.mxu0 0
        %6113 = vmatprep.subr.bf16.mxu0 0
        %6114 = vmatpush1.bf16.msra.mxu0 0
        %6115 = vmatprep.subr.bf16.mxu0 0
        %6116 = vmatpush1.bf16.msra.mxu0 0
        %6117 = vmatprep.mubr.bf16.mxu0 0
        %6118 = vmatmul.mubr.bf16.gmra.mrb[0].mxu0 %v6080
        %v6119 = vpop.f32.mrb[0].mxu0
        %v6120 = vadd.f32 0.0, %v6119
        %v6121 = vpop.f32.mrb[0].mxu0
        %v6122 = vpop.f32.mrb[0].mxu0
        %v6123 = vadd.f32 0.0, %v6122
        %v6124 = vpop.f32.mrb[0].mxu0
        %6125 = vdwg.mxu0
        %v6127 = vand.u32 %v6076, %v1164
        %6129 = vmatprep.subr.bf16.mxu0 0
        %6130 = vmatpush1.bf16.msra.mxu0 %v6127
        %6131 = vmatprep.subr.bf16.mxu0 0
        %6132 = vmatpush1.bf16.msra.mxu0 0
        %6133 = vmatprep.subr.bf16.mxu0 0
        %6134 = vmatpush1.bf16.msra.mxu0 0
        %6135 = vmatprep.subr.bf16.mxu0 0
        %6136 = vmatpush1.bf16.msra.mxu0 0
        %6137 = vmatprep.subr.bf16.mxu0 0
        %6138 = vmatpush1.bf16.msra.mxu0 0
        %6139 = vmatprep.subr.bf16.mxu0 0
        %6140 = vmatpush1.bf16.msra.mxu0 0
        %6141 = vmatprep.subr.bf16.mxu0 0
        %6142 = vmatpush1.bf16.msra.mxu0 0
        %6143 = vmatprep.subr.bf16.mxu0 0
        %6144 = vmatpush1.bf16.msra.mxu0 0
        %6145 = vmatprep.subr.bf16.mxu0 0
        %6146 = vmatpush1.bf16.msra.mxu0 0
        %6147 = vmatprep.subr.bf16.mxu0 0
        %6148 = vmatpush1.bf16.msra.mxu0 0
        %6149 = vmatprep.subr.bf16.mxu0 0
        %6150 = vmatpush1.bf16.msra.mxu0 0
        %6151 = vmatprep.subr.bf16.mxu0 0
        %6152 = vmatpush1.bf16.msra.mxu0 0
        %6153 = vmatprep.subr.bf16.mxu0 0
        %6154 = vmatpush1.bf16.msra.mxu0 0
        %6155 = vmatprep.subr.bf16.mxu0 0
        %6156 = vmatpush1.bf16.msra.mxu0 0
        %6157 = vmatprep.subr.bf16.mxu0 0
        %6158 = vmatpush1.bf16.msra.mxu0 0
        %6159 = vmatprep.subr.bf16.mxu0 0
        %6160 = vmatpush1.bf16.msra.mxu0 0
        %6161 = vmatprep.mubr.bf16.mxu0 0
        %6162 = vmatmul.mubr.bf16.gmra.mrb[0].mxu0 %v1159
        %v6163 = vpop.f32.mrb[0].mxu0
        %v6164 = vadd.f32 %v6120, %v6163
        %v6165 = vpop.f32.mrb[0].mxu0
        %v6166 = vpop.f32.mrb[0].mxu0
        %v6167 = vadd.f32 %v6123, %v6166
        %v6168 = vpop.f32.mrb[0].mxu0
        %6169 = vdwg.mxu0
        %v6170 = vld [vmem:[%s63] sm:$0x1]
        %v6172 = vlaneseq
        %v6173 = vshrl.u32 %v6172, 7
        %v6174 = vsub.s32 0, %v6173
        %v6175 = vrot.slane %v6170, %v6174
        %v6177 = vadd.f32 %v6164, %v6175
        %v6178 = vadd.f32 %v6167, %v6175
        %v6179 = vxor.u32 %v6177, 2147483648
        %v6180 = vxor.u32 %v6178, 2147483648
        %v6181 = vmul.f32 %v6179, 1.442695
        %v6182 = vpow.pop %v6181
        %v6183 = vmul.f32 %v6180, 1.442695
        %v6184 = vpow.pop %v6183
        %v6185 = vadd.f32 %v6182, 1.0
        %v6186 = vadd.f32 %v6184, 1.0
        %v6187 = vrcp.pop %v6185
        %v6188 = vmul.f32 1.0, %v6187
        %v6189 = vrcp.pop %v6186
        %v6190 = vmul.f32 1.0, %v6189
        %v6191 = vsub.f32 1.0, %v6188
        %v6192 = vsub.f32 1.0, %v6190
        %v6193 = vmul.f32 %v6191, %v6068
        %v6194 = vmul.f32 %v6192, %v6071
        %v6195 = vmul.f32 %v6188, %v3580
        %v6196 = vmul.f32 %v6190, %v3583
        %v6197 = vadd.f32 %v6193, %v6195
        %v6198 = vadd.f32 %v6194, %v6196
        %6201 = vrot.lane.b32.xlu0 %v6068, 5
        %v6202 = vpop.permute.xlu0 %6201
        %6203 = vrot.lane.b32.xlu0 %v6071, 5
        %v6204 = vpop.permute.xlu0 %6203
        %6209 = vrot.lane.b32.xlu0 %v6197, 10
        %v6210 = vpop.permute.xlu0 %6209
        %6211 = vrot.lane.b32.xlu0 %v6198, 10
        %v6212 = vpop.permute.xlu0 %6211
        %6217 = vrot.lane.b32.xlu0 %v6188, 15
        %v6218 = vpop.permute.xlu0 %6217
        %6219 = vrot.lane.b32.xlu0 %v6190, 15
        %v6220 = vpop.permute.xlu0 %6219
        %v6223 = vsel %vm1157, %v3580, %v6202
        %v6224 = vsel %vm1157, %v3583, %v6204
        %vm6225 = vcmask 80896
        %v6226 = vsel %vm6225, %v6223, %v6210
        %v6227 = vsel %vm6225, %v6224, %v6212
        %vm6228 = vcmask 121856
        %v6229 = vsel %vm6228, %v6226, %v6218
        %v6230 = vsel %vm6228, %v6227, %v6220
        %vm6231 = vcmask 162816
        %6232 = vst.msk [vmem:[%s1143] sm:$0xff] %vm6231, %v6229
        %6233 = vst.msk [vmem:[%s1143 + $0x8] sm:$0xff] %vm6231, %v6230
        %s6234 = smul.u32 2, %s91
        %p6235 = scmp.lt.s32.totalorder %s6234, 3
        %s6236 = scalar_select %p6235, %s6234, 3
        %s6237 = smul.addr %s6236, 8
        %s6238 = scalar_lea.vmem %s69, %s6237
        %s6239 = sand.u32 %s849, 1
        %s6240 = scalar_lea.sflag [#allocation3], %s6239
        %s6241 = sand.u32 %s849, 1
        %s6242 = smul.addr %s6241, 32
        %s6243 = scalar_lea.vmem [#allocation2], %s6242
        %s6244 = sand.u32 %s875, 1
        %s6245 = scalar_lea.sflag [#allocation5], %s6244
        %s6246 = sand.u32 %s875, 1
        %s6247 = smul.addr %s6246, 32
        %s6248 = scalar_lea.vmem [#allocation4], %s6247
        // Predicated region
        $region157: #{_backbone_saits_forward.1} parent=155 // pred_check
          %p6249 = pneg %p833
        $region158: #{_backbone_saits_forward.1} parent=155 // pred_check_branch
          %6251 = sbr.rel (%p6249) target = $region160
        $region159: #{_backbone_saits_forward.1} parent=155 // pred_region
          %s6252 = smul.u32 2, %s91
        $region160: #{_backbone_saits_forward.1} parent=155 // pred_fallthru
          _
        // Predicated region
        $region161: #{_backbone_saits_forward.1} parent=155 // pred_check
          %p6253 = pneg %p859
        $region162: #{_backbone_saits_forward.1} parent=155 // pred_check_branch
          %6255 = sbr.rel (%p6253) target = $region164
        $region163: #{_backbone_saits_forward.1} parent=155 // pred_region
          %s6256 = smul.u32 2, %s91
          %s6258 = ssub.s32 512, 512
          %6259 = vsyncadd %s6240, %s6258
          %s6260 = smul.addr %s6256, 2
          %s6261 = smul.addr %s6260, 128
          %s6262 = scalar_lea.hbm %s71, %s6261
          %s6263 = sshll.u32 %s6243, 4
          %s6264 = int_to_ptr.vmem [resolvable:$true] %s6263
          %6269 = dma.vmem_to_hbm [thread:$0]  %s6264, 512, %s6262, %s6240, 128, 128, 8
        $region164: #{_backbone_saits_forward.1} parent=155 // pred_fallthru
          _
        // Predicated region
        $region165: #{_backbone_saits_forward.1} parent=155 // pred_check
          %p6270 = pneg %p885
        $region166: #{_backbone_saits_forward.1} parent=155 // pred_check_branch
          %6272 = sbr.rel (%p6270) target = $region168
        $region167: #{_backbone_saits_forward.1} parent=155 // pred_region
          %s6273 = smul.u32 2, %s91
          %s6275 = ssub.s32 512, 512
          %6276 = vsyncadd %s6245, %s6275
          %s6277 = smul.addr %s6273, 2
          %s6278 = smul.addr %s6277, 128
          %s6279 = scalar_lea.hbm %s73, %s6278
          %s6280 = sshll.u32 %s6248, 4
          %s6281 = int_to_ptr.vmem [resolvable:$true] %s6280
          %6286 = dma.vmem_to_hbm [thread:$0]  %s6281, 512, %s6279, %s6245, 128, 128, 8
        $region168: #{_backbone_saits_forward.1} parent=155 // pred_fallthru
          _
      $region156: #{_backbone_saits_forward.1} parent=5 // pred_fallthru
        _
      %p6287 = scmp.le.s32.totalorder 2, %s86
      // Predicated region
      $region169: #{_backbone_saits_forward.1} parent=5 // pred_check
        %p6288 = pneg %p6287
      $region170: #{_backbone_saits_forward.1} parent=5 // pred_check_branch
        %6290 = sbr.rel (%p6288) target = $region172
      $region171: #{_backbone_saits_forward.1} parent=5 // pred_region
        %s6291 = ssub.s32 %s86, 2
        // Predicated region
        $region173: #{_backbone_saits_forward.1} parent=171 // pred_check
          %p6292 = pneg %p839
        $region174: #{_backbone_saits_forward.1} parent=171 // pred_check_branch
          %6294 = sbr.rel (%p6292) target = $region176
        $region175: #{_backbone_saits_forward.1} parent=171 // pred_region
          %s6295 = smul.u32 2, %s92
          %p6296 = scmp.lt.s32.totalorder %s6295, 3
          %s6297 = scalar_select %p6296, %s6295, 3
          %s6298 = smul.addr %s6297, 8
          %s6299 = scalar_lea.vmem %s69, %s6298
        $region176: #{_backbone_saits_forward.1} parent=171 // pred_fallthru
          _
        // Predicated region
        $region177: #{_backbone_saits_forward.1} parent=171 // pred_check
          %p6300 = pneg %p865
        $region178: #{_backbone_saits_forward.1} parent=171 // pred_check_branch
          %6302 = sbr.rel (%p6300) target = $region180
        $region179: #{_backbone_saits_forward.1} parent=171 // pred_region
          %s6303 = sand.u32 %s850, 1
          %s6304 = scalar_lea.sflag [#allocation3], %s6303
          %s6305 = sand.u32 %s850, 1
          %s6306 = smul.addr %s6305, 32
          %s6307 = scalar_lea.vmem [#allocation2], %s6306
          %6308 = dma.done %s6304, 512
        $region180: #{_backbone_saits_forward.1} parent=171 // pred_fallthru
          _
        // Predicated region
        $region181: #{_backbone_saits_forward.1} parent=171 // pred_check
          %p6309 = pneg %p891
        $region182: #{_backbone_saits_forward.1} parent=171 // pred_check_branch
          %6311 = sbr.rel (%p6309) target = $region184
        $region183: #{_backbone_saits_forward.1} parent=171 // pred_region
          %s6312 = sand.u32 %s876, 1
          %s6313 = scalar_lea.sflag [#allocation5], %s6312
          %s6314 = sand.u32 %s876, 1
          %s6315 = smul.addr %s6314, 32
          %s6316 = scalar_lea.vmem [#allocation4], %s6315
          %6317 = dma.done %s6313, 512
        $region184: #{_backbone_saits_forward.1} parent=171 // pred_fallthru
          _
      $region172: #{_backbone_saits_forward.1} parent=5 // pred_fallthru
        _
    $region6: #{_backbone_saits_forward.1} parent=1 // loop_footer
      %s90 = sadd.s32 1, %s86
    $region7: #{_backbone_saits_forward.1} parent=1 // loop_footer_branch
      %85 = sbr.rel target = $region3
    $region8: #{_backbone_saits_forward.1} parent=1 // loop_exit
      _
    %6318 = vsyncpa [#allocation3], 1
    %s6319 = scalar_lea.sflag [#allocation3], 1
    %6320 = vsyncpa %s6319, 1
    %6321 = vsyncpa [#allocation5], 1
    %s6322 = scalar_lea.sflag [#allocation5], 1
    %6323 = vsyncpa %s6322, 1

</llo_original>
